<compile_context>
chip_gen: v5e
topology: v5e:2x2
jax: 0.10.0
libtpu: 0.0.40
codegen_flags: <defaults>
</compile_context>

<pallas_src>
import jax
import jax.numpy as jnp
from jax.experimental import pallas as pl
from jax.experimental.pallas import tpu as pltpu

IN_DIM = 3072
HID_DIM = 2048
OUT_DIM = 10
BN_EPS = 1e-5

TN = 1024                 # hidden-feature tile width
N_TILES = HID_DIM // TN   # = 2 grid steps (parallel -> one per v7x TensorCore)


def fused_kernel(x_ref, w1_ref, b1_ref, g_ref, beta_ref, w2_ref, out_ref):
    """One hidden-feature tile, fully fused:
         y          = x @ W1_tile + b1_tile      (bf16 inputs, f32 MXU accum)
         h          = relu(batchnorm(y))         (training-mode batch stats)
         out_ref[c] = h @ W2_tile                (partial logits for this tile)
    """
    y = jnp.dot(x_ref[...], w1_ref[...], preferred_element_type=jnp.float32)
    y = y + b1_ref[...]                                    # (B, TN) f32
    mean = jnp.mean(y, axis=0, keepdims=True)              # (1, TN)
    var = jnp.mean((y - mean) ** 2, axis=0, keepdims=True) # biased var (PyTorch train fwd)
    y_hat = (y - mean) * jax.lax.rsqrt(var + BN_EPS)
    h = jnp.maximum(g_ref[...] * y_hat + beta_ref[...], 0.0)
    part = jnp.dot(h, w2_ref[...], preferred_element_type=jnp.float32)  # (B, 10)
    out_ref[...] = part[None]                              # (1, B, 10)


@jax.jit
def label_classifier_forward(x, params):
    w1, b1, gamma, beta, w2, b2 = params
    B = x.shape[0]
    x_bf16 = x.astype(jnp.bfloat16)

    cost = pl.CostEstimate(
        flops=2 * B * IN_DIM * HID_DIM + 2 * B * HID_DIM * OUT_DIM,
        transcendentals=0,
        bytes_accessed=(IN_DIM * HID_DIM * 2        # W1 (bf16) — dominant term
                        + B * IN_DIM * 2            # x (bf16)
                        + HID_DIM * OUT_DIM * 4     # W2
                        + 3 * HID_DIM * 4           # b1, gamma, beta
                        + N_TILES * B * OUT_DIM * 4),
    )

    partial_logits = pl.pallas_call(
        fused_kernel,
        out_shape=jax.ShapeDtypeStruct((N_TILES, B, OUT_DIM), jnp.float32),
        grid_spec=pltpu.PrefetchScalarGridSpec(
            num_scalar_prefetch=0,
            grid=(N_TILES,),
            in_specs=[
                pl.BlockSpec((B, IN_DIM), lambda c: (0, 0)),    # x (resident, bf16)
                pl.BlockSpec((IN_DIM, TN), lambda c: (0, c)),   # W1 tile (bf16)
                pl.BlockSpec((1, TN), lambda c: (0, c)),        # b1 tile
                pl.BlockSpec((1, TN), lambda c: (0, c)),        # gamma tile
                pl.BlockSpec((1, TN), lambda c: (0, c)),        # beta tile
                pl.BlockSpec((TN, OUT_DIM), lambda c: (c, 0)),  # W2 tile (f32)
            ],
            out_specs=pl.BlockSpec((1, B, OUT_DIM), lambda c: (c, 0, 0)),
        ),
        compiler_params=pltpu.CompilerParams(
            dimension_semantics=("parallel",),
            vmem_limit_bytes=32 << 20,
        ),
        cost_estimate=cost,
    )(x_bf16, w1, b1.reshape(1, HID_DIM), gamma.reshape(1, HID_DIM),
      beta.reshape(1, HID_DIM), w2)

    # Tiny epilogue on (N_TILES, B, 10): combine partial logits, add b2, softmax.
    # Fused by XLA under jit; replaces the old second pallas_call.
    logits = jnp.sum(partial_logits, axis=0) + b2
    return jax.nn.softmax(logits, axis=-1)


def init_params(key):
    """PyTorch-default-style init (uniform +/- 1/sqrt(fan_in); BN gamma=1, beta=0).
    Weights stored as (in, out); W1 kept in bf16 for storage/DMA (halves the
    dominant HBM stream), everything post-matmul stays f32."""
    k1, k2, k3, k4 = jax.random.split(key, 4)
    bound1 = 1.0 / jnp.sqrt(IN_DIM)
    bound2 = 1.0 / jnp.sqrt(HID_DIM)
    w1 = jax.random.uniform(k1, (IN_DIM, HID_DIM), jnp.float32, -bound1, bound1)
    w1 = w1.astype(jnp.bfloat16)
    b1 = jax.random.uniform(k2, (HID_DIM,), jnp.float32, -bound1, bound1)
    gamma = jnp.ones((HID_DIM,), jnp.float32)
    beta = jnp.zeros((HID_DIM,), jnp.float32)
    w2 = jax.random.uniform(k3, (HID_DIM, OUT_DIM), jnp.float32, -bound2, bound2)
    b2 = jax.random.uniform(k4, (OUT_DIM,), jnp.float32, -bound2, bound2)
    return (w1, b1, gamma, beta, w2, b2)


def reference_forward(x, params):
    """Pure-JAX reference using the same bf16 weight/input cast as the kernel."""
    w1, b1, gamma, beta, w2, b2 = params
    y = jnp.dot(x.astype(jnp.bfloat16), w1,
                preferred_element_type=jnp.float32) + b1
    mean = jnp.mean(y, axis=0, keepdims=True)
    var = jnp.mean((y - mean) ** 2, axis=0, keepdims=True)
    h = jnp.maximum(gamma * (y - mean) * jax.lax.rsqrt(var + BN_EPS) + beta, 0.0)
    logits = h @ w2 + b2
    return jax.nn.softmax(logits, axis=-1)


if __name__ == "__main__":
    key = jax.random.PRNGKey(0)
    kx, kp = jax.random.split(key)
    B = 8  # small batch; feature dims fixed by the module (3072 -> 2048 -> 10)
    x = jax.random.normal(kx, (B, IN_DIM), jnp.float32)
    params = init_params(kp)

    out = label_classifier_forward(x, params)
    out = jax.block_until_ready(out)

    ref = reference_forward(x, params)
    assert out.shape == (B, OUT_DIM)
    assert jnp.allclose(jnp.sum(out, axis=-1), 1.0, atol=1e-5)
    # bf16 weight storage + different reduction tiling -> loosened tolerance.
    assert jnp.allclose(out, ref, atol=2e-3, rtol=2e-3)
    print("KERNEL_OK")
</pallas_src>

<mosaic_0001>
module attributes {stable_mosaic.version = 11 : i64} {
  func.func @fused_kernel(%arg0: i32, %arg1: memref<8x3072xbf16, #tpu.memory_space<vmem>>, %arg2: memref<3072x1024xbf16, #tpu.memory_space<vmem>>, %arg3: memref<1x1024xf32, #tpu.memory_space<vmem>>, %arg4: memref<1x1024xf32, #tpu.memory_space<vmem>>, %arg5: memref<1x1024xf32, #tpu.memory_space<vmem>>, %arg6: memref<1024x10xf32, #tpu.memory_space<vmem>>, %arg7: memref<1x8x10xf32, #tpu.memory_space<vmem>>) attributes {dimension_semantics = [#tpu.dimension_semantics<parallel>], iteration_bounds = array<i64: 2>, scalar_prefetch = 0 : i64, scratch_operands = 0 : i64, tpu.core_type = #tpu.core_type<tc>, window_params = [{pipeline_mode = #tpu.pipeline_mode<synchronous>, transform_indices = @transform_0, window_bounds = array<i64: 8, 3072>}, {transform_indices = @transform_1, window_bounds = array<i64: 3072, 1024>}, {transform_indices = @transform_2, window_bounds = array<i64: 1, 1024>}, {transform_indices = @transform_3, window_bounds = array<i64: 1, 1024>}, {transform_indices = @transform_4, window_bounds = array<i64: 1, 1024>}, {transform_indices = @transform_5, window_bounds = array<i64: 1024, 10>}, {transform_indices = @transform_6, window_bounds = array<i64: 1, 8, 10>}]} {
    %c0 = arith.constant 0 : index
    %c0_0 = arith.constant 0 : index
    %0 = vector.load %arg1[%c0, %c0_0] : memref<8x3072xbf16, #tpu.memory_space<vmem>>, vector<8x3072xbf16>
    %c0_1 = arith.constant 0 : index
    %c0_2 = arith.constant 0 : index
    %1 = vector.load %arg2[%c0_1, %c0_2] : memref<3072x1024xbf16, #tpu.memory_space<vmem>>, vector<3072x1024xbf16>
    %cst = arith.constant dense<0.000000e+00> : vector<8x1024xf32>
    %2 = tpu.matmul %0, %1, %cst {dimension_numbers = #tpu.dot_dimension_numbers<[1], [0], [0], [1], [0, 0, 1, 1], [], []>} : vector<8x3072xbf16>, vector<3072x1024xbf16>, vector<8x1024xf32> -> vector<8x1024xf32>
    %c0_3 = arith.constant 0 : index
    %c0_4 = arith.constant 0 : index
    %3 = vector.load %arg3[%c0_3, %c0_4] : memref<1x1024xf32, #tpu.memory_space<vmem>>, vector<1x1024xf32>
    %4 = vector.broadcast %3 : vector<1x1024xf32> to vector<8x1024xf32>
    %5 = arith.addf %2, %4 : vector<8x1024xf32>
    %cst_5 = arith.constant dense<0.000000e+00> : vector<1024xf32>
    %6 = vector.multi_reduction <add>, %5, %cst_5 [0] : vector<8x1024xf32> to vector<1024xf32>
    %7 = vector.shape_cast %6 : vector<1024xf32> to vector<1x1024xf32>
    %cst_6 = arith.constant 8.000000e+00 : f32
    %8 = vector.broadcast %cst_6 : f32 to vector<1x1024xf32>
    %9 = arith.divf %7, %8 : vector<1x1024xf32>
    %10 = vector.broadcast %9 : vector<1x1024xf32> to vector<8x1024xf32>
    %11 = arith.subf %5, %10 : vector<8x1024xf32>
    %12 = arith.mulf %11, %11 : vector<8x1024xf32>
    %cst_7 = arith.constant dense<0.000000e+00> : vector<1024xf32>
    %13 = vector.multi_reduction <add>, %12, %cst_7 [0] : vector<8x1024xf32> to vector<1024xf32>
    %14 = vector.shape_cast %13 : vector<1024xf32> to vector<1x1024xf32>
    %cst_8 = arith.constant 8.000000e+00 : f32
    %15 = vector.broadcast %cst_8 : f32 to vector<1x1024xf32>
    %16 = arith.divf %14, %15 : vector<1x1024xf32>
    %17 = vector.broadcast %9 : vector<1x1024xf32> to vector<8x1024xf32>
    %18 = arith.subf %5, %17 : vector<8x1024xf32>
    %cst_9 = arith.constant 9.99999974E-6 : f32
    %19 = vector.broadcast %cst_9 : f32 to vector<1x1024xf32>
    %20 = arith.addf %16, %19 : vector<1x1024xf32>
    %21 = math.rsqrt %20 : vector<1x1024xf32>
    %22 = vector.broadcast %21 : vector<1x1024xf32> to vector<8x1024xf32>
    %23 = arith.mulf %18, %22 : vector<8x1024xf32>
    %c0_10 = arith.constant 0 : index
    %c0_11 = arith.constant 0 : index
    %24 = vector.load %arg4[%c0_10, %c0_11] : memref<1x1024xf32, #tpu.memory_space<vmem>>, vector<1x1024xf32>
    %25 = vector.broadcast %24 : vector<1x1024xf32> to vector<8x1024xf32>
    %26 = arith.mulf %25, %23 : vector<8x1024xf32>
    %c0_12 = arith.constant 0 : index
    %c0_13 = arith.constant 0 : index
    %27 = vector.load %arg5[%c0_12, %c0_13] : memref<1x1024xf32, #tpu.memory_space<vmem>>, vector<1x1024xf32>
    %28 = vector.broadcast %27 : vector<1x1024xf32> to vector<8x1024xf32>
    %29 = arith.addf %26, %28 : vector<8x1024xf32>
    %cst_14 = arith.constant 0.000000e+00 : f32
    %30 = vector.broadcast %cst_14 : f32 to vector<8x1024xf32>
    %31 = arith.maximumf %29, %30 : vector<8x1024xf32>
    %c0_15 = arith.constant 0 : index
    %c0_16 = arith.constant 0 : index
    %32 = vector.load %arg6[%c0_15, %c0_16] : memref<1024x10xf32, #tpu.memory_space<vmem>>, vector<1024x10xf32>
    %cst_17 = arith.constant dense<0.000000e+00> : vector<8x10xf32>
    %33 = tpu.matmul %31, %32, %cst_17 {dimension_numbers = #tpu.dot_dimension_numbers<[1], [0], [0], [1], [0, 0, 1, 1], [], []>} : vector<8x1024xf32>, vector<1024x10xf32>, vector<8x10xf32> -> vector<8x10xf32>
    %34 = vector.shape_cast %33 : vector<8x10xf32> to vector<1x8x10xf32>
    %c0_18 = arith.constant 0 : index
    %c0_19 = arith.constant 0 : index
    %c0_20 = arith.constant 0 : index
    %35 = vector.load %arg7[%c0_18, %c0_19, %c0_20] : memref<1x8x10xf32, #tpu.memory_space<vmem>>, vector<1x8x10xf32>
    tpu.vector_store %arg7[%c0_18, %c0_19, %c0_20], %34 {strides = array<i32>} : memref<1x8x10xf32, #tpu.memory_space<vmem>>, vector<1x8x10xf32>,
    return
  }
  func.func @transform_0(%arg0: i32) -> (i32, i32) {
    %c0_i32 = arith.constant 0 : i32
    %c0_i32_0 = arith.constant 0 : i32
    %c0_i32_1 = arith.constant 0 : i32
    return %c0_i32, %c0_i32_0 : i32, i32
  }
  func.func @transform_1(%arg0: i32) -> (i32, i32) {
    %c0_i32 = arith.constant 0 : i32
    %c0_i32_0 = arith.constant 0 : i32
    return %c0_i32, %arg0 : i32, i32
  }
  func.func @transform_2(%arg0: i32) -> (i32, i32) {
    %c0_i32 = arith.constant 0 : i32
    %c0_i32_0 = arith.constant 0 : i32
    return %c0_i32, %arg0 : i32, i32
  }
  func.func @transform_3(%arg0: i32) -> (i32, i32) {
    %c0_i32 = arith.constant 0 : i32
    %c0_i32_0 = arith.constant 0 : i32
    return %c0_i32, %arg0 : i32, i32
  }
  func.func @transform_4(%arg0: i32) -> (i32, i32) {
    %c0_i32 = arith.constant 0 : i32
    %c0_i32_0 = arith.constant 0 : i32
    return %c0_i32, %arg0 : i32, i32
  }
  func.func @transform_5(%arg0: i32) -> (i32, i32) {
    %c0_i32 = arith.constant 0 : i32
    %c0_i32_0 = arith.constant 0 : i32
    return %arg0, %c0_i32 : i32, i32
  }
  func.func @transform_6(%arg0: i32) -> (i32, i32, i32) {
    %c0_i32 = arith.constant 0 : i32
    %c0_i32_0 = arith.constant 0 : i32
    %c0_i32_1 = arith.constant 0 : i32
    return %arg0, %c0_i32, %c0_i32_0 : i32, i32, i32
  }
}

</mosaic_0001>

<llo_original>
// kernel: label_classifier_forward.1
$region0: #{label_classifier_forward.1}
  #allocation0 [shape = 'u32[]', space=smem, size = 0x4, offset = 0x4, fixed_abs, tag = 'smem constant byte address 0x4 - core index']
  #allocation1 [shape = 'u32[72,128]{1,0:T(1,128)}', space=vmem, size = 0x9000, scoped, tag = 'internal scratch']
  %s0 = inlined_call_operand.vmem [shape: bf16[8,3072], index: 0, kind: input, shape index: {}]
  %s1 = inlined_call_operand.hbm [shape: bf16[3072,2048], index: 1, kind: input, shape index: {}]
  %s2 = inlined_call_operand.hbm [shape: f32[1,2048], index: 2, kind: input, shape index: {}]
  %s3 = inlined_call_operand.hbm [shape: f32[1,2048], index: 3, kind: input, shape index: {}]
  %s4 = inlined_call_operand.hbm [shape: f32[1,2048], index: 4, kind: input, shape index: {}]
  %s5 = inlined_call_operand.vmem [shape: f32[2048,10], index: 5, kind: input, shape index: {}]
  %s6 = inlined_call_operand.vmem [shape: f32[2,8,10], index: 6, kind: output, shape index: {}]
  %s7 = sld [smem:[#allocation0]]
  $region73: #{label_classifier_forward.1} parent=0
    _
  %s9 = ssub.s32 1, %s7
  %s10 = scalar_select 0, %s9, %s7
  $region1: #{label_classifier_forward.1} parent=0
    #allocation2 [shape = 'u8[12582912]{0}', space=vmem, size = 0xc00000, scoped, tag = 'input window, operand 1']
    #allocation3 [shape = 's32[2]{0}', space=sflag, size = 0x8, scoped, tag = 'scoped memory for label_classifier_forward.1']
    #allocation4 [shape = 'u8[8192]{0}', space=vmem, size = 0x2000, scoped, tag = 'input window, operand 2']
    #allocation5 [shape = 's32[2]{0}', space=sflag, size = 0x8, scoped, tag = 'scoped memory for label_classifier_forward.1']
    #allocation6 [shape = 'u8[8192]{0}', space=vmem, size = 0x2000, scoped, tag = 'input window, operand 3']
    #allocation7 [shape = 'u8[8192]{0}', space=vmem, size = 0x2000, scoped, tag = 'input window, operand 4']
    #allocation8 [shape = 's32[2]{0}', space=sflag, size = 0x8, scoped, tag = 'scoped memory for label_classifier_forward.1']
    %11 = vsyncpa [#allocation3], 0
    %s12 = scalar_lea.sflag [#allocation3], 1
    %13 = vsyncpa %s12, 0
    %14 = vsyncpa [#allocation5], 0
    %s15 = scalar_lea.sflag [#allocation5], 1
    %16 = vsyncpa %s15, 0
    %17 = vsyncpa [#allocation8], 0
    %s18 = scalar_lea.sflag [#allocation8], 1
    %19 = vsyncpa %s18, 0
    loop: start=0, step=1, limit=4
    $region2: #{label_classifier_forward.1} parent=1 // loop_pre_header
      _
    $region3: #{label_classifier_forward.1} parent=1 // loop_header
      %s21 = sphi 0, %s25
      %p22 = scmp.ge.s32.totalorder %s21, 4
      %s29 = sphi 0, %s29
      %s31 = sphi 0, %s29
      %s32 = sphi 0, %s31
      %s46 = sphi 0, %s32
      %s52 = sphi 0, %s54
      %s55 = sphi 0, %s52
      %s56 = sphi 0, %s55
      %s72 = sphi 0, %s56
      %s78 = sphi 0, %s80
      %s81 = sphi 0, %s78
      %s82 = sphi 0, %s81
      %s98 = sphi 0, %s82
      %s104 = sphi 0, %s106
      %s107 = sphi 0, %s104
      %s108 = sphi 0, %s107
      %s124 = sphi 0, %s108
      %s130 = sphi 0, %s132
      %s133 = sphi 0, %s130
      %s134 = sphi 0, %s133
      %s150 = sphi 0, %s134
      %s156 = sphi 0, %s158
      %s159 = sphi 0, %s156
      %s160 = sphi 0, %s159
      %s176 = sphi 0, %s160
      %s182 = sphi 0, %s184
      %s185 = sphi 0, %s182
      %s186 = sphi 0, %s185
      %s202 = sphi 0, %s186
    $region4: #{label_classifier_forward.1} parent=1 // loop_header_branch
      %24 = sbr.rel (%p22) target = $region8
    $region5: #{label_classifier_forward.1} parent=1 // loop_body
      %s26 = ssub.s32 %s21, 1
      %s27 = ssub.s32 %s21, 2
      %s28 = sadd.s32 %s21, 1
      %s30 = sadd.s32 %s29, 1
      %p33 = scmp.eq.s32.totalorder %s21, 1
      %p34 = scmp.ne.s32.totalorder %s29, %s31
      %p35 = scmp.eq.s32.totalorder %s21, 0
      %p36 = por %p34, %p35
      %p37 = scmp.ne.s32.totalorder %s29, %s31
      %p38 = scmp.eq.s32.totalorder %s26, 1
      %p39 = por %p37, %p38
      %p40 = scmp.ne.s32.totalorder %s31, %s32
      %p41 = scmp.eq.s32.totalorder %s26, 0
      %p42 = por %p40, %p41
      %p43 = scmp.ne.s32.totalorder %s31, %s32
      %p44 = scmp.eq.s32.totalorder %s27, 1
      %p45 = por %p43, %p44
      %p47 = scmp.ne.s32.totalorder %s32, %s46
      %p48 = scmp.eq.s32.totalorder %s27, 0
      %p49 = por %p47, %p48
      %s50 = ssub.s32 %s21, %s28
      %p51 = scmp.eq.s32.totalorder %s50, 0
      %s53 = sadd.s32 %s52, 1
      %s54 = scalar_select %p51, %s52, %s53
      %p57 = pneg %p51
      %p58 = scmp.eq.s32.totalorder %s21, 1
      %p59 = por %p57, %p58
      %p60 = scmp.ne.s32.totalorder %s52, %s55
      %p61 = scmp.eq.s32.totalorder %s21, 0
      %p62 = por %p60, %p61
      %p63 = scmp.ne.s32.totalorder %s52, %s55
      %p64 = scmp.eq.s32.totalorder %s26, 1
      %p65 = por %p63, %p64
      %p66 = scmp.ne.s32.totalorder %s55, %s56
      %p67 = scmp.eq.s32.totalorder %s26, 0
      %p68 = por %p66, %p67
      %p69 = scmp.ne.s32.totalorder %s55, %s56
      %p70 = scmp.eq.s32.totalorder %s27, 1
      %p71 = por %p69, %p70
      %p73 = scmp.ne.s32.totalorder %s56, %s72
      %p74 = scmp.eq.s32.totalorder %s27, 0
      %p75 = por %p73, %p74
      %s76 = ssub.s32 %s21, %s28
      %p77 = scmp.eq.s32.totalorder %s76, 0
      %s79 = sadd.s32 %s78, 1
      %s80 = scalar_select %p77, %s78, %s79
      %p83 = pneg %p77
      %p84 = scmp.eq.s32.totalorder %s21, 1
      %p85 = por %p83, %p84
      %p86 = scmp.ne.s32.totalorder %s78, %s81
      %p87 = scmp.eq.s32.totalorder %s21, 0
      %p88 = por %p86, %p87
      %p89 = scmp.ne.s32.totalorder %s78, %s81
      %p90 = scmp.eq.s32.totalorder %s26, 1
      %p91 = por %p89, %p90
      %p92 = scmp.ne.s32.totalorder %s81, %s82
      %p93 = scmp.eq.s32.totalorder %s26, 0
      %p94 = por %p92, %p93
      %p95 = scmp.ne.s32.totalorder %s81, %s82
      %p96 = scmp.eq.s32.totalorder %s27, 1
      %p97 = por %p95, %p96
      %p99 = scmp.ne.s32.totalorder %s82, %s98
      %p100 = scmp.eq.s32.totalorder %s27, 0
      %p101 = por %p99, %p100
      %s102 = ssub.s32 %s21, %s28
      %p103 = scmp.eq.s32.totalorder %s102, 0
      %s105 = sadd.s32 %s104, 1
      %s106 = scalar_select %p103, %s104, %s105
      %p109 = pneg %p103
      %p110 = scmp.eq.s32.totalorder %s21, 1
      %p111 = por %p109, %p110
      %p112 = scmp.ne.s32.totalorder %s104, %s107
      %p113 = scmp.eq.s32.totalorder %s21, 0
      %p114 = por %p112, %p113
      %p115 = scmp.ne.s32.totalorder %s104, %s107
      %p116 = scmp.eq.s32.totalorder %s26, 1
      %p117 = por %p115, %p116
      %p118 = scmp.ne.s32.totalorder %s107, %s108
      %p119 = scmp.eq.s32.totalorder %s26, 0
      %p120 = por %p118, %p119
      %p121 = scmp.ne.s32.totalorder %s107, %s108
      %p122 = scmp.eq.s32.totalorder %s27, 1
      %p123 = por %p121, %p122
      %p125 = scmp.ne.s32.totalorder %s108, %s124
      %p126 = scmp.eq.s32.totalorder %s27, 0
      %p127 = por %p125, %p126
      %s128 = ssub.s32 %s21, %s28
      %p129 = scmp.eq.s32.totalorder %s128, 0
      %s131 = sadd.s32 %s130, 1
      %s132 = scalar_select %p129, %s130, %s131
      %p135 = pneg %p129
      %p136 = scmp.eq.s32.totalorder %s21, 1
      %p137 = por %p135, %p136
      %p138 = scmp.ne.s32.totalorder %s130, %s133
      %p139 = scmp.eq.s32.totalorder %s21, 0
      %p140 = por %p138, %p139
      %p141 = scmp.ne.s32.totalorder %s130, %s133
      %p142 = scmp.eq.s32.totalorder %s26, 1
      %p143 = por %p141, %p142
      %p144 = scmp.ne.s32.totalorder %s133, %s134
      %p145 = scmp.eq.s32.totalorder %s26, 0
      %p146 = por %p144, %p145
      %p147 = scmp.ne.s32.totalorder %s133, %s134
      %p148 = scmp.eq.s32.totalorder %s27, 1
      %p149 = por %p147, %p148
      %p151 = scmp.ne.s32.totalorder %s134, %s150
      %p152 = scmp.eq.s32.totalorder %s27, 0
      %p153 = por %p151, %p152
      %s154 = ssub.s32 %s21, %s28
      %p155 = scmp.eq.s32.totalorder %s154, 0
      %s157 = sadd.s32 %s156, 1
      %s158 = scalar_select %p155, %s156, %s157
      %p161 = pneg %p155
      %p162 = scmp.eq.s32.totalorder %s21, 1
      %p163 = por %p161, %p162
      %p164 = scmp.ne.s32.totalorder %s156, %s159
      %p165 = scmp.eq.s32.totalorder %s21, 0
      %p166 = por %p164, %p165
      %p167 = scmp.ne.s32.totalorder %s156, %s159
      %p168 = scmp.eq.s32.totalorder %s26, 1
      %p169 = por %p167, %p168
      %p170 = scmp.ne.s32.totalorder %s159, %s160
      %p171 = scmp.eq.s32.totalorder %s26, 0
      %p172 = por %p170, %p171
      %p173 = scmp.ne.s32.totalorder %s159, %s160
      %p174 = scmp.eq.s32.totalorder %s27, 1
      %p175 = por %p173, %p174
      %p177 = scmp.ne.s32.totalorder %s160, %s176
      %p178 = scmp.eq.s32.totalorder %s27, 0
      %p179 = por %p177, %p178
      %s180 = ssub.s32 %s21, %s28
      %p181 = scmp.eq.s32.totalorder %s180, 0
      %s183 = sadd.s32 %s182, 1
      %s184 = scalar_select %p181, %s182, %s183
      %p187 = pneg %p181
      %p188 = scmp.eq.s32.totalorder %s21, 1
      %p189 = por %p187, %p188
      %p190 = scmp.ne.s32.totalorder %s182, %s185
      %p191 = scmp.eq.s32.totalorder %s21, 0
      %p192 = por %p190, %p191
      %p193 = scmp.ne.s32.totalorder %s182, %s185
      %p194 = scmp.eq.s32.totalorder %s26, 1
      %p195 = por %p193, %p194
      %p196 = scmp.ne.s32.totalorder %s185, %s186
      %p197 = scmp.eq.s32.totalorder %s26, 0
      %p198 = por %p196, %p197
      %p199 = scmp.ne.s32.totalorder %s185, %s186
      %p200 = scmp.eq.s32.totalorder %s27, 1
      %p201 = por %p199, %p200
      %p203 = scmp.ne.s32.totalorder %s186, %s202
      %p204 = scmp.eq.s32.totalorder %s27, 0
      %p205 = por %p203, %p204
      %p206 = scmp.le.s32.totalorder 1, %s21
      %p207 = scmp.lt.s32.totalorder %s21, 3
      %p208 = pnand %p206, %p207
      %p209 = pneg %p208
      // Predicated region
      $region9: #{label_classifier_forward.1} parent=5 // pred_check
        _
      $region10: #{label_classifier_forward.1} parent=5 // pred_check_branch
        %211 = sbr.rel (%p208) target = $region12
      $region11: #{label_classifier_forward.1} parent=5 // pred_region
        %s212 = ssub.s32 %s21, 1
        // Predicated region
        $region13: #{label_classifier_forward.1} parent=11 // pred_check
          %p213 = pneg %p42
        $region14: #{label_classifier_forward.1} parent=11 // pred_check_branch
          %215 = sbr.rel (%p213) target = $region16
        $region15: #{label_classifier_forward.1} parent=11 // pred_region
          _
        $region16: #{label_classifier_forward.1} parent=11 // pred_fallthru
          _
      $region12: #{label_classifier_forward.1} parent=5 // pred_fallthru
        _
      %p216 = scmp.lt.s32.totalorder %s21, 2
      // Predicated region
      $region17: #{label_classifier_forward.1} parent=5 // pred_check
        %p217 = pneg %p216
      $region18: #{label_classifier_forward.1} parent=5 // pred_check_branch
        %219 = sbr.rel (%p217) target = $region20
      $region19: #{label_classifier_forward.1} parent=5 // pred_region
        // Predicated region
        $region21: #{label_classifier_forward.1} parent=19 // pred_check
          %p220 = pneg %p62
        $region22: #{label_classifier_forward.1} parent=19 // pred_check_branch
          %222 = sbr.rel (%p220) target = $region24
        $region23: #{label_classifier_forward.1} parent=19 // pred_region
          %s223 = sand.u32 %s52, 1
          %s224 = scalar_lea.sflag [#allocation3], %s223
          %s225 = sand.u32 %s52, 1
          %s226 = smul.addr %s225, 12288
          %s227 = scalar_lea.vmem [#allocation2], %s226
          %s228 = smul.u32 8, %s21
          %230 = vsyncadd %s224, 0
          %s231 = smul.addr %s228, 4
          %s232 = scalar_lea.hbm %s1, %s231
          %s233 = sshll.u32 %s232, 4
          %s234 = int_to_ptr.hbm [resolvable:$true] %s233
          %s235 = sshll.u32 %s227, 4
          %s236 = int_to_ptr.vmem [resolvable:$true] %s235
          %241 = dma.hbm_to_vmem [thread:$0]  %s234, 196608, %s236, %s224, 1024, 512, 32
        $region24: #{label_classifier_forward.1} parent=19 // pred_fallthru
          _
        // Predicated region
        $region25: #{label_classifier_forward.1} parent=19 // pred_check
          %p242 = pneg %p88
        $region26: #{label_classifier_forward.1} parent=19 // pred_check_branch
          %244 = sbr.rel (%p242) target = $region28
        $region27: #{label_classifier_forward.1} parent=19 // pred_region
          %s245 = sand.u32 %s21, 1
          %s246 = scalar_lea.sflag [#allocation5], %s245
          %s247 = sand.u32 %s78, 1
          %s248 = smul.addr %s247, 8
          %s249 = scalar_lea.vmem [#allocation4], %s248
          %s250 = smul.u32 8, %s21
          %252 = vsyncadd %s246, 0
          %s253 = scalar_lea.hbm %s2, %s250
          %s255 = sshll.u32 %s253, 4
          %s256 = int_to_ptr.hbm [resolvable:$true] %s255
          %s257 = sshll.u32 %s249, 4
          %s258 = int_to_ptr.vmem [resolvable:$true] %s257
          %260 = dma.hbm_to_vmem [thread:$0]  %s256, 128, %s258, %s246
        $region28: #{label_classifier_forward.1} parent=19 // pred_fallthru
          _
        // Predicated region
        $region29: #{label_classifier_forward.1} parent=19 // pred_check
          %p261 = pneg %p114
        $region30: #{label_classifier_forward.1} parent=19 // pred_check_branch
          %263 = sbr.rel (%p261) target = $region32
        $region31: #{label_classifier_forward.1} parent=19 // pred_region
          %s264 = sand.u32 %s21, 1
          %s265 = scalar_lea.sflag [#allocation5], %s264
          %s266 = sand.u32 %s104, 1
          %s267 = smul.addr %s266, 8
          %s268 = scalar_lea.vmem [#allocation6], %s267
          %s269 = smul.u32 8, %s21
          %271 = vsyncadd %s265, 0
          %s272 = scalar_lea.hbm %s3, %s269
          %s274 = sshll.u32 %s272, 4
          %s275 = int_to_ptr.hbm [resolvable:$true] %s274
          %s276 = sshll.u32 %s268, 4
          %s277 = int_to_ptr.vmem [resolvable:$true] %s276
          %279 = dma.hbm_to_vmem [thread:$0]  %s275, 128, %s277, %s265
        $region32: #{label_classifier_forward.1} parent=19 // pred_fallthru
          _
        // Predicated region
        $region33: #{label_classifier_forward.1} parent=19 // pred_check
          %p280 = pneg %p140
        $region34: #{label_classifier_forward.1} parent=19 // pred_check_branch
          %282 = sbr.rel (%p280) target = $region36
        $region35: #{label_classifier_forward.1} parent=19 // pred_region
          %s283 = sand.u32 %s130, 1
          %s284 = scalar_lea.sflag [#allocation8], %s283
          %s285 = sand.u32 %s130, 1
          %s286 = smul.addr %s285, 8
          %s287 = scalar_lea.vmem [#allocation7], %s286
          %s288 = smul.u32 8, %s21
          %290 = vsyncadd %s284, 0
          %s291 = scalar_lea.hbm %s4, %s288
          %s293 = sshll.u32 %s291, 4
          %s294 = int_to_ptr.hbm [resolvable:$true] %s293
          %s295 = sshll.u32 %s287, 4
          %s296 = int_to_ptr.vmem [resolvable:$true] %s295
          %298 = dma.hbm_to_vmem [thread:$0]  %s294, 128, %s296, %s284
        $region36: #{label_classifier_forward.1} parent=19 // pred_fallthru
          _
        // Predicated region
        $region37: #{label_classifier_forward.1} parent=19 // pred_check
          %p299 = pneg %p166
        $region38: #{label_classifier_forward.1} parent=19 // pred_check_branch
          %301 = sbr.rel (%p299) target = $region40
        $region39: #{label_classifier_forward.1} parent=19 // pred_region
          %s302 = smul.u32 128, %s21
          %p303 = scmp.lt.s32.totalorder %s302, 255
          %s304 = scalar_select %p303, %s302, 255
          %s305 = smul.addr %s304, 8
          %s306 = scalar_lea.vmem %s5, %s305
          %s307 = smul.u32 128, %s21
        $region40: #{label_classifier_forward.1} parent=19 // pred_fallthru
          _
      $region20: #{label_classifier_forward.1} parent=5 // pred_fallthru
        _
      %p308 = scmp.le.s32.totalorder 1, %s21
      %p309 = scmp.lt.s32.totalorder %s21, 3
      %p310 = pnand %p308, %p309
      %p311 = pneg %p310
      // Predicated region
      $region41: #{label_classifier_forward.1} parent=5 // pred_check
        _
      $region42: #{label_classifier_forward.1} parent=5 // pred_check_branch
        %313 = sbr.rel (%p310) target = $region44
      $region43: #{label_classifier_forward.1} parent=5 // pred_region
        %s314 = ssub.s32 %s21, 1
        %s315 = sand.u32 %s55, 1
        %s316 = scalar_lea.sflag [#allocation3], %s315
        %s317 = sand.u32 %s55, 1
        %s318 = smul.addr %s317, 12288
        %s319 = scalar_lea.vmem [#allocation2], %s318
        // Predicated region
        $region45: #{label_classifier_forward.1} parent=43 // pred_check
          %p320 = pneg %p68
        $region46: #{label_classifier_forward.1} parent=43 // pred_check_branch
          %322 = sbr.rel (%p320) target = $region48
        $region47: #{label_classifier_forward.1} parent=43 // pred_region
          %324 = dma.done %s316, 196608
        $region48: #{label_classifier_forward.1} parent=43 // pred_fallthru
          _
        %s325 = sand.u32 %s26, 1
        %s326 = scalar_lea.sflag [#allocation5], %s325
        %s327 = sand.u32 %s81, 1
        %s328 = smul.addr %s327, 8
        %s329 = scalar_lea.vmem [#allocation4], %s328
        // Predicated region
        $region49: #{label_classifier_forward.1} parent=43 // pred_check
          %p330 = pneg %p94
        $region50: #{label_classifier_forward.1} parent=43 // pred_check_branch
          %332 = sbr.rel (%p330) target = $region52
        $region51: #{label_classifier_forward.1} parent=43 // pred_region
          %334 = dma.done %s326, 128
        $region52: #{label_classifier_forward.1} parent=43 // pred_fallthru
          _
        %s335 = sand.u32 %s26, 1
        %s336 = scalar_lea.sflag [#allocation5], %s335
        %s337 = sand.u32 %s107, 1
        %s338 = smul.addr %s337, 8
        %s339 = scalar_lea.vmem [#allocation6], %s338
        // Predicated region
        $region53: #{label_classifier_forward.1} parent=43 // pred_check
          %p340 = pneg %p120
        $region54: #{label_classifier_forward.1} parent=43 // pred_check_branch
          %342 = sbr.rel (%p340) target = $region56
        $region55: #{label_classifier_forward.1} parent=43 // pred_region
          %344 = dma.done %s336, 128
        $region56: #{label_classifier_forward.1} parent=43 // pred_fallthru
          _
        %s345 = sand.u32 %s133, 1
        %s346 = scalar_lea.sflag [#allocation8], %s345
        %s347 = sand.u32 %s133, 1
        %s348 = smul.addr %s347, 8
        %s349 = scalar_lea.vmem [#allocation7], %s348
        // Predicated region
        $region57: #{label_classifier_forward.1} parent=43 // pred_check
          %p350 = pneg %p146
        $region58: #{label_classifier_forward.1} parent=43 // pred_check_branch
          %352 = sbr.rel (%p350) target = $region60
        $region59: #{label_classifier_forward.1} parent=43 // pred_region
          %354 = dma.done %s346, 128
        $region60: #{label_classifier_forward.1} parent=43 // pred_fallthru
          _
        %p355 = pneg %p42
        %p356 = pneg %p39
        %s357 = sand.u32 %s55, 1
        %s358 = scalar_lea.sflag [#allocation3], %s357
        %s359 = sand.u32 %s55, 1
        %s360 = smul.addr %s359, 12288
        %s361 = scalar_lea.vmem [#allocation2], %s360
        %p362 = pneg %p68
        %p363 = pneg %p65
        %s364 = sand.u32 %s26, 1
        %s365 = scalar_lea.sflag [#allocation5], %s364
        %s366 = sand.u32 %s81, 1
        %s367 = smul.addr %s366, 8
        %s368 = scalar_lea.vmem [#allocation4], %s367
        %p369 = pneg %p94
        %p370 = pneg %p91
        %s371 = sand.u32 %s26, 1
        %s372 = scalar_lea.sflag [#allocation5], %s371
        %s373 = sand.u32 %s107, 1
        %s374 = smul.addr %s373, 8
        %s375 = scalar_lea.vmem [#allocation6], %s374
        %p376 = pneg %p120
        %p377 = pneg %p117
        %s378 = sand.u32 %s133, 1
        %s379 = scalar_lea.sflag [#allocation8], %s378
        %s380 = sand.u32 %s133, 1
        %s381 = smul.addr %s380, 8
        %s382 = scalar_lea.vmem [#allocation7], %s381
        %p383 = pneg %p146
        %p384 = pneg %p143
        %s385 = smul.u32 128, %s26
        %p386 = scmp.lt.s32.totalorder %s385, 255
        %s387 = scalar_select %p386, %s385, 255
        %s388 = smul.addr %s387, 8
        %s389 = scalar_lea.vmem %s5, %s388
        %p390 = pneg %p172
        %p391 = pneg %p169
        %p392 = pneg %p198
        %p393 = pneg %p195
        %p394 = scmp.lt.s32.totalorder %s26, 1
        %s395 = scalar_select %p394, %s26, 1
        %s396 = smul.addr %s395, 8
        %s397 = scalar_lea.vmem %s6, %s396
        %s398 = smul.u32 8, %s26
        %s399 = smul.u32 8, %s26
        %s400 = smul.u32 8, %s26
        %s401 = smul.u32 8, %s26
        %s402 = smul.u32 128, %s26
        %p403 = scmp.lt.s32.totalorder %s402, 255
        %s404 = scalar_select %p403, %s402, 255
        %s405 = smul.addr %s404, 8
        %s406 = scalar_lea.vmem %s5, %s405
        %s407 = smul.u32 128, %s26
        %p408 = scmp.lt.s32.totalorder %s26, 1
        %s409 = scalar_select %p408, %s26, 1
        %s410 = smul.addr %s409, 8
        %s411 = scalar_lea.vmem %s6, %s410
        %v412 = vld [vmem:[%s0] sm:$0xff]
        %v413 = vld [vmem:[%s0 + $0x8] sm:$0xff]
        %v414 = vld [vmem:[%s0 + $0x10] sm:$0xff]
        %v415 = vld [vmem:[%s0 + $0x18] sm:$0xff]
        %v416 = vld [vmem:[%s0 + $0x20] sm:$0xff]
        %v417 = vld [vmem:[%s0 + $0x28] sm:$0xff]
        %v418 = vld [vmem:[%s0 + $0x30] sm:$0xff]
        %v419 = vld [vmem:[%s0 + $0x38] sm:$0xff]
        %v420 = vld [vmem:[%s0 + $0x40] sm:$0xff]
        %v421 = vld [vmem:[%s0 + $0x48] sm:$0xff]
        %v422 = vld [vmem:[%s0 + $0x50] sm:$0xff]
        %v423 = vld [vmem:[%s0 + $0x58] sm:$0xff]
        %v424 = vld [vmem:[%s319] sm:$0xff]
        %v425 = vld [vmem:[%s319 + $0x8] sm:$0xff]
        %v426 = vld [vmem:[%s319 + $0x10] sm:$0xff]
        %v427 = vld [vmem:[%s319 + $0x18] sm:$0xff]
        %v428 = vld [vmem:[%s319 + $0x20] sm:$0xff]
        %v429 = vld [vmem:[%s319 + $0x28] sm:$0xff]
        %v430 = vld [vmem:[%s319 + $0x30] sm:$0xff]
        %v431 = vld [vmem:[%s319 + $0x38] sm:$0xff]
        %v432 = vld [vmem:[%s319 + $0x40] sm:$0xff]
        %v433 = vld [vmem:[%s319 + $0x48] sm:$0xff]
        %v434 = vld [vmem:[%s319 + $0x50] sm:$0xff]
        %v435 = vld [vmem:[%s319 + $0x58] sm:$0xff]
        %v436 = vld [vmem:[%s319 + $0x60] sm:$0xff]
        %v437 = vld [vmem:[%s319 + $0x68] sm:$0xff]
        %v438 = vld [vmem:[%s319 + $0x70] sm:$0xff]
        %v439 = vld [vmem:[%s319 + $0x78] sm:$0xff]
        %v440 = vld [vmem:[%s319 + $0x80] sm:$0xff]
        %v441 = vld [vmem:[%s319 + $0x88] sm:$0xff]
        %v442 = vld [vmem:[%s319 + $0x90] sm:$0xff]
        %v443 = vld [vmem:[%s319 + $0x98] sm:$0xff]
        %v444 = vld [vmem:[%s319 + $0xa0] sm:$0xff]
        %v445 = vld [vmem:[%s319 + $0xa8] sm:$0xff]
        %v446 = vld [vmem:[%s319 + $0xb0] sm:$0xff]
        %v447 = vld [vmem:[%s319 + $0xb8] sm:$0xff]
        %v448 = vld [vmem:[%s319 + $0xc0] sm:$0xff]
        %v449 = vld [vmem:[%s319 + $0xc8] sm:$0xff]
        %v450 = vld [vmem:[%s319 + $0xd0] sm:$0xff]
        %v451 = vld [vmem:[%s319 + $0xd8] sm:$0xff]
        %v452 = vld [vmem:[%s319 + $0xe0] sm:$0xff]
        %v453 = vld [vmem:[%s319 + $0xe8] sm:$0xff]
        %v454 = vld [vmem:[%s319 + $0xf0] sm:$0xff]
        %v455 = vld [vmem:[%s319 + $0xf8] sm:$0xff]
        %v456 = vld [vmem:[%s319 + $0x100] sm:$0xff]
        %v457 = vld [vmem:[%s319 + $0x108] sm:$0xff]
        %v458 = vld [vmem:[%s319 + $0x110] sm:$0xff]
        %v459 = vld [vmem:[%s319 + $0x118] sm:$0xff]
        %v460 = vld [vmem:[%s319 + $0x120] sm:$0xff]
        %v461 = vld [vmem:[%s319 + $0x128] sm:$0xff]
        %v462 = vld [vmem:[%s319 + $0x130] sm:$0xff]
        %v463 = vld [vmem:[%s319 + $0x138] sm:$0xff]
        %v464 = vld [vmem:[%s319 + $0x140] sm:$0xff]
        %v465 = vld [vmem:[%s319 + $0x148] sm:$0xff]
        %v466 = vld [vmem:[%s319 + $0x150] sm:$0xff]
        %v467 = vld [vmem:[%s319 + $0x158] sm:$0xff]
        %v468 = vld [vmem:[%s319 + $0x160] sm:$0xff]
        %v469 = vld [vmem:[%s319 + $0x168] sm:$0xff]
        %v470 = vld [vmem:[%s319 + $0x170] sm:$0xff]
        %v471 = vld [vmem:[%s319 + $0x178] sm:$0xff]
        %v472 = vld [vmem:[%s319 + $0x180] sm:$0xff]
        %v473 = vld [vmem:[%s319 + $0x188] sm:$0xff]
        %v474 = vld [vmem:[%s319 + $0x190] sm:$0xff]
        %v475 = vld [vmem:[%s319 + $0x198] sm:$0xff]
        %v476 = vld [vmem:[%s319 + $0x1a0] sm:$0xff]
        %v477 = vld [vmem:[%s319 + $0x1a8] sm:$0xff]
        %v478 = vld [vmem:[%s319 + $0x1b0] sm:$0xff]
        %v479 = vld [vmem:[%s319 + $0x1b8] sm:$0xff]
        %v480 = vld [vmem:[%s319 + $0x1c0] sm:$0xff]
        %v481 = vld [vmem:[%s319 + $0x1c8] sm:$0xff]
        %v482 = vld [vmem:[%s319 + $0x1d0] sm:$0xff]
        %v483 = vld [vmem:[%s319 + $0x1d8] sm:$0xff]
        %v484 = vld [vmem:[%s319 + $0x1e0] sm:$0xff]
        %v485 = vld [vmem:[%s319 + $0x1e8] sm:$0xff]
        %v486 = vld [vmem:[%s319 + $0x1f0] sm:$0xff]
        %v487 = vld [vmem:[%s319 + $0x1f8] sm:$0xff]
        %v488 = vld [vmem:[%s319 + $0x200] sm:$0xff]
        %v489 = vld [vmem:[%s319 + $0x208] sm:$0xff]
        %v490 = vld [vmem:[%s319 + $0x210] sm:$0xff]
        %v491 = vld [vmem:[%s319 + $0x218] sm:$0xff]
        %v492 = vld [vmem:[%s319 + $0x220] sm:$0xff]
        %v493 = vld [vmem:[%s319 + $0x228] sm:$0xff]
        %v494 = vld [vmem:[%s319 + $0x230] sm:$0xff]
        %v495 = vld [vmem:[%s319 + $0x238] sm:$0xff]
        %v496 = vld [vmem:[%s319 + $0x240] sm:$0xff]
        %v497 = vld [vmem:[%s319 + $0x248] sm:$0xff]
        %v498 = vld [vmem:[%s319 + $0x250] sm:$0xff]
        %v499 = vld [vmem:[%s319 + $0x258] sm:$0xff]
        %v500 = vld [vmem:[%s319 + $0x260] sm:$0xff]
        %v501 = vld [vmem:[%s319 + $0x268] sm:$0xff]
        %v502 = vld [vmem:[%s319 + $0x270] sm:$0xff]
        %v503 = vld [vmem:[%s319 + $0x278] sm:$0xff]
        %v504 = vld [vmem:[%s319 + $0x280] sm:$0xff]
        %v505 = vld [vmem:[%s319 + $0x288] sm:$0xff]
        %v506 = vld [vmem:[%s319 + $0x290] sm:$0xff]
        %v507 = vld [vmem:[%s319 + $0x298] sm:$0xff]
        %v508 = vld [vmem:[%s319 + $0x2a0] sm:$0xff]
        %v509 = vld [vmem:[%s319 + $0x2a8] sm:$0xff]
        %v510 = vld [vmem:[%s319 + $0x2b0] sm:$0xff]
        %v511 = vld [vmem:[%s319 + $0x2b8] sm:$0xff]
        %v512 = vld [vmem:[%s319 + $0x2c0] sm:$0xff]
        %v513 = vld [vmem:[%s319 + $0x2c8] sm:$0xff]
        %v514 = vld [vmem:[%s319 + $0x2d0] sm:$0xff]
        %v515 = vld [vmem:[%s319 + $0x2d8] sm:$0xff]
        %v516 = vld [vmem:[%s319 + $0x2e0] sm:$0xff]
        %v517 = vld [vmem:[%s319 + $0x2e8] sm:$0xff]
        %v518 = vld [vmem:[%s319 + $0x2f0] sm:$0xff]
        %v519 = vld [vmem:[%s319 + $0x2f8] sm:$0xff]
        %v520 = vld [vmem:[%s319 + $0x300] sm:$0xff]
        %v521 = vld [vmem:[%s319 + $0x308] sm:$0xff]
        %v522 = vld [vmem:[%s319 + $0x310] sm:$0xff]
        %v523 = vld [vmem:[%s319 + $0x318] sm:$0xff]
        %v524 = vld [vmem:[%s319 + $0x320] sm:$0xff]
        %v525 = vld [vmem:[%s319 + $0x328] sm:$0xff]
        %v526 = vld [vmem:[%s319 + $0x330] sm:$0xff]
        %v527 = vld [vmem:[%s319 + $0x338] sm:$0xff]
        %v528 = vld [vmem:[%s319 + $0x340] sm:$0xff]
        %v529 = vld [vmem:[%s319 + $0x348] sm:$0xff]
        %v530 = vld [vmem:[%s319 + $0x350] sm:$0xff]
        %v531 = vld [vmem:[%s319 + $0x358] sm:$0xff]
        %v532 = vld [vmem:[%s319 + $0x360] sm:$0xff]
        %v533 = vld [vmem:[%s319 + $0x368] sm:$0xff]
        %v534 = vld [vmem:[%s319 + $0x370] sm:$0xff]
        %v535 = vld [vmem:[%s319 + $0x378] sm:$0xff]
        %v536 = vld [vmem:[%s319 + $0x380] sm:$0xff]
        %v537 = vld [vmem:[%s319 + $0x388] sm:$0xff]
        %v538 = vld [vmem:[%s319 + $0x390] sm:$0xff]
        %v539 = vld [vmem:[%s319 + $0x398] sm:$0xff]
        %v540 = vld [vmem:[%s319 + $0x3a0] sm:$0xff]
        %v541 = vld [vmem:[%s319 + $0x3a8] sm:$0xff]
        %v542 = vld [vmem:[%s319 + $0x3b0] sm:$0xff]
        %v543 = vld [vmem:[%s319 + $0x3b8] sm:$0xff]
        %v544 = vld [vmem:[%s319 + $0x3c0] sm:$0xff]
        %v545 = vld [vmem:[%s319 + $0x3c8] sm:$0xff]
        %v546 = vld [vmem:[%s319 + $0x3d0] sm:$0xff]
        %v547 = vld [vmem:[%s319 + $0x3d8] sm:$0xff]
        %v548 = vld [vmem:[%s319 + $0x3e0] sm:$0xff]
        %v549 = vld [vmem:[%s319 + $0x3e8] sm:$0xff]
        %v550 = vld [vmem:[%s319 + $0x3f0] sm:$0xff]
        %v551 = vld [vmem:[%s319 + $0x3f8] sm:$0xff]
        %v552 = vld [vmem:[%s319 + $0x400] sm:$0xff]
        %v553 = vld [vmem:[%s319 + $0x408] sm:$0xff]
        %v554 = vld [vmem:[%s319 + $0x410] sm:$0xff]
        %v555 = vld [vmem:[%s319 + $0x418] sm:$0xff]
        %v556 = vld [vmem:[%s319 + $0x420] sm:$0xff]
        %v557 = vld [vmem:[%s319 + $0x428] sm:$0xff]
        %v558 = vld [vmem:[%s319 + $0x430] sm:$0xff]
        %v559 = vld [vmem:[%s319 + $0x438] sm:$0xff]
        %v560 = vld [vmem:[%s319 + $0x440] sm:$0xff]
        %v561 = vld [vmem:[%s319 + $0x448] sm:$0xff]
        %v562 = vld [vmem:[%s319 + $0x450] sm:$0xff]
        %v563 = vld [vmem:[%s319 + $0x458] sm:$0xff]
        %v564 = vld [vmem:[%s319 + $0x460] sm:$0xff]
        %v565 = vld [vmem:[%s319 + $0x468] sm:$0xff]
        %v566 = vld [vmem:[%s319 + $0x470] sm:$0xff]
        %v567 = vld [vmem:[%s319 + $0x478] sm:$0xff]
        %v568 = vld [vmem:[%s319 + $0x480] sm:$0xff]
        %v569 = vld [vmem:[%s319 + $0x488] sm:$0xff]
        %v570 = vld [vmem:[%s319 + $0x490] sm:$0xff]
        %v571 = vld [vmem:[%s319 + $0x498] sm:$0xff]
        %v572 = vld [vmem:[%s319 + $0x4a0] sm:$0xff]
        %v573 = vld [vmem:[%s319 + $0x4a8] sm:$0xff]
        %v574 = vld [vmem:[%s319 + $0x4b0] sm:$0xff]
        %v575 = vld [vmem:[%s319 + $0x4b8] sm:$0xff]
        %v576 = vld [vmem:[%s319 + $0x4c0] sm:$0xff]
        %v577 = vld [vmem:[%s319 + $0x4c8] sm:$0xff]
        %v578 = vld [vmem:[%s319 + $0x4d0] sm:$0xff]
        %v579 = vld [vmem:[%s319 + $0x4d8] sm:$0xff]
        %v580 = vld [vmem:[%s319 + $0x4e0] sm:$0xff]
        %v581 = vld [vmem:[%s319 + $0x4e8] sm:$0xff]
        %v582 = vld [vmem:[%s319 + $0x4f0] sm:$0xff]
        %v583 = vld [vmem:[%s319 + $0x4f8] sm:$0xff]
        %v584 = vld [vmem:[%s319 + $0x500] sm:$0xff]
        %v585 = vld [vmem:[%s319 + $0x508] sm:$0xff]
        %v586 = vld [vmem:[%s319 + $0x510] sm:$0xff]
        %v587 = vld [vmem:[%s319 + $0x518] sm:$0xff]
        %v588 = vld [vmem:[%s319 + $0x520] sm:$0xff]
        %v589 = vld [vmem:[%s319 + $0x528] sm:$0xff]
        %v590 = vld [vmem:[%s319 + $0x530] sm:$0xff]
        %v591 = vld [vmem:[%s319 + $0x538] sm:$0xff]
        %v592 = vld [vmem:[%s319 + $0x540] sm:$0xff]
        %v593 = vld [vmem:[%s319 + $0x548] sm:$0xff]
        %v594 = vld [vmem:[%s319 + $0x550] sm:$0xff]
        %v595 = vld [vmem:[%s319 + $0x558] sm:$0xff]
        %v596 = vld [vmem:[%s319 + $0x560] sm:$0xff]
        %v597 = vld [vmem:[%s319 + $0x568] sm:$0xff]
        %v598 = vld [vmem:[%s319 + $0x570] sm:$0xff]
        %v599 = vld [vmem:[%s319 + $0x578] sm:$0xff]
        %v600 = vld [vmem:[%s319 + $0x580] sm:$0xff]
        %v601 = vld [vmem:[%s319 + $0x588] sm:$0xff]
        %v602 = vld [vmem:[%s319 + $0x590] sm:$0xff]
        %v603 = vld [vmem:[%s319 + $0x598] sm:$0xff]
        %v604 = vld [vmem:[%s319 + $0x5a0] sm:$0xff]
        %v605 = vld [vmem:[%s319 + $0x5a8] sm:$0xff]
        %v606 = vld [vmem:[%s319 + $0x5b0] sm:$0xff]
        %v607 = vld [vmem:[%s319 + $0x5b8] sm:$0xff]
        %v608 = vld [vmem:[%s319 + $0x5c0] sm:$0xff]
        %v609 = vld [vmem:[%s319 + $0x5c8] sm:$0xff]
        %v610 = vld [vmem:[%s319 + $0x5d0] sm:$0xff]
        %v611 = vld [vmem:[%s319 + $0x5d8] sm:$0xff]
        %v612 = vld [vmem:[%s319 + $0x5e0] sm:$0xff]
        %v613 = vld [vmem:[%s319 + $0x5e8] sm:$0xff]
        %v614 = vld [vmem:[%s319 + $0x5f0] sm:$0xff]
        %v615 = vld [vmem:[%s319 + $0x5f8] sm:$0xff]
        %v616 = vld [vmem:[%s319 + $0x600] sm:$0xff]
        %v617 = vld [vmem:[%s319 + $0x608] sm:$0xff]
        %v618 = vld [vmem:[%s319 + $0x610] sm:$0xff]
        %v619 = vld [vmem:[%s319 + $0x618] sm:$0xff]
        %v620 = vld [vmem:[%s319 + $0x620] sm:$0xff]
        %v621 = vld [vmem:[%s319 + $0x628] sm:$0xff]
        %v622 = vld [vmem:[%s319 + $0x630] sm:$0xff]
        %v623 = vld [vmem:[%s319 + $0x638] sm:$0xff]
        %v624 = vld [vmem:[%s319 + $0x640] sm:$0xff]
        %v625 = vld [vmem:[%s319 + $0x648] sm:$0xff]
        %v626 = vld [vmem:[%s319 + $0x650] sm:$0xff]
        %v627 = vld [vmem:[%s319 + $0x658] sm:$0xff]
        %v628 = vld [vmem:[%s319 + $0x660] sm:$0xff]
        %v629 = vld [vmem:[%s319 + $0x668] sm:$0xff]
        %v630 = vld [vmem:[%s319 + $0x670] sm:$0xff]
        %v631 = vld [vmem:[%s319 + $0x678] sm:$0xff]
        %v632 = vld [vmem:[%s319 + $0x680] sm:$0xff]
        %v633 = vld [vmem:[%s319 + $0x688] sm:$0xff]
        %v634 = vld [vmem:[%s319 + $0x690] sm:$0xff]
        %v635 = vld [vmem:[%s319 + $0x698] sm:$0xff]
        %v636 = vld [vmem:[%s319 + $0x6a0] sm:$0xff]
        %v637 = vld [vmem:[%s319 + $0x6a8] sm:$0xff]
        %v638 = vld [vmem:[%s319 + $0x6b0] sm:$0xff]
        %v639 = vld [vmem:[%s319 + $0x6b8] sm:$0xff]
        %v640 = vld [vmem:[%s319 + $0x6c0] sm:$0xff]
        %v641 = vld [vmem:[%s319 + $0x6c8] sm:$0xff]
        %v642 = vld [vmem:[%s319 + $0x6d0] sm:$0xff]
        %v643 = vld [vmem:[%s319 + $0x6d8] sm:$0xff]
        %v644 = vld [vmem:[%s319 + $0x6e0] sm:$0xff]
        %v645 = vld [vmem:[%s319 + $0x6e8] sm:$0xff]
        %v646 = vld [vmem:[%s319 + $0x6f0] sm:$0xff]
        %v647 = vld [vmem:[%s319 + $0x6f8] sm:$0xff]
        %v648 = vld [vmem:[%s319 + $0x700] sm:$0xff]
        %v649 = vld [vmem:[%s319 + $0x708] sm:$0xff]
        %v650 = vld [vmem:[%s319 + $0x710] sm:$0xff]
        %v651 = vld [vmem:[%s319 + $0x718] sm:$0xff]
        %v652 = vld [vmem:[%s319 + $0x720] sm:$0xff]
        %v653 = vld [vmem:[%s319 + $0x728] sm:$0xff]
        %v654 = vld [vmem:[%s319 + $0x730] sm:$0xff]
        %v655 = vld [vmem:[%s319 + $0x738] sm:$0xff]
        %v656 = vld [vmem:[%s319 + $0x740] sm:$0xff]
        %v657 = vld [vmem:[%s319 + $0x748] sm:$0xff]
        %v658 = vld [vmem:[%s319 + $0x750] sm:$0xff]
        %v659 = vld [vmem:[%s319 + $0x758] sm:$0xff]
        %v660 = vld [vmem:[%s319 + $0x760] sm:$0xff]
        %v661 = vld [vmem:[%s319 + $0x768] sm:$0xff]
        %v662 = vld [vmem:[%s319 + $0x770] sm:$0xff]
        %v663 = vld [vmem:[%s319 + $0x778] sm:$0xff]
        %v664 = vld [vmem:[%s319 + $0x780] sm:$0xff]
        %v665 = vld [vmem:[%s319 + $0x788] sm:$0xff]
        %v666 = vld [vmem:[%s319 + $0x790] sm:$0xff]
        %v667 = vld [vmem:[%s319 + $0x798] sm:$0xff]
        %v668 = vld [vmem:[%s319 + $0x7a0] sm:$0xff]
        %v669 = vld [vmem:[%s319 + $0x7a8] sm:$0xff]
        %v670 = vld [vmem:[%s319 + $0x7b0] sm:$0xff]
        %v671 = vld [vmem:[%s319 + $0x7b8] sm:$0xff]
        %v672 = vld [vmem:[%s319 + $0x7c0] sm:$0xff]
        %v673 = vld [vmem:[%s319 + $0x7c8] sm:$0xff]
        %v674 = vld [vmem:[%s319 + $0x7d0] sm:$0xff]
        %v675 = vld [vmem:[%s319 + $0x7d8] sm:$0xff]
        %v676 = vld [vmem:[%s319 + $0x7e0] sm:$0xff]
        %v677 = vld [vmem:[%s319 + $0x7e8] sm:$0xff]
        %v678 = vld [vmem:[%s319 + $0x7f0] sm:$0xff]
        %v679 = vld [vmem:[%s319 + $0x7f8] sm:$0xff]
        %v680 = vld [vmem:[%s319 + $0x800] sm:$0xff]
        %v681 = vld [vmem:[%s319 + $0x808] sm:$0xff]
        %v682 = vld [vmem:[%s319 + $0x810] sm:$0xff]
        %v683 = vld [vmem:[%s319 + $0x818] sm:$0xff]
        %v684 = vld [vmem:[%s319 + $0x820] sm:$0xff]
        %v685 = vld [vmem:[%s319 + $0x828] sm:$0xff]
        %v686 = vld [vmem:[%s319 + $0x830] sm:$0xff]
        %v687 = vld [vmem:[%s319 + $0x838] sm:$0xff]
        %v688 = vld [vmem:[%s319 + $0x840] sm:$0xff]
        %v689 = vld [vmem:[%s319 + $0x848] sm:$0xff]
        %v690 = vld [vmem:[%s319 + $0x850] sm:$0xff]
        %v691 = vld [vmem:[%s319 + $0x858] sm:$0xff]
        %v692 = vld [vmem:[%s319 + $0x860] sm:$0xff]
        %v693 = vld [vmem:[%s319 + $0x868] sm:$0xff]
        %v694 = vld [vmem:[%s319 + $0x870] sm:$0xff]
        %v695 = vld [vmem:[%s319 + $0x878] sm:$0xff]
        %v696 = vld [vmem:[%s319 + $0x880] sm:$0xff]
        %v697 = vld [vmem:[%s319 + $0x888] sm:$0xff]
        %v698 = vld [vmem:[%s319 + $0x890] sm:$0xff]
        %v699 = vld [vmem:[%s319 + $0x898] sm:$0xff]
        %v700 = vld [vmem:[%s319 + $0x8a0] sm:$0xff]
        %v701 = vld [vmem:[%s319 + $0x8a8] sm:$0xff]
        %v702 = vld [vmem:[%s319 + $0x8b0] sm:$0xff]
        %v703 = vld [vmem:[%s319 + $0x8b8] sm:$0xff]
        %v704 = vld [vmem:[%s319 + $0x8c0] sm:$0xff]
        %v705 = vld [vmem:[%s319 + $0x8c8] sm:$0xff]
        %v706 = vld [vmem:[%s319 + $0x8d0] sm:$0xff]
        %v707 = vld [vmem:[%s319 + $0x8d8] sm:$0xff]
        %v708 = vld [vmem:[%s319 + $0x8e0] sm:$0xff]
        %v709 = vld [vmem:[%s319 + $0x8e8] sm:$0xff]
        %v710 = vld [vmem:[%s319 + $0x8f0] sm:$0xff]
        %v711 = vld [vmem:[%s319 + $0x8f8] sm:$0xff]
        %v712 = vld [vmem:[%s319 + $0x900] sm:$0xff]
        %v713 = vld [vmem:[%s319 + $0x908] sm:$0xff]
        %v714 = vld [vmem:[%s319 + $0x910] sm:$0xff]
        %v715 = vld [vmem:[%s319 + $0x918] sm:$0xff]
        %v716 = vld [vmem:[%s319 + $0x920] sm:$0xff]
        %v717 = vld [vmem:[%s319 + $0x928] sm:$0xff]
        %v718 = vld [vmem:[%s319 + $0x930] sm:$0xff]
        %v719 = vld [vmem:[%s319 + $0x938] sm:$0xff]
        %v720 = vld [vmem:[%s319 + $0x940] sm:$0xff]
        %v721 = vld [vmem:[%s319 + $0x948] sm:$0xff]
        %v722 = vld [vmem:[%s319 + $0x950] sm:$0xff]
        %v723 = vld [vmem:[%s319 + $0x958] sm:$0xff]
        %v724 = vld [vmem:[%s319 + $0x960] sm:$0xff]
        %v725 = vld [vmem:[%s319 + $0x968] sm:$0xff]
        %v726 = vld [vmem:[%s319 + $0x970] sm:$0xff]
        %v727 = vld [vmem:[%s319 + $0x978] sm:$0xff]
        %v728 = vld [vmem:[%s319 + $0x980] sm:$0xff]
        %v729 = vld [vmem:[%s319 + $0x988] sm:$0xff]
        %v730 = vld [vmem:[%s319 + $0x990] sm:$0xff]
        %v731 = vld [vmem:[%s319 + $0x998] sm:$0xff]
        %v732 = vld [vmem:[%s319 + $0x9a0] sm:$0xff]
        %v733 = vld [vmem:[%s319 + $0x9a8] sm:$0xff]
        %v734 = vld [vmem:[%s319 + $0x9b0] sm:$0xff]
        %v735 = vld [vmem:[%s319 + $0x9b8] sm:$0xff]
        %v736 = vld [vmem:[%s319 + $0x9c0] sm:$0xff]
        %v737 = vld [vmem:[%s319 + $0x9c8] sm:$0xff]
        %v738 = vld [vmem:[%s319 + $0x9d0] sm:$0xff]
        %v739 = vld [vmem:[%s319 + $0x9d8] sm:$0xff]
        %v740 = vld [vmem:[%s319 + $0x9e0] sm:$0xff]
        %v741 = vld [vmem:[%s319 + $0x9e8] sm:$0xff]
        %v742 = vld [vmem:[%s319 + $0x9f0] sm:$0xff]
        %v743 = vld [vmem:[%s319 + $0x9f8] sm:$0xff]
        %v744 = vld [vmem:[%s319 + $0xa00] sm:$0xff]
        %v745 = vld [vmem:[%s319 + $0xa08] sm:$0xff]
        %v746 = vld [vmem:[%s319 + $0xa10] sm:$0xff]
        %v747 = vld [vmem:[%s319 + $0xa18] sm:$0xff]
        %v748 = vld [vmem:[%s319 + $0xa20] sm:$0xff]
        %v749 = vld [vmem:[%s319 + $0xa28] sm:$0xff]
        %v750 = vld [vmem:[%s319 + $0xa30] sm:$0xff]
        %v751 = vld [vmem:[%s319 + $0xa38] sm:$0xff]
        %v752 = vld [vmem:[%s319 + $0xa40] sm:$0xff]
        %v753 = vld [vmem:[%s319 + $0xa48] sm:$0xff]
        %v754 = vld [vmem:[%s319 + $0xa50] sm:$0xff]
        %v755 = vld [vmem:[%s319 + $0xa58] sm:$0xff]
        %v756 = vld [vmem:[%s319 + $0xa60] sm:$0xff]
        %v757 = vld [vmem:[%s319 + $0xa68] sm:$0xff]
        %v758 = vld [vmem:[%s319 + $0xa70] sm:$0xff]
        %v759 = vld [vmem:[%s319 + $0xa78] sm:$0xff]
        %v760 = vld [vmem:[%s319 + $0xa80] sm:$0xff]
        %v761 = vld [vmem:[%s319 + $0xa88] sm:$0xff]
        %v762 = vld [vmem:[%s319 + $0xa90] sm:$0xff]
        %v763 = vld [vmem:[%s319 + $0xa98] sm:$0xff]
        %v764 = vld [vmem:[%s319 + $0xaa0] sm:$0xff]
        %v765 = vld [vmem:[%s319 + $0xaa8] sm:$0xff]
        %v766 = vld [vmem:[%s319 + $0xab0] sm:$0xff]
        %v767 = vld [vmem:[%s319 + $0xab8] sm:$0xff]
        %v768 = vld [vmem:[%s319 + $0xac0] sm:$0xff]
        %v769 = vld [vmem:[%s319 + $0xac8] sm:$0xff]
        %v770 = vld [vmem:[%s319 + $0xad0] sm:$0xff]
        %v771 = vld [vmem:[%s319 + $0xad8] sm:$0xff]
        %v772 = vld [vmem:[%s319 + $0xae0] sm:$0xff]
        %v773 = vld [vmem:[%s319 + $0xae8] sm:$0xff]
        %v774 = vld [vmem:[%s319 + $0xaf0] sm:$0xff]
        %v775 = vld [vmem:[%s319 + $0xaf8] sm:$0xff]
        %v776 = vld [vmem:[%s319 + $0xb00] sm:$0xff]
        %v777 = vld [vmem:[%s319 + $0xb08] sm:$0xff]
        %v778 = vld [vmem:[%s319 + $0xb10] sm:$0xff]
        %v779 = vld [vmem:[%s319 + $0xb18] sm:$0xff]
        %v780 = vld [vmem:[%s319 + $0xb20] sm:$0xff]
        %v781 = vld [vmem:[%s319 + $0xb28] sm:$0xff]
        %v782 = vld [vmem:[%s319 + $0xb30] sm:$0xff]
        %v783 = vld [vmem:[%s319 + $0xb38] sm:$0xff]
        %v784 = vld [vmem:[%s319 + $0xb40] sm:$0xff]
        %v785 = vld [vmem:[%s319 + $0xb48] sm:$0xff]
        %v786 = vld [vmem:[%s319 + $0xb50] sm:$0xff]
        %v787 = vld [vmem:[%s319 + $0xb58] sm:$0xff]
        %v788 = vld [vmem:[%s319 + $0xb60] sm:$0xff]
        %v789 = vld [vmem:[%s319 + $0xb68] sm:$0xff]
        %v790 = vld [vmem:[%s319 + $0xb70] sm:$0xff]
        %v791 = vld [vmem:[%s319 + $0xb78] sm:$0xff]
        %v792 = vld [vmem:[%s319 + $0xb80] sm:$0xff]
        %v793 = vld [vmem:[%s319 + $0xb88] sm:$0xff]
        %v794 = vld [vmem:[%s319 + $0xb90] sm:$0xff]
        %v795 = vld [vmem:[%s319 + $0xb98] sm:$0xff]
        %v796 = vld [vmem:[%s319 + $0xba0] sm:$0xff]
        %v797 = vld [vmem:[%s319 + $0xba8] sm:$0xff]
        %v798 = vld [vmem:[%s319 + $0xbb0] sm:$0xff]
        %v799 = vld [vmem:[%s319 + $0xbb8] sm:$0xff]
        %v800 = vld [vmem:[%s319 + $0xbc0] sm:$0xff]
        %v801 = vld [vmem:[%s319 + $0xbc8] sm:$0xff]
        %v802 = vld [vmem:[%s319 + $0xbd0] sm:$0xff]
        %v803 = vld [vmem:[%s319 + $0xbd8] sm:$0xff]
        %v804 = vld [vmem:[%s319 + $0xbe0] sm:$0xff]
        %v805 = vld [vmem:[%s319 + $0xbe8] sm:$0xff]
        %v806 = vld [vmem:[%s319 + $0xbf0] sm:$0xff]
        %v807 = vld [vmem:[%s319 + $0xbf8] sm:$0xff]
        %v808 = vld [vmem:[%s319 + $0xc00] sm:$0xff]
        %v809 = vld [vmem:[%s319 + $0xc08] sm:$0xff]
        %v810 = vld [vmem:[%s319 + $0xc10] sm:$0xff]
        %v811 = vld [vmem:[%s319 + $0xc18] sm:$0xff]
        %v812 = vld [vmem:[%s319 + $0xc20] sm:$0xff]
        %v813 = vld [vmem:[%s319 + $0xc28] sm:$0xff]
        %v814 = vld [vmem:[%s319 + $0xc30] sm:$0xff]
        %v815 = vld [vmem:[%s319 + $0xc38] sm:$0xff]
        %v816 = vld [vmem:[%s319 + $0xc40] sm:$0xff]
        %v817 = vld [vmem:[%s319 + $0xc48] sm:$0xff]
        %v818 = vld [vmem:[%s319 + $0xc50] sm:$0xff]
        %v819 = vld [vmem:[%s319 + $0xc58] sm:$0xff]
        %v820 = vld [vmem:[%s319 + $0xc60] sm:$0xff]
        %v821 = vld [vmem:[%s319 + $0xc68] sm:$0xff]
        %v822 = vld [vmem:[%s319 + $0xc70] sm:$0xff]
        %v823 = vld [vmem:[%s319 + $0xc78] sm:$0xff]
        %v824 = vld [vmem:[%s319 + $0xc80] sm:$0xff]
        %v825 = vld [vmem:[%s319 + $0xc88] sm:$0xff]
        %v826 = vld [vmem:[%s319 + $0xc90] sm:$0xff]
        %v827 = vld [vmem:[%s319 + $0xc98] sm:$0xff]
        %v828 = vld [vmem:[%s319 + $0xca0] sm:$0xff]
        %v829 = vld [vmem:[%s319 + $0xca8] sm:$0xff]
        %v830 = vld [vmem:[%s319 + $0xcb0] sm:$0xff]
        %v831 = vld [vmem:[%s319 + $0xcb8] sm:$0xff]
        %v832 = vld [vmem:[%s319 + $0xcc0] sm:$0xff]
        %v833 = vld [vmem:[%s319 + $0xcc8] sm:$0xff]
        %v834 = vld [vmem:[%s319 + $0xcd0] sm:$0xff]
        %v835 = vld [vmem:[%s319 + $0xcd8] sm:$0xff]
        %v836 = vld [vmem:[%s319 + $0xce0] sm:$0xff]
        %v837 = vld [vmem:[%s319 + $0xce8] sm:$0xff]
        %v838 = vld [vmem:[%s319 + $0xcf0] sm:$0xff]
        %v839 = vld [vmem:[%s319 + $0xcf8] sm:$0xff]
        %v840 = vld [vmem:[%s319 + $0xd00] sm:$0xff]
        %v841 = vld [vmem:[%s319 + $0xd08] sm:$0xff]
        %v842 = vld [vmem:[%s319 + $0xd10] sm:$0xff]
        %v843 = vld [vmem:[%s319 + $0xd18] sm:$0xff]
        %v844 = vld [vmem:[%s319 + $0xd20] sm:$0xff]
        %v845 = vld [vmem:[%s319 + $0xd28] sm:$0xff]
        %v846 = vld [vmem:[%s319 + $0xd30] sm:$0xff]
        %v847 = vld [vmem:[%s319 + $0xd38] sm:$0xff]
        %v848 = vld [vmem:[%s319 + $0xd40] sm:$0xff]
        %v849 = vld [vmem:[%s319 + $0xd48] sm:$0xff]
        %v850 = vld [vmem:[%s319 + $0xd50] sm:$0xff]
        %v851 = vld [vmem:[%s319 + $0xd58] sm:$0xff]
        %v852 = vld [vmem:[%s319 + $0xd60] sm:$0xff]
        %v853 = vld [vmem:[%s319 + $0xd68] sm:$0xff]
        %v854 = vld [vmem:[%s319 + $0xd70] sm:$0xff]
        %v855 = vld [vmem:[%s319 + $0xd78] sm:$0xff]
        %v856 = vld [vmem:[%s319 + $0xd80] sm:$0xff]
        %v857 = vld [vmem:[%s319 + $0xd88] sm:$0xff]
        %v858 = vld [vmem:[%s319 + $0xd90] sm:$0xff]
        %v859 = vld [vmem:[%s319 + $0xd98] sm:$0xff]
        %v860 = vld [vmem:[%s319 + $0xda0] sm:$0xff]
        %v861 = vld [vmem:[%s319 + $0xda8] sm:$0xff]
        %v862 = vld [vmem:[%s319 + $0xdb0] sm:$0xff]
        %v863 = vld [vmem:[%s319 + $0xdb8] sm:$0xff]
        %v864 = vld [vmem:[%s319 + $0xdc0] sm:$0xff]
        %v865 = vld [vmem:[%s319 + $0xdc8] sm:$0xff]
        %v866 = vld [vmem:[%s319 + $0xdd0] sm:$0xff]
        %v867 = vld [vmem:[%s319 + $0xdd8] sm:$0xff]
        %v868 = vld [vmem:[%s319 + $0xde0] sm:$0xff]
        %v869 = vld [vmem:[%s319 + $0xde8] sm:$0xff]
        %v870 = vld [vmem:[%s319 + $0xdf0] sm:$0xff]
        %v871 = vld [vmem:[%s319 + $0xdf8] sm:$0xff]
        %v872 = vld [vmem:[%s319 + $0xe00] sm:$0xff]
        %v873 = vld [vmem:[%s319 + $0xe08] sm:$0xff]
        %v874 = vld [vmem:[%s319 + $0xe10] sm:$0xff]
        %v875 = vld [vmem:[%s319 + $0xe18] sm:$0xff]
        %v876 = vld [vmem:[%s319 + $0xe20] sm:$0xff]
        %v877 = vld [vmem:[%s319 + $0xe28] sm:$0xff]
        %v878 = vld [vmem:[%s319 + $0xe30] sm:$0xff]
        %v879 = vld [vmem:[%s319 + $0xe38] sm:$0xff]
        %v880 = vld [vmem:[%s319 + $0xe40] sm:$0xff]
        %v881 = vld [vmem:[%s319 + $0xe48] sm:$0xff]
        %v882 = vld [vmem:[%s319 + $0xe50] sm:$0xff]
        %v883 = vld [vmem:[%s319 + $0xe58] sm:$0xff]
        %v884 = vld [vmem:[%s319 + $0xe60] sm:$0xff]
        %v885 = vld [vmem:[%s319 + $0xe68] sm:$0xff]
        %v886 = vld [vmem:[%s319 + $0xe70] sm:$0xff]
        %v887 = vld [vmem:[%s319 + $0xe78] sm:$0xff]
        %v888 = vld [vmem:[%s319 + $0xe80] sm:$0xff]
        %v889 = vld [vmem:[%s319 + $0xe88] sm:$0xff]
        %v890 = vld [vmem:[%s319 + $0xe90] sm:$0xff]
        %v891 = vld [vmem:[%s319 + $0xe98] sm:$0xff]
        %v892 = vld [vmem:[%s319 + $0xea0] sm:$0xff]
        %v893 = vld [vmem:[%s319 + $0xea8] sm:$0xff]
        %v894 = vld [vmem:[%s319 + $0xeb0] sm:$0xff]
        %v895 = vld [vmem:[%s319 + $0xeb8] sm:$0xff]
        %v896 = vld [vmem:[%s319 + $0xec0] sm:$0xff]
        %v897 = vld [vmem:[%s319 + $0xec8] sm:$0xff]
        %v898 = vld [vmem:[%s319 + $0xed0] sm:$0xff]
        %v899 = vld [vmem:[%s319 + $0xed8] sm:$0xff]
        %v900 = vld [vmem:[%s319 + $0xee0] sm:$0xff]
        %v901 = vld [vmem:[%s319 + $0xee8] sm:$0xff]
        %v902 = vld [vmem:[%s319 + $0xef0] sm:$0xff]
        %v903 = vld [vmem:[%s319 + $0xef8] sm:$0xff]
        %v904 = vld [vmem:[%s319 + $0xf00] sm:$0xff]
        %v905 = vld [vmem:[%s319 + $0xf08] sm:$0xff]
        %v906 = vld [vmem:[%s319 + $0xf10] sm:$0xff]
        %v907 = vld [vmem:[%s319 + $0xf18] sm:$0xff]
        %v908 = vld [vmem:[%s319 + $0xf20] sm:$0xff]
        %v909 = vld [vmem:[%s319 + $0xf28] sm:$0xff]
        %v910 = vld [vmem:[%s319 + $0xf30] sm:$0xff]
        %v911 = vld [vmem:[%s319 + $0xf38] sm:$0xff]
        %v912 = vld [vmem:[%s319 + $0xf40] sm:$0xff]
        %v913 = vld [vmem:[%s319 + $0xf48] sm:$0xff]
        %v914 = vld [vmem:[%s319 + $0xf50] sm:$0xff]
        %v915 = vld [vmem:[%s319 + $0xf58] sm:$0xff]
        %v916 = vld [vmem:[%s319 + $0xf60] sm:$0xff]
        %v917 = vld [vmem:[%s319 + $0xf68] sm:$0xff]
        %v918 = vld [vmem:[%s319 + $0xf70] sm:$0xff]
        %v919 = vld [vmem:[%s319 + $0xf78] sm:$0xff]
        %v920 = vld [vmem:[%s319 + $0xf80] sm:$0xff]
        %v921 = vld [vmem:[%s319 + $0xf88] sm:$0xff]
        %v922 = vld [vmem:[%s319 + $0xf90] sm:$0xff]
        %v923 = vld [vmem:[%s319 + $0xf98] sm:$0xff]
        %v924 = vld [vmem:[%s319 + $0xfa0] sm:$0xff]
        %v925 = vld [vmem:[%s319 + $0xfa8] sm:$0xff]
        %v926 = vld [vmem:[%s319 + $0xfb0] sm:$0xff]
        %v927 = vld [vmem:[%s319 + $0xfb8] sm:$0xff]
        %v928 = vld [vmem:[%s319 + $0xfc0] sm:$0xff]
        %v929 = vld [vmem:[%s319 + $0xfc8] sm:$0xff]
        %v930 = vld [vmem:[%s319 + $0xfd0] sm:$0xff]
        %v931 = vld [vmem:[%s319 + $0xfd8] sm:$0xff]
        %v932 = vld [vmem:[%s319 + $0xfe0] sm:$0xff]
        %v933 = vld [vmem:[%s319 + $0xfe8] sm:$0xff]
        %v934 = vld [vmem:[%s319 + $0xff0] sm:$0xff]
        %v935 = vld [vmem:[%s319 + $0xff8] sm:$0xff]
        %v936 = vld [vmem:[%s319 + $0x1000] sm:$0xff]
        %v937 = vld [vmem:[%s319 + $0x1008] sm:$0xff]
        %v938 = vld [vmem:[%s319 + $0x1010] sm:$0xff]
        %v939 = vld [vmem:[%s319 + $0x1018] sm:$0xff]
        %v940 = vld [vmem:[%s319 + $0x1020] sm:$0xff]
        %v941 = vld [vmem:[%s319 + $0x1028] sm:$0xff]
        %v942 = vld [vmem:[%s319 + $0x1030] sm:$0xff]
        %v943 = vld [vmem:[%s319 + $0x1038] sm:$0xff]
        %v944 = vld [vmem:[%s319 + $0x1040] sm:$0xff]
        %v945 = vld [vmem:[%s319 + $0x1048] sm:$0xff]
        %v946 = vld [vmem:[%s319 + $0x1050] sm:$0xff]
        %v947 = vld [vmem:[%s319 + $0x1058] sm:$0xff]
        %v948 = vld [vmem:[%s319 + $0x1060] sm:$0xff]
        %v949 = vld [vmem:[%s319 + $0x1068] sm:$0xff]
        %v950 = vld [vmem:[%s319 + $0x1070] sm:$0xff]
        %v951 = vld [vmem:[%s319 + $0x1078] sm:$0xff]
        %v952 = vld [vmem:[%s319 + $0x1080] sm:$0xff]
        %v953 = vld [vmem:[%s319 + $0x1088] sm:$0xff]
        %v954 = vld [vmem:[%s319 + $0x1090] sm:$0xff]
        %v955 = vld [vmem:[%s319 + $0x1098] sm:$0xff]
        %v956 = vld [vmem:[%s319 + $0x10a0] sm:$0xff]
        %v957 = vld [vmem:[%s319 + $0x10a8] sm:$0xff]
        %v958 = vld [vmem:[%s319 + $0x10b0] sm:$0xff]
        %v959 = vld [vmem:[%s319 + $0x10b8] sm:$0xff]
        %v960 = vld [vmem:[%s319 + $0x10c0] sm:$0xff]
        %v961 = vld [vmem:[%s319 + $0x10c8] sm:$0xff]
        %v962 = vld [vmem:[%s319 + $0x10d0] sm:$0xff]
        %v963 = vld [vmem:[%s319 + $0x10d8] sm:$0xff]
        %v964 = vld [vmem:[%s319 + $0x10e0] sm:$0xff]
        %v965 = vld [vmem:[%s319 + $0x10e8] sm:$0xff]
        %v966 = vld [vmem:[%s319 + $0x10f0] sm:$0xff]
        %v967 = vld [vmem:[%s319 + $0x10f8] sm:$0xff]
        %v968 = vld [vmem:[%s319 + $0x1100] sm:$0xff]
        %v969 = vld [vmem:[%s319 + $0x1108] sm:$0xff]
        %v970 = vld [vmem:[%s319 + $0x1110] sm:$0xff]
        %v971 = vld [vmem:[%s319 + $0x1118] sm:$0xff]
        %v972 = vld [vmem:[%s319 + $0x1120] sm:$0xff]
        %v973 = vld [vmem:[%s319 + $0x1128] sm:$0xff]
        %v974 = vld [vmem:[%s319 + $0x1130] sm:$0xff]
        %v975 = vld [vmem:[%s319 + $0x1138] sm:$0xff]
        %v976 = vld [vmem:[%s319 + $0x1140] sm:$0xff]
        %v977 = vld [vmem:[%s319 + $0x1148] sm:$0xff]
        %v978 = vld [vmem:[%s319 + $0x1150] sm:$0xff]
        %v979 = vld [vmem:[%s319 + $0x1158] sm:$0xff]
        %v980 = vld [vmem:[%s319 + $0x1160] sm:$0xff]
        %v981 = vld [vmem:[%s319 + $0x1168] sm:$0xff]
        %v982 = vld [vmem:[%s319 + $0x1170] sm:$0xff]
        %v983 = vld [vmem:[%s319 + $0x1178] sm:$0xff]
        %v984 = vld [vmem:[%s319 + $0x1180] sm:$0xff]
        %v985 = vld [vmem:[%s319 + $0x1188] sm:$0xff]
        %v986 = vld [vmem:[%s319 + $0x1190] sm:$0xff]
        %v987 = vld [vmem:[%s319 + $0x1198] sm:$0xff]
        %v988 = vld [vmem:[%s319 + $0x11a0] sm:$0xff]
        %v989 = vld [vmem:[%s319 + $0x11a8] sm:$0xff]
        %v990 = vld [vmem:[%s319 + $0x11b0] sm:$0xff]
        %v991 = vld [vmem:[%s319 + $0x11b8] sm:$0xff]
        %v992 = vld [vmem:[%s319 + $0x11c0] sm:$0xff]
        %v993 = vld [vmem:[%s319 + $0x11c8] sm:$0xff]
        %v994 = vld [vmem:[%s319 + $0x11d0] sm:$0xff]
        %v995 = vld [vmem:[%s319 + $0x11d8] sm:$0xff]
        %v996 = vld [vmem:[%s319 + $0x11e0] sm:$0xff]
        %v997 = vld [vmem:[%s319 + $0x11e8] sm:$0xff]
        %v998 = vld [vmem:[%s319 + $0x11f0] sm:$0xff]
        %v999 = vld [vmem:[%s319 + $0x11f8] sm:$0xff]
        %v1000 = vld [vmem:[%s319 + $0x1200] sm:$0xff]
        %v1001 = vld [vmem:[%s319 + $0x1208] sm:$0xff]
        %v1002 = vld [vmem:[%s319 + $0x1210] sm:$0xff]
        %v1003 = vld [vmem:[%s319 + $0x1218] sm:$0xff]
        %v1004 = vld [vmem:[%s319 + $0x1220] sm:$0xff]
        %v1005 = vld [vmem:[%s319 + $0x1228] sm:$0xff]
        %v1006 = vld [vmem:[%s319 + $0x1230] sm:$0xff]
        %v1007 = vld [vmem:[%s319 + $0x1238] sm:$0xff]
        %v1008 = vld [vmem:[%s319 + $0x1240] sm:$0xff]
        %v1009 = vld [vmem:[%s319 + $0x1248] sm:$0xff]
        %v1010 = vld [vmem:[%s319 + $0x1250] sm:$0xff]
        %v1011 = vld [vmem:[%s319 + $0x1258] sm:$0xff]
        %v1012 = vld [vmem:[%s319 + $0x1260] sm:$0xff]
        %v1013 = vld [vmem:[%s319 + $0x1268] sm:$0xff]
        %v1014 = vld [vmem:[%s319 + $0x1270] sm:$0xff]
        %v1015 = vld [vmem:[%s319 + $0x1278] sm:$0xff]
        %v1016 = vld [vmem:[%s319 + $0x1280] sm:$0xff]
        %v1017 = vld [vmem:[%s319 + $0x1288] sm:$0xff]
        %v1018 = vld [vmem:[%s319 + $0x1290] sm:$0xff]
        %v1019 = vld [vmem:[%s319 + $0x1298] sm:$0xff]
        %v1020 = vld [vmem:[%s319 + $0x12a0] sm:$0xff]
        %v1021 = vld [vmem:[%s319 + $0x12a8] sm:$0xff]
        %v1022 = vld [vmem:[%s319 + $0x12b0] sm:$0xff]
        %v1023 = vld [vmem:[%s319 + $0x12b8] sm:$0xff]
        %v1024 = vld [vmem:[%s319 + $0x12c0] sm:$0xff]
        %v1025 = vld [vmem:[%s319 + $0x12c8] sm:$0xff]
        %v1026 = vld [vmem:[%s319 + $0x12d0] sm:$0xff]
        %v1027 = vld [vmem:[%s319 + $0x12d8] sm:$0xff]
        %v1028 = vld [vmem:[%s319 + $0x12e0] sm:$0xff]
        %v1029 = vld [vmem:[%s319 + $0x12e8] sm:$0xff]
        %v1030 = vld [vmem:[%s319 + $0x12f0] sm:$0xff]
        %v1031 = vld [vmem:[%s319 + $0x12f8] sm:$0xff]
        %v1032 = vld [vmem:[%s319 + $0x1300] sm:$0xff]
        %v1033 = vld [vmem:[%s319 + $0x1308] sm:$0xff]
        %v1034 = vld [vmem:[%s319 + $0x1310] sm:$0xff]
        %v1035 = vld [vmem:[%s319 + $0x1318] sm:$0xff]
        %v1036 = vld [vmem:[%s319 + $0x1320] sm:$0xff]
        %v1037 = vld [vmem:[%s319 + $0x1328] sm:$0xff]
        %v1038 = vld [vmem:[%s319 + $0x1330] sm:$0xff]
        %v1039 = vld [vmem:[%s319 + $0x1338] sm:$0xff]
        %v1040 = vld [vmem:[%s319 + $0x1340] sm:$0xff]
        %v1041 = vld [vmem:[%s319 + $0x1348] sm:$0xff]
        %v1042 = vld [vmem:[%s319 + $0x1350] sm:$0xff]
        %v1043 = vld [vmem:[%s319 + $0x1358] sm:$0xff]
        %v1044 = vld [vmem:[%s319 + $0x1360] sm:$0xff]
        %v1045 = vld [vmem:[%s319 + $0x1368] sm:$0xff]
        %v1046 = vld [vmem:[%s319 + $0x1370] sm:$0xff]
        %v1047 = vld [vmem:[%s319 + $0x1378] sm:$0xff]
        %v1048 = vld [vmem:[%s319 + $0x1380] sm:$0xff]
        %v1049 = vld [vmem:[%s319 + $0x1388] sm:$0xff]
        %v1050 = vld [vmem:[%s319 + $0x1390] sm:$0xff]
        %v1051 = vld [vmem:[%s319 + $0x1398] sm:$0xff]
        %v1052 = vld [vmem:[%s319 + $0x13a0] sm:$0xff]
        %v1053 = vld [vmem:[%s319 + $0x13a8] sm:$0xff]
        %v1054 = vld [vmem:[%s319 + $0x13b0] sm:$0xff]
        %v1055 = vld [vmem:[%s319 + $0x13b8] sm:$0xff]
        %v1056 = vld [vmem:[%s319 + $0x13c0] sm:$0xff]
        %v1057 = vld [vmem:[%s319 + $0x13c8] sm:$0xff]
        %v1058 = vld [vmem:[%s319 + $0x13d0] sm:$0xff]
        %v1059 = vld [vmem:[%s319 + $0x13d8] sm:$0xff]
        %v1060 = vld [vmem:[%s319 + $0x13e0] sm:$0xff]
        %v1061 = vld [vmem:[%s319 + $0x13e8] sm:$0xff]
        %v1062 = vld [vmem:[%s319 + $0x13f0] sm:$0xff]
        %v1063 = vld [vmem:[%s319 + $0x13f8] sm:$0xff]
        %v1064 = vld [vmem:[%s319 + $0x1400] sm:$0xff]
        %v1065 = vld [vmem:[%s319 + $0x1408] sm:$0xff]
        %v1066 = vld [vmem:[%s319 + $0x1410] sm:$0xff]
        %v1067 = vld [vmem:[%s319 + $0x1418] sm:$0xff]
        %v1068 = vld [vmem:[%s319 + $0x1420] sm:$0xff]
        %v1069 = vld [vmem:[%s319 + $0x1428] sm:$0xff]
        %v1070 = vld [vmem:[%s319 + $0x1430] sm:$0xff]
        %v1071 = vld [vmem:[%s319 + $0x1438] sm:$0xff]
        %v1072 = vld [vmem:[%s319 + $0x1440] sm:$0xff]
        %v1073 = vld [vmem:[%s319 + $0x1448] sm:$0xff]
        %v1074 = vld [vmem:[%s319 + $0x1450] sm:$0xff]
        %v1075 = vld [vmem:[%s319 + $0x1458] sm:$0xff]
        %v1076 = vld [vmem:[%s319 + $0x1460] sm:$0xff]
        %v1077 = vld [vmem:[%s319 + $0x1468] sm:$0xff]
        %v1078 = vld [vmem:[%s319 + $0x1470] sm:$0xff]
        %v1079 = vld [vmem:[%s319 + $0x1478] sm:$0xff]
        %v1080 = vld [vmem:[%s319 + $0x1480] sm:$0xff]
        %v1081 = vld [vmem:[%s319 + $0x1488] sm:$0xff]
        %v1082 = vld [vmem:[%s319 + $0x1490] sm:$0xff]
        %v1083 = vld [vmem:[%s319 + $0x1498] sm:$0xff]
        %v1084 = vld [vmem:[%s319 + $0x14a0] sm:$0xff]
        %v1085 = vld [vmem:[%s319 + $0x14a8] sm:$0xff]
        %v1086 = vld [vmem:[%s319 + $0x14b0] sm:$0xff]
        %v1087 = vld [vmem:[%s319 + $0x14b8] sm:$0xff]
        %v1088 = vld [vmem:[%s319 + $0x14c0] sm:$0xff]
        %v1089 = vld [vmem:[%s319 + $0x14c8] sm:$0xff]
        %v1090 = vld [vmem:[%s319 + $0x14d0] sm:$0xff]
        %v1091 = vld [vmem:[%s319 + $0x14d8] sm:$0xff]
        %v1092 = vld [vmem:[%s319 + $0x14e0] sm:$0xff]
        %v1093 = vld [vmem:[%s319 + $0x14e8] sm:$0xff]
        %v1094 = vld [vmem:[%s319 + $0x14f0] sm:$0xff]
        %v1095 = vld [vmem:[%s319 + $0x14f8] sm:$0xff]
        %v1096 = vld [vmem:[%s319 + $0x1500] sm:$0xff]
        %v1097 = vld [vmem:[%s319 + $0x1508] sm:$0xff]
        %v1098 = vld [vmem:[%s319 + $0x1510] sm:$0xff]
        %v1099 = vld [vmem:[%s319 + $0x1518] sm:$0xff]
        %v1100 = vld [vmem:[%s319 + $0x1520] sm:$0xff]
        %v1101 = vld [vmem:[%s319 + $0x1528] sm:$0xff]
        %v1102 = vld [vmem:[%s319 + $0x1530] sm:$0xff]
        %v1103 = vld [vmem:[%s319 + $0x1538] sm:$0xff]
        %v1104 = vld [vmem:[%s319 + $0x1540] sm:$0xff]
        %v1105 = vld [vmem:[%s319 + $0x1548] sm:$0xff]
        %v1106 = vld [vmem:[%s319 + $0x1550] sm:$0xff]
        %v1107 = vld [vmem:[%s319 + $0x1558] sm:$0xff]
        %v1108 = vld [vmem:[%s319 + $0x1560] sm:$0xff]
        %v1109 = vld [vmem:[%s319 + $0x1568] sm:$0xff]
        %v1110 = vld [vmem:[%s319 + $0x1570] sm:$0xff]
        %v1111 = vld [vmem:[%s319 + $0x1578] sm:$0xff]
        %v1112 = vld [vmem:[%s319 + $0x1580] sm:$0xff]
        %v1113 = vld [vmem:[%s319 + $0x1588] sm:$0xff]
        %v1114 = vld [vmem:[%s319 + $0x1590] sm:$0xff]
        %v1115 = vld [vmem:[%s319 + $0x1598] sm:$0xff]
        %v1116 = vld [vmem:[%s319 + $0x15a0] sm:$0xff]
        %v1117 = vld [vmem:[%s319 + $0x15a8] sm:$0xff]
        %v1118 = vld [vmem:[%s319 + $0x15b0] sm:$0xff]
        %v1119 = vld [vmem:[%s319 + $0x15b8] sm:$0xff]
        %v1120 = vld [vmem:[%s319 + $0x15c0] sm:$0xff]
        %v1121 = vld [vmem:[%s319 + $0x15c8] sm:$0xff]
        %v1122 = vld [vmem:[%s319 + $0x15d0] sm:$0xff]
        %v1123 = vld [vmem:[%s319 + $0x15d8] sm:$0xff]
        %v1124 = vld [vmem:[%s319 + $0x15e0] sm:$0xff]
        %v1125 = vld [vmem:[%s319 + $0x15e8] sm:$0xff]
        %v1126 = vld [vmem:[%s319 + $0x15f0] sm:$0xff]
        %v1127 = vld [vmem:[%s319 + $0x15f8] sm:$0xff]
        %v1128 = vld [vmem:[%s319 + $0x1600] sm:$0xff]
        %v1129 = vld [vmem:[%s319 + $0x1608] sm:$0xff]
        %v1130 = vld [vmem:[%s319 + $0x1610] sm:$0xff]
        %v1131 = vld [vmem:[%s319 + $0x1618] sm:$0xff]
        %v1132 = vld [vmem:[%s319 + $0x1620] sm:$0xff]
        %v1133 = vld [vmem:[%s319 + $0x1628] sm:$0xff]
        %v1134 = vld [vmem:[%s319 + $0x1630] sm:$0xff]
        %v1135 = vld [vmem:[%s319 + $0x1638] sm:$0xff]
        %v1136 = vld [vmem:[%s319 + $0x1640] sm:$0xff]
        %v1137 = vld [vmem:[%s319 + $0x1648] sm:$0xff]
        %v1138 = vld [vmem:[%s319 + $0x1650] sm:$0xff]
        %v1139 = vld [vmem:[%s319 + $0x1658] sm:$0xff]
        %v1140 = vld [vmem:[%s319 + $0x1660] sm:$0xff]
        %v1141 = vld [vmem:[%s319 + $0x1668] sm:$0xff]
        %v1142 = vld [vmem:[%s319 + $0x1670] sm:$0xff]
        %v1143 = vld [vmem:[%s319 + $0x1678] sm:$0xff]
        %v1144 = vld [vmem:[%s319 + $0x1680] sm:$0xff]
        %v1145 = vld [vmem:[%s319 + $0x1688] sm:$0xff]
        %v1146 = vld [vmem:[%s319 + $0x1690] sm:$0xff]
        %v1147 = vld [vmem:[%s319 + $0x1698] sm:$0xff]
        %v1148 = vld [vmem:[%s319 + $0x16a0] sm:$0xff]
        %v1149 = vld [vmem:[%s319 + $0x16a8] sm:$0xff]
        %v1150 = vld [vmem:[%s319 + $0x16b0] sm:$0xff]
        %v1151 = vld [vmem:[%s319 + $0x16b8] sm:$0xff]
        %v1152 = vld [vmem:[%s319 + $0x16c0] sm:$0xff]
        %v1153 = vld [vmem:[%s319 + $0x16c8] sm:$0xff]
        %v1154 = vld [vmem:[%s319 + $0x16d0] sm:$0xff]
        %v1155 = vld [vmem:[%s319 + $0x16d8] sm:$0xff]
        %v1156 = vld [vmem:[%s319 + $0x16e0] sm:$0xff]
        %v1157 = vld [vmem:[%s319 + $0x16e8] sm:$0xff]
        %v1158 = vld [vmem:[%s319 + $0x16f0] sm:$0xff]
        %v1159 = vld [vmem:[%s319 + $0x16f8] sm:$0xff]
        %v1160 = vld [vmem:[%s319 + $0x1700] sm:$0xff]
        %v1161 = vld [vmem:[%s319 + $0x1708] sm:$0xff]
        %v1162 = vld [vmem:[%s319 + $0x1710] sm:$0xff]
        %v1163 = vld [vmem:[%s319 + $0x1718] sm:$0xff]
        %v1164 = vld [vmem:[%s319 + $0x1720] sm:$0xff]
        %v1165 = vld [vmem:[%s319 + $0x1728] sm:$0xff]
        %v1166 = vld [vmem:[%s319 + $0x1730] sm:$0xff]
        %v1167 = vld [vmem:[%s319 + $0x1738] sm:$0xff]
        %v1168 = vld [vmem:[%s319 + $0x1740] sm:$0xff]
        %v1169 = vld [vmem:[%s319 + $0x1748] sm:$0xff]
        %v1170 = vld [vmem:[%s319 + $0x1750] sm:$0xff]
        %v1171 = vld [vmem:[%s319 + $0x1758] sm:$0xff]
        %v1172 = vld [vmem:[%s319 + $0x1760] sm:$0xff]
        %v1173 = vld [vmem:[%s319 + $0x1768] sm:$0xff]
        %v1174 = vld [vmem:[%s319 + $0x1770] sm:$0xff]
        %v1175 = vld [vmem:[%s319 + $0x1778] sm:$0xff]
        %v1176 = vld [vmem:[%s319 + $0x1780] sm:$0xff]
        %v1177 = vld [vmem:[%s319 + $0x1788] sm:$0xff]
        %v1178 = vld [vmem:[%s319 + $0x1790] sm:$0xff]
        %v1179 = vld [vmem:[%s319 + $0x1798] sm:$0xff]
        %v1180 = vld [vmem:[%s319 + $0x17a0] sm:$0xff]
        %v1181 = vld [vmem:[%s319 + $0x17a8] sm:$0xff]
        %v1182 = vld [vmem:[%s319 + $0x17b0] sm:$0xff]
        %v1183 = vld [vmem:[%s319 + $0x17b8] sm:$0xff]
        %v1184 = vld [vmem:[%s319 + $0x17c0] sm:$0xff]
        %v1185 = vld [vmem:[%s319 + $0x17c8] sm:$0xff]
        %v1186 = vld [vmem:[%s319 + $0x17d0] sm:$0xff]
        %v1187 = vld [vmem:[%s319 + $0x17d8] sm:$0xff]
        %v1188 = vld [vmem:[%s319 + $0x17e0] sm:$0xff]
        %v1189 = vld [vmem:[%s319 + $0x17e8] sm:$0xff]
        %v1190 = vld [vmem:[%s319 + $0x17f0] sm:$0xff]
        %v1191 = vld [vmem:[%s319 + $0x17f8] sm:$0xff]
        %v1192 = vld [vmem:[%s319 + $0x1800] sm:$0xff]
        %v1193 = vld [vmem:[%s319 + $0x1808] sm:$0xff]
        %v1194 = vld [vmem:[%s319 + $0x1810] sm:$0xff]
        %v1195 = vld [vmem:[%s319 + $0x1818] sm:$0xff]
        %v1196 = vld [vmem:[%s319 + $0x1820] sm:$0xff]
        %v1197 = vld [vmem:[%s319 + $0x1828] sm:$0xff]
        %v1198 = vld [vmem:[%s319 + $0x1830] sm:$0xff]
        %v1199 = vld [vmem:[%s319 + $0x1838] sm:$0xff]
        %v1200 = vld [vmem:[%s319 + $0x1840] sm:$0xff]
        %v1201 = vld [vmem:[%s319 + $0x1848] sm:$0xff]
        %v1202 = vld [vmem:[%s319 + $0x1850] sm:$0xff]
        %v1203 = vld [vmem:[%s319 + $0x1858] sm:$0xff]
        %v1204 = vld [vmem:[%s319 + $0x1860] sm:$0xff]
        %v1205 = vld [vmem:[%s319 + $0x1868] sm:$0xff]
        %v1206 = vld [vmem:[%s319 + $0x1870] sm:$0xff]
        %v1207 = vld [vmem:[%s319 + $0x1878] sm:$0xff]
        %v1208 = vld [vmem:[%s319 + $0x1880] sm:$0xff]
        %v1209 = vld [vmem:[%s319 + $0x1888] sm:$0xff]
        %v1210 = vld [vmem:[%s319 + $0x1890] sm:$0xff]
        %v1211 = vld [vmem:[%s319 + $0x1898] sm:$0xff]
        %v1212 = vld [vmem:[%s319 + $0x18a0] sm:$0xff]
        %v1213 = vld [vmem:[%s319 + $0x18a8] sm:$0xff]
        %v1214 = vld [vmem:[%s319 + $0x18b0] sm:$0xff]
        %v1215 = vld [vmem:[%s319 + $0x18b8] sm:$0xff]
        %v1216 = vld [vmem:[%s319 + $0x18c0] sm:$0xff]
        %v1217 = vld [vmem:[%s319 + $0x18c8] sm:$0xff]
        %v1218 = vld [vmem:[%s319 + $0x18d0] sm:$0xff]
        %v1219 = vld [vmem:[%s319 + $0x18d8] sm:$0xff]
        %v1220 = vld [vmem:[%s319 + $0x18e0] sm:$0xff]
        %v1221 = vld [vmem:[%s319 + $0x18e8] sm:$0xff]
        %v1222 = vld [vmem:[%s319 + $0x18f0] sm:$0xff]
        %v1223 = vld [vmem:[%s319 + $0x18f8] sm:$0xff]
        %v1224 = vld [vmem:[%s319 + $0x1900] sm:$0xff]
        %v1225 = vld [vmem:[%s319 + $0x1908] sm:$0xff]
        %v1226 = vld [vmem:[%s319 + $0x1910] sm:$0xff]
        %v1227 = vld [vmem:[%s319 + $0x1918] sm:$0xff]
        %v1228 = vld [vmem:[%s319 + $0x1920] sm:$0xff]
        %v1229 = vld [vmem:[%s319 + $0x1928] sm:$0xff]
        %v1230 = vld [vmem:[%s319 + $0x1930] sm:$0xff]
        %v1231 = vld [vmem:[%s319 + $0x1938] sm:$0xff]
        %v1232 = vld [vmem:[%s319 + $0x1940] sm:$0xff]
        %v1233 = vld [vmem:[%s319 + $0x1948] sm:$0xff]
        %v1234 = vld [vmem:[%s319 + $0x1950] sm:$0xff]
        %v1235 = vld [vmem:[%s319 + $0x1958] sm:$0xff]
        %v1236 = vld [vmem:[%s319 + $0x1960] sm:$0xff]
        %v1237 = vld [vmem:[%s319 + $0x1968] sm:$0xff]
        %v1238 = vld [vmem:[%s319 + $0x1970] sm:$0xff]
        %v1239 = vld [vmem:[%s319 + $0x1978] sm:$0xff]
        %v1240 = vld [vmem:[%s319 + $0x1980] sm:$0xff]
        %v1241 = vld [vmem:[%s319 + $0x1988] sm:$0xff]
        %v1242 = vld [vmem:[%s319 + $0x1990] sm:$0xff]
        %v1243 = vld [vmem:[%s319 + $0x1998] sm:$0xff]
        %v1244 = vld [vmem:[%s319 + $0x19a0] sm:$0xff]
        %v1245 = vld [vmem:[%s319 + $0x19a8] sm:$0xff]
        %v1246 = vld [vmem:[%s319 + $0x19b0] sm:$0xff]
        %v1247 = vld [vmem:[%s319 + $0x19b8] sm:$0xff]
        %v1248 = vld [vmem:[%s319 + $0x19c0] sm:$0xff]
        %v1249 = vld [vmem:[%s319 + $0x19c8] sm:$0xff]
        %v1250 = vld [vmem:[%s319 + $0x19d0] sm:$0xff]
        %v1251 = vld [vmem:[%s319 + $0x19d8] sm:$0xff]
        %v1252 = vld [vmem:[%s319 + $0x19e0] sm:$0xff]
        %v1253 = vld [vmem:[%s319 + $0x19e8] sm:$0xff]
        %v1254 = vld [vmem:[%s319 + $0x19f0] sm:$0xff]
        %v1255 = vld [vmem:[%s319 + $0x19f8] sm:$0xff]
        %v1256 = vld [vmem:[%s319 + $0x1a00] sm:$0xff]
        %v1257 = vld [vmem:[%s319 + $0x1a08] sm:$0xff]
        %v1258 = vld [vmem:[%s319 + $0x1a10] sm:$0xff]
        %v1259 = vld [vmem:[%s319 + $0x1a18] sm:$0xff]
        %v1260 = vld [vmem:[%s319 + $0x1a20] sm:$0xff]
        %v1261 = vld [vmem:[%s319 + $0x1a28] sm:$0xff]
        %v1262 = vld [vmem:[%s319 + $0x1a30] sm:$0xff]
        %v1263 = vld [vmem:[%s319 + $0x1a38] sm:$0xff]
        %v1264 = vld [vmem:[%s319 + $0x1a40] sm:$0xff]
        %v1265 = vld [vmem:[%s319 + $0x1a48] sm:$0xff]
        %v1266 = vld [vmem:[%s319 + $0x1a50] sm:$0xff]
        %v1267 = vld [vmem:[%s319 + $0x1a58] sm:$0xff]
        %v1268 = vld [vmem:[%s319 + $0x1a60] sm:$0xff]
        %v1269 = vld [vmem:[%s319 + $0x1a68] sm:$0xff]
        %v1270 = vld [vmem:[%s319 + $0x1a70] sm:$0xff]
        %v1271 = vld [vmem:[%s319 + $0x1a78] sm:$0xff]
        %v1272 = vld [vmem:[%s319 + $0x1a80] sm:$0xff]
        %v1273 = vld [vmem:[%s319 + $0x1a88] sm:$0xff]
        %v1274 = vld [vmem:[%s319 + $0x1a90] sm:$0xff]
        %v1275 = vld [vmem:[%s319 + $0x1a98] sm:$0xff]
        %v1276 = vld [vmem:[%s319 + $0x1aa0] sm:$0xff]
        %v1277 = vld [vmem:[%s319 + $0x1aa8] sm:$0xff]
        %v1278 = vld [vmem:[%s319 + $0x1ab0] sm:$0xff]
        %v1279 = vld [vmem:[%s319 + $0x1ab8] sm:$0xff]
        %v1280 = vld [vmem:[%s319 + $0x1ac0] sm:$0xff]
        %v1281 = vld [vmem:[%s319 + $0x1ac8] sm:$0xff]
        %v1282 = vld [vmem:[%s319 + $0x1ad0] sm:$0xff]
        %v1283 = vld [vmem:[%s319 + $0x1ad8] sm:$0xff]
        %v1284 = vld [vmem:[%s319 + $0x1ae0] sm:$0xff]
        %v1285 = vld [vmem:[%s319 + $0x1ae8] sm:$0xff]
        %v1286 = vld [vmem:[%s319 + $0x1af0] sm:$0xff]
        %v1287 = vld [vmem:[%s319 + $0x1af8] sm:$0xff]
        %v1288 = vld [vmem:[%s319 + $0x1b00] sm:$0xff]
        %v1289 = vld [vmem:[%s319 + $0x1b08] sm:$0xff]
        %v1290 = vld [vmem:[%s319 + $0x1b10] sm:$0xff]
        %v1291 = vld [vmem:[%s319 + $0x1b18] sm:$0xff]
        %v1292 = vld [vmem:[%s319 + $0x1b20] sm:$0xff]
        %v1293 = vld [vmem:[%s319 + $0x1b28] sm:$0xff]
        %v1294 = vld [vmem:[%s319 + $0x1b30] sm:$0xff]
        %v1295 = vld [vmem:[%s319 + $0x1b38] sm:$0xff]
        %v1296 = vld [vmem:[%s319 + $0x1b40] sm:$0xff]
        %v1297 = vld [vmem:[%s319 + $0x1b48] sm:$0xff]
        %v1298 = vld [vmem:[%s319 + $0x1b50] sm:$0xff]
        %v1299 = vld [vmem:[%s319 + $0x1b58] sm:$0xff]
        %v1300 = vld [vmem:[%s319 + $0x1b60] sm:$0xff]
        %v1301 = vld [vmem:[%s319 + $0x1b68] sm:$0xff]
        %v1302 = vld [vmem:[%s319 + $0x1b70] sm:$0xff]
        %v1303 = vld [vmem:[%s319 + $0x1b78] sm:$0xff]
        %v1304 = vld [vmem:[%s319 + $0x1b80] sm:$0xff]
        %v1305 = vld [vmem:[%s319 + $0x1b88] sm:$0xff]
        %v1306 = vld [vmem:[%s319 + $0x1b90] sm:$0xff]
        %v1307 = vld [vmem:[%s319 + $0x1b98] sm:$0xff]
        %v1308 = vld [vmem:[%s319 + $0x1ba0] sm:$0xff]
        %v1309 = vld [vmem:[%s319 + $0x1ba8] sm:$0xff]
        %v1310 = vld [vmem:[%s319 + $0x1bb0] sm:$0xff]
        %v1311 = vld [vmem:[%s319 + $0x1bb8] sm:$0xff]
        %v1312 = vld [vmem:[%s319 + $0x1bc0] sm:$0xff]
        %v1313 = vld [vmem:[%s319 + $0x1bc8] sm:$0xff]
        %v1314 = vld [vmem:[%s319 + $0x1bd0] sm:$0xff]
        %v1315 = vld [vmem:[%s319 + $0x1bd8] sm:$0xff]
        %v1316 = vld [vmem:[%s319 + $0x1be0] sm:$0xff]
        %v1317 = vld [vmem:[%s319 + $0x1be8] sm:$0xff]
        %v1318 = vld [vmem:[%s319 + $0x1bf0] sm:$0xff]
        %v1319 = vld [vmem:[%s319 + $0x1bf8] sm:$0xff]
        %v1320 = vld [vmem:[%s319 + $0x1c00] sm:$0xff]
        %v1321 = vld [vmem:[%s319 + $0x1c08] sm:$0xff]
        %v1322 = vld [vmem:[%s319 + $0x1c10] sm:$0xff]
        %v1323 = vld [vmem:[%s319 + $0x1c18] sm:$0xff]
        %v1324 = vld [vmem:[%s319 + $0x1c20] sm:$0xff]
        %v1325 = vld [vmem:[%s319 + $0x1c28] sm:$0xff]
        %v1326 = vld [vmem:[%s319 + $0x1c30] sm:$0xff]
        %v1327 = vld [vmem:[%s319 + $0x1c38] sm:$0xff]
        %v1328 = vld [vmem:[%s319 + $0x1c40] sm:$0xff]
        %v1329 = vld [vmem:[%s319 + $0x1c48] sm:$0xff]
        %v1330 = vld [vmem:[%s319 + $0x1c50] sm:$0xff]
        %v1331 = vld [vmem:[%s319 + $0x1c58] sm:$0xff]
        %v1332 = vld [vmem:[%s319 + $0x1c60] sm:$0xff]
        %v1333 = vld [vmem:[%s319 + $0x1c68] sm:$0xff]
        %v1334 = vld [vmem:[%s319 + $0x1c70] sm:$0xff]
        %v1335 = vld [vmem:[%s319 + $0x1c78] sm:$0xff]
        %v1336 = vld [vmem:[%s319 + $0x1c80] sm:$0xff]
        %v1337 = vld [vmem:[%s319 + $0x1c88] sm:$0xff]
        %v1338 = vld [vmem:[%s319 + $0x1c90] sm:$0xff]
        %v1339 = vld [vmem:[%s319 + $0x1c98] sm:$0xff]
        %v1340 = vld [vmem:[%s319 + $0x1ca0] sm:$0xff]
        %v1341 = vld [vmem:[%s319 + $0x1ca8] sm:$0xff]
        %v1342 = vld [vmem:[%s319 + $0x1cb0] sm:$0xff]
        %v1343 = vld [vmem:[%s319 + $0x1cb8] sm:$0xff]
        %v1344 = vld [vmem:[%s319 + $0x1cc0] sm:$0xff]
        %v1345 = vld [vmem:[%s319 + $0x1cc8] sm:$0xff]
        %v1346 = vld [vmem:[%s319 + $0x1cd0] sm:$0xff]
        %v1347 = vld [vmem:[%s319 + $0x1cd8] sm:$0xff]
        %v1348 = vld [vmem:[%s319 + $0x1ce0] sm:$0xff]
        %v1349 = vld [vmem:[%s319 + $0x1ce8] sm:$0xff]
        %v1350 = vld [vmem:[%s319 + $0x1cf0] sm:$0xff]
        %v1351 = vld [vmem:[%s319 + $0x1cf8] sm:$0xff]
        %v1352 = vld [vmem:[%s319 + $0x1d00] sm:$0xff]
        %v1353 = vld [vmem:[%s319 + $0x1d08] sm:$0xff]
        %v1354 = vld [vmem:[%s319 + $0x1d10] sm:$0xff]
        %v1355 = vld [vmem:[%s319 + $0x1d18] sm:$0xff]
        %v1356 = vld [vmem:[%s319 + $0x1d20] sm:$0xff]
        %v1357 = vld [vmem:[%s319 + $0x1d28] sm:$0xff]
        %v1358 = vld [vmem:[%s319 + $0x1d30] sm:$0xff]
        %v1359 = vld [vmem:[%s319 + $0x1d38] sm:$0xff]
        %v1360 = vld [vmem:[%s319 + $0x1d40] sm:$0xff]
        %v1361 = vld [vmem:[%s319 + $0x1d48] sm:$0xff]
        %v1362 = vld [vmem:[%s319 + $0x1d50] sm:$0xff]
        %v1363 = vld [vmem:[%s319 + $0x1d58] sm:$0xff]
        %v1364 = vld [vmem:[%s319 + $0x1d60] sm:$0xff]
        %v1365 = vld [vmem:[%s319 + $0x1d68] sm:$0xff]
        %v1366 = vld [vmem:[%s319 + $0x1d70] sm:$0xff]
        %v1367 = vld [vmem:[%s319 + $0x1d78] sm:$0xff]
        %v1368 = vld [vmem:[%s319 + $0x1d80] sm:$0xff]
        %v1369 = vld [vmem:[%s319 + $0x1d88] sm:$0xff]
        %v1370 = vld [vmem:[%s319 + $0x1d90] sm:$0xff]
        %v1371 = vld [vmem:[%s319 + $0x1d98] sm:$0xff]
        %v1372 = vld [vmem:[%s319 + $0x1da0] sm:$0xff]
        %v1373 = vld [vmem:[%s319 + $0x1da8] sm:$0xff]
        %v1374 = vld [vmem:[%s319 + $0x1db0] sm:$0xff]
        %v1375 = vld [vmem:[%s319 + $0x1db8] sm:$0xff]
        %v1376 = vld [vmem:[%s319 + $0x1dc0] sm:$0xff]
        %v1377 = vld [vmem:[%s319 + $0x1dc8] sm:$0xff]
        %v1378 = vld [vmem:[%s319 + $0x1dd0] sm:$0xff]
        %v1379 = vld [vmem:[%s319 + $0x1dd8] sm:$0xff]
        %v1380 = vld [vmem:[%s319 + $0x1de0] sm:$0xff]
        %v1381 = vld [vmem:[%s319 + $0x1de8] sm:$0xff]
        %v1382 = vld [vmem:[%s319 + $0x1df0] sm:$0xff]
        %v1383 = vld [vmem:[%s319 + $0x1df8] sm:$0xff]
        %v1384 = vld [vmem:[%s319 + $0x1e00] sm:$0xff]
        %v1385 = vld [vmem:[%s319 + $0x1e08] sm:$0xff]
        %v1386 = vld [vmem:[%s319 + $0x1e10] sm:$0xff]
        %v1387 = vld [vmem:[%s319 + $0x1e18] sm:$0xff]
        %v1388 = vld [vmem:[%s319 + $0x1e20] sm:$0xff]
        %v1389 = vld [vmem:[%s319 + $0x1e28] sm:$0xff]
        %v1390 = vld [vmem:[%s319 + $0x1e30] sm:$0xff]
        %v1391 = vld [vmem:[%s319 + $0x1e38] sm:$0xff]
        %v1392 = vld [vmem:[%s319 + $0x1e40] sm:$0xff]
        %v1393 = vld [vmem:[%s319 + $0x1e48] sm:$0xff]
        %v1394 = vld [vmem:[%s319 + $0x1e50] sm:$0xff]
        %v1395 = vld [vmem:[%s319 + $0x1e58] sm:$0xff]
        %v1396 = vld [vmem:[%s319 + $0x1e60] sm:$0xff]
        %v1397 = vld [vmem:[%s319 + $0x1e68] sm:$0xff]
        %v1398 = vld [vmem:[%s319 + $0x1e70] sm:$0xff]
        %v1399 = vld [vmem:[%s319 + $0x1e78] sm:$0xff]
        %v1400 = vld [vmem:[%s319 + $0x1e80] sm:$0xff]
        %v1401 = vld [vmem:[%s319 + $0x1e88] sm:$0xff]
        %v1402 = vld [vmem:[%s319 + $0x1e90] sm:$0xff]
        %v1403 = vld [vmem:[%s319 + $0x1e98] sm:$0xff]
        %v1404 = vld [vmem:[%s319 + $0x1ea0] sm:$0xff]
        %v1405 = vld [vmem:[%s319 + $0x1ea8] sm:$0xff]
        %v1406 = vld [vmem:[%s319 + $0x1eb0] sm:$0xff]
        %v1407 = vld [vmem:[%s319 + $0x1eb8] sm:$0xff]
        %v1408 = vld [vmem:[%s319 + $0x1ec0] sm:$0xff]
        %v1409 = vld [vmem:[%s319 + $0x1ec8] sm:$0xff]
        %v1410 = vld [vmem:[%s319 + $0x1ed0] sm:$0xff]
        %v1411 = vld [vmem:[%s319 + $0x1ed8] sm:$0xff]
        %v1412 = vld [vmem:[%s319 + $0x1ee0] sm:$0xff]
        %v1413 = vld [vmem:[%s319 + $0x1ee8] sm:$0xff]
        %v1414 = vld [vmem:[%s319 + $0x1ef0] sm:$0xff]
        %v1415 = vld [vmem:[%s319 + $0x1ef8] sm:$0xff]
        %v1416 = vld [vmem:[%s319 + $0x1f00] sm:$0xff]
        %v1417 = vld [vmem:[%s319 + $0x1f08] sm:$0xff]
        %v1418 = vld [vmem:[%s319 + $0x1f10] sm:$0xff]
        %v1419 = vld [vmem:[%s319 + $0x1f18] sm:$0xff]
        %v1420 = vld [vmem:[%s319 + $0x1f20] sm:$0xff]
        %v1421 = vld [vmem:[%s319 + $0x1f28] sm:$0xff]
        %v1422 = vld [vmem:[%s319 + $0x1f30] sm:$0xff]
        %v1423 = vld [vmem:[%s319 + $0x1f38] sm:$0xff]
        %v1424 = vld [vmem:[%s319 + $0x1f40] sm:$0xff]
        %v1425 = vld [vmem:[%s319 + $0x1f48] sm:$0xff]
        %v1426 = vld [vmem:[%s319 + $0x1f50] sm:$0xff]
        %v1427 = vld [vmem:[%s319 + $0x1f58] sm:$0xff]
        %v1428 = vld [vmem:[%s319 + $0x1f60] sm:$0xff]
        %v1429 = vld [vmem:[%s319 + $0x1f68] sm:$0xff]
        %v1430 = vld [vmem:[%s319 + $0x1f70] sm:$0xff]
        %v1431 = vld [vmem:[%s319 + $0x1f78] sm:$0xff]
        %v1432 = vld [vmem:[%s319 + $0x1f80] sm:$0xff]
        %v1433 = vld [vmem:[%s319 + $0x1f88] sm:$0xff]
        %v1434 = vld [vmem:[%s319 + $0x1f90] sm:$0xff]
        %v1435 = vld [vmem:[%s319 + $0x1f98] sm:$0xff]
        %v1436 = vld [vmem:[%s319 + $0x1fa0] sm:$0xff]
        %v1437 = vld [vmem:[%s319 + $0x1fa8] sm:$0xff]
        %v1438 = vld [vmem:[%s319 + $0x1fb0] sm:$0xff]
        %v1439 = vld [vmem:[%s319 + $0x1fb8] sm:$0xff]
        %v1440 = vld [vmem:[%s319 + $0x1fc0] sm:$0xff]
        %v1441 = vld [vmem:[%s319 + $0x1fc8] sm:$0xff]
        %v1442 = vld [vmem:[%s319 + $0x1fd0] sm:$0xff]
        %v1443 = vld [vmem:[%s319 + $0x1fd8] sm:$0xff]
        %v1444 = vld [vmem:[%s319 + $0x1fe0] sm:$0xff]
        %v1445 = vld [vmem:[%s319 + $0x1fe8] sm:$0xff]
        %v1446 = vld [vmem:[%s319 + $0x1ff0] sm:$0xff]
        %v1447 = vld [vmem:[%s319 + $0x1ff8] sm:$0xff]
        %v1448 = vld [vmem:[%s319 + $0x2000] sm:$0xff]
        %v1449 = vld [vmem:[%s319 + $0x2008] sm:$0xff]
        %v1450 = vld [vmem:[%s319 + $0x2010] sm:$0xff]
        %v1451 = vld [vmem:[%s319 + $0x2018] sm:$0xff]
        %v1452 = vld [vmem:[%s319 + $0x2020] sm:$0xff]
        %v1453 = vld [vmem:[%s319 + $0x2028] sm:$0xff]
        %v1454 = vld [vmem:[%s319 + $0x2030] sm:$0xff]
        %v1455 = vld [vmem:[%s319 + $0x2038] sm:$0xff]
        %v1456 = vld [vmem:[%s319 + $0x2040] sm:$0xff]
        %v1457 = vld [vmem:[%s319 + $0x2048] sm:$0xff]
        %v1458 = vld [vmem:[%s319 + $0x2050] sm:$0xff]
        %v1459 = vld [vmem:[%s319 + $0x2058] sm:$0xff]
        %v1460 = vld [vmem:[%s319 + $0x2060] sm:$0xff]
        %v1461 = vld [vmem:[%s319 + $0x2068] sm:$0xff]
        %v1462 = vld [vmem:[%s319 + $0x2070] sm:$0xff]
        %v1463 = vld [vmem:[%s319 + $0x2078] sm:$0xff]
        %v1464 = vld [vmem:[%s319 + $0x2080] sm:$0xff]
        %v1465 = vld [vmem:[%s319 + $0x2088] sm:$0xff]
        %v1466 = vld [vmem:[%s319 + $0x2090] sm:$0xff]
        %v1467 = vld [vmem:[%s319 + $0x2098] sm:$0xff]
        %v1468 = vld [vmem:[%s319 + $0x20a0] sm:$0xff]
        %v1469 = vld [vmem:[%s319 + $0x20a8] sm:$0xff]
        %v1470 = vld [vmem:[%s319 + $0x20b0] sm:$0xff]
        %v1471 = vld [vmem:[%s319 + $0x20b8] sm:$0xff]
        %v1472 = vld [vmem:[%s319 + $0x20c0] sm:$0xff]
        %v1473 = vld [vmem:[%s319 + $0x20c8] sm:$0xff]
        %v1474 = vld [vmem:[%s319 + $0x20d0] sm:$0xff]
        %v1475 = vld [vmem:[%s319 + $0x20d8] sm:$0xff]
        %v1476 = vld [vmem:[%s319 + $0x20e0] sm:$0xff]
        %v1477 = vld [vmem:[%s319 + $0x20e8] sm:$0xff]
        %v1478 = vld [vmem:[%s319 + $0x20f0] sm:$0xff]
        %v1479 = vld [vmem:[%s319 + $0x20f8] sm:$0xff]
        %v1480 = vld [vmem:[%s319 + $0x2100] sm:$0xff]
        %v1481 = vld [vmem:[%s319 + $0x2108] sm:$0xff]
        %v1482 = vld [vmem:[%s319 + $0x2110] sm:$0xff]
        %v1483 = vld [vmem:[%s319 + $0x2118] sm:$0xff]
        %v1484 = vld [vmem:[%s319 + $0x2120] sm:$0xff]
        %v1485 = vld [vmem:[%s319 + $0x2128] sm:$0xff]
        %v1486 = vld [vmem:[%s319 + $0x2130] sm:$0xff]
        %v1487 = vld [vmem:[%s319 + $0x2138] sm:$0xff]
        %v1488 = vld [vmem:[%s319 + $0x2140] sm:$0xff]
        %v1489 = vld [vmem:[%s319 + $0x2148] sm:$0xff]
        %v1490 = vld [vmem:[%s319 + $0x2150] sm:$0xff]
        %v1491 = vld [vmem:[%s319 + $0x2158] sm:$0xff]
        %v1492 = vld [vmem:[%s319 + $0x2160] sm:$0xff]
        %v1493 = vld [vmem:[%s319 + $0x2168] sm:$0xff]
        %v1494 = vld [vmem:[%s319 + $0x2170] sm:$0xff]
        %v1495 = vld [vmem:[%s319 + $0x2178] sm:$0xff]
        %v1496 = vld [vmem:[%s319 + $0x2180] sm:$0xff]
        %v1497 = vld [vmem:[%s319 + $0x2188] sm:$0xff]
        %v1498 = vld [vmem:[%s319 + $0x2190] sm:$0xff]
        %v1499 = vld [vmem:[%s319 + $0x2198] sm:$0xff]
        %v1500 = vld [vmem:[%s319 + $0x21a0] sm:$0xff]
        %v1501 = vld [vmem:[%s319 + $0x21a8] sm:$0xff]
        %v1502 = vld [vmem:[%s319 + $0x21b0] sm:$0xff]
        %v1503 = vld [vmem:[%s319 + $0x21b8] sm:$0xff]
        %v1504 = vld [vmem:[%s319 + $0x21c0] sm:$0xff]
        %v1505 = vld [vmem:[%s319 + $0x21c8] sm:$0xff]
        %v1506 = vld [vmem:[%s319 + $0x21d0] sm:$0xff]
        %v1507 = vld [vmem:[%s319 + $0x21d8] sm:$0xff]
        %v1508 = vld [vmem:[%s319 + $0x21e0] sm:$0xff]
        %v1509 = vld [vmem:[%s319 + $0x21e8] sm:$0xff]
        %v1510 = vld [vmem:[%s319 + $0x21f0] sm:$0xff]
        %v1511 = vld [vmem:[%s319 + $0x21f8] sm:$0xff]
        %v1512 = vld [vmem:[%s319 + $0x2200] sm:$0xff]
        %v1513 = vld [vmem:[%s319 + $0x2208] sm:$0xff]
        %v1514 = vld [vmem:[%s319 + $0x2210] sm:$0xff]
        %v1515 = vld [vmem:[%s319 + $0x2218] sm:$0xff]
        %v1516 = vld [vmem:[%s319 + $0x2220] sm:$0xff]
        %v1517 = vld [vmem:[%s319 + $0x2228] sm:$0xff]
        %v1518 = vld [vmem:[%s319 + $0x2230] sm:$0xff]
        %v1519 = vld [vmem:[%s319 + $0x2238] sm:$0xff]
        %v1520 = vld [vmem:[%s319 + $0x2240] sm:$0xff]
        %v1521 = vld [vmem:[%s319 + $0x2248] sm:$0xff]
        %v1522 = vld [vmem:[%s319 + $0x2250] sm:$0xff]
        %v1523 = vld [vmem:[%s319 + $0x2258] sm:$0xff]
        %v1524 = vld [vmem:[%s319 + $0x2260] sm:$0xff]
        %v1525 = vld [vmem:[%s319 + $0x2268] sm:$0xff]
        %v1526 = vld [vmem:[%s319 + $0x2270] sm:$0xff]
        %v1527 = vld [vmem:[%s319 + $0x2278] sm:$0xff]
        %v1528 = vld [vmem:[%s319 + $0x2280] sm:$0xff]
        %v1529 = vld [vmem:[%s319 + $0x2288] sm:$0xff]
        %v1530 = vld [vmem:[%s319 + $0x2290] sm:$0xff]
        %v1531 = vld [vmem:[%s319 + $0x2298] sm:$0xff]
        %v1532 = vld [vmem:[%s319 + $0x22a0] sm:$0xff]
        %v1533 = vld [vmem:[%s319 + $0x22a8] sm:$0xff]
        %v1534 = vld [vmem:[%s319 + $0x22b0] sm:$0xff]
        %v1535 = vld [vmem:[%s319 + $0x22b8] sm:$0xff]
        %v1536 = vld [vmem:[%s319 + $0x22c0] sm:$0xff]
        %v1537 = vld [vmem:[%s319 + $0x22c8] sm:$0xff]
        %v1538 = vld [vmem:[%s319 + $0x22d0] sm:$0xff]
        %v1539 = vld [vmem:[%s319 + $0x22d8] sm:$0xff]
        %v1540 = vld [vmem:[%s319 + $0x22e0] sm:$0xff]
        %v1541 = vld [vmem:[%s319 + $0x22e8] sm:$0xff]
        %v1542 = vld [vmem:[%s319 + $0x22f0] sm:$0xff]
        %v1543 = vld [vmem:[%s319 + $0x22f8] sm:$0xff]
        %v1544 = vld [vmem:[%s319 + $0x2300] sm:$0xff]
        %v1545 = vld [vmem:[%s319 + $0x2308] sm:$0xff]
        %v1546 = vld [vmem:[%s319 + $0x2310] sm:$0xff]
        %v1547 = vld [vmem:[%s319 + $0x2318] sm:$0xff]
        %v1548 = vld [vmem:[%s319 + $0x2320] sm:$0xff]
        %v1549 = vld [vmem:[%s319 + $0x2328] sm:$0xff]
        %v1550 = vld [vmem:[%s319 + $0x2330] sm:$0xff]
        %v1551 = vld [vmem:[%s319 + $0x2338] sm:$0xff]
        %v1552 = vld [vmem:[%s319 + $0x2340] sm:$0xff]
        %v1553 = vld [vmem:[%s319 + $0x2348] sm:$0xff]
        %v1554 = vld [vmem:[%s319 + $0x2350] sm:$0xff]
        %v1555 = vld [vmem:[%s319 + $0x2358] sm:$0xff]
        %v1556 = vld [vmem:[%s319 + $0x2360] sm:$0xff]
        %v1557 = vld [vmem:[%s319 + $0x2368] sm:$0xff]
        %v1558 = vld [vmem:[%s319 + $0x2370] sm:$0xff]
        %v1559 = vld [vmem:[%s319 + $0x2378] sm:$0xff]
        %v1560 = vld [vmem:[%s319 + $0x2380] sm:$0xff]
        %v1561 = vld [vmem:[%s319 + $0x2388] sm:$0xff]
        %v1562 = vld [vmem:[%s319 + $0x2390] sm:$0xff]
        %v1563 = vld [vmem:[%s319 + $0x2398] sm:$0xff]
        %v1564 = vld [vmem:[%s319 + $0x23a0] sm:$0xff]
        %v1565 = vld [vmem:[%s319 + $0x23a8] sm:$0xff]
        %v1566 = vld [vmem:[%s319 + $0x23b0] sm:$0xff]
        %v1567 = vld [vmem:[%s319 + $0x23b8] sm:$0xff]
        %v1568 = vld [vmem:[%s319 + $0x23c0] sm:$0xff]
        %v1569 = vld [vmem:[%s319 + $0x23c8] sm:$0xff]
        %v1570 = vld [vmem:[%s319 + $0x23d0] sm:$0xff]
        %v1571 = vld [vmem:[%s319 + $0x23d8] sm:$0xff]
        %v1572 = vld [vmem:[%s319 + $0x23e0] sm:$0xff]
        %v1573 = vld [vmem:[%s319 + $0x23e8] sm:$0xff]
        %v1574 = vld [vmem:[%s319 + $0x23f0] sm:$0xff]
        %v1575 = vld [vmem:[%s319 + $0x23f8] sm:$0xff]
        %v1576 = vld [vmem:[%s319 + $0x2400] sm:$0xff]
        %v1577 = vld [vmem:[%s319 + $0x2408] sm:$0xff]
        %v1578 = vld [vmem:[%s319 + $0x2410] sm:$0xff]
        %v1579 = vld [vmem:[%s319 + $0x2418] sm:$0xff]
        %v1580 = vld [vmem:[%s319 + $0x2420] sm:$0xff]
        %v1581 = vld [vmem:[%s319 + $0x2428] sm:$0xff]
        %v1582 = vld [vmem:[%s319 + $0x2430] sm:$0xff]
        %v1583 = vld [vmem:[%s319 + $0x2438] sm:$0xff]
        %v1584 = vld [vmem:[%s319 + $0x2440] sm:$0xff]
        %v1585 = vld [vmem:[%s319 + $0x2448] sm:$0xff]
        %v1586 = vld [vmem:[%s319 + $0x2450] sm:$0xff]
        %v1587 = vld [vmem:[%s319 + $0x2458] sm:$0xff]
        %v1588 = vld [vmem:[%s319 + $0x2460] sm:$0xff]
        %v1589 = vld [vmem:[%s319 + $0x2468] sm:$0xff]
        %v1590 = vld [vmem:[%s319 + $0x2470] sm:$0xff]
        %v1591 = vld [vmem:[%s319 + $0x2478] sm:$0xff]
        %v1592 = vld [vmem:[%s319 + $0x2480] sm:$0xff]
        %v1593 = vld [vmem:[%s319 + $0x2488] sm:$0xff]
        %v1594 = vld [vmem:[%s319 + $0x2490] sm:$0xff]
        %v1595 = vld [vmem:[%s319 + $0x2498] sm:$0xff]
        %v1596 = vld [vmem:[%s319 + $0x24a0] sm:$0xff]
        %v1597 = vld [vmem:[%s319 + $0x24a8] sm:$0xff]
        %v1598 = vld [vmem:[%s319 + $0x24b0] sm:$0xff]
        %v1599 = vld [vmem:[%s319 + $0x24b8] sm:$0xff]
        %v1600 = vld [vmem:[%s319 + $0x24c0] sm:$0xff]
        %v1601 = vld [vmem:[%s319 + $0x24c8] sm:$0xff]
        %v1602 = vld [vmem:[%s319 + $0x24d0] sm:$0xff]
        %v1603 = vld [vmem:[%s319 + $0x24d8] sm:$0xff]
        %v1604 = vld [vmem:[%s319 + $0x24e0] sm:$0xff]
        %v1605 = vld [vmem:[%s319 + $0x24e8] sm:$0xff]
        %v1606 = vld [vmem:[%s319 + $0x24f0] sm:$0xff]
        %v1607 = vld [vmem:[%s319 + $0x24f8] sm:$0xff]
        %v1608 = vld [vmem:[%s319 + $0x2500] sm:$0xff]
        %v1609 = vld [vmem:[%s319 + $0x2508] sm:$0xff]
        %v1610 = vld [vmem:[%s319 + $0x2510] sm:$0xff]
        %v1611 = vld [vmem:[%s319 + $0x2518] sm:$0xff]
        %v1612 = vld [vmem:[%s319 + $0x2520] sm:$0xff]
        %v1613 = vld [vmem:[%s319 + $0x2528] sm:$0xff]
        %v1614 = vld [vmem:[%s319 + $0x2530] sm:$0xff]
        %v1615 = vld [vmem:[%s319 + $0x2538] sm:$0xff]
        %v1616 = vld [vmem:[%s319 + $0x2540] sm:$0xff]
        %v1617 = vld [vmem:[%s319 + $0x2548] sm:$0xff]
        %v1618 = vld [vmem:[%s319 + $0x2550] sm:$0xff]
        %v1619 = vld [vmem:[%s319 + $0x2558] sm:$0xff]
        %v1620 = vld [vmem:[%s319 + $0x2560] sm:$0xff]
        %v1621 = vld [vmem:[%s319 + $0x2568] sm:$0xff]
        %v1622 = vld [vmem:[%s319 + $0x2570] sm:$0xff]
        %v1623 = vld [vmem:[%s319 + $0x2578] sm:$0xff]
        %v1624 = vld [vmem:[%s319 + $0x2580] sm:$0xff]
        %v1625 = vld [vmem:[%s319 + $0x2588] sm:$0xff]
        %v1626 = vld [vmem:[%s319 + $0x2590] sm:$0xff]
        %v1627 = vld [vmem:[%s319 + $0x2598] sm:$0xff]
        %v1628 = vld [vmem:[%s319 + $0x25a0] sm:$0xff]
        %v1629 = vld [vmem:[%s319 + $0x25a8] sm:$0xff]
        %v1630 = vld [vmem:[%s319 + $0x25b0] sm:$0xff]
        %v1631 = vld [vmem:[%s319 + $0x25b8] sm:$0xff]
        %v1632 = vld [vmem:[%s319 + $0x25c0] sm:$0xff]
        %v1633 = vld [vmem:[%s319 + $0x25c8] sm:$0xff]
        %v1634 = vld [vmem:[%s319 + $0x25d0] sm:$0xff]
        %v1635 = vld [vmem:[%s319 + $0x25d8] sm:$0xff]
        %v1636 = vld [vmem:[%s319 + $0x25e0] sm:$0xff]
        %v1637 = vld [vmem:[%s319 + $0x25e8] sm:$0xff]
        %v1638 = vld [vmem:[%s319 + $0x25f0] sm:$0xff]
        %v1639 = vld [vmem:[%s319 + $0x25f8] sm:$0xff]
        %v1640 = vld [vmem:[%s319 + $0x2600] sm:$0xff]
        %v1641 = vld [vmem:[%s319 + $0x2608] sm:$0xff]
        %v1642 = vld [vmem:[%s319 + $0x2610] sm:$0xff]
        %v1643 = vld [vmem:[%s319 + $0x2618] sm:$0xff]
        %v1644 = vld [vmem:[%s319 + $0x2620] sm:$0xff]
        %v1645 = vld [vmem:[%s319 + $0x2628] sm:$0xff]
        %v1646 = vld [vmem:[%s319 + $0x2630] sm:$0xff]
        %v1647 = vld [vmem:[%s319 + $0x2638] sm:$0xff]
        %v1648 = vld [vmem:[%s319 + $0x2640] sm:$0xff]
        %v1649 = vld [vmem:[%s319 + $0x2648] sm:$0xff]
        %v1650 = vld [vmem:[%s319 + $0x2650] sm:$0xff]
        %v1651 = vld [vmem:[%s319 + $0x2658] sm:$0xff]
        %v1652 = vld [vmem:[%s319 + $0x2660] sm:$0xff]
        %v1653 = vld [vmem:[%s319 + $0x2668] sm:$0xff]
        %v1654 = vld [vmem:[%s319 + $0x2670] sm:$0xff]
        %v1655 = vld [vmem:[%s319 + $0x2678] sm:$0xff]
        %v1656 = vld [vmem:[%s319 + $0x2680] sm:$0xff]
        %v1657 = vld [vmem:[%s319 + $0x2688] sm:$0xff]
        %v1658 = vld [vmem:[%s319 + $0x2690] sm:$0xff]
        %v1659 = vld [vmem:[%s319 + $0x2698] sm:$0xff]
        %v1660 = vld [vmem:[%s319 + $0x26a0] sm:$0xff]
        %v1661 = vld [vmem:[%s319 + $0x26a8] sm:$0xff]
        %v1662 = vld [vmem:[%s319 + $0x26b0] sm:$0xff]
        %v1663 = vld [vmem:[%s319 + $0x26b8] sm:$0xff]
        %v1664 = vld [vmem:[%s319 + $0x26c0] sm:$0xff]
        %v1665 = vld [vmem:[%s319 + $0x26c8] sm:$0xff]
        %v1666 = vld [vmem:[%s319 + $0x26d0] sm:$0xff]
        %v1667 = vld [vmem:[%s319 + $0x26d8] sm:$0xff]
        %v1668 = vld [vmem:[%s319 + $0x26e0] sm:$0xff]
        %v1669 = vld [vmem:[%s319 + $0x26e8] sm:$0xff]
        %v1670 = vld [vmem:[%s319 + $0x26f0] sm:$0xff]
        %v1671 = vld [vmem:[%s319 + $0x26f8] sm:$0xff]
        %v1672 = vld [vmem:[%s319 + $0x2700] sm:$0xff]
        %v1673 = vld [vmem:[%s319 + $0x2708] sm:$0xff]
        %v1674 = vld [vmem:[%s319 + $0x2710] sm:$0xff]
        %v1675 = vld [vmem:[%s319 + $0x2718] sm:$0xff]
        %v1676 = vld [vmem:[%s319 + $0x2720] sm:$0xff]
        %v1677 = vld [vmem:[%s319 + $0x2728] sm:$0xff]
        %v1678 = vld [vmem:[%s319 + $0x2730] sm:$0xff]
        %v1679 = vld [vmem:[%s319 + $0x2738] sm:$0xff]
        %v1680 = vld [vmem:[%s319 + $0x2740] sm:$0xff]
        %v1681 = vld [vmem:[%s319 + $0x2748] sm:$0xff]
        %v1682 = vld [vmem:[%s319 + $0x2750] sm:$0xff]
        %v1683 = vld [vmem:[%s319 + $0x2758] sm:$0xff]
        %v1684 = vld [vmem:[%s319 + $0x2760] sm:$0xff]
        %v1685 = vld [vmem:[%s319 + $0x2768] sm:$0xff]
        %v1686 = vld [vmem:[%s319 + $0x2770] sm:$0xff]
        %v1687 = vld [vmem:[%s319 + $0x2778] sm:$0xff]
        %v1688 = vld [vmem:[%s319 + $0x2780] sm:$0xff]
        %v1689 = vld [vmem:[%s319 + $0x2788] sm:$0xff]
        %v1690 = vld [vmem:[%s319 + $0x2790] sm:$0xff]
        %v1691 = vld [vmem:[%s319 + $0x2798] sm:$0xff]
        %v1692 = vld [vmem:[%s319 + $0x27a0] sm:$0xff]
        %v1693 = vld [vmem:[%s319 + $0x27a8] sm:$0xff]
        %v1694 = vld [vmem:[%s319 + $0x27b0] sm:$0xff]
        %v1695 = vld [vmem:[%s319 + $0x27b8] sm:$0xff]
        %v1696 = vld [vmem:[%s319 + $0x27c0] sm:$0xff]
        %v1697 = vld [vmem:[%s319 + $0x27c8] sm:$0xff]
        %v1698 = vld [vmem:[%s319 + $0x27d0] sm:$0xff]
        %v1699 = vld [vmem:[%s319 + $0x27d8] sm:$0xff]
        %v1700 = vld [vmem:[%s319 + $0x27e0] sm:$0xff]
        %v1701 = vld [vmem:[%s319 + $0x27e8] sm:$0xff]
        %v1702 = vld [vmem:[%s319 + $0x27f0] sm:$0xff]
        %v1703 = vld [vmem:[%s319 + $0x27f8] sm:$0xff]
        %v1704 = vld [vmem:[%s319 + $0x2800] sm:$0xff]
        %v1705 = vld [vmem:[%s319 + $0x2808] sm:$0xff]
        %v1706 = vld [vmem:[%s319 + $0x2810] sm:$0xff]
        %v1707 = vld [vmem:[%s319 + $0x2818] sm:$0xff]
        %v1708 = vld [vmem:[%s319 + $0x2820] sm:$0xff]
        %v1709 = vld [vmem:[%s319 + $0x2828] sm:$0xff]
        %v1710 = vld [vmem:[%s319 + $0x2830] sm:$0xff]
        %v1711 = vld [vmem:[%s319 + $0x2838] sm:$0xff]
        %v1712 = vld [vmem:[%s319 + $0x2840] sm:$0xff]
        %v1713 = vld [vmem:[%s319 + $0x2848] sm:$0xff]
        %v1714 = vld [vmem:[%s319 + $0x2850] sm:$0xff]
        %v1715 = vld [vmem:[%s319 + $0x2858] sm:$0xff]
        %v1716 = vld [vmem:[%s319 + $0x2860] sm:$0xff]
        %v1717 = vld [vmem:[%s319 + $0x2868] sm:$0xff]
        %v1718 = vld [vmem:[%s319 + $0x2870] sm:$0xff]
        %v1719 = vld [vmem:[%s319 + $0x2878] sm:$0xff]
        %v1720 = vld [vmem:[%s319 + $0x2880] sm:$0xff]
        %v1721 = vld [vmem:[%s319 + $0x2888] sm:$0xff]
        %v1722 = vld [vmem:[%s319 + $0x2890] sm:$0xff]
        %v1723 = vld [vmem:[%s319 + $0x2898] sm:$0xff]
        %v1724 = vld [vmem:[%s319 + $0x28a0] sm:$0xff]
        %v1725 = vld [vmem:[%s319 + $0x28a8] sm:$0xff]
        %v1726 = vld [vmem:[%s319 + $0x28b0] sm:$0xff]
        %v1727 = vld [vmem:[%s319 + $0x28b8] sm:$0xff]
        %v1728 = vld [vmem:[%s319 + $0x28c0] sm:$0xff]
        %v1729 = vld [vmem:[%s319 + $0x28c8] sm:$0xff]
        %v1730 = vld [vmem:[%s319 + $0x28d0] sm:$0xff]
        %v1731 = vld [vmem:[%s319 + $0x28d8] sm:$0xff]
        %v1732 = vld [vmem:[%s319 + $0x28e0] sm:$0xff]
        %v1733 = vld [vmem:[%s319 + $0x28e8] sm:$0xff]
        %v1734 = vld [vmem:[%s319 + $0x28f0] sm:$0xff]
        %v1735 = vld [vmem:[%s319 + $0x28f8] sm:$0xff]
        %v1736 = vld [vmem:[%s319 + $0x2900] sm:$0xff]
        %v1737 = vld [vmem:[%s319 + $0x2908] sm:$0xff]
        %v1738 = vld [vmem:[%s319 + $0x2910] sm:$0xff]
        %v1739 = vld [vmem:[%s319 + $0x2918] sm:$0xff]
        %v1740 = vld [vmem:[%s319 + $0x2920] sm:$0xff]
        %v1741 = vld [vmem:[%s319 + $0x2928] sm:$0xff]
        %v1742 = vld [vmem:[%s319 + $0x2930] sm:$0xff]
        %v1743 = vld [vmem:[%s319 + $0x2938] sm:$0xff]
        %v1744 = vld [vmem:[%s319 + $0x2940] sm:$0xff]
        %v1745 = vld [vmem:[%s319 + $0x2948] sm:$0xff]
        %v1746 = vld [vmem:[%s319 + $0x2950] sm:$0xff]
        %v1747 = vld [vmem:[%s319 + $0x2958] sm:$0xff]
        %v1748 = vld [vmem:[%s319 + $0x2960] sm:$0xff]
        %v1749 = vld [vmem:[%s319 + $0x2968] sm:$0xff]
        %v1750 = vld [vmem:[%s319 + $0x2970] sm:$0xff]
        %v1751 = vld [vmem:[%s319 + $0x2978] sm:$0xff]
        %v1752 = vld [vmem:[%s319 + $0x2980] sm:$0xff]
        %v1753 = vld [vmem:[%s319 + $0x2988] sm:$0xff]
        %v1754 = vld [vmem:[%s319 + $0x2990] sm:$0xff]
        %v1755 = vld [vmem:[%s319 + $0x2998] sm:$0xff]
        %v1756 = vld [vmem:[%s319 + $0x29a0] sm:$0xff]
        %v1757 = vld [vmem:[%s319 + $0x29a8] sm:$0xff]
        %v1758 = vld [vmem:[%s319 + $0x29b0] sm:$0xff]
        %v1759 = vld [vmem:[%s319 + $0x29b8] sm:$0xff]
        %v1760 = vld [vmem:[%s319 + $0x29c0] sm:$0xff]
        %v1761 = vld [vmem:[%s319 + $0x29c8] sm:$0xff]
        %v1762 = vld [vmem:[%s319 + $0x29d0] sm:$0xff]
        %v1763 = vld [vmem:[%s319 + $0x29d8] sm:$0xff]
        %v1764 = vld [vmem:[%s319 + $0x29e0] sm:$0xff]
        %v1765 = vld [vmem:[%s319 + $0x29e8] sm:$0xff]
        %v1766 = vld [vmem:[%s319 + $0x29f0] sm:$0xff]
        %v1767 = vld [vmem:[%s319 + $0x29f8] sm:$0xff]
        %v1768 = vld [vmem:[%s319 + $0x2a00] sm:$0xff]
        %v1769 = vld [vmem:[%s319 + $0x2a08] sm:$0xff]
        %v1770 = vld [vmem:[%s319 + $0x2a10] sm:$0xff]
        %v1771 = vld [vmem:[%s319 + $0x2a18] sm:$0xff]
        %v1772 = vld [vmem:[%s319 + $0x2a20] sm:$0xff]
        %v1773 = vld [vmem:[%s319 + $0x2a28] sm:$0xff]
        %v1774 = vld [vmem:[%s319 + $0x2a30] sm:$0xff]
        %v1775 = vld [vmem:[%s319 + $0x2a38] sm:$0xff]
        %v1776 = vld [vmem:[%s319 + $0x2a40] sm:$0xff]
        %v1777 = vld [vmem:[%s319 + $0x2a48] sm:$0xff]
        %v1778 = vld [vmem:[%s319 + $0x2a50] sm:$0xff]
        %v1779 = vld [vmem:[%s319 + $0x2a58] sm:$0xff]
        %v1780 = vld [vmem:[%s319 + $0x2a60] sm:$0xff]
        %v1781 = vld [vmem:[%s319 + $0x2a68] sm:$0xff]
        %v1782 = vld [vmem:[%s319 + $0x2a70] sm:$0xff]
        %v1783 = vld [vmem:[%s319 + $0x2a78] sm:$0xff]
        %v1784 = vld [vmem:[%s319 + $0x2a80] sm:$0xff]
        %v1785 = vld [vmem:[%s319 + $0x2a88] sm:$0xff]
        %v1786 = vld [vmem:[%s319 + $0x2a90] sm:$0xff]
        %v1787 = vld [vmem:[%s319 + $0x2a98] sm:$0xff]
        %v1788 = vld [vmem:[%s319 + $0x2aa0] sm:$0xff]
        %v1789 = vld [vmem:[%s319 + $0x2aa8] sm:$0xff]
        %v1790 = vld [vmem:[%s319 + $0x2ab0] sm:$0xff]
        %v1791 = vld [vmem:[%s319 + $0x2ab8] sm:$0xff]
        %v1792 = vld [vmem:[%s319 + $0x2ac0] sm:$0xff]
        %v1793 = vld [vmem:[%s319 + $0x2ac8] sm:$0xff]
        %v1794 = vld [vmem:[%s319 + $0x2ad0] sm:$0xff]
        %v1795 = vld [vmem:[%s319 + $0x2ad8] sm:$0xff]
        %v1796 = vld [vmem:[%s319 + $0x2ae0] sm:$0xff]
        %v1797 = vld [vmem:[%s319 + $0x2ae8] sm:$0xff]
        %v1798 = vld [vmem:[%s319 + $0x2af0] sm:$0xff]
        %v1799 = vld [vmem:[%s319 + $0x2af8] sm:$0xff]
        %v1800 = vld [vmem:[%s319 + $0x2b00] sm:$0xff]
        %v1801 = vld [vmem:[%s319 + $0x2b08] sm:$0xff]
        %v1802 = vld [vmem:[%s319 + $0x2b10] sm:$0xff]
        %v1803 = vld [vmem:[%s319 + $0x2b18] sm:$0xff]
        %v1804 = vld [vmem:[%s319 + $0x2b20] sm:$0xff]
        %v1805 = vld [vmem:[%s319 + $0x2b28] sm:$0xff]
        %v1806 = vld [vmem:[%s319 + $0x2b30] sm:$0xff]
        %v1807 = vld [vmem:[%s319 + $0x2b38] sm:$0xff]
        %v1808 = vld [vmem:[%s319 + $0x2b40] sm:$0xff]
        %v1809 = vld [vmem:[%s319 + $0x2b48] sm:$0xff]
        %v1810 = vld [vmem:[%s319 + $0x2b50] sm:$0xff]
        %v1811 = vld [vmem:[%s319 + $0x2b58] sm:$0xff]
        %v1812 = vld [vmem:[%s319 + $0x2b60] sm:$0xff]
        %v1813 = vld [vmem:[%s319 + $0x2b68] sm:$0xff]
        %v1814 = vld [vmem:[%s319 + $0x2b70] sm:$0xff]
        %v1815 = vld [vmem:[%s319 + $0x2b78] sm:$0xff]
        %v1816 = vld [vmem:[%s319 + $0x2b80] sm:$0xff]
        %v1817 = vld [vmem:[%s319 + $0x2b88] sm:$0xff]
        %v1818 = vld [vmem:[%s319 + $0x2b90] sm:$0xff]
        %v1819 = vld [vmem:[%s319 + $0x2b98] sm:$0xff]
        %v1820 = vld [vmem:[%s319 + $0x2ba0] sm:$0xff]
        %v1821 = vld [vmem:[%s319 + $0x2ba8] sm:$0xff]
        %v1822 = vld [vmem:[%s319 + $0x2bb0] sm:$0xff]
        %v1823 = vld [vmem:[%s319 + $0x2bb8] sm:$0xff]
        %v1824 = vld [vmem:[%s319 + $0x2bc0] sm:$0xff]
        %v1825 = vld [vmem:[%s319 + $0x2bc8] sm:$0xff]
        %v1826 = vld [vmem:[%s319 + $0x2bd0] sm:$0xff]
        %v1827 = vld [vmem:[%s319 + $0x2bd8] sm:$0xff]
        %v1828 = vld [vmem:[%s319 + $0x2be0] sm:$0xff]
        %v1829 = vld [vmem:[%s319 + $0x2be8] sm:$0xff]
        %v1830 = vld [vmem:[%s319 + $0x2bf0] sm:$0xff]
        %v1831 = vld [vmem:[%s319 + $0x2bf8] sm:$0xff]
        %v1832 = vld [vmem:[%s319 + $0x2c00] sm:$0xff]
        %v1833 = vld [vmem:[%s319 + $0x2c08] sm:$0xff]
        %v1834 = vld [vmem:[%s319 + $0x2c10] sm:$0xff]
        %v1835 = vld [vmem:[%s319 + $0x2c18] sm:$0xff]
        %v1836 = vld [vmem:[%s319 + $0x2c20] sm:$0xff]
        %v1837 = vld [vmem:[%s319 + $0x2c28] sm:$0xff]
        %v1838 = vld [vmem:[%s319 + $0x2c30] sm:$0xff]
        %v1839 = vld [vmem:[%s319 + $0x2c38] sm:$0xff]
        %v1840 = vld [vmem:[%s319 + $0x2c40] sm:$0xff]
        %v1841 = vld [vmem:[%s319 + $0x2c48] sm:$0xff]
        %v1842 = vld [vmem:[%s319 + $0x2c50] sm:$0xff]
        %v1843 = vld [vmem:[%s319 + $0x2c58] sm:$0xff]
        %v1844 = vld [vmem:[%s319 + $0x2c60] sm:$0xff]
        %v1845 = vld [vmem:[%s319 + $0x2c68] sm:$0xff]
        %v1846 = vld [vmem:[%s319 + $0x2c70] sm:$0xff]
        %v1847 = vld [vmem:[%s319 + $0x2c78] sm:$0xff]
        %v1848 = vld [vmem:[%s319 + $0x2c80] sm:$0xff]
        %v1849 = vld [vmem:[%s319 + $0x2c88] sm:$0xff]
        %v1850 = vld [vmem:[%s319 + $0x2c90] sm:$0xff]
        %v1851 = vld [vmem:[%s319 + $0x2c98] sm:$0xff]
        %v1852 = vld [vmem:[%s319 + $0x2ca0] sm:$0xff]
        %v1853 = vld [vmem:[%s319 + $0x2ca8] sm:$0xff]
        %v1854 = vld [vmem:[%s319 + $0x2cb0] sm:$0xff]
        %v1855 = vld [vmem:[%s319 + $0x2cb8] sm:$0xff]
        %v1856 = vld [vmem:[%s319 + $0x2cc0] sm:$0xff]
        %v1857 = vld [vmem:[%s319 + $0x2cc8] sm:$0xff]
        %v1858 = vld [vmem:[%s319 + $0x2cd0] sm:$0xff]
        %v1859 = vld [vmem:[%s319 + $0x2cd8] sm:$0xff]
        %v1860 = vld [vmem:[%s319 + $0x2ce0] sm:$0xff]
        %v1861 = vld [vmem:[%s319 + $0x2ce8] sm:$0xff]
        %v1862 = vld [vmem:[%s319 + $0x2cf0] sm:$0xff]
        %v1863 = vld [vmem:[%s319 + $0x2cf8] sm:$0xff]
        %v1864 = vld [vmem:[%s319 + $0x2d00] sm:$0xff]
        %v1865 = vld [vmem:[%s319 + $0x2d08] sm:$0xff]
        %v1866 = vld [vmem:[%s319 + $0x2d10] sm:$0xff]
        %v1867 = vld [vmem:[%s319 + $0x2d18] sm:$0xff]
        %v1868 = vld [vmem:[%s319 + $0x2d20] sm:$0xff]
        %v1869 = vld [vmem:[%s319 + $0x2d28] sm:$0xff]
        %v1870 = vld [vmem:[%s319 + $0x2d30] sm:$0xff]
        %v1871 = vld [vmem:[%s319 + $0x2d38] sm:$0xff]
        %v1872 = vld [vmem:[%s319 + $0x2d40] sm:$0xff]
        %v1873 = vld [vmem:[%s319 + $0x2d48] sm:$0xff]
        %v1874 = vld [vmem:[%s319 + $0x2d50] sm:$0xff]
        %v1875 = vld [vmem:[%s319 + $0x2d58] sm:$0xff]
        %v1876 = vld [vmem:[%s319 + $0x2d60] sm:$0xff]
        %v1877 = vld [vmem:[%s319 + $0x2d68] sm:$0xff]
        %v1878 = vld [vmem:[%s319 + $0x2d70] sm:$0xff]
        %v1879 = vld [vmem:[%s319 + $0x2d78] sm:$0xff]
        %v1880 = vld [vmem:[%s319 + $0x2d80] sm:$0xff]
        %v1881 = vld [vmem:[%s319 + $0x2d88] sm:$0xff]
        %v1882 = vld [vmem:[%s319 + $0x2d90] sm:$0xff]
        %v1883 = vld [vmem:[%s319 + $0x2d98] sm:$0xff]
        %v1884 = vld [vmem:[%s319 + $0x2da0] sm:$0xff]
        %v1885 = vld [vmem:[%s319 + $0x2da8] sm:$0xff]
        %v1886 = vld [vmem:[%s319 + $0x2db0] sm:$0xff]
        %v1887 = vld [vmem:[%s319 + $0x2db8] sm:$0xff]
        %v1888 = vld [vmem:[%s319 + $0x2dc0] sm:$0xff]
        %v1889 = vld [vmem:[%s319 + $0x2dc8] sm:$0xff]
        %v1890 = vld [vmem:[%s319 + $0x2dd0] sm:$0xff]
        %v1891 = vld [vmem:[%s319 + $0x2dd8] sm:$0xff]
        %v1892 = vld [vmem:[%s319 + $0x2de0] sm:$0xff]
        %v1893 = vld [vmem:[%s319 + $0x2de8] sm:$0xff]
        %v1894 = vld [vmem:[%s319 + $0x2df0] sm:$0xff]
        %v1895 = vld [vmem:[%s319 + $0x2df8] sm:$0xff]
        %v1896 = vld [vmem:[%s319 + $0x2e00] sm:$0xff]
        %v1897 = vld [vmem:[%s319 + $0x2e08] sm:$0xff]
        %v1898 = vld [vmem:[%s319 + $0x2e10] sm:$0xff]
        %v1899 = vld [vmem:[%s319 + $0x2e18] sm:$0xff]
        %v1900 = vld [vmem:[%s319 + $0x2e20] sm:$0xff]
        %v1901 = vld [vmem:[%s319 + $0x2e28] sm:$0xff]
        %v1902 = vld [vmem:[%s319 + $0x2e30] sm:$0xff]
        %v1903 = vld [vmem:[%s319 + $0x2e38] sm:$0xff]
        %v1904 = vld [vmem:[%s319 + $0x2e40] sm:$0xff]
        %v1905 = vld [vmem:[%s319 + $0x2e48] sm:$0xff]
        %v1906 = vld [vmem:[%s319 + $0x2e50] sm:$0xff]
        %v1907 = vld [vmem:[%s319 + $0x2e58] sm:$0xff]
        %v1908 = vld [vmem:[%s319 + $0x2e60] sm:$0xff]
        %v1909 = vld [vmem:[%s319 + $0x2e68] sm:$0xff]
        %v1910 = vld [vmem:[%s319 + $0x2e70] sm:$0xff]
        %v1911 = vld [vmem:[%s319 + $0x2e78] sm:$0xff]
        %v1912 = vld [vmem:[%s319 + $0x2e80] sm:$0xff]
        %v1913 = vld [vmem:[%s319 + $0x2e88] sm:$0xff]
        %v1914 = vld [vmem:[%s319 + $0x2e90] sm:$0xff]
        %v1915 = vld [vmem:[%s319 + $0x2e98] sm:$0xff]
        %v1916 = vld [vmem:[%s319 + $0x2ea0] sm:$0xff]
        %v1917 = vld [vmem:[%s319 + $0x2ea8] sm:$0xff]
        %v1918 = vld [vmem:[%s319 + $0x2eb0] sm:$0xff]
        %v1919 = vld [vmem:[%s319 + $0x2eb8] sm:$0xff]
        %v1920 = vld [vmem:[%s319 + $0x2ec0] sm:$0xff]
        %v1921 = vld [vmem:[%s319 + $0x2ec8] sm:$0xff]
        %v1922 = vld [vmem:[%s319 + $0x2ed0] sm:$0xff]
        %v1923 = vld [vmem:[%s319 + $0x2ed8] sm:$0xff]
        %v1924 = vld [vmem:[%s319 + $0x2ee0] sm:$0xff]
        %v1925 = vld [vmem:[%s319 + $0x2ee8] sm:$0xff]
        %v1926 = vld [vmem:[%s319 + $0x2ef0] sm:$0xff]
        %v1927 = vld [vmem:[%s319 + $0x2ef8] sm:$0xff]
        %v1928 = vld [vmem:[%s319 + $0x2f00] sm:$0xff]
        %v1929 = vld [vmem:[%s319 + $0x2f08] sm:$0xff]
        %v1930 = vld [vmem:[%s319 + $0x2f10] sm:$0xff]
        %v1931 = vld [vmem:[%s319 + $0x2f18] sm:$0xff]
        %v1932 = vld [vmem:[%s319 + $0x2f20] sm:$0xff]
        %v1933 = vld [vmem:[%s319 + $0x2f28] sm:$0xff]
        %v1934 = vld [vmem:[%s319 + $0x2f30] sm:$0xff]
        %v1935 = vld [vmem:[%s319 + $0x2f38] sm:$0xff]
        %v1936 = vld [vmem:[%s319 + $0x2f40] sm:$0xff]
        %v1937 = vld [vmem:[%s319 + $0x2f48] sm:$0xff]
        %v1938 = vld [vmem:[%s319 + $0x2f50] sm:$0xff]
        %v1939 = vld [vmem:[%s319 + $0x2f58] sm:$0xff]
        %v1940 = vld [vmem:[%s319 + $0x2f60] sm:$0xff]
        %v1941 = vld [vmem:[%s319 + $0x2f68] sm:$0xff]
        %v1942 = vld [vmem:[%s319 + $0x2f70] sm:$0xff]
        %v1943 = vld [vmem:[%s319 + $0x2f78] sm:$0xff]
        %v1944 = vld [vmem:[%s319 + $0x2f80] sm:$0xff]
        %v1945 = vld [vmem:[%s319 + $0x2f88] sm:$0xff]
        %v1946 = vld [vmem:[%s319 + $0x2f90] sm:$0xff]
        %v1947 = vld [vmem:[%s319 + $0x2f98] sm:$0xff]
        %v1948 = vld [vmem:[%s319 + $0x2fa0] sm:$0xff]
        %v1949 = vld [vmem:[%s319 + $0x2fa8] sm:$0xff]
        %v1950 = vld [vmem:[%s319 + $0x2fb0] sm:$0xff]
        %v1951 = vld [vmem:[%s319 + $0x2fb8] sm:$0xff]
        %v1952 = vld [vmem:[%s319 + $0x2fc0] sm:$0xff]
        %v1953 = vld [vmem:[%s319 + $0x2fc8] sm:$0xff]
        %v1954 = vld [vmem:[%s319 + $0x2fd0] sm:$0xff]
        %v1955 = vld [vmem:[%s319 + $0x2fd8] sm:$0xff]
        %v1956 = vld [vmem:[%s319 + $0x2fe0] sm:$0xff]
        %v1957 = vld [vmem:[%s319 + $0x2fe8] sm:$0xff]
        %v1958 = vld [vmem:[%s319 + $0x2ff0] sm:$0xff]
        %v1959 = vld [vmem:[%s319 + $0x2ff8] sm:$0xff]
        %v1960 = vld [vmem:[%s329] sm:$0xff]
        %v1962 = vperm.slane %v1960, 0
        %v1963 = vperm.slane %v1960, 1
        %v1964 = vperm.slane %v1960, 2
        %v1965 = vperm.slane %v1960, 3
        %v1966 = vperm.slane %v1960, 4
        %v1967 = vperm.slane %v1960, 5
        %v1968 = vperm.slane %v1960, 6
        %v1969 = vperm.slane %v1960, 7
        %v1990 = vunpack.c.l.b16 %v412
        %v1991 = vunpack.c.h.b16 %v412
        %v1992 = vunpack.c.l.b16 %v413
        %v1993 = vunpack.c.h.b16 %v413
        %v1994 = vunpack.c.l.b16 %v414
        %v1995 = vunpack.c.h.b16 %v414
        %v1996 = vunpack.c.l.b16 %v415
        %v1997 = vunpack.c.h.b16 %v415
        %v1998 = vunpack.c.l.b16 %v416
        %v1999 = vunpack.c.h.b16 %v416
        %v2000 = vunpack.c.l.b16 %v417
        %v2001 = vunpack.c.h.b16 %v417
        %v2002 = vunpack.c.l.b16 %v418
        %v2003 = vunpack.c.h.b16 %v418
        %v2004 = vunpack.c.l.b16 %v419
        %v2005 = vunpack.c.h.b16 %v419
        %v2006 = vunpack.c.l.b16 %v420
        %v2007 = vunpack.c.h.b16 %v420
        %v2008 = vunpack.c.l.b16 %v421
        %v2009 = vunpack.c.h.b16 %v421
        %v2010 = vunpack.c.l.b16 %v422
        %v2011 = vunpack.c.h.b16 %v422
        %v2012 = vunpack.c.l.b16 %v423
        %v2013 = vunpack.c.h.b16 %v423
        %v2014 = vpack.c.b16 %v1990, %v1990
        %v2015 = vpack.c.b16 %v1991, %v1991
        %v2016 = vpack.c.b16 %v1992, %v1992
        %v2017 = vpack.c.b16 %v1993, %v1993
        %v2018 = vpack.c.b16 %v1994, %v1994
        %v2019 = vpack.c.b16 %v1995, %v1995
        %v2020 = vpack.c.b16 %v1996, %v1996
        %v2021 = vpack.c.b16 %v1997, %v1997
        %v2022 = vpack.c.b16 %v1998, %v1998
        %v2023 = vpack.c.b16 %v1999, %v1999
        %v2024 = vpack.c.b16 %v2000, %v2000
        %v2025 = vpack.c.b16 %v2001, %v2001
        %v2026 = vpack.c.b16 %v2002, %v2002
        %v2027 = vpack.c.b16 %v2003, %v2003
        %v2028 = vpack.c.b16 %v2004, %v2004
        %v2029 = vpack.c.b16 %v2005, %v2005
        %v2030 = vpack.c.b16 %v2006, %v2006
        %v2031 = vpack.c.b16 %v2007, %v2007
        %v2032 = vpack.c.b16 %v2008, %v2008
        %v2033 = vpack.c.b16 %v2009, %v2009
        %v2034 = vpack.c.b16 %v2010, %v2010
        %v2035 = vpack.c.b16 %v2011, %v2011
        %v2036 = vpack.c.b16 %v2012, %v2012
        %v2037 = vpack.c.b16 %v2013, %v2013
        %v3598 = vunpack.c.l.b16 %v424
        %v3599 = vunpack.c.h.b16 %v424
        %v3600 = vunpack.c.l.b16 %v425
        %v3601 = vunpack.c.h.b16 %v425
        %v3602 = vunpack.c.l.b16 %v426
        %v3603 = vunpack.c.h.b16 %v426
        %v3604 = vunpack.c.l.b16 %v427
        %v3605 = vunpack.c.h.b16 %v427
        %v3606 = vunpack.c.l.b16 %v428
        %v3607 = vunpack.c.h.b16 %v428
        %v3608 = vunpack.c.l.b16 %v429
        %v3609 = vunpack.c.h.b16 %v429
        %v3610 = vunpack.c.l.b16 %v430
        %v3611 = vunpack.c.h.b16 %v430
        %v3612 = vunpack.c.l.b16 %v431
        %v3613 = vunpack.c.h.b16 %v431
        %v3614 = vunpack.c.l.b16 %v432
        %v3615 = vunpack.c.h.b16 %v432
        %v3616 = vunpack.c.l.b16 %v433
        %v3617 = vunpack.c.h.b16 %v433
        %v3618 = vunpack.c.l.b16 %v434
        %v3619 = vunpack.c.h.b16 %v434
        %v3620 = vunpack.c.l.b16 %v435
        %v3621 = vunpack.c.h.b16 %v435
        %v3622 = vunpack.c.l.b16 %v436
        %v3623 = vunpack.c.h.b16 %v436
        %v3624 = vunpack.c.l.b16 %v437
        %v3625 = vunpack.c.h.b16 %v437
        %v3626 = vunpack.c.l.b16 %v438
        %v3627 = vunpack.c.h.b16 %v438
        %v3628 = vunpack.c.l.b16 %v439
        %v3629 = vunpack.c.h.b16 %v439
        %v3630 = vunpack.c.l.b16 %v440
        %v3631 = vunpack.c.h.b16 %v440
        %v3632 = vunpack.c.l.b16 %v441
        %v3633 = vunpack.c.h.b16 %v441
        %v3634 = vunpack.c.l.b16 %v442
        %v3635 = vunpack.c.h.b16 %v442
        %v3636 = vunpack.c.l.b16 %v443
        %v3637 = vunpack.c.h.b16 %v443
        %v3638 = vunpack.c.l.b16 %v444
        %v3639 = vunpack.c.h.b16 %v444
        %v3640 = vunpack.c.l.b16 %v445
        %v3641 = vunpack.c.h.b16 %v445
        %v3642 = vunpack.c.l.b16 %v446
        %v3643 = vunpack.c.h.b16 %v446
        %v3644 = vunpack.c.l.b16 %v447
        %v3645 = vunpack.c.h.b16 %v447
        %v3646 = vunpack.c.l.b16 %v448
        %v3647 = vunpack.c.h.b16 %v448
        %v3648 = vunpack.c.l.b16 %v449
        %v3649 = vunpack.c.h.b16 %v449
        %v3650 = vunpack.c.l.b16 %v450
        %v3651 = vunpack.c.h.b16 %v450
        %v3652 = vunpack.c.l.b16 %v451
        %v3653 = vunpack.c.h.b16 %v451
        %v3654 = vunpack.c.l.b16 %v452
        %v3655 = vunpack.c.h.b16 %v452
        %v3656 = vunpack.c.l.b16 %v453
        %v3657 = vunpack.c.h.b16 %v453
        %v3658 = vunpack.c.l.b16 %v454
        %v3659 = vunpack.c.h.b16 %v454
        %v3660 = vunpack.c.l.b16 %v455
        %v3661 = vunpack.c.h.b16 %v455
        %v3662 = vunpack.c.l.b16 %v456
        %v3663 = vunpack.c.h.b16 %v456
        %v3664 = vunpack.c.l.b16 %v457
        %v3665 = vunpack.c.h.b16 %v457
        %v3666 = vunpack.c.l.b16 %v458
        %v3667 = vunpack.c.h.b16 %v458
        %v3668 = vunpack.c.l.b16 %v459
        %v3669 = vunpack.c.h.b16 %v459
        %v3670 = vunpack.c.l.b16 %v460
        %v3671 = vunpack.c.h.b16 %v460
        %v3672 = vunpack.c.l.b16 %v461
        %v3673 = vunpack.c.h.b16 %v461
        %v3674 = vunpack.c.l.b16 %v462
        %v3675 = vunpack.c.h.b16 %v462
        %v3676 = vunpack.c.l.b16 %v463
        %v3677 = vunpack.c.h.b16 %v463
        %v3678 = vunpack.c.l.b16 %v464
        %v3679 = vunpack.c.h.b16 %v464
        %v3680 = vunpack.c.l.b16 %v465
        %v3681 = vunpack.c.h.b16 %v465
        %v3682 = vunpack.c.l.b16 %v466
        %v3683 = vunpack.c.h.b16 %v466
        %v3684 = vunpack.c.l.b16 %v467
        %v3685 = vunpack.c.h.b16 %v467
        %v3686 = vunpack.c.l.b16 %v468
        %v3687 = vunpack.c.h.b16 %v468
        %v3688 = vunpack.c.l.b16 %v469
        %v3689 = vunpack.c.h.b16 %v469
        %v3690 = vunpack.c.l.b16 %v470
        %v3691 = vunpack.c.h.b16 %v470
        %v3692 = vunpack.c.l.b16 %v471
        %v3693 = vunpack.c.h.b16 %v471
        %v3694 = vunpack.c.l.b16 %v472
        %v3695 = vunpack.c.h.b16 %v472
        %v3696 = vunpack.c.l.b16 %v473
        %v3697 = vunpack.c.h.b16 %v473
        %v3698 = vunpack.c.l.b16 %v474
        %v3699 = vunpack.c.h.b16 %v474
        %v3700 = vunpack.c.l.b16 %v475
        %v3701 = vunpack.c.h.b16 %v475
        %v3702 = vunpack.c.l.b16 %v476
        %v3703 = vunpack.c.h.b16 %v476
        %v3704 = vunpack.c.l.b16 %v477
        %v3705 = vunpack.c.h.b16 %v477
        %v3706 = vunpack.c.l.b16 %v478
        %v3707 = vunpack.c.h.b16 %v478
        %v3708 = vunpack.c.l.b16 %v479
        %v3709 = vunpack.c.h.b16 %v479
        %v3710 = vunpack.c.l.b16 %v480
        %v3711 = vunpack.c.h.b16 %v480
        %v3712 = vunpack.c.l.b16 %v481
        %v3713 = vunpack.c.h.b16 %v481
        %v3714 = vunpack.c.l.b16 %v482
        %v3715 = vunpack.c.h.b16 %v482
        %v3716 = vunpack.c.l.b16 %v483
        %v3717 = vunpack.c.h.b16 %v483
        %v3718 = vunpack.c.l.b16 %v484
        %v3719 = vunpack.c.h.b16 %v484
        %v3720 = vunpack.c.l.b16 %v485
        %v3721 = vunpack.c.h.b16 %v485
        %v3722 = vunpack.c.l.b16 %v486
        %v3723 = vunpack.c.h.b16 %v486
        %v3724 = vunpack.c.l.b16 %v487
        %v3725 = vunpack.c.h.b16 %v487
        %v3726 = vunpack.c.l.b16 %v488
        %v3727 = vunpack.c.h.b16 %v488
        %v3728 = vunpack.c.l.b16 %v489
        %v3729 = vunpack.c.h.b16 %v489
        %v3730 = vunpack.c.l.b16 %v490
        %v3731 = vunpack.c.h.b16 %v490
        %v3732 = vunpack.c.l.b16 %v491
        %v3733 = vunpack.c.h.b16 %v491
        %v3734 = vunpack.c.l.b16 %v492
        %v3735 = vunpack.c.h.b16 %v492
        %v3736 = vunpack.c.l.b16 %v493
        %v3737 = vunpack.c.h.b16 %v493
        %v3738 = vunpack.c.l.b16 %v494
        %v3739 = vunpack.c.h.b16 %v494
        %v3740 = vunpack.c.l.b16 %v495
        %v3741 = vunpack.c.h.b16 %v495
        %v3742 = vunpack.c.l.b16 %v496
        %v3743 = vunpack.c.h.b16 %v496
        %v3744 = vunpack.c.l.b16 %v497
        %v3745 = vunpack.c.h.b16 %v497
        %v3746 = vunpack.c.l.b16 %v498
        %v3747 = vunpack.c.h.b16 %v498
        %v3748 = vunpack.c.l.b16 %v499
        %v3749 = vunpack.c.h.b16 %v499
        %v3750 = vunpack.c.l.b16 %v500
        %v3751 = vunpack.c.h.b16 %v500
        %v3752 = vunpack.c.l.b16 %v501
        %v3753 = vunpack.c.h.b16 %v501
        %v3754 = vunpack.c.l.b16 %v502
        %v3755 = vunpack.c.h.b16 %v502
        %v3756 = vunpack.c.l.b16 %v503
        %v3757 = vunpack.c.h.b16 %v503
        %v3758 = vunpack.c.l.b16 %v504
        %v3759 = vunpack.c.h.b16 %v504
        %v3760 = vunpack.c.l.b16 %v505
        %v3761 = vunpack.c.h.b16 %v505
        %v3762 = vunpack.c.l.b16 %v506
        %v3763 = vunpack.c.h.b16 %v506
        %v3764 = vunpack.c.l.b16 %v507
        %v3765 = vunpack.c.h.b16 %v507
        %v3766 = vunpack.c.l.b16 %v508
        %v3767 = vunpack.c.h.b16 %v508
        %v3768 = vunpack.c.l.b16 %v509
        %v3769 = vunpack.c.h.b16 %v509
        %v3770 = vunpack.c.l.b16 %v510
        %v3771 = vunpack.c.h.b16 %v510
        %v3772 = vunpack.c.l.b16 %v511
        %v3773 = vunpack.c.h.b16 %v511
        %v3774 = vunpack.c.l.b16 %v512
        %v3775 = vunpack.c.h.b16 %v512
        %v3776 = vunpack.c.l.b16 %v513
        %v3777 = vunpack.c.h.b16 %v513
        %v3778 = vunpack.c.l.b16 %v514
        %v3779 = vunpack.c.h.b16 %v514
        %v3780 = vunpack.c.l.b16 %v515
        %v3781 = vunpack.c.h.b16 %v515
        %v3782 = vunpack.c.l.b16 %v516
        %v3783 = vunpack.c.h.b16 %v516
        %v3784 = vunpack.c.l.b16 %v517
        %v3785 = vunpack.c.h.b16 %v517
        %v3786 = vunpack.c.l.b16 %v518
        %v3787 = vunpack.c.h.b16 %v518
        %v3788 = vunpack.c.l.b16 %v519
        %v3789 = vunpack.c.h.b16 %v519
        %v3790 = vunpack.c.l.b16 %v520
        %v3791 = vunpack.c.h.b16 %v520
        %v3792 = vunpack.c.l.b16 %v521
        %v3793 = vunpack.c.h.b16 %v521
        %v3794 = vunpack.c.l.b16 %v522
        %v3795 = vunpack.c.h.b16 %v522
        %v3796 = vunpack.c.l.b16 %v523
        %v3797 = vunpack.c.h.b16 %v523
        %v3798 = vunpack.c.l.b16 %v524
        %v3799 = vunpack.c.h.b16 %v524
        %v3800 = vunpack.c.l.b16 %v525
        %v3801 = vunpack.c.h.b16 %v525
        %v3802 = vunpack.c.l.b16 %v526
        %v3803 = vunpack.c.h.b16 %v526
        %v3804 = vunpack.c.l.b16 %v527
        %v3805 = vunpack.c.h.b16 %v527
        %v3806 = vunpack.c.l.b16 %v528
        %v3807 = vunpack.c.h.b16 %v528
        %v3808 = vunpack.c.l.b16 %v529
        %v3809 = vunpack.c.h.b16 %v529
        %v3810 = vunpack.c.l.b16 %v530
        %v3811 = vunpack.c.h.b16 %v530
        %v3812 = vunpack.c.l.b16 %v531
        %v3813 = vunpack.c.h.b16 %v531
        %v3814 = vunpack.c.l.b16 %v532
        %v3815 = vunpack.c.h.b16 %v532
        %v3816 = vunpack.c.l.b16 %v533
        %v3817 = vunpack.c.h.b16 %v533
        %v3818 = vunpack.c.l.b16 %v534
        %v3819 = vunpack.c.h.b16 %v534
        %v3820 = vunpack.c.l.b16 %v535
        %v3821 = vunpack.c.h.b16 %v535
        %v3822 = vunpack.c.l.b16 %v536
        %v3823 = vunpack.c.h.b16 %v536
        %v3824 = vunpack.c.l.b16 %v537
        %v3825 = vunpack.c.h.b16 %v537
        %v3826 = vunpack.c.l.b16 %v538
        %v3827 = vunpack.c.h.b16 %v538
        %v3828 = vunpack.c.l.b16 %v539
        %v3829 = vunpack.c.h.b16 %v539
        %v3830 = vunpack.c.l.b16 %v540
        %v3831 = vunpack.c.h.b16 %v540
        %v3832 = vunpack.c.l.b16 %v541
        %v3833 = vunpack.c.h.b16 %v541
        %v3834 = vunpack.c.l.b16 %v542
        %v3835 = vunpack.c.h.b16 %v542
        %v3836 = vunpack.c.l.b16 %v543
        %v3837 = vunpack.c.h.b16 %v543
        %v3838 = vunpack.c.l.b16 %v544
        %v3839 = vunpack.c.h.b16 %v544
        %v3840 = vunpack.c.l.b16 %v545
        %v3841 = vunpack.c.h.b16 %v545
        %v3842 = vunpack.c.l.b16 %v546
        %v3843 = vunpack.c.h.b16 %v546
        %v3844 = vunpack.c.l.b16 %v547
        %v3845 = vunpack.c.h.b16 %v547
        %v3846 = vunpack.c.l.b16 %v548
        %v3847 = vunpack.c.h.b16 %v548
        %v3848 = vunpack.c.l.b16 %v549
        %v3849 = vunpack.c.h.b16 %v549
        %v3850 = vunpack.c.l.b16 %v550
        %v3851 = vunpack.c.h.b16 %v550
        %v3852 = vunpack.c.l.b16 %v551
        %v3853 = vunpack.c.h.b16 %v551
        %v3854 = vunpack.c.l.b16 %v552
        %v3855 = vunpack.c.h.b16 %v552
        %v3856 = vunpack.c.l.b16 %v553
        %v3857 = vunpack.c.h.b16 %v553
        %v3858 = vunpack.c.l.b16 %v554
        %v3859 = vunpack.c.h.b16 %v554
        %v3860 = vunpack.c.l.b16 %v555
        %v3861 = vunpack.c.h.b16 %v555
        %v3862 = vunpack.c.l.b16 %v556
        %v3863 = vunpack.c.h.b16 %v556
        %v3864 = vunpack.c.l.b16 %v557
        %v3865 = vunpack.c.h.b16 %v557
        %v3866 = vunpack.c.l.b16 %v558
        %v3867 = vunpack.c.h.b16 %v558
        %v3868 = vunpack.c.l.b16 %v559
        %v3869 = vunpack.c.h.b16 %v559
        %v3870 = vunpack.c.l.b16 %v560
        %v3871 = vunpack.c.h.b16 %v560
        %v3872 = vunpack.c.l.b16 %v561
        %v3873 = vunpack.c.h.b16 %v561
        %v3874 = vunpack.c.l.b16 %v562
        %v3875 = vunpack.c.h.b16 %v562
        %v3876 = vunpack.c.l.b16 %v563
        %v3877 = vunpack.c.h.b16 %v563
        %v3878 = vunpack.c.l.b16 %v564
        %v3879 = vunpack.c.h.b16 %v564
        %v3880 = vunpack.c.l.b16 %v565
        %v3881 = vunpack.c.h.b16 %v565
        %v3882 = vunpack.c.l.b16 %v566
        %v3883 = vunpack.c.h.b16 %v566
        %v3884 = vunpack.c.l.b16 %v567
        %v3885 = vunpack.c.h.b16 %v567
        %v3886 = vunpack.c.l.b16 %v568
        %v3887 = vunpack.c.h.b16 %v568
        %v3888 = vunpack.c.l.b16 %v569
        %v3889 = vunpack.c.h.b16 %v569
        %v3890 = vunpack.c.l.b16 %v570
        %v3891 = vunpack.c.h.b16 %v570
        %v3892 = vunpack.c.l.b16 %v571
        %v3893 = vunpack.c.h.b16 %v571
        %v3894 = vunpack.c.l.b16 %v572
        %v3895 = vunpack.c.h.b16 %v572
        %v3896 = vunpack.c.l.b16 %v573
        %v3897 = vunpack.c.h.b16 %v573
        %v3898 = vunpack.c.l.b16 %v574
        %v3899 = vunpack.c.h.b16 %v574
        %v3900 = vunpack.c.l.b16 %v575
        %v3901 = vunpack.c.h.b16 %v575
        %v3902 = vunpack.c.l.b16 %v576
        %v3903 = vunpack.c.h.b16 %v576
        %v3904 = vunpack.c.l.b16 %v577
        %v3905 = vunpack.c.h.b16 %v577
        %v3906 = vunpack.c.l.b16 %v578
        %v3907 = vunpack.c.h.b16 %v578
        %v3908 = vunpack.c.l.b16 %v579
        %v3909 = vunpack.c.h.b16 %v579
        %v3910 = vunpack.c.l.b16 %v580
        %v3911 = vunpack.c.h.b16 %v580
        %v3912 = vunpack.c.l.b16 %v581
        %v3913 = vunpack.c.h.b16 %v581
        %v3914 = vunpack.c.l.b16 %v582
        %v3915 = vunpack.c.h.b16 %v582
        %v3916 = vunpack.c.l.b16 %v583
        %v3917 = vunpack.c.h.b16 %v583
        %v3918 = vunpack.c.l.b16 %v584
        %v3919 = vunpack.c.h.b16 %v584
        %v3920 = vunpack.c.l.b16 %v585
        %v3921 = vunpack.c.h.b16 %v585
        %v3922 = vunpack.c.l.b16 %v586
        %v3923 = vunpack.c.h.b16 %v586
        %v3924 = vunpack.c.l.b16 %v587
        %v3925 = vunpack.c.h.b16 %v587
        %v3926 = vunpack.c.l.b16 %v588
        %v3927 = vunpack.c.h.b16 %v588
        %v3928 = vunpack.c.l.b16 %v589
        %v3929 = vunpack.c.h.b16 %v589
        %v3930 = vunpack.c.l.b16 %v590
        %v3931 = vunpack.c.h.b16 %v590
        %v3932 = vunpack.c.l.b16 %v591
        %v3933 = vunpack.c.h.b16 %v591
        %v3934 = vunpack.c.l.b16 %v592
        %v3935 = vunpack.c.h.b16 %v592
        %v3936 = vunpack.c.l.b16 %v593
        %v3937 = vunpack.c.h.b16 %v593
        %v3938 = vunpack.c.l.b16 %v594
        %v3939 = vunpack.c.h.b16 %v594
        %v3940 = vunpack.c.l.b16 %v595
        %v3941 = vunpack.c.h.b16 %v595
        %v3942 = vunpack.c.l.b16 %v596
        %v3943 = vunpack.c.h.b16 %v596
        %v3944 = vunpack.c.l.b16 %v597
        %v3945 = vunpack.c.h.b16 %v597
        %v3946 = vunpack.c.l.b16 %v598
        %v3947 = vunpack.c.h.b16 %v598
        %v3948 = vunpack.c.l.b16 %v599
        %v3949 = vunpack.c.h.b16 %v599
        %v3950 = vunpack.c.l.b16 %v600
        %v3951 = vunpack.c.h.b16 %v600
        %v3952 = vunpack.c.l.b16 %v601
        %v3953 = vunpack.c.h.b16 %v601
        %v3954 = vunpack.c.l.b16 %v602
        %v3955 = vunpack.c.h.b16 %v602
        %v3956 = vunpack.c.l.b16 %v603
        %v3957 = vunpack.c.h.b16 %v603
        %v3958 = vunpack.c.l.b16 %v604
        %v3959 = vunpack.c.h.b16 %v604
        %v3960 = vunpack.c.l.b16 %v605
        %v3961 = vunpack.c.h.b16 %v605
        %v3962 = vunpack.c.l.b16 %v606
        %v3963 = vunpack.c.h.b16 %v606
        %v3964 = vunpack.c.l.b16 %v607
        %v3965 = vunpack.c.h.b16 %v607
        %v3966 = vunpack.c.l.b16 %v608
        %v3967 = vunpack.c.h.b16 %v608
        %v3968 = vunpack.c.l.b16 %v609
        %v3969 = vunpack.c.h.b16 %v609
        %v3970 = vunpack.c.l.b16 %v610
        %v3971 = vunpack.c.h.b16 %v610
        %v3972 = vunpack.c.l.b16 %v611
        %v3973 = vunpack.c.h.b16 %v611
        %v3974 = vunpack.c.l.b16 %v612
        %v3975 = vunpack.c.h.b16 %v612
        %v3976 = vunpack.c.l.b16 %v613
        %v3977 = vunpack.c.h.b16 %v613
        %v3978 = vunpack.c.l.b16 %v614
        %v3979 = vunpack.c.h.b16 %v614
        %v3980 = vunpack.c.l.b16 %v615
        %v3981 = vunpack.c.h.b16 %v615
        %v3982 = vunpack.c.l.b16 %v616
        %v3983 = vunpack.c.h.b16 %v616
        %v3984 = vunpack.c.l.b16 %v617
        %v3985 = vunpack.c.h.b16 %v617
        %v3986 = vunpack.c.l.b16 %v618
        %v3987 = vunpack.c.h.b16 %v618
        %v3988 = vunpack.c.l.b16 %v619
        %v3989 = vunpack.c.h.b16 %v619
        %v3990 = vunpack.c.l.b16 %v620
        %v3991 = vunpack.c.h.b16 %v620
        %v3992 = vunpack.c.l.b16 %v621
        %v3993 = vunpack.c.h.b16 %v621
        %v3994 = vunpack.c.l.b16 %v622
        %v3995 = vunpack.c.h.b16 %v622
        %v3996 = vunpack.c.l.b16 %v623
        %v3997 = vunpack.c.h.b16 %v623
        %v3998 = vunpack.c.l.b16 %v624
        %v3999 = vunpack.c.h.b16 %v624
        %v4000 = vunpack.c.l.b16 %v625
        %v4001 = vunpack.c.h.b16 %v625
        %v4002 = vunpack.c.l.b16 %v626
        %v4003 = vunpack.c.h.b16 %v626
        %v4004 = vunpack.c.l.b16 %v627
        %v4005 = vunpack.c.h.b16 %v627
        %v4006 = vunpack.c.l.b16 %v628
        %v4007 = vunpack.c.h.b16 %v628
        %v4008 = vunpack.c.l.b16 %v629
        %v4009 = vunpack.c.h.b16 %v629
        %v4010 = vunpack.c.l.b16 %v630
        %v4011 = vunpack.c.h.b16 %v630
        %v4012 = vunpack.c.l.b16 %v631
        %v4013 = vunpack.c.h.b16 %v631
        %v4014 = vunpack.c.l.b16 %v632
        %v4015 = vunpack.c.h.b16 %v632
        %v4016 = vunpack.c.l.b16 %v633
        %v4017 = vunpack.c.h.b16 %v633
        %v4018 = vunpack.c.l.b16 %v634
        %v4019 = vunpack.c.h.b16 %v634
        %v4020 = vunpack.c.l.b16 %v635
        %v4021 = vunpack.c.h.b16 %v635
        %v4022 = vunpack.c.l.b16 %v636
        %v4023 = vunpack.c.h.b16 %v636
        %v4024 = vunpack.c.l.b16 %v637
        %v4025 = vunpack.c.h.b16 %v637
        %v4026 = vunpack.c.l.b16 %v638
        %v4027 = vunpack.c.h.b16 %v638
        %v4028 = vunpack.c.l.b16 %v639
        %v4029 = vunpack.c.h.b16 %v639
        %v4030 = vunpack.c.l.b16 %v640
        %v4031 = vunpack.c.h.b16 %v640
        %v4032 = vunpack.c.l.b16 %v641
        %v4033 = vunpack.c.h.b16 %v641
        %v4034 = vunpack.c.l.b16 %v642
        %v4035 = vunpack.c.h.b16 %v642
        %v4036 = vunpack.c.l.b16 %v643
        %v4037 = vunpack.c.h.b16 %v643
        %v4038 = vunpack.c.l.b16 %v644
        %v4039 = vunpack.c.h.b16 %v644
        %v4040 = vunpack.c.l.b16 %v645
        %v4041 = vunpack.c.h.b16 %v645
        %v4042 = vunpack.c.l.b16 %v646
        %v4043 = vunpack.c.h.b16 %v646
        %v4044 = vunpack.c.l.b16 %v647
        %v4045 = vunpack.c.h.b16 %v647
        %v4046 = vunpack.c.l.b16 %v648
        %v4047 = vunpack.c.h.b16 %v648
        %v4048 = vunpack.c.l.b16 %v649
        %v4049 = vunpack.c.h.b16 %v649
        %v4050 = vunpack.c.l.b16 %v650
        %v4051 = vunpack.c.h.b16 %v650
        %v4052 = vunpack.c.l.b16 %v651
        %v4053 = vunpack.c.h.b16 %v651
        %v4054 = vunpack.c.l.b16 %v652
        %v4055 = vunpack.c.h.b16 %v652
        %v4056 = vunpack.c.l.b16 %v653
        %v4057 = vunpack.c.h.b16 %v653
        %v4058 = vunpack.c.l.b16 %v654
        %v4059 = vunpack.c.h.b16 %v654
        %v4060 = vunpack.c.l.b16 %v655
        %v4061 = vunpack.c.h.b16 %v655
        %v4062 = vunpack.c.l.b16 %v656
        %v4063 = vunpack.c.h.b16 %v656
        %v4064 = vunpack.c.l.b16 %v657
        %v4065 = vunpack.c.h.b16 %v657
        %v4066 = vunpack.c.l.b16 %v658
        %v4067 = vunpack.c.h.b16 %v658
        %v4068 = vunpack.c.l.b16 %v659
        %v4069 = vunpack.c.h.b16 %v659
        %v4070 = vunpack.c.l.b16 %v660
        %v4071 = vunpack.c.h.b16 %v660
        %v4072 = vunpack.c.l.b16 %v661
        %v4073 = vunpack.c.h.b16 %v661
        %v4074 = vunpack.c.l.b16 %v662
        %v4075 = vunpack.c.h.b16 %v662
        %v4076 = vunpack.c.l.b16 %v663
        %v4077 = vunpack.c.h.b16 %v663
        %v4078 = vunpack.c.l.b16 %v664
        %v4079 = vunpack.c.h.b16 %v664
        %v4080 = vunpack.c.l.b16 %v665
        %v4081 = vunpack.c.h.b16 %v665
        %v4082 = vunpack.c.l.b16 %v666
        %v4083 = vunpack.c.h.b16 %v666
        %v4084 = vunpack.c.l.b16 %v667
        %v4085 = vunpack.c.h.b16 %v667
        %v4086 = vunpack.c.l.b16 %v668
        %v4087 = vunpack.c.h.b16 %v668
        %v4088 = vunpack.c.l.b16 %v669
        %v4089 = vunpack.c.h.b16 %v669
        %v4090 = vunpack.c.l.b16 %v670
        %v4091 = vunpack.c.h.b16 %v670
        %v4092 = vunpack.c.l.b16 %v671
        %v4093 = vunpack.c.h.b16 %v671
        %v4094 = vunpack.c.l.b16 %v672
        %v4095 = vunpack.c.h.b16 %v672
        %v4096 = vunpack.c.l.b16 %v673
        %v4097 = vunpack.c.h.b16 %v673
        %v4098 = vunpack.c.l.b16 %v674
        %v4099 = vunpack.c.h.b16 %v674
        %v4100 = vunpack.c.l.b16 %v675
        %v4101 = vunpack.c.h.b16 %v675
        %v4102 = vunpack.c.l.b16 %v676
        %v4103 = vunpack.c.h.b16 %v676
        %v4104 = vunpack.c.l.b16 %v677
        %v4105 = vunpack.c.h.b16 %v677
        %v4106 = vunpack.c.l.b16 %v678
        %v4107 = vunpack.c.h.b16 %v678
        %v4108 = vunpack.c.l.b16 %v679
        %v4109 = vunpack.c.h.b16 %v679
        %v4110 = vunpack.c.l.b16 %v680
        %v4111 = vunpack.c.h.b16 %v680
        %v4112 = vunpack.c.l.b16 %v681
        %v4113 = vunpack.c.h.b16 %v681
        %v4114 = vunpack.c.l.b16 %v682
        %v4115 = vunpack.c.h.b16 %v682
        %v4116 = vunpack.c.l.b16 %v683
        %v4117 = vunpack.c.h.b16 %v683
        %v4118 = vunpack.c.l.b16 %v684
        %v4119 = vunpack.c.h.b16 %v684
        %v4120 = vunpack.c.l.b16 %v685
        %v4121 = vunpack.c.h.b16 %v685
        %v4122 = vunpack.c.l.b16 %v686
        %v4123 = vunpack.c.h.b16 %v686
        %v4124 = vunpack.c.l.b16 %v687
        %v4125 = vunpack.c.h.b16 %v687
        %v4126 = vunpack.c.l.b16 %v688
        %v4127 = vunpack.c.h.b16 %v688
        %v4128 = vunpack.c.l.b16 %v689
        %v4129 = vunpack.c.h.b16 %v689
        %v4130 = vunpack.c.l.b16 %v690
        %v4131 = vunpack.c.h.b16 %v690
        %v4132 = vunpack.c.l.b16 %v691
        %v4133 = vunpack.c.h.b16 %v691
        %v4134 = vunpack.c.l.b16 %v692
        %v4135 = vunpack.c.h.b16 %v692
        %v4136 = vunpack.c.l.b16 %v693
        %v4137 = vunpack.c.h.b16 %v693
        %v4138 = vunpack.c.l.b16 %v694
        %v4139 = vunpack.c.h.b16 %v694
        %v4140 = vunpack.c.l.b16 %v695
        %v4141 = vunpack.c.h.b16 %v695
        %v4142 = vunpack.c.l.b16 %v696
        %v4143 = vunpack.c.h.b16 %v696
        %v4144 = vunpack.c.l.b16 %v697
        %v4145 = vunpack.c.h.b16 %v697
        %v4146 = vunpack.c.l.b16 %v698
        %v4147 = vunpack.c.h.b16 %v698
        %v4148 = vunpack.c.l.b16 %v699
        %v4149 = vunpack.c.h.b16 %v699
        %v4150 = vunpack.c.l.b16 %v700
        %v4151 = vunpack.c.h.b16 %v700
        %v4152 = vunpack.c.l.b16 %v701
        %v4153 = vunpack.c.h.b16 %v701
        %v4154 = vunpack.c.l.b16 %v702
        %v4155 = vunpack.c.h.b16 %v702
        %v4156 = vunpack.c.l.b16 %v703
        %v4157 = vunpack.c.h.b16 %v703
        %v4158 = vunpack.c.l.b16 %v704
        %v4159 = vunpack.c.h.b16 %v704
        %v4160 = vunpack.c.l.b16 %v705
        %v4161 = vunpack.c.h.b16 %v705
        %v4162 = vunpack.c.l.b16 %v706
        %v4163 = vunpack.c.h.b16 %v706
        %v4164 = vunpack.c.l.b16 %v707
        %v4165 = vunpack.c.h.b16 %v707
        %v4166 = vunpack.c.l.b16 %v708
        %v4167 = vunpack.c.h.b16 %v708
        %v4168 = vunpack.c.l.b16 %v709
        %v4169 = vunpack.c.h.b16 %v709
        %v4170 = vunpack.c.l.b16 %v710
        %v4171 = vunpack.c.h.b16 %v710
        %v4172 = vunpack.c.l.b16 %v711
        %v4173 = vunpack.c.h.b16 %v711
        %v4174 = vunpack.c.l.b16 %v712
        %v4175 = vunpack.c.h.b16 %v712
        %v4176 = vunpack.c.l.b16 %v713
        %v4177 = vunpack.c.h.b16 %v713
        %v4178 = vunpack.c.l.b16 %v714
        %v4179 = vunpack.c.h.b16 %v714
        %v4180 = vunpack.c.l.b16 %v715
        %v4181 = vunpack.c.h.b16 %v715
        %v4182 = vunpack.c.l.b16 %v716
        %v4183 = vunpack.c.h.b16 %v716
        %v4184 = vunpack.c.l.b16 %v717
        %v4185 = vunpack.c.h.b16 %v717
        %v4186 = vunpack.c.l.b16 %v718
        %v4187 = vunpack.c.h.b16 %v718
        %v4188 = vunpack.c.l.b16 %v719
        %v4189 = vunpack.c.h.b16 %v719
        %v4190 = vunpack.c.l.b16 %v720
        %v4191 = vunpack.c.h.b16 %v720
        %v4192 = vunpack.c.l.b16 %v721
        %v4193 = vunpack.c.h.b16 %v721
        %v4194 = vunpack.c.l.b16 %v722
        %v4195 = vunpack.c.h.b16 %v722
        %v4196 = vunpack.c.l.b16 %v723
        %v4197 = vunpack.c.h.b16 %v723
        %v4198 = vunpack.c.l.b16 %v724
        %v4199 = vunpack.c.h.b16 %v724
        %v4200 = vunpack.c.l.b16 %v725
        %v4201 = vunpack.c.h.b16 %v725
        %v4202 = vunpack.c.l.b16 %v726
        %v4203 = vunpack.c.h.b16 %v726
        %v4204 = vunpack.c.l.b16 %v727
        %v4205 = vunpack.c.h.b16 %v727
        %v4206 = vunpack.c.l.b16 %v728
        %v4207 = vunpack.c.h.b16 %v728
        %v4208 = vunpack.c.l.b16 %v729
        %v4209 = vunpack.c.h.b16 %v729
        %v4210 = vunpack.c.l.b16 %v730
        %v4211 = vunpack.c.h.b16 %v730
        %v4212 = vunpack.c.l.b16 %v731
        %v4213 = vunpack.c.h.b16 %v731
        %v4214 = vunpack.c.l.b16 %v732
        %v4215 = vunpack.c.h.b16 %v732
        %v4216 = vunpack.c.l.b16 %v733
        %v4217 = vunpack.c.h.b16 %v733
        %v4218 = vunpack.c.l.b16 %v734
        %v4219 = vunpack.c.h.b16 %v734
        %v4220 = vunpack.c.l.b16 %v735
        %v4221 = vunpack.c.h.b16 %v735
        %v4222 = vunpack.c.l.b16 %v736
        %v4223 = vunpack.c.h.b16 %v736
        %v4224 = vunpack.c.l.b16 %v737
        %v4225 = vunpack.c.h.b16 %v737
        %v4226 = vunpack.c.l.b16 %v738
        %v4227 = vunpack.c.h.b16 %v738
        %v4228 = vunpack.c.l.b16 %v739
        %v4229 = vunpack.c.h.b16 %v739
        %v4230 = vunpack.c.l.b16 %v740
        %v4231 = vunpack.c.h.b16 %v740
        %v4232 = vunpack.c.l.b16 %v741
        %v4233 = vunpack.c.h.b16 %v741
        %v4234 = vunpack.c.l.b16 %v742
        %v4235 = vunpack.c.h.b16 %v742
        %v4236 = vunpack.c.l.b16 %v743
        %v4237 = vunpack.c.h.b16 %v743
        %v4238 = vunpack.c.l.b16 %v744
        %v4239 = vunpack.c.h.b16 %v744
        %v4240 = vunpack.c.l.b16 %v745
        %v4241 = vunpack.c.h.b16 %v745
        %v4242 = vunpack.c.l.b16 %v746
        %v4243 = vunpack.c.h.b16 %v746
        %v4244 = vunpack.c.l.b16 %v747
        %v4245 = vunpack.c.h.b16 %v747
        %v4246 = vunpack.c.l.b16 %v748
        %v4247 = vunpack.c.h.b16 %v748
        %v4248 = vunpack.c.l.b16 %v749
        %v4249 = vunpack.c.h.b16 %v749
        %v4250 = vunpack.c.l.b16 %v750
        %v4251 = vunpack.c.h.b16 %v750
        %v4252 = vunpack.c.l.b16 %v751
        %v4253 = vunpack.c.h.b16 %v751
        %v4254 = vunpack.c.l.b16 %v752
        %v4255 = vunpack.c.h.b16 %v752
        %v4256 = vunpack.c.l.b16 %v753
        %v4257 = vunpack.c.h.b16 %v753
        %v4258 = vunpack.c.l.b16 %v754
        %v4259 = vunpack.c.h.b16 %v754
        %v4260 = vunpack.c.l.b16 %v755
        %v4261 = vunpack.c.h.b16 %v755
        %v4262 = vunpack.c.l.b16 %v756
        %v4263 = vunpack.c.h.b16 %v756
        %v4264 = vunpack.c.l.b16 %v757
        %v4265 = vunpack.c.h.b16 %v757
        %v4266 = vunpack.c.l.b16 %v758
        %v4267 = vunpack.c.h.b16 %v758
        %v4268 = vunpack.c.l.b16 %v759
        %v4269 = vunpack.c.h.b16 %v759
        %v4270 = vunpack.c.l.b16 %v760
        %v4271 = vunpack.c.h.b16 %v760
        %v4272 = vunpack.c.l.b16 %v761
        %v4273 = vunpack.c.h.b16 %v761
        %v4274 = vunpack.c.l.b16 %v762
        %v4275 = vunpack.c.h.b16 %v762
        %v4276 = vunpack.c.l.b16 %v763
        %v4277 = vunpack.c.h.b16 %v763
        %v4278 = vunpack.c.l.b16 %v764
        %v4279 = vunpack.c.h.b16 %v764
        %v4280 = vunpack.c.l.b16 %v765
        %v4281 = vunpack.c.h.b16 %v765
        %v4282 = vunpack.c.l.b16 %v766
        %v4283 = vunpack.c.h.b16 %v766
        %v4284 = vunpack.c.l.b16 %v767
        %v4285 = vunpack.c.h.b16 %v767
        %v4286 = vunpack.c.l.b16 %v768
        %v4287 = vunpack.c.h.b16 %v768
        %v4288 = vunpack.c.l.b16 %v769
        %v4289 = vunpack.c.h.b16 %v769
        %v4290 = vunpack.c.l.b16 %v770
        %v4291 = vunpack.c.h.b16 %v770
        %v4292 = vunpack.c.l.b16 %v771
        %v4293 = vunpack.c.h.b16 %v771
        %v4294 = vunpack.c.l.b16 %v772
        %v4295 = vunpack.c.h.b16 %v772
        %v4296 = vunpack.c.l.b16 %v773
        %v4297 = vunpack.c.h.b16 %v773
        %v4298 = vunpack.c.l.b16 %v774
        %v4299 = vunpack.c.h.b16 %v774
        %v4300 = vunpack.c.l.b16 %v775
        %v4301 = vunpack.c.h.b16 %v775
        %v4302 = vunpack.c.l.b16 %v776
        %v4303 = vunpack.c.h.b16 %v776
        %v4304 = vunpack.c.l.b16 %v777
        %v4305 = vunpack.c.h.b16 %v777
        %v4306 = vunpack.c.l.b16 %v778
        %v4307 = vunpack.c.h.b16 %v778
        %v4308 = vunpack.c.l.b16 %v779
        %v4309 = vunpack.c.h.b16 %v779
        %v4310 = vunpack.c.l.b16 %v780
        %v4311 = vunpack.c.h.b16 %v780
        %v4312 = vunpack.c.l.b16 %v781
        %v4313 = vunpack.c.h.b16 %v781
        %v4314 = vunpack.c.l.b16 %v782
        %v4315 = vunpack.c.h.b16 %v782
        %v4316 = vunpack.c.l.b16 %v783
        %v4317 = vunpack.c.h.b16 %v783
        %v4318 = vunpack.c.l.b16 %v784
        %v4319 = vunpack.c.h.b16 %v784
        %v4320 = vunpack.c.l.b16 %v785
        %v4321 = vunpack.c.h.b16 %v785
        %v4322 = vunpack.c.l.b16 %v786
        %v4323 = vunpack.c.h.b16 %v786
        %v4324 = vunpack.c.l.b16 %v787
        %v4325 = vunpack.c.h.b16 %v787
        %v4326 = vunpack.c.l.b16 %v788
        %v4327 = vunpack.c.h.b16 %v788
        %v4328 = vunpack.c.l.b16 %v789
        %v4329 = vunpack.c.h.b16 %v789
        %v4330 = vunpack.c.l.b16 %v790
        %v4331 = vunpack.c.h.b16 %v790
        %v4332 = vunpack.c.l.b16 %v791
        %v4333 = vunpack.c.h.b16 %v791
        %v4334 = vunpack.c.l.b16 %v792
        %v4335 = vunpack.c.h.b16 %v792
        %v4336 = vunpack.c.l.b16 %v793
        %v4337 = vunpack.c.h.b16 %v793
        %v4338 = vunpack.c.l.b16 %v794
        %v4339 = vunpack.c.h.b16 %v794
        %v4340 = vunpack.c.l.b16 %v795
        %v4341 = vunpack.c.h.b16 %v795
        %v4342 = vunpack.c.l.b16 %v796
        %v4343 = vunpack.c.h.b16 %v796
        %v4344 = vunpack.c.l.b16 %v797
        %v4345 = vunpack.c.h.b16 %v797
        %v4346 = vunpack.c.l.b16 %v798
        %v4347 = vunpack.c.h.b16 %v798
        %v4348 = vunpack.c.l.b16 %v799
        %v4349 = vunpack.c.h.b16 %v799
        %v4350 = vunpack.c.l.b16 %v800
        %v4351 = vunpack.c.h.b16 %v800
        %v4352 = vunpack.c.l.b16 %v801
        %v4353 = vunpack.c.h.b16 %v801
        %v4354 = vunpack.c.l.b16 %v802
        %v4355 = vunpack.c.h.b16 %v802
        %v4356 = vunpack.c.l.b16 %v803
        %v4357 = vunpack.c.h.b16 %v803
        %v4358 = vunpack.c.l.b16 %v804
        %v4359 = vunpack.c.h.b16 %v804
        %v4360 = vunpack.c.l.b16 %v805
        %v4361 = vunpack.c.h.b16 %v805
        %v4362 = vunpack.c.l.b16 %v806
        %v4363 = vunpack.c.h.b16 %v806
        %v4364 = vunpack.c.l.b16 %v807
        %v4365 = vunpack.c.h.b16 %v807
        %v4366 = vunpack.c.l.b16 %v808
        %v4367 = vunpack.c.h.b16 %v808
        %v4368 = vunpack.c.l.b16 %v809
        %v4369 = vunpack.c.h.b16 %v809
        %v4370 = vunpack.c.l.b16 %v810
        %v4371 = vunpack.c.h.b16 %v810
        %v4372 = vunpack.c.l.b16 %v811
        %v4373 = vunpack.c.h.b16 %v811
        %v4374 = vunpack.c.l.b16 %v812
        %v4375 = vunpack.c.h.b16 %v812
        %v4376 = vunpack.c.l.b16 %v813
        %v4377 = vunpack.c.h.b16 %v813
        %v4378 = vunpack.c.l.b16 %v814
        %v4379 = vunpack.c.h.b16 %v814
        %v4380 = vunpack.c.l.b16 %v815
        %v4381 = vunpack.c.h.b16 %v815
        %v4382 = vunpack.c.l.b16 %v816
        %v4383 = vunpack.c.h.b16 %v816
        %v4384 = vunpack.c.l.b16 %v817
        %v4385 = vunpack.c.h.b16 %v817
        %v4386 = vunpack.c.l.b16 %v818
        %v4387 = vunpack.c.h.b16 %v818
        %v4388 = vunpack.c.l.b16 %v819
        %v4389 = vunpack.c.h.b16 %v819
        %v4390 = vunpack.c.l.b16 %v820
        %v4391 = vunpack.c.h.b16 %v820
        %v4392 = vunpack.c.l.b16 %v821
        %v4393 = vunpack.c.h.b16 %v821
        %v4394 = vunpack.c.l.b16 %v822
        %v4395 = vunpack.c.h.b16 %v822
        %v4396 = vunpack.c.l.b16 %v823
        %v4397 = vunpack.c.h.b16 %v823
        %v4398 = vunpack.c.l.b16 %v824
        %v4399 = vunpack.c.h.b16 %v824
        %v4400 = vunpack.c.l.b16 %v825
        %v4401 = vunpack.c.h.b16 %v825
        %v4402 = vunpack.c.l.b16 %v826
        %v4403 = vunpack.c.h.b16 %v826
        %v4404 = vunpack.c.l.b16 %v827
        %v4405 = vunpack.c.h.b16 %v827
        %v4406 = vunpack.c.l.b16 %v828
        %v4407 = vunpack.c.h.b16 %v828
        %v4408 = vunpack.c.l.b16 %v829
        %v4409 = vunpack.c.h.b16 %v829
        %v4410 = vunpack.c.l.b16 %v830
        %v4411 = vunpack.c.h.b16 %v830
        %v4412 = vunpack.c.l.b16 %v831
        %v4413 = vunpack.c.h.b16 %v831
        %v4414 = vunpack.c.l.b16 %v832
        %v4415 = vunpack.c.h.b16 %v832
        %v4416 = vunpack.c.l.b16 %v833
        %v4417 = vunpack.c.h.b16 %v833
        %v4418 = vunpack.c.l.b16 %v834
        %v4419 = vunpack.c.h.b16 %v834
        %v4420 = vunpack.c.l.b16 %v835
        %v4421 = vunpack.c.h.b16 %v835
        %v4422 = vunpack.c.l.b16 %v836
        %v4423 = vunpack.c.h.b16 %v836
        %v4424 = vunpack.c.l.b16 %v837
        %v4425 = vunpack.c.h.b16 %v837
        %v4426 = vunpack.c.l.b16 %v838
        %v4427 = vunpack.c.h.b16 %v838
        %v4428 = vunpack.c.l.b16 %v839
        %v4429 = vunpack.c.h.b16 %v839
        %v4430 = vunpack.c.l.b16 %v840
        %v4431 = vunpack.c.h.b16 %v840
        %v4432 = vunpack.c.l.b16 %v841
        %v4433 = vunpack.c.h.b16 %v841
        %v4434 = vunpack.c.l.b16 %v842
        %v4435 = vunpack.c.h.b16 %v842
        %v4436 = vunpack.c.l.b16 %v843
        %v4437 = vunpack.c.h.b16 %v843
        %v4438 = vunpack.c.l.b16 %v844
        %v4439 = vunpack.c.h.b16 %v844
        %v4440 = vunpack.c.l.b16 %v845
        %v4441 = vunpack.c.h.b16 %v845
        %v4442 = vunpack.c.l.b16 %v846
        %v4443 = vunpack.c.h.b16 %v846
        %v4444 = vunpack.c.l.b16 %v847
        %v4445 = vunpack.c.h.b16 %v847
        %v4446 = vunpack.c.l.b16 %v848
        %v4447 = vunpack.c.h.b16 %v848
        %v4448 = vunpack.c.l.b16 %v849
        %v4449 = vunpack.c.h.b16 %v849
        %v4450 = vunpack.c.l.b16 %v850
        %v4451 = vunpack.c.h.b16 %v850
        %v4452 = vunpack.c.l.b16 %v851
        %v4453 = vunpack.c.h.b16 %v851
        %v4454 = vunpack.c.l.b16 %v852
        %v4455 = vunpack.c.h.b16 %v852
        %v4456 = vunpack.c.l.b16 %v853
        %v4457 = vunpack.c.h.b16 %v853
        %v4458 = vunpack.c.l.b16 %v854
        %v4459 = vunpack.c.h.b16 %v854
        %v4460 = vunpack.c.l.b16 %v855
        %v4461 = vunpack.c.h.b16 %v855
        %v4462 = vunpack.c.l.b16 %v856
        %v4463 = vunpack.c.h.b16 %v856
        %v4464 = vunpack.c.l.b16 %v857
        %v4465 = vunpack.c.h.b16 %v857
        %v4466 = vunpack.c.l.b16 %v858
        %v4467 = vunpack.c.h.b16 %v858
        %v4468 = vunpack.c.l.b16 %v859
        %v4469 = vunpack.c.h.b16 %v859
        %v4470 = vunpack.c.l.b16 %v860
        %v4471 = vunpack.c.h.b16 %v860
        %v4472 = vunpack.c.l.b16 %v861
        %v4473 = vunpack.c.h.b16 %v861
        %v4474 = vunpack.c.l.b16 %v862
        %v4475 = vunpack.c.h.b16 %v862
        %v4476 = vunpack.c.l.b16 %v863
        %v4477 = vunpack.c.h.b16 %v863
        %v4478 = vunpack.c.l.b16 %v864
        %v4479 = vunpack.c.h.b16 %v864
        %v4480 = vunpack.c.l.b16 %v865
        %v4481 = vunpack.c.h.b16 %v865
        %v4482 = vunpack.c.l.b16 %v866
        %v4483 = vunpack.c.h.b16 %v866
        %v4484 = vunpack.c.l.b16 %v867
        %v4485 = vunpack.c.h.b16 %v867
        %v4486 = vunpack.c.l.b16 %v868
        %v4487 = vunpack.c.h.b16 %v868
        %v4488 = vunpack.c.l.b16 %v869
        %v4489 = vunpack.c.h.b16 %v869
        %v4490 = vunpack.c.l.b16 %v870
        %v4491 = vunpack.c.h.b16 %v870
        %v4492 = vunpack.c.l.b16 %v871
        %v4493 = vunpack.c.h.b16 %v871
        %v4494 = vunpack.c.l.b16 %v872
        %v4495 = vunpack.c.h.b16 %v872
        %v4496 = vunpack.c.l.b16 %v873
        %v4497 = vunpack.c.h.b16 %v873
        %v4498 = vunpack.c.l.b16 %v874
        %v4499 = vunpack.c.h.b16 %v874
        %v4500 = vunpack.c.l.b16 %v875
        %v4501 = vunpack.c.h.b16 %v875
        %v4502 = vunpack.c.l.b16 %v876
        %v4503 = vunpack.c.h.b16 %v876
        %v4504 = vunpack.c.l.b16 %v877
        %v4505 = vunpack.c.h.b16 %v877
        %v4506 = vunpack.c.l.b16 %v878
        %v4507 = vunpack.c.h.b16 %v878
        %v4508 = vunpack.c.l.b16 %v879
        %v4509 = vunpack.c.h.b16 %v879
        %v4510 = vunpack.c.l.b16 %v880
        %v4511 = vunpack.c.h.b16 %v880
        %v4512 = vunpack.c.l.b16 %v881
        %v4513 = vunpack.c.h.b16 %v881
        %v4514 = vunpack.c.l.b16 %v882
        %v4515 = vunpack.c.h.b16 %v882
        %v4516 = vunpack.c.l.b16 %v883
        %v4517 = vunpack.c.h.b16 %v883
        %v4518 = vunpack.c.l.b16 %v884
        %v4519 = vunpack.c.h.b16 %v884
        %v4520 = vunpack.c.l.b16 %v885
        %v4521 = vunpack.c.h.b16 %v885
        %v4522 = vunpack.c.l.b16 %v886
        %v4523 = vunpack.c.h.b16 %v886
        %v4524 = vunpack.c.l.b16 %v887
        %v4525 = vunpack.c.h.b16 %v887
        %v4526 = vunpack.c.l.b16 %v888
        %v4527 = vunpack.c.h.b16 %v888
        %v4528 = vunpack.c.l.b16 %v889
        %v4529 = vunpack.c.h.b16 %v889
        %v4530 = vunpack.c.l.b16 %v890
        %v4531 = vunpack.c.h.b16 %v890
        %v4532 = vunpack.c.l.b16 %v891
        %v4533 = vunpack.c.h.b16 %v891
        %v4534 = vunpack.c.l.b16 %v892
        %v4535 = vunpack.c.h.b16 %v892
        %v4536 = vunpack.c.l.b16 %v893
        %v4537 = vunpack.c.h.b16 %v893
        %v4538 = vunpack.c.l.b16 %v894
        %v4539 = vunpack.c.h.b16 %v894
        %v4540 = vunpack.c.l.b16 %v895
        %v4541 = vunpack.c.h.b16 %v895
        %v4542 = vunpack.c.l.b16 %v896
        %v4543 = vunpack.c.h.b16 %v896
        %v4544 = vunpack.c.l.b16 %v897
        %v4545 = vunpack.c.h.b16 %v897
        %v4546 = vunpack.c.l.b16 %v898
        %v4547 = vunpack.c.h.b16 %v898
        %v4548 = vunpack.c.l.b16 %v899
        %v4549 = vunpack.c.h.b16 %v899
        %v4550 = vunpack.c.l.b16 %v900
        %v4551 = vunpack.c.h.b16 %v900
        %v4552 = vunpack.c.l.b16 %v901
        %v4553 = vunpack.c.h.b16 %v901
        %v4554 = vunpack.c.l.b16 %v902
        %v4555 = vunpack.c.h.b16 %v902
        %v4556 = vunpack.c.l.b16 %v903
        %v4557 = vunpack.c.h.b16 %v903
        %v4558 = vunpack.c.l.b16 %v904
        %v4559 = vunpack.c.h.b16 %v904
        %v4560 = vunpack.c.l.b16 %v905
        %v4561 = vunpack.c.h.b16 %v905
        %v4562 = vunpack.c.l.b16 %v906
        %v4563 = vunpack.c.h.b16 %v906
        %v4564 = vunpack.c.l.b16 %v907
        %v4565 = vunpack.c.h.b16 %v907
        %v4566 = vunpack.c.l.b16 %v908
        %v4567 = vunpack.c.h.b16 %v908
        %v4568 = vunpack.c.l.b16 %v909
        %v4569 = vunpack.c.h.b16 %v909
        %v4570 = vunpack.c.l.b16 %v910
        %v4571 = vunpack.c.h.b16 %v910
        %v4572 = vunpack.c.l.b16 %v911
        %v4573 = vunpack.c.h.b16 %v911
        %v4574 = vunpack.c.l.b16 %v912
        %v4575 = vunpack.c.h.b16 %v912
        %v4576 = vunpack.c.l.b16 %v913
        %v4577 = vunpack.c.h.b16 %v913
        %v4578 = vunpack.c.l.b16 %v914
        %v4579 = vunpack.c.h.b16 %v914
        %v4580 = vunpack.c.l.b16 %v915
        %v4581 = vunpack.c.h.b16 %v915
        %v4582 = vunpack.c.l.b16 %v916
        %v4583 = vunpack.c.h.b16 %v916
        %v4584 = vunpack.c.l.b16 %v917
        %v4585 = vunpack.c.h.b16 %v917
        %v4586 = vunpack.c.l.b16 %v918
        %v4587 = vunpack.c.h.b16 %v918
        %v4588 = vunpack.c.l.b16 %v919
        %v4589 = vunpack.c.h.b16 %v919
        %v4590 = vunpack.c.l.b16 %v920
        %v4591 = vunpack.c.h.b16 %v920
        %v4592 = vunpack.c.l.b16 %v921
        %v4593 = vunpack.c.h.b16 %v921
        %v4594 = vunpack.c.l.b16 %v922
        %v4595 = vunpack.c.h.b16 %v922
        %v4596 = vunpack.c.l.b16 %v923
        %v4597 = vunpack.c.h.b16 %v923
        %v4598 = vunpack.c.l.b16 %v924
        %v4599 = vunpack.c.h.b16 %v924
        %v4600 = vunpack.c.l.b16 %v925
        %v4601 = vunpack.c.h.b16 %v925
        %v4602 = vunpack.c.l.b16 %v926
        %v4603 = vunpack.c.h.b16 %v926
        %v4604 = vunpack.c.l.b16 %v927
        %v4605 = vunpack.c.h.b16 %v927
        %v4606 = vunpack.c.l.b16 %v928
        %v4607 = vunpack.c.h.b16 %v928
        %v4608 = vunpack.c.l.b16 %v929
        %v4609 = vunpack.c.h.b16 %v929
        %v4610 = vunpack.c.l.b16 %v930
        %v4611 = vunpack.c.h.b16 %v930
        %v4612 = vunpack.c.l.b16 %v931
        %v4613 = vunpack.c.h.b16 %v931
        %v4614 = vunpack.c.l.b16 %v932
        %v4615 = vunpack.c.h.b16 %v932
        %v4616 = vunpack.c.l.b16 %v933
        %v4617 = vunpack.c.h.b16 %v933
        %v4618 = vunpack.c.l.b16 %v934
        %v4619 = vunpack.c.h.b16 %v934
        %v4620 = vunpack.c.l.b16 %v935
        %v4621 = vunpack.c.h.b16 %v935
        %v4622 = vunpack.c.l.b16 %v936
        %v4623 = vunpack.c.h.b16 %v936
        %v4624 = vunpack.c.l.b16 %v937
        %v4625 = vunpack.c.h.b16 %v937
        %v4626 = vunpack.c.l.b16 %v938
        %v4627 = vunpack.c.h.b16 %v938
        %v4628 = vunpack.c.l.b16 %v939
        %v4629 = vunpack.c.h.b16 %v939
        %v4630 = vunpack.c.l.b16 %v940
        %v4631 = vunpack.c.h.b16 %v940
        %v4632 = vunpack.c.l.b16 %v941
        %v4633 = vunpack.c.h.b16 %v941
        %v4634 = vunpack.c.l.b16 %v942
        %v4635 = vunpack.c.h.b16 %v942
        %v4636 = vunpack.c.l.b16 %v943
        %v4637 = vunpack.c.h.b16 %v943
        %v4638 = vunpack.c.l.b16 %v944
        %v4639 = vunpack.c.h.b16 %v944
        %v4640 = vunpack.c.l.b16 %v945
        %v4641 = vunpack.c.h.b16 %v945
        %v4642 = vunpack.c.l.b16 %v946
        %v4643 = vunpack.c.h.b16 %v946
        %v4644 = vunpack.c.l.b16 %v947
        %v4645 = vunpack.c.h.b16 %v947
        %v4646 = vunpack.c.l.b16 %v948
        %v4647 = vunpack.c.h.b16 %v948
        %v4648 = vunpack.c.l.b16 %v949
        %v4649 = vunpack.c.h.b16 %v949
        %v4650 = vunpack.c.l.b16 %v950
        %v4651 = vunpack.c.h.b16 %v950
        %v4652 = vunpack.c.l.b16 %v951
        %v4653 = vunpack.c.h.b16 %v951
        %v4654 = vunpack.c.l.b16 %v952
        %v4655 = vunpack.c.h.b16 %v952
        %v4656 = vunpack.c.l.b16 %v953
        %v4657 = vunpack.c.h.b16 %v953
        %v4658 = vunpack.c.l.b16 %v954
        %v4659 = vunpack.c.h.b16 %v954
        %v4660 = vunpack.c.l.b16 %v955
        %v4661 = vunpack.c.h.b16 %v955
        %v4662 = vunpack.c.l.b16 %v956
        %v4663 = vunpack.c.h.b16 %v956
        %v4664 = vunpack.c.l.b16 %v957
        %v4665 = vunpack.c.h.b16 %v957
        %v4666 = vunpack.c.l.b16 %v958
        %v4667 = vunpack.c.h.b16 %v958
        %v4668 = vunpack.c.l.b16 %v959
        %v4669 = vunpack.c.h.b16 %v959
        %v4670 = vunpack.c.l.b16 %v960
        %v4671 = vunpack.c.h.b16 %v960
        %v4672 = vunpack.c.l.b16 %v961
        %v4673 = vunpack.c.h.b16 %v961
        %v4674 = vunpack.c.l.b16 %v962
        %v4675 = vunpack.c.h.b16 %v962
        %v4676 = vunpack.c.l.b16 %v963
        %v4677 = vunpack.c.h.b16 %v963
        %v4678 = vunpack.c.l.b16 %v964
        %v4679 = vunpack.c.h.b16 %v964
        %v4680 = vunpack.c.l.b16 %v965
        %v4681 = vunpack.c.h.b16 %v965
        %v4682 = vunpack.c.l.b16 %v966
        %v4683 = vunpack.c.h.b16 %v966
        %v4684 = vunpack.c.l.b16 %v967
        %v4685 = vunpack.c.h.b16 %v967
        %v4686 = vunpack.c.l.b16 %v968
        %v4687 = vunpack.c.h.b16 %v968
        %v4688 = vunpack.c.l.b16 %v969
        %v4689 = vunpack.c.h.b16 %v969
        %v4690 = vunpack.c.l.b16 %v970
        %v4691 = vunpack.c.h.b16 %v970
        %v4692 = vunpack.c.l.b16 %v971
        %v4693 = vunpack.c.h.b16 %v971
        %v4694 = vunpack.c.l.b16 %v972
        %v4695 = vunpack.c.h.b16 %v972
        %v4696 = vunpack.c.l.b16 %v973
        %v4697 = vunpack.c.h.b16 %v973
        %v4698 = vunpack.c.l.b16 %v974
        %v4699 = vunpack.c.h.b16 %v974
        %v4700 = vunpack.c.l.b16 %v975
        %v4701 = vunpack.c.h.b16 %v975
        %v4702 = vunpack.c.l.b16 %v976
        %v4703 = vunpack.c.h.b16 %v976
        %v4704 = vunpack.c.l.b16 %v977
        %v4705 = vunpack.c.h.b16 %v977
        %v4706 = vunpack.c.l.b16 %v978
        %v4707 = vunpack.c.h.b16 %v978
        %v4708 = vunpack.c.l.b16 %v979
        %v4709 = vunpack.c.h.b16 %v979
        %v4710 = vunpack.c.l.b16 %v980
        %v4711 = vunpack.c.h.b16 %v980
        %v4712 = vunpack.c.l.b16 %v981
        %v4713 = vunpack.c.h.b16 %v981
        %v4714 = vunpack.c.l.b16 %v982
        %v4715 = vunpack.c.h.b16 %v982
        %v4716 = vunpack.c.l.b16 %v983
        %v4717 = vunpack.c.h.b16 %v983
        %v4718 = vunpack.c.l.b16 %v984
        %v4719 = vunpack.c.h.b16 %v984
        %v4720 = vunpack.c.l.b16 %v985
        %v4721 = vunpack.c.h.b16 %v985
        %v4722 = vunpack.c.l.b16 %v986
        %v4723 = vunpack.c.h.b16 %v986
        %v4724 = vunpack.c.l.b16 %v987
        %v4725 = vunpack.c.h.b16 %v987
        %v4726 = vunpack.c.l.b16 %v988
        %v4727 = vunpack.c.h.b16 %v988
        %v4728 = vunpack.c.l.b16 %v989
        %v4729 = vunpack.c.h.b16 %v989
        %v4730 = vunpack.c.l.b16 %v990
        %v4731 = vunpack.c.h.b16 %v990
        %v4732 = vunpack.c.l.b16 %v991
        %v4733 = vunpack.c.h.b16 %v991
        %v4734 = vunpack.c.l.b16 %v992
        %v4735 = vunpack.c.h.b16 %v992
        %v4736 = vunpack.c.l.b16 %v993
        %v4737 = vunpack.c.h.b16 %v993
        %v4738 = vunpack.c.l.b16 %v994
        %v4739 = vunpack.c.h.b16 %v994
        %v4740 = vunpack.c.l.b16 %v995
        %v4741 = vunpack.c.h.b16 %v995
        %v4742 = vunpack.c.l.b16 %v996
        %v4743 = vunpack.c.h.b16 %v996
        %v4744 = vunpack.c.l.b16 %v997
        %v4745 = vunpack.c.h.b16 %v997
        %v4746 = vunpack.c.l.b16 %v998
        %v4747 = vunpack.c.h.b16 %v998
        %v4748 = vunpack.c.l.b16 %v999
        %v4749 = vunpack.c.h.b16 %v999
        %v4750 = vunpack.c.l.b16 %v1000
        %v4751 = vunpack.c.h.b16 %v1000
        %v4752 = vunpack.c.l.b16 %v1001
        %v4753 = vunpack.c.h.b16 %v1001
        %v4754 = vunpack.c.l.b16 %v1002
        %v4755 = vunpack.c.h.b16 %v1002
        %v4756 = vunpack.c.l.b16 %v1003
        %v4757 = vunpack.c.h.b16 %v1003
        %v4758 = vunpack.c.l.b16 %v1004
        %v4759 = vunpack.c.h.b16 %v1004
        %v4760 = vunpack.c.l.b16 %v1005
        %v4761 = vunpack.c.h.b16 %v1005
        %v4762 = vunpack.c.l.b16 %v1006
        %v4763 = vunpack.c.h.b16 %v1006
        %v4764 = vunpack.c.l.b16 %v1007
        %v4765 = vunpack.c.h.b16 %v1007
        %v4766 = vunpack.c.l.b16 %v1008
        %v4767 = vunpack.c.h.b16 %v1008
        %v4768 = vunpack.c.l.b16 %v1009
        %v4769 = vunpack.c.h.b16 %v1009
        %v4770 = vunpack.c.l.b16 %v1010
        %v4771 = vunpack.c.h.b16 %v1010
        %v4772 = vunpack.c.l.b16 %v1011
        %v4773 = vunpack.c.h.b16 %v1011
        %v4774 = vunpack.c.l.b16 %v1012
        %v4775 = vunpack.c.h.b16 %v1012
        %v4776 = vunpack.c.l.b16 %v1013
        %v4777 = vunpack.c.h.b16 %v1013
        %v4778 = vunpack.c.l.b16 %v1014
        %v4779 = vunpack.c.h.b16 %v1014
        %v4780 = vunpack.c.l.b16 %v1015
        %v4781 = vunpack.c.h.b16 %v1015
        %v4782 = vunpack.c.l.b16 %v1016
        %v4783 = vunpack.c.h.b16 %v1016
        %v4784 = vunpack.c.l.b16 %v1017
        %v4785 = vunpack.c.h.b16 %v1017
        %v4786 = vunpack.c.l.b16 %v1018
        %v4787 = vunpack.c.h.b16 %v1018
        %v4788 = vunpack.c.l.b16 %v1019
        %v4789 = vunpack.c.h.b16 %v1019
        %v4790 = vunpack.c.l.b16 %v1020
        %v4791 = vunpack.c.h.b16 %v1020
        %v4792 = vunpack.c.l.b16 %v1021
        %v4793 = vunpack.c.h.b16 %v1021
        %v4794 = vunpack.c.l.b16 %v1022
        %v4795 = vunpack.c.h.b16 %v1022
        %v4796 = vunpack.c.l.b16 %v1023
        %v4797 = vunpack.c.h.b16 %v1023
        %v4798 = vunpack.c.l.b16 %v1024
        %v4799 = vunpack.c.h.b16 %v1024
        %v4800 = vunpack.c.l.b16 %v1025
        %v4801 = vunpack.c.h.b16 %v1025
        %v4802 = vunpack.c.l.b16 %v1026
        %v4803 = vunpack.c.h.b16 %v1026
        %v4804 = vunpack.c.l.b16 %v1027
        %v4805 = vunpack.c.h.b16 %v1027
        %v4806 = vunpack.c.l.b16 %v1028
        %v4807 = vunpack.c.h.b16 %v1028
        %v4808 = vunpack.c.l.b16 %v1029
        %v4809 = vunpack.c.h.b16 %v1029
        %v4810 = vunpack.c.l.b16 %v1030
        %v4811 = vunpack.c.h.b16 %v1030
        %v4812 = vunpack.c.l.b16 %v1031
        %v4813 = vunpack.c.h.b16 %v1031
        %v4814 = vunpack.c.l.b16 %v1032
        %v4815 = vunpack.c.h.b16 %v1032
        %v4816 = vunpack.c.l.b16 %v1033
        %v4817 = vunpack.c.h.b16 %v1033
        %v4818 = vunpack.c.l.b16 %v1034
        %v4819 = vunpack.c.h.b16 %v1034
        %v4820 = vunpack.c.l.b16 %v1035
        %v4821 = vunpack.c.h.b16 %v1035
        %v4822 = vunpack.c.l.b16 %v1036
        %v4823 = vunpack.c.h.b16 %v1036
        %v4824 = vunpack.c.l.b16 %v1037
        %v4825 = vunpack.c.h.b16 %v1037
        %v4826 = vunpack.c.l.b16 %v1038
        %v4827 = vunpack.c.h.b16 %v1038
        %v4828 = vunpack.c.l.b16 %v1039
        %v4829 = vunpack.c.h.b16 %v1039
        %v4830 = vunpack.c.l.b16 %v1040
        %v4831 = vunpack.c.h.b16 %v1040
        %v4832 = vunpack.c.l.b16 %v1041
        %v4833 = vunpack.c.h.b16 %v1041
        %v4834 = vunpack.c.l.b16 %v1042
        %v4835 = vunpack.c.h.b16 %v1042
        %v4836 = vunpack.c.l.b16 %v1043
        %v4837 = vunpack.c.h.b16 %v1043
        %v4838 = vunpack.c.l.b16 %v1044
        %v4839 = vunpack.c.h.b16 %v1044
        %v4840 = vunpack.c.l.b16 %v1045
        %v4841 = vunpack.c.h.b16 %v1045
        %v4842 = vunpack.c.l.b16 %v1046
        %v4843 = vunpack.c.h.b16 %v1046
        %v4844 = vunpack.c.l.b16 %v1047
        %v4845 = vunpack.c.h.b16 %v1047
        %v4846 = vunpack.c.l.b16 %v1048
        %v4847 = vunpack.c.h.b16 %v1048
        %v4848 = vunpack.c.l.b16 %v1049
        %v4849 = vunpack.c.h.b16 %v1049
        %v4850 = vunpack.c.l.b16 %v1050
        %v4851 = vunpack.c.h.b16 %v1050
        %v4852 = vunpack.c.l.b16 %v1051
        %v4853 = vunpack.c.h.b16 %v1051
        %v4854 = vunpack.c.l.b16 %v1052
        %v4855 = vunpack.c.h.b16 %v1052
        %v4856 = vunpack.c.l.b16 %v1053
        %v4857 = vunpack.c.h.b16 %v1053
        %v4858 = vunpack.c.l.b16 %v1054
        %v4859 = vunpack.c.h.b16 %v1054
        %v4860 = vunpack.c.l.b16 %v1055
        %v4861 = vunpack.c.h.b16 %v1055
        %v4862 = vunpack.c.l.b16 %v1056
        %v4863 = vunpack.c.h.b16 %v1056
        %v4864 = vunpack.c.l.b16 %v1057
        %v4865 = vunpack.c.h.b16 %v1057
        %v4866 = vunpack.c.l.b16 %v1058
        %v4867 = vunpack.c.h.b16 %v1058
        %v4868 = vunpack.c.l.b16 %v1059
        %v4869 = vunpack.c.h.b16 %v1059
        %v4870 = vunpack.c.l.b16 %v1060
        %v4871 = vunpack.c.h.b16 %v1060
        %v4872 = vunpack.c.l.b16 %v1061
        %v4873 = vunpack.c.h.b16 %v1061
        %v4874 = vunpack.c.l.b16 %v1062
        %v4875 = vunpack.c.h.b16 %v1062
        %v4876 = vunpack.c.l.b16 %v1063
        %v4877 = vunpack.c.h.b16 %v1063
        %v4878 = vunpack.c.l.b16 %v1064
        %v4879 = vunpack.c.h.b16 %v1064
        %v4880 = vunpack.c.l.b16 %v1065
        %v4881 = vunpack.c.h.b16 %v1065
        %v4882 = vunpack.c.l.b16 %v1066
        %v4883 = vunpack.c.h.b16 %v1066
        %v4884 = vunpack.c.l.b16 %v1067
        %v4885 = vunpack.c.h.b16 %v1067
        %v4886 = vunpack.c.l.b16 %v1068
        %v4887 = vunpack.c.h.b16 %v1068
        %v4888 = vunpack.c.l.b16 %v1069
        %v4889 = vunpack.c.h.b16 %v1069
        %v4890 = vunpack.c.l.b16 %v1070
        %v4891 = vunpack.c.h.b16 %v1070
        %v4892 = vunpack.c.l.b16 %v1071
        %v4893 = vunpack.c.h.b16 %v1071
        %v4894 = vunpack.c.l.b16 %v1072
        %v4895 = vunpack.c.h.b16 %v1072
        %v4896 = vunpack.c.l.b16 %v1073
        %v4897 = vunpack.c.h.b16 %v1073
        %v4898 = vunpack.c.l.b16 %v1074
        %v4899 = vunpack.c.h.b16 %v1074
        %v4900 = vunpack.c.l.b16 %v1075
        %v4901 = vunpack.c.h.b16 %v1075
        %v4902 = vunpack.c.l.b16 %v1076
        %v4903 = vunpack.c.h.b16 %v1076
        %v4904 = vunpack.c.l.b16 %v1077
        %v4905 = vunpack.c.h.b16 %v1077
        %v4906 = vunpack.c.l.b16 %v1078
        %v4907 = vunpack.c.h.b16 %v1078
        %v4908 = vunpack.c.l.b16 %v1079
        %v4909 = vunpack.c.h.b16 %v1079
        %v4910 = vunpack.c.l.b16 %v1080
        %v4911 = vunpack.c.h.b16 %v1080
        %v4912 = vunpack.c.l.b16 %v1081
        %v4913 = vunpack.c.h.b16 %v1081
        %v4914 = vunpack.c.l.b16 %v1082
        %v4915 = vunpack.c.h.b16 %v1082
        %v4916 = vunpack.c.l.b16 %v1083
        %v4917 = vunpack.c.h.b16 %v1083
        %v4918 = vunpack.c.l.b16 %v1084
        %v4919 = vunpack.c.h.b16 %v1084
        %v4920 = vunpack.c.l.b16 %v1085
        %v4921 = vunpack.c.h.b16 %v1085
        %v4922 = vunpack.c.l.b16 %v1086
        %v4923 = vunpack.c.h.b16 %v1086
        %v4924 = vunpack.c.l.b16 %v1087
        %v4925 = vunpack.c.h.b16 %v1087
        %v4926 = vunpack.c.l.b16 %v1088
        %v4927 = vunpack.c.h.b16 %v1088
        %v4928 = vunpack.c.l.b16 %v1089
        %v4929 = vunpack.c.h.b16 %v1089
        %v4930 = vunpack.c.l.b16 %v1090
        %v4931 = vunpack.c.h.b16 %v1090
        %v4932 = vunpack.c.l.b16 %v1091
        %v4933 = vunpack.c.h.b16 %v1091
        %v4934 = vunpack.c.l.b16 %v1092
        %v4935 = vunpack.c.h.b16 %v1092
        %v4936 = vunpack.c.l.b16 %v1093
        %v4937 = vunpack.c.h.b16 %v1093
        %v4938 = vunpack.c.l.b16 %v1094
        %v4939 = vunpack.c.h.b16 %v1094
        %v4940 = vunpack.c.l.b16 %v1095
        %v4941 = vunpack.c.h.b16 %v1095
        %v4942 = vunpack.c.l.b16 %v1096
        %v4943 = vunpack.c.h.b16 %v1096
        %v4944 = vunpack.c.l.b16 %v1097
        %v4945 = vunpack.c.h.b16 %v1097
        %v4946 = vunpack.c.l.b16 %v1098
        %v4947 = vunpack.c.h.b16 %v1098
        %v4948 = vunpack.c.l.b16 %v1099
        %v4949 = vunpack.c.h.b16 %v1099
        %v4950 = vunpack.c.l.b16 %v1100
        %v4951 = vunpack.c.h.b16 %v1100
        %v4952 = vunpack.c.l.b16 %v1101
        %v4953 = vunpack.c.h.b16 %v1101
        %v4954 = vunpack.c.l.b16 %v1102
        %v4955 = vunpack.c.h.b16 %v1102
        %v4956 = vunpack.c.l.b16 %v1103
        %v4957 = vunpack.c.h.b16 %v1103
        %v4958 = vunpack.c.l.b16 %v1104
        %v4959 = vunpack.c.h.b16 %v1104
        %v4960 = vunpack.c.l.b16 %v1105
        %v4961 = vunpack.c.h.b16 %v1105
        %v4962 = vunpack.c.l.b16 %v1106
        %v4963 = vunpack.c.h.b16 %v1106
        %v4964 = vunpack.c.l.b16 %v1107
        %v4965 = vunpack.c.h.b16 %v1107
        %v4966 = vunpack.c.l.b16 %v1108
        %v4967 = vunpack.c.h.b16 %v1108
        %v4968 = vunpack.c.l.b16 %v1109
        %v4969 = vunpack.c.h.b16 %v1109
        %v4970 = vunpack.c.l.b16 %v1110
        %v4971 = vunpack.c.h.b16 %v1110
        %v4972 = vunpack.c.l.b16 %v1111
        %v4973 = vunpack.c.h.b16 %v1111
        %v4974 = vunpack.c.l.b16 %v1112
        %v4975 = vunpack.c.h.b16 %v1112
        %v4976 = vunpack.c.l.b16 %v1113
        %v4977 = vunpack.c.h.b16 %v1113
        %v4978 = vunpack.c.l.b16 %v1114
        %v4979 = vunpack.c.h.b16 %v1114
        %v4980 = vunpack.c.l.b16 %v1115
        %v4981 = vunpack.c.h.b16 %v1115
        %v4982 = vunpack.c.l.b16 %v1116
        %v4983 = vunpack.c.h.b16 %v1116
        %v4984 = vunpack.c.l.b16 %v1117
        %v4985 = vunpack.c.h.b16 %v1117
        %v4986 = vunpack.c.l.b16 %v1118
        %v4987 = vunpack.c.h.b16 %v1118
        %v4988 = vunpack.c.l.b16 %v1119
        %v4989 = vunpack.c.h.b16 %v1119
        %v4990 = vunpack.c.l.b16 %v1120
        %v4991 = vunpack.c.h.b16 %v1120
        %v4992 = vunpack.c.l.b16 %v1121
        %v4993 = vunpack.c.h.b16 %v1121
        %v4994 = vunpack.c.l.b16 %v1122
        %v4995 = vunpack.c.h.b16 %v1122
        %v4996 = vunpack.c.l.b16 %v1123
        %v4997 = vunpack.c.h.b16 %v1123
        %v4998 = vunpack.c.l.b16 %v1124
        %v4999 = vunpack.c.h.b16 %v1124
        %v5000 = vunpack.c.l.b16 %v1125
        %v5001 = vunpack.c.h.b16 %v1125
        %v5002 = vunpack.c.l.b16 %v1126
        %v5003 = vunpack.c.h.b16 %v1126
        %v5004 = vunpack.c.l.b16 %v1127
        %v5005 = vunpack.c.h.b16 %v1127
        %v5006 = vunpack.c.l.b16 %v1128
        %v5007 = vunpack.c.h.b16 %v1128
        %v5008 = vunpack.c.l.b16 %v1129
        %v5009 = vunpack.c.h.b16 %v1129
        %v5010 = vunpack.c.l.b16 %v1130
        %v5011 = vunpack.c.h.b16 %v1130
        %v5012 = vunpack.c.l.b16 %v1131
        %v5013 = vunpack.c.h.b16 %v1131
        %v5014 = vunpack.c.l.b16 %v1132
        %v5015 = vunpack.c.h.b16 %v1132
        %v5016 = vunpack.c.l.b16 %v1133
        %v5017 = vunpack.c.h.b16 %v1133
        %v5018 = vunpack.c.l.b16 %v1134
        %v5019 = vunpack.c.h.b16 %v1134
        %v5020 = vunpack.c.l.b16 %v1135
        %v5021 = vunpack.c.h.b16 %v1135
        %v5022 = vunpack.c.l.b16 %v1136
        %v5023 = vunpack.c.h.b16 %v1136
        %v5024 = vunpack.c.l.b16 %v1137
        %v5025 = vunpack.c.h.b16 %v1137
        %v5026 = vunpack.c.l.b16 %v1138
        %v5027 = vunpack.c.h.b16 %v1138
        %v5028 = vunpack.c.l.b16 %v1139
        %v5029 = vunpack.c.h.b16 %v1139
        %v5030 = vunpack.c.l.b16 %v1140
        %v5031 = vunpack.c.h.b16 %v1140
        %v5032 = vunpack.c.l.b16 %v1141
        %v5033 = vunpack.c.h.b16 %v1141
        %v5034 = vunpack.c.l.b16 %v1142
        %v5035 = vunpack.c.h.b16 %v1142
        %v5036 = vunpack.c.l.b16 %v1143
        %v5037 = vunpack.c.h.b16 %v1143
        %v5038 = vunpack.c.l.b16 %v1144
        %v5039 = vunpack.c.h.b16 %v1144
        %v5040 = vunpack.c.l.b16 %v1145
        %v5041 = vunpack.c.h.b16 %v1145
        %v5042 = vunpack.c.l.b16 %v1146
        %v5043 = vunpack.c.h.b16 %v1146
        %v5044 = vunpack.c.l.b16 %v1147
        %v5045 = vunpack.c.h.b16 %v1147
        %v5046 = vunpack.c.l.b16 %v1148
        %v5047 = vunpack.c.h.b16 %v1148
        %v5048 = vunpack.c.l.b16 %v1149
        %v5049 = vunpack.c.h.b16 %v1149
        %v5050 = vunpack.c.l.b16 %v1150
        %v5051 = vunpack.c.h.b16 %v1150
        %v5052 = vunpack.c.l.b16 %v1151
        %v5053 = vunpack.c.h.b16 %v1151
        %v5054 = vunpack.c.l.b16 %v1152
        %v5055 = vunpack.c.h.b16 %v1152
        %v5056 = vunpack.c.l.b16 %v1153
        %v5057 = vunpack.c.h.b16 %v1153
        %v5058 = vunpack.c.l.b16 %v1154
        %v5059 = vunpack.c.h.b16 %v1154
        %v5060 = vunpack.c.l.b16 %v1155
        %v5061 = vunpack.c.h.b16 %v1155
        %v5062 = vunpack.c.l.b16 %v1156
        %v5063 = vunpack.c.h.b16 %v1156
        %v5064 = vunpack.c.l.b16 %v1157
        %v5065 = vunpack.c.h.b16 %v1157
        %v5066 = vunpack.c.l.b16 %v1158
        %v5067 = vunpack.c.h.b16 %v1158
        %v5068 = vunpack.c.l.b16 %v1159
        %v5069 = vunpack.c.h.b16 %v1159
        %v5070 = vunpack.c.l.b16 %v1160
        %v5071 = vunpack.c.h.b16 %v1160
        %v5072 = vunpack.c.l.b16 %v1161
        %v5073 = vunpack.c.h.b16 %v1161
        %v5074 = vunpack.c.l.b16 %v1162
        %v5075 = vunpack.c.h.b16 %v1162
        %v5076 = vunpack.c.l.b16 %v1163
        %v5077 = vunpack.c.h.b16 %v1163
        %v5078 = vunpack.c.l.b16 %v1164
        %v5079 = vunpack.c.h.b16 %v1164
        %v5080 = vunpack.c.l.b16 %v1165
        %v5081 = vunpack.c.h.b16 %v1165
        %v5082 = vunpack.c.l.b16 %v1166
        %v5083 = vunpack.c.h.b16 %v1166
        %v5084 = vunpack.c.l.b16 %v1167
        %v5085 = vunpack.c.h.b16 %v1167
        %v5086 = vunpack.c.l.b16 %v1168
        %v5087 = vunpack.c.h.b16 %v1168
        %v5088 = vunpack.c.l.b16 %v1169
        %v5089 = vunpack.c.h.b16 %v1169
        %v5090 = vunpack.c.l.b16 %v1170
        %v5091 = vunpack.c.h.b16 %v1170
        %v5092 = vunpack.c.l.b16 %v1171
        %v5093 = vunpack.c.h.b16 %v1171
        %v5094 = vunpack.c.l.b16 %v1172
        %v5095 = vunpack.c.h.b16 %v1172
        %v5096 = vunpack.c.l.b16 %v1173
        %v5097 = vunpack.c.h.b16 %v1173
        %v5098 = vunpack.c.l.b16 %v1174
        %v5099 = vunpack.c.h.b16 %v1174
        %v5100 = vunpack.c.l.b16 %v1175
        %v5101 = vunpack.c.h.b16 %v1175
        %v5102 = vunpack.c.l.b16 %v1176
        %v5103 = vunpack.c.h.b16 %v1176
        %v5104 = vunpack.c.l.b16 %v1177
        %v5105 = vunpack.c.h.b16 %v1177
        %v5106 = vunpack.c.l.b16 %v1178
        %v5107 = vunpack.c.h.b16 %v1178
        %v5108 = vunpack.c.l.b16 %v1179
        %v5109 = vunpack.c.h.b16 %v1179
        %v5110 = vunpack.c.l.b16 %v1180
        %v5111 = vunpack.c.h.b16 %v1180
        %v5112 = vunpack.c.l.b16 %v1181
        %v5113 = vunpack.c.h.b16 %v1181
        %v5114 = vunpack.c.l.b16 %v1182
        %v5115 = vunpack.c.h.b16 %v1182
        %v5116 = vunpack.c.l.b16 %v1183
        %v5117 = vunpack.c.h.b16 %v1183
        %v5118 = vunpack.c.l.b16 %v1184
        %v5119 = vunpack.c.h.b16 %v1184
        %v5120 = vunpack.c.l.b16 %v1185
        %v5121 = vunpack.c.h.b16 %v1185
        %v5122 = vunpack.c.l.b16 %v1186
        %v5123 = vunpack.c.h.b16 %v1186
        %v5124 = vunpack.c.l.b16 %v1187
        %v5125 = vunpack.c.h.b16 %v1187
        %v5126 = vunpack.c.l.b16 %v1188
        %v5127 = vunpack.c.h.b16 %v1188
        %v5128 = vunpack.c.l.b16 %v1189
        %v5129 = vunpack.c.h.b16 %v1189
        %v5130 = vunpack.c.l.b16 %v1190
        %v5131 = vunpack.c.h.b16 %v1190
        %v5132 = vunpack.c.l.b16 %v1191
        %v5133 = vunpack.c.h.b16 %v1191
        %v5134 = vunpack.c.l.b16 %v1192
        %v5135 = vunpack.c.h.b16 %v1192
        %v5136 = vunpack.c.l.b16 %v1193
        %v5137 = vunpack.c.h.b16 %v1193
        %v5138 = vunpack.c.l.b16 %v1194
        %v5139 = vunpack.c.h.b16 %v1194
        %v5140 = vunpack.c.l.b16 %v1195
        %v5141 = vunpack.c.h.b16 %v1195
        %v5142 = vunpack.c.l.b16 %v1196
        %v5143 = vunpack.c.h.b16 %v1196
        %v5144 = vunpack.c.l.b16 %v1197
        %v5145 = vunpack.c.h.b16 %v1197
        %v5146 = vunpack.c.l.b16 %v1198
        %v5147 = vunpack.c.h.b16 %v1198
        %v5148 = vunpack.c.l.b16 %v1199
        %v5149 = vunpack.c.h.b16 %v1199
        %v5150 = vunpack.c.l.b16 %v1200
        %v5151 = vunpack.c.h.b16 %v1200
        %v5152 = vunpack.c.l.b16 %v1201
        %v5153 = vunpack.c.h.b16 %v1201
        %v5154 = vunpack.c.l.b16 %v1202
        %v5155 = vunpack.c.h.b16 %v1202
        %v5156 = vunpack.c.l.b16 %v1203
        %v5157 = vunpack.c.h.b16 %v1203
        %v5158 = vunpack.c.l.b16 %v1204
        %v5159 = vunpack.c.h.b16 %v1204
        %v5160 = vunpack.c.l.b16 %v1205
        %v5161 = vunpack.c.h.b16 %v1205
        %v5162 = vunpack.c.l.b16 %v1206
        %v5163 = vunpack.c.h.b16 %v1206
        %v5164 = vunpack.c.l.b16 %v1207
        %v5165 = vunpack.c.h.b16 %v1207
        %v5166 = vunpack.c.l.b16 %v1208
        %v5167 = vunpack.c.h.b16 %v1208
        %v5168 = vunpack.c.l.b16 %v1209
        %v5169 = vunpack.c.h.b16 %v1209
        %v5170 = vunpack.c.l.b16 %v1210
        %v5171 = vunpack.c.h.b16 %v1210
        %v5172 = vunpack.c.l.b16 %v1211
        %v5173 = vunpack.c.h.b16 %v1211
        %v5174 = vunpack.c.l.b16 %v1212
        %v5175 = vunpack.c.h.b16 %v1212
        %v5176 = vunpack.c.l.b16 %v1213
        %v5177 = vunpack.c.h.b16 %v1213
        %v5178 = vunpack.c.l.b16 %v1214
        %v5179 = vunpack.c.h.b16 %v1214
        %v5180 = vunpack.c.l.b16 %v1215
        %v5181 = vunpack.c.h.b16 %v1215
        %v5182 = vunpack.c.l.b16 %v1216
        %v5183 = vunpack.c.h.b16 %v1216
        %v5184 = vunpack.c.l.b16 %v1217
        %v5185 = vunpack.c.h.b16 %v1217
        %v5186 = vunpack.c.l.b16 %v1218
        %v5187 = vunpack.c.h.b16 %v1218
        %v5188 = vunpack.c.l.b16 %v1219
        %v5189 = vunpack.c.h.b16 %v1219
        %v5190 = vunpack.c.l.b16 %v1220
        %v5191 = vunpack.c.h.b16 %v1220
        %v5192 = vunpack.c.l.b16 %v1221
        %v5193 = vunpack.c.h.b16 %v1221
        %v5194 = vunpack.c.l.b16 %v1222
        %v5195 = vunpack.c.h.b16 %v1222
        %v5196 = vunpack.c.l.b16 %v1223
        %v5197 = vunpack.c.h.b16 %v1223
        %v5198 = vunpack.c.l.b16 %v1224
        %v5199 = vunpack.c.h.b16 %v1224
        %v5200 = vunpack.c.l.b16 %v1225
        %v5201 = vunpack.c.h.b16 %v1225
        %v5202 = vunpack.c.l.b16 %v1226
        %v5203 = vunpack.c.h.b16 %v1226
        %v5204 = vunpack.c.l.b16 %v1227
        %v5205 = vunpack.c.h.b16 %v1227
        %v5206 = vunpack.c.l.b16 %v1228
        %v5207 = vunpack.c.h.b16 %v1228
        %v5208 = vunpack.c.l.b16 %v1229
        %v5209 = vunpack.c.h.b16 %v1229
        %v5210 = vunpack.c.l.b16 %v1230
        %v5211 = vunpack.c.h.b16 %v1230
        %v5212 = vunpack.c.l.b16 %v1231
        %v5213 = vunpack.c.h.b16 %v1231
        %v5214 = vunpack.c.l.b16 %v1232
        %v5215 = vunpack.c.h.b16 %v1232
        %v5216 = vunpack.c.l.b16 %v1233
        %v5217 = vunpack.c.h.b16 %v1233
        %v5218 = vunpack.c.l.b16 %v1234
        %v5219 = vunpack.c.h.b16 %v1234
        %v5220 = vunpack.c.l.b16 %v1235
        %v5221 = vunpack.c.h.b16 %v1235
        %v5222 = vunpack.c.l.b16 %v1236
        %v5223 = vunpack.c.h.b16 %v1236
        %v5224 = vunpack.c.l.b16 %v1237
        %v5225 = vunpack.c.h.b16 %v1237
        %v5226 = vunpack.c.l.b16 %v1238
        %v5227 = vunpack.c.h.b16 %v1238
        %v5228 = vunpack.c.l.b16 %v1239
        %v5229 = vunpack.c.h.b16 %v1239
        %v5230 = vunpack.c.l.b16 %v1240
        %v5231 = vunpack.c.h.b16 %v1240
        %v5232 = vunpack.c.l.b16 %v1241
        %v5233 = vunpack.c.h.b16 %v1241
        %v5234 = vunpack.c.l.b16 %v1242
        %v5235 = vunpack.c.h.b16 %v1242
        %v5236 = vunpack.c.l.b16 %v1243
        %v5237 = vunpack.c.h.b16 %v1243
        %v5238 = vunpack.c.l.b16 %v1244
        %v5239 = vunpack.c.h.b16 %v1244
        %v5240 = vunpack.c.l.b16 %v1245
        %v5241 = vunpack.c.h.b16 %v1245
        %v5242 = vunpack.c.l.b16 %v1246
        %v5243 = vunpack.c.h.b16 %v1246
        %v5244 = vunpack.c.l.b16 %v1247
        %v5245 = vunpack.c.h.b16 %v1247
        %v5246 = vunpack.c.l.b16 %v1248
        %v5247 = vunpack.c.h.b16 %v1248
        %v5248 = vunpack.c.l.b16 %v1249
        %v5249 = vunpack.c.h.b16 %v1249
        %v5250 = vunpack.c.l.b16 %v1250
        %v5251 = vunpack.c.h.b16 %v1250
        %v5252 = vunpack.c.l.b16 %v1251
        %v5253 = vunpack.c.h.b16 %v1251
        %v5254 = vunpack.c.l.b16 %v1252
        %v5255 = vunpack.c.h.b16 %v1252
        %v5256 = vunpack.c.l.b16 %v1253
        %v5257 = vunpack.c.h.b16 %v1253
        %v5258 = vunpack.c.l.b16 %v1254
        %v5259 = vunpack.c.h.b16 %v1254
        %v5260 = vunpack.c.l.b16 %v1255
        %v5261 = vunpack.c.h.b16 %v1255
        %v5262 = vunpack.c.l.b16 %v1256
        %v5263 = vunpack.c.h.b16 %v1256
        %v5264 = vunpack.c.l.b16 %v1257
        %v5265 = vunpack.c.h.b16 %v1257
        %v5266 = vunpack.c.l.b16 %v1258
        %v5267 = vunpack.c.h.b16 %v1258
        %v5268 = vunpack.c.l.b16 %v1259
        %v5269 = vunpack.c.h.b16 %v1259
        %v5270 = vunpack.c.l.b16 %v1260
        %v5271 = vunpack.c.h.b16 %v1260
        %v5272 = vunpack.c.l.b16 %v1261
        %v5273 = vunpack.c.h.b16 %v1261
        %v5274 = vunpack.c.l.b16 %v1262
        %v5275 = vunpack.c.h.b16 %v1262
        %v5276 = vunpack.c.l.b16 %v1263
        %v5277 = vunpack.c.h.b16 %v1263
        %v5278 = vunpack.c.l.b16 %v1264
        %v5279 = vunpack.c.h.b16 %v1264
        %v5280 = vunpack.c.l.b16 %v1265
        %v5281 = vunpack.c.h.b16 %v1265
        %v5282 = vunpack.c.l.b16 %v1266
        %v5283 = vunpack.c.h.b16 %v1266
        %v5284 = vunpack.c.l.b16 %v1267
        %v5285 = vunpack.c.h.b16 %v1267
        %v5286 = vunpack.c.l.b16 %v1268
        %v5287 = vunpack.c.h.b16 %v1268
        %v5288 = vunpack.c.l.b16 %v1269
        %v5289 = vunpack.c.h.b16 %v1269
        %v5290 = vunpack.c.l.b16 %v1270
        %v5291 = vunpack.c.h.b16 %v1270
        %v5292 = vunpack.c.l.b16 %v1271
        %v5293 = vunpack.c.h.b16 %v1271
        %v5294 = vunpack.c.l.b16 %v1272
        %v5295 = vunpack.c.h.b16 %v1272
        %v5296 = vunpack.c.l.b16 %v1273
        %v5297 = vunpack.c.h.b16 %v1273
        %v5298 = vunpack.c.l.b16 %v1274
        %v5299 = vunpack.c.h.b16 %v1274
        %v5300 = vunpack.c.l.b16 %v1275
        %v5301 = vunpack.c.h.b16 %v1275
        %v5302 = vunpack.c.l.b16 %v1276
        %v5303 = vunpack.c.h.b16 %v1276
        %v5304 = vunpack.c.l.b16 %v1277
        %v5305 = vunpack.c.h.b16 %v1277
        %v5306 = vunpack.c.l.b16 %v1278
        %v5307 = vunpack.c.h.b16 %v1278
        %v5308 = vunpack.c.l.b16 %v1279
        %v5309 = vunpack.c.h.b16 %v1279
        %v5310 = vunpack.c.l.b16 %v1280
        %v5311 = vunpack.c.h.b16 %v1280
        %v5312 = vunpack.c.l.b16 %v1281
        %v5313 = vunpack.c.h.b16 %v1281
        %v5314 = vunpack.c.l.b16 %v1282
        %v5315 = vunpack.c.h.b16 %v1282
        %v5316 = vunpack.c.l.b16 %v1283
        %v5317 = vunpack.c.h.b16 %v1283
        %v5318 = vunpack.c.l.b16 %v1284
        %v5319 = vunpack.c.h.b16 %v1284
        %v5320 = vunpack.c.l.b16 %v1285
        %v5321 = vunpack.c.h.b16 %v1285
        %v5322 = vunpack.c.l.b16 %v1286
        %v5323 = vunpack.c.h.b16 %v1286
        %v5324 = vunpack.c.l.b16 %v1287
        %v5325 = vunpack.c.h.b16 %v1287
        %v5326 = vunpack.c.l.b16 %v1288
        %v5327 = vunpack.c.h.b16 %v1288
        %v5328 = vunpack.c.l.b16 %v1289
        %v5329 = vunpack.c.h.b16 %v1289
        %v5330 = vunpack.c.l.b16 %v1290
        %v5331 = vunpack.c.h.b16 %v1290
        %v5332 = vunpack.c.l.b16 %v1291
        %v5333 = vunpack.c.h.b16 %v1291
        %v5334 = vunpack.c.l.b16 %v1292
        %v5335 = vunpack.c.h.b16 %v1292
        %v5336 = vunpack.c.l.b16 %v1293
        %v5337 = vunpack.c.h.b16 %v1293
        %v5338 = vunpack.c.l.b16 %v1294
        %v5339 = vunpack.c.h.b16 %v1294
        %v5340 = vunpack.c.l.b16 %v1295
        %v5341 = vunpack.c.h.b16 %v1295
        %v5342 = vunpack.c.l.b16 %v1296
        %v5343 = vunpack.c.h.b16 %v1296
        %v5344 = vunpack.c.l.b16 %v1297
        %v5345 = vunpack.c.h.b16 %v1297
        %v5346 = vunpack.c.l.b16 %v1298
        %v5347 = vunpack.c.h.b16 %v1298
        %v5348 = vunpack.c.l.b16 %v1299
        %v5349 = vunpack.c.h.b16 %v1299
        %v5350 = vunpack.c.l.b16 %v1300
        %v5351 = vunpack.c.h.b16 %v1300
        %v5352 = vunpack.c.l.b16 %v1301
        %v5353 = vunpack.c.h.b16 %v1301
        %v5354 = vunpack.c.l.b16 %v1302
        %v5355 = vunpack.c.h.b16 %v1302
        %v5356 = vunpack.c.l.b16 %v1303
        %v5357 = vunpack.c.h.b16 %v1303
        %v5358 = vunpack.c.l.b16 %v1304
        %v5359 = vunpack.c.h.b16 %v1304
        %v5360 = vunpack.c.l.b16 %v1305
        %v5361 = vunpack.c.h.b16 %v1305
        %v5362 = vunpack.c.l.b16 %v1306
        %v5363 = vunpack.c.h.b16 %v1306
        %v5364 = vunpack.c.l.b16 %v1307
        %v5365 = vunpack.c.h.b16 %v1307
        %v5366 = vunpack.c.l.b16 %v1308
        %v5367 = vunpack.c.h.b16 %v1308
        %v5368 = vunpack.c.l.b16 %v1309
        %v5369 = vunpack.c.h.b16 %v1309
        %v5370 = vunpack.c.l.b16 %v1310
        %v5371 = vunpack.c.h.b16 %v1310
        %v5372 = vunpack.c.l.b16 %v1311
        %v5373 = vunpack.c.h.b16 %v1311
        %v5374 = vunpack.c.l.b16 %v1312
        %v5375 = vunpack.c.h.b16 %v1312
        %v5376 = vunpack.c.l.b16 %v1313
        %v5377 = vunpack.c.h.b16 %v1313
        %v5378 = vunpack.c.l.b16 %v1314
        %v5379 = vunpack.c.h.b16 %v1314
        %v5380 = vunpack.c.l.b16 %v1315
        %v5381 = vunpack.c.h.b16 %v1315
        %v5382 = vunpack.c.l.b16 %v1316
        %v5383 = vunpack.c.h.b16 %v1316
        %v5384 = vunpack.c.l.b16 %v1317
        %v5385 = vunpack.c.h.b16 %v1317
        %v5386 = vunpack.c.l.b16 %v1318
        %v5387 = vunpack.c.h.b16 %v1318
        %v5388 = vunpack.c.l.b16 %v1319
        %v5389 = vunpack.c.h.b16 %v1319
        %v5390 = vunpack.c.l.b16 %v1320
        %v5391 = vunpack.c.h.b16 %v1320
        %v5392 = vunpack.c.l.b16 %v1321
        %v5393 = vunpack.c.h.b16 %v1321
        %v5394 = vunpack.c.l.b16 %v1322
        %v5395 = vunpack.c.h.b16 %v1322
        %v5396 = vunpack.c.l.b16 %v1323
        %v5397 = vunpack.c.h.b16 %v1323
        %v5398 = vunpack.c.l.b16 %v1324
        %v5399 = vunpack.c.h.b16 %v1324
        %v5400 = vunpack.c.l.b16 %v1325
        %v5401 = vunpack.c.h.b16 %v1325
        %v5402 = vunpack.c.l.b16 %v1326
        %v5403 = vunpack.c.h.b16 %v1326
        %v5404 = vunpack.c.l.b16 %v1327
        %v5405 = vunpack.c.h.b16 %v1327
        %v5406 = vunpack.c.l.b16 %v1328
        %v5407 = vunpack.c.h.b16 %v1328
        %v5408 = vunpack.c.l.b16 %v1329
        %v5409 = vunpack.c.h.b16 %v1329
        %v5410 = vunpack.c.l.b16 %v1330
        %v5411 = vunpack.c.h.b16 %v1330
        %v5412 = vunpack.c.l.b16 %v1331
        %v5413 = vunpack.c.h.b16 %v1331
        %v5414 = vunpack.c.l.b16 %v1332
        %v5415 = vunpack.c.h.b16 %v1332
        %v5416 = vunpack.c.l.b16 %v1333
        %v5417 = vunpack.c.h.b16 %v1333
        %v5418 = vunpack.c.l.b16 %v1334
        %v5419 = vunpack.c.h.b16 %v1334
        %v5420 = vunpack.c.l.b16 %v1335
        %v5421 = vunpack.c.h.b16 %v1335
        %v5422 = vunpack.c.l.b16 %v1336
        %v5423 = vunpack.c.h.b16 %v1336
        %v5424 = vunpack.c.l.b16 %v1337
        %v5425 = vunpack.c.h.b16 %v1337
        %v5426 = vunpack.c.l.b16 %v1338
        %v5427 = vunpack.c.h.b16 %v1338
        %v5428 = vunpack.c.l.b16 %v1339
        %v5429 = vunpack.c.h.b16 %v1339
        %v5430 = vunpack.c.l.b16 %v1340
        %v5431 = vunpack.c.h.b16 %v1340
        %v5432 = vunpack.c.l.b16 %v1341
        %v5433 = vunpack.c.h.b16 %v1341
        %v5434 = vunpack.c.l.b16 %v1342
        %v5435 = vunpack.c.h.b16 %v1342
        %v5436 = vunpack.c.l.b16 %v1343
        %v5437 = vunpack.c.h.b16 %v1343
        %v5438 = vunpack.c.l.b16 %v1344
        %v5439 = vunpack.c.h.b16 %v1344
        %v5440 = vunpack.c.l.b16 %v1345
        %v5441 = vunpack.c.h.b16 %v1345
        %v5442 = vunpack.c.l.b16 %v1346
        %v5443 = vunpack.c.h.b16 %v1346
        %v5444 = vunpack.c.l.b16 %v1347
        %v5445 = vunpack.c.h.b16 %v1347
        %v5446 = vunpack.c.l.b16 %v1348
        %v5447 = vunpack.c.h.b16 %v1348
        %v5448 = vunpack.c.l.b16 %v1349
        %v5449 = vunpack.c.h.b16 %v1349
        %v5450 = vunpack.c.l.b16 %v1350
        %v5451 = vunpack.c.h.b16 %v1350
        %v5452 = vunpack.c.l.b16 %v1351
        %v5453 = vunpack.c.h.b16 %v1351
        %v5454 = vunpack.c.l.b16 %v1352
        %v5455 = vunpack.c.h.b16 %v1352
        %v5456 = vunpack.c.l.b16 %v1353
        %v5457 = vunpack.c.h.b16 %v1353
        %v5458 = vunpack.c.l.b16 %v1354
        %v5459 = vunpack.c.h.b16 %v1354
        %v5460 = vunpack.c.l.b16 %v1355
        %v5461 = vunpack.c.h.b16 %v1355
        %v5462 = vunpack.c.l.b16 %v1356
        %v5463 = vunpack.c.h.b16 %v1356
        %v5464 = vunpack.c.l.b16 %v1357
        %v5465 = vunpack.c.h.b16 %v1357
        %v5466 = vunpack.c.l.b16 %v1358
        %v5467 = vunpack.c.h.b16 %v1358
        %v5468 = vunpack.c.l.b16 %v1359
        %v5469 = vunpack.c.h.b16 %v1359
        %v5470 = vunpack.c.l.b16 %v1360
        %v5471 = vunpack.c.h.b16 %v1360
        %v5472 = vunpack.c.l.b16 %v1361
        %v5473 = vunpack.c.h.b16 %v1361
        %v5474 = vunpack.c.l.b16 %v1362
        %v5475 = vunpack.c.h.b16 %v1362
        %v5476 = vunpack.c.l.b16 %v1363
        %v5477 = vunpack.c.h.b16 %v1363
        %v5478 = vunpack.c.l.b16 %v1364
        %v5479 = vunpack.c.h.b16 %v1364
        %v5480 = vunpack.c.l.b16 %v1365
        %v5481 = vunpack.c.h.b16 %v1365
        %v5482 = vunpack.c.l.b16 %v1366
        %v5483 = vunpack.c.h.b16 %v1366
        %v5484 = vunpack.c.l.b16 %v1367
        %v5485 = vunpack.c.h.b16 %v1367
        %v5486 = vunpack.c.l.b16 %v1368
        %v5487 = vunpack.c.h.b16 %v1368
        %v5488 = vunpack.c.l.b16 %v1369
        %v5489 = vunpack.c.h.b16 %v1369
        %v5490 = vunpack.c.l.b16 %v1370
        %v5491 = vunpack.c.h.b16 %v1370
        %v5492 = vunpack.c.l.b16 %v1371
        %v5493 = vunpack.c.h.b16 %v1371
        %v5494 = vunpack.c.l.b16 %v1372
        %v5495 = vunpack.c.h.b16 %v1372
        %v5496 = vunpack.c.l.b16 %v1373
        %v5497 = vunpack.c.h.b16 %v1373
        %v5498 = vunpack.c.l.b16 %v1374
        %v5499 = vunpack.c.h.b16 %v1374
        %v5500 = vunpack.c.l.b16 %v1375
        %v5501 = vunpack.c.h.b16 %v1375
        %v5502 = vunpack.c.l.b16 %v1376
        %v5503 = vunpack.c.h.b16 %v1376
        %v5504 = vunpack.c.l.b16 %v1377
        %v5505 = vunpack.c.h.b16 %v1377
        %v5506 = vunpack.c.l.b16 %v1378
        %v5507 = vunpack.c.h.b16 %v1378
        %v5508 = vunpack.c.l.b16 %v1379
        %v5509 = vunpack.c.h.b16 %v1379
        %v5510 = vunpack.c.l.b16 %v1380
        %v5511 = vunpack.c.h.b16 %v1380
        %v5512 = vunpack.c.l.b16 %v1381
        %v5513 = vunpack.c.h.b16 %v1381
        %v5514 = vunpack.c.l.b16 %v1382
        %v5515 = vunpack.c.h.b16 %v1382
        %v5516 = vunpack.c.l.b16 %v1383
        %v5517 = vunpack.c.h.b16 %v1383
        %v5518 = vunpack.c.l.b16 %v1384
        %v5519 = vunpack.c.h.b16 %v1384
        %v5520 = vunpack.c.l.b16 %v1385
        %v5521 = vunpack.c.h.b16 %v1385
        %v5522 = vunpack.c.l.b16 %v1386
        %v5523 = vunpack.c.h.b16 %v1386
        %v5524 = vunpack.c.l.b16 %v1387
        %v5525 = vunpack.c.h.b16 %v1387
        %v5526 = vunpack.c.l.b16 %v1388
        %v5527 = vunpack.c.h.b16 %v1388
        %v5528 = vunpack.c.l.b16 %v1389
        %v5529 = vunpack.c.h.b16 %v1389
        %v5530 = vunpack.c.l.b16 %v1390
        %v5531 = vunpack.c.h.b16 %v1390
        %v5532 = vunpack.c.l.b16 %v1391
        %v5533 = vunpack.c.h.b16 %v1391
        %v5534 = vunpack.c.l.b16 %v1392
        %v5535 = vunpack.c.h.b16 %v1392
        %v5536 = vunpack.c.l.b16 %v1393
        %v5537 = vunpack.c.h.b16 %v1393
        %v5538 = vunpack.c.l.b16 %v1394
        %v5539 = vunpack.c.h.b16 %v1394
        %v5540 = vunpack.c.l.b16 %v1395
        %v5541 = vunpack.c.h.b16 %v1395
        %v5542 = vunpack.c.l.b16 %v1396
        %v5543 = vunpack.c.h.b16 %v1396
        %v5544 = vunpack.c.l.b16 %v1397
        %v5545 = vunpack.c.h.b16 %v1397
        %v5546 = vunpack.c.l.b16 %v1398
        %v5547 = vunpack.c.h.b16 %v1398
        %v5548 = vunpack.c.l.b16 %v1399
        %v5549 = vunpack.c.h.b16 %v1399
        %v5550 = vunpack.c.l.b16 %v1400
        %v5551 = vunpack.c.h.b16 %v1400
        %v5552 = vunpack.c.l.b16 %v1401
        %v5553 = vunpack.c.h.b16 %v1401
        %v5554 = vunpack.c.l.b16 %v1402
        %v5555 = vunpack.c.h.b16 %v1402
        %v5556 = vunpack.c.l.b16 %v1403
        %v5557 = vunpack.c.h.b16 %v1403
        %v5558 = vunpack.c.l.b16 %v1404
        %v5559 = vunpack.c.h.b16 %v1404
        %v5560 = vunpack.c.l.b16 %v1405
        %v5561 = vunpack.c.h.b16 %v1405
        %v5562 = vunpack.c.l.b16 %v1406
        %v5563 = vunpack.c.h.b16 %v1406
        %v5564 = vunpack.c.l.b16 %v1407
        %v5565 = vunpack.c.h.b16 %v1407
        %v5566 = vunpack.c.l.b16 %v1408
        %v5567 = vunpack.c.h.b16 %v1408
        %v5568 = vunpack.c.l.b16 %v1409
        %v5569 = vunpack.c.h.b16 %v1409
        %v5570 = vunpack.c.l.b16 %v1410
        %v5571 = vunpack.c.h.b16 %v1410
        %v5572 = vunpack.c.l.b16 %v1411
        %v5573 = vunpack.c.h.b16 %v1411
        %v5574 = vunpack.c.l.b16 %v1412
        %v5575 = vunpack.c.h.b16 %v1412
        %v5576 = vunpack.c.l.b16 %v1413
        %v5577 = vunpack.c.h.b16 %v1413
        %v5578 = vunpack.c.l.b16 %v1414
        %v5579 = vunpack.c.h.b16 %v1414
        %v5580 = vunpack.c.l.b16 %v1415
        %v5581 = vunpack.c.h.b16 %v1415
        %v5582 = vunpack.c.l.b16 %v1416
        %v5583 = vunpack.c.h.b16 %v1416
        %v5584 = vunpack.c.l.b16 %v1417
        %v5585 = vunpack.c.h.b16 %v1417
        %v5586 = vunpack.c.l.b16 %v1418
        %v5587 = vunpack.c.h.b16 %v1418
        %v5588 = vunpack.c.l.b16 %v1419
        %v5589 = vunpack.c.h.b16 %v1419
        %v5590 = vunpack.c.l.b16 %v1420
        %v5591 = vunpack.c.h.b16 %v1420
        %v5592 = vunpack.c.l.b16 %v1421
        %v5593 = vunpack.c.h.b16 %v1421
        %v5594 = vunpack.c.l.b16 %v1422
        %v5595 = vunpack.c.h.b16 %v1422
        %v5596 = vunpack.c.l.b16 %v1423
        %v5597 = vunpack.c.h.b16 %v1423
        %v5598 = vunpack.c.l.b16 %v1424
        %v5599 = vunpack.c.h.b16 %v1424
        %v5600 = vunpack.c.l.b16 %v1425
        %v5601 = vunpack.c.h.b16 %v1425
        %v5602 = vunpack.c.l.b16 %v1426
        %v5603 = vunpack.c.h.b16 %v1426
        %v5604 = vunpack.c.l.b16 %v1427
        %v5605 = vunpack.c.h.b16 %v1427
        %v5606 = vunpack.c.l.b16 %v1428
        %v5607 = vunpack.c.h.b16 %v1428
        %v5608 = vunpack.c.l.b16 %v1429
        %v5609 = vunpack.c.h.b16 %v1429
        %v5610 = vunpack.c.l.b16 %v1430
        %v5611 = vunpack.c.h.b16 %v1430
        %v5612 = vunpack.c.l.b16 %v1431
        %v5613 = vunpack.c.h.b16 %v1431
        %v5614 = vunpack.c.l.b16 %v1432
        %v5615 = vunpack.c.h.b16 %v1432
        %v5616 = vunpack.c.l.b16 %v1433
        %v5617 = vunpack.c.h.b16 %v1433
        %v5618 = vunpack.c.l.b16 %v1434
        %v5619 = vunpack.c.h.b16 %v1434
        %v5620 = vunpack.c.l.b16 %v1435
        %v5621 = vunpack.c.h.b16 %v1435
        %v5622 = vunpack.c.l.b16 %v1436
        %v5623 = vunpack.c.h.b16 %v1436
        %v5624 = vunpack.c.l.b16 %v1437
        %v5625 = vunpack.c.h.b16 %v1437
        %v5626 = vunpack.c.l.b16 %v1438
        %v5627 = vunpack.c.h.b16 %v1438
        %v5628 = vunpack.c.l.b16 %v1439
        %v5629 = vunpack.c.h.b16 %v1439
        %v5630 = vunpack.c.l.b16 %v1440
        %v5631 = vunpack.c.h.b16 %v1440
        %v5632 = vunpack.c.l.b16 %v1441
        %v5633 = vunpack.c.h.b16 %v1441
        %v5634 = vunpack.c.l.b16 %v1442
        %v5635 = vunpack.c.h.b16 %v1442
        %v5636 = vunpack.c.l.b16 %v1443
        %v5637 = vunpack.c.h.b16 %v1443
        %v5638 = vunpack.c.l.b16 %v1444
        %v5639 = vunpack.c.h.b16 %v1444
        %v5640 = vunpack.c.l.b16 %v1445
        %v5641 = vunpack.c.h.b16 %v1445
        %v5642 = vunpack.c.l.b16 %v1446
        %v5643 = vunpack.c.h.b16 %v1446
        %v5644 = vunpack.c.l.b16 %v1447
        %v5645 = vunpack.c.h.b16 %v1447
        %v5646 = vunpack.c.l.b16 %v1448
        %v5647 = vunpack.c.h.b16 %v1448
        %v5648 = vunpack.c.l.b16 %v1449
        %v5649 = vunpack.c.h.b16 %v1449
        %v5650 = vunpack.c.l.b16 %v1450
        %v5651 = vunpack.c.h.b16 %v1450
        %v5652 = vunpack.c.l.b16 %v1451
        %v5653 = vunpack.c.h.b16 %v1451
        %v5654 = vunpack.c.l.b16 %v1452
        %v5655 = vunpack.c.h.b16 %v1452
        %v5656 = vunpack.c.l.b16 %v1453
        %v5657 = vunpack.c.h.b16 %v1453
        %v5658 = vunpack.c.l.b16 %v1454
        %v5659 = vunpack.c.h.b16 %v1454
        %v5660 = vunpack.c.l.b16 %v1455
        %v5661 = vunpack.c.h.b16 %v1455
        %v5662 = vunpack.c.l.b16 %v1456
        %v5663 = vunpack.c.h.b16 %v1456
        %v5664 = vunpack.c.l.b16 %v1457
        %v5665 = vunpack.c.h.b16 %v1457
        %v5666 = vunpack.c.l.b16 %v1458
        %v5667 = vunpack.c.h.b16 %v1458
        %v5668 = vunpack.c.l.b16 %v1459
        %v5669 = vunpack.c.h.b16 %v1459
        %v5670 = vunpack.c.l.b16 %v1460
        %v5671 = vunpack.c.h.b16 %v1460
        %v5672 = vunpack.c.l.b16 %v1461
        %v5673 = vunpack.c.h.b16 %v1461
        %v5674 = vunpack.c.l.b16 %v1462
        %v5675 = vunpack.c.h.b16 %v1462
        %v5676 = vunpack.c.l.b16 %v1463
        %v5677 = vunpack.c.h.b16 %v1463
        %v5678 = vunpack.c.l.b16 %v1464
        %v5679 = vunpack.c.h.b16 %v1464
        %v5680 = vunpack.c.l.b16 %v1465
        %v5681 = vunpack.c.h.b16 %v1465
        %v5682 = vunpack.c.l.b16 %v1466
        %v5683 = vunpack.c.h.b16 %v1466
        %v5684 = vunpack.c.l.b16 %v1467
        %v5685 = vunpack.c.h.b16 %v1467
        %v5686 = vunpack.c.l.b16 %v1468
        %v5687 = vunpack.c.h.b16 %v1468
        %v5688 = vunpack.c.l.b16 %v1469
        %v5689 = vunpack.c.h.b16 %v1469
        %v5690 = vunpack.c.l.b16 %v1470
        %v5691 = vunpack.c.h.b16 %v1470
        %v5692 = vunpack.c.l.b16 %v1471
        %v5693 = vunpack.c.h.b16 %v1471
        %v5694 = vunpack.c.l.b16 %v1472
        %v5695 = vunpack.c.h.b16 %v1472
        %v5696 = vunpack.c.l.b16 %v1473
        %v5697 = vunpack.c.h.b16 %v1473
        %v5698 = vunpack.c.l.b16 %v1474
        %v5699 = vunpack.c.h.b16 %v1474
        %v5700 = vunpack.c.l.b16 %v1475
        %v5701 = vunpack.c.h.b16 %v1475
        %v5702 = vunpack.c.l.b16 %v1476
        %v5703 = vunpack.c.h.b16 %v1476
        %v5704 = vunpack.c.l.b16 %v1477
        %v5705 = vunpack.c.h.b16 %v1477
        %v5706 = vunpack.c.l.b16 %v1478
        %v5707 = vunpack.c.h.b16 %v1478
        %v5708 = vunpack.c.l.b16 %v1479
        %v5709 = vunpack.c.h.b16 %v1479
        %v5710 = vunpack.c.l.b16 %v1480
        %v5711 = vunpack.c.h.b16 %v1480
        %v5712 = vunpack.c.l.b16 %v1481
        %v5713 = vunpack.c.h.b16 %v1481
        %v5714 = vunpack.c.l.b16 %v1482
        %v5715 = vunpack.c.h.b16 %v1482
        %v5716 = vunpack.c.l.b16 %v1483
        %v5717 = vunpack.c.h.b16 %v1483
        %v5718 = vunpack.c.l.b16 %v1484
        %v5719 = vunpack.c.h.b16 %v1484
        %v5720 = vunpack.c.l.b16 %v1485
        %v5721 = vunpack.c.h.b16 %v1485
        %v5722 = vunpack.c.l.b16 %v1486
        %v5723 = vunpack.c.h.b16 %v1486
        %v5724 = vunpack.c.l.b16 %v1487
        %v5725 = vunpack.c.h.b16 %v1487
        %v5726 = vunpack.c.l.b16 %v1488
        %v5727 = vunpack.c.h.b16 %v1488
        %v5728 = vunpack.c.l.b16 %v1489
        %v5729 = vunpack.c.h.b16 %v1489
        %v5730 = vunpack.c.l.b16 %v1490
        %v5731 = vunpack.c.h.b16 %v1490
        %v5732 = vunpack.c.l.b16 %v1491
        %v5733 = vunpack.c.h.b16 %v1491
        %v5734 = vunpack.c.l.b16 %v1492
        %v5735 = vunpack.c.h.b16 %v1492
        %v5736 = vunpack.c.l.b16 %v1493
        %v5737 = vunpack.c.h.b16 %v1493
        %v5738 = vunpack.c.l.b16 %v1494
        %v5739 = vunpack.c.h.b16 %v1494
        %v5740 = vunpack.c.l.b16 %v1495
        %v5741 = vunpack.c.h.b16 %v1495
        %v5742 = vunpack.c.l.b16 %v1496
        %v5743 = vunpack.c.h.b16 %v1496
        %v5744 = vunpack.c.l.b16 %v1497
        %v5745 = vunpack.c.h.b16 %v1497
        %v5746 = vunpack.c.l.b16 %v1498
        %v5747 = vunpack.c.h.b16 %v1498
        %v5748 = vunpack.c.l.b16 %v1499
        %v5749 = vunpack.c.h.b16 %v1499
        %v5750 = vunpack.c.l.b16 %v1500
        %v5751 = vunpack.c.h.b16 %v1500
        %v5752 = vunpack.c.l.b16 %v1501
        %v5753 = vunpack.c.h.b16 %v1501
        %v5754 = vunpack.c.l.b16 %v1502
        %v5755 = vunpack.c.h.b16 %v1502
        %v5756 = vunpack.c.l.b16 %v1503
        %v5757 = vunpack.c.h.b16 %v1503
        %v5758 = vunpack.c.l.b16 %v1504
        %v5759 = vunpack.c.h.b16 %v1504
        %v5760 = vunpack.c.l.b16 %v1505
        %v5761 = vunpack.c.h.b16 %v1505
        %v5762 = vunpack.c.l.b16 %v1506
        %v5763 = vunpack.c.h.b16 %v1506
        %v5764 = vunpack.c.l.b16 %v1507
        %v5765 = vunpack.c.h.b16 %v1507
        %v5766 = vunpack.c.l.b16 %v1508
        %v5767 = vunpack.c.h.b16 %v1508
        %v5768 = vunpack.c.l.b16 %v1509
        %v5769 = vunpack.c.h.b16 %v1509
        %v5770 = vunpack.c.l.b16 %v1510
        %v5771 = vunpack.c.h.b16 %v1510
        %v5772 = vunpack.c.l.b16 %v1511
        %v5773 = vunpack.c.h.b16 %v1511
        %v5774 = vunpack.c.l.b16 %v1512
        %v5775 = vunpack.c.h.b16 %v1512
        %v5776 = vunpack.c.l.b16 %v1513
        %v5777 = vunpack.c.h.b16 %v1513
        %v5778 = vunpack.c.l.b16 %v1514
        %v5779 = vunpack.c.h.b16 %v1514
        %v5780 = vunpack.c.l.b16 %v1515
        %v5781 = vunpack.c.h.b16 %v1515
        %v5782 = vunpack.c.l.b16 %v1516
        %v5783 = vunpack.c.h.b16 %v1516
        %v5784 = vunpack.c.l.b16 %v1517
        %v5785 = vunpack.c.h.b16 %v1517
        %v5786 = vunpack.c.l.b16 %v1518
        %v5787 = vunpack.c.h.b16 %v1518
        %v5788 = vunpack.c.l.b16 %v1519
        %v5789 = vunpack.c.h.b16 %v1519
        %v5790 = vunpack.c.l.b16 %v1520
        %v5791 = vunpack.c.h.b16 %v1520
        %v5792 = vunpack.c.l.b16 %v1521
        %v5793 = vunpack.c.h.b16 %v1521
        %v5794 = vunpack.c.l.b16 %v1522
        %v5795 = vunpack.c.h.b16 %v1522
        %v5796 = vunpack.c.l.b16 %v1523
        %v5797 = vunpack.c.h.b16 %v1523
        %v5798 = vunpack.c.l.b16 %v1524
        %v5799 = vunpack.c.h.b16 %v1524
        %v5800 = vunpack.c.l.b16 %v1525
        %v5801 = vunpack.c.h.b16 %v1525
        %v5802 = vunpack.c.l.b16 %v1526
        %v5803 = vunpack.c.h.b16 %v1526
        %v5804 = vunpack.c.l.b16 %v1527
        %v5805 = vunpack.c.h.b16 %v1527
        %v5806 = vunpack.c.l.b16 %v1528
        %v5807 = vunpack.c.h.b16 %v1528
        %v5808 = vunpack.c.l.b16 %v1529
        %v5809 = vunpack.c.h.b16 %v1529
        %v5810 = vunpack.c.l.b16 %v1530
        %v5811 = vunpack.c.h.b16 %v1530
        %v5812 = vunpack.c.l.b16 %v1531
        %v5813 = vunpack.c.h.b16 %v1531
        %v5814 = vunpack.c.l.b16 %v1532
        %v5815 = vunpack.c.h.b16 %v1532
        %v5816 = vunpack.c.l.b16 %v1533
        %v5817 = vunpack.c.h.b16 %v1533
        %v5818 = vunpack.c.l.b16 %v1534
        %v5819 = vunpack.c.h.b16 %v1534
        %v5820 = vunpack.c.l.b16 %v1535
        %v5821 = vunpack.c.h.b16 %v1535
        %v5822 = vunpack.c.l.b16 %v1536
        %v5823 = vunpack.c.h.b16 %v1536
        %v5824 = vunpack.c.l.b16 %v1537
        %v5825 = vunpack.c.h.b16 %v1537
        %v5826 = vunpack.c.l.b16 %v1538
        %v5827 = vunpack.c.h.b16 %v1538
        %v5828 = vunpack.c.l.b16 %v1539
        %v5829 = vunpack.c.h.b16 %v1539
        %v5830 = vunpack.c.l.b16 %v1540
        %v5831 = vunpack.c.h.b16 %v1540
        %v5832 = vunpack.c.l.b16 %v1541
        %v5833 = vunpack.c.h.b16 %v1541
        %v5834 = vunpack.c.l.b16 %v1542
        %v5835 = vunpack.c.h.b16 %v1542
        %v5836 = vunpack.c.l.b16 %v1543
        %v5837 = vunpack.c.h.b16 %v1543
        %v5838 = vunpack.c.l.b16 %v1544
        %v5839 = vunpack.c.h.b16 %v1544
        %v5840 = vunpack.c.l.b16 %v1545
        %v5841 = vunpack.c.h.b16 %v1545
        %v5842 = vunpack.c.l.b16 %v1546
        %v5843 = vunpack.c.h.b16 %v1546
        %v5844 = vunpack.c.l.b16 %v1547
        %v5845 = vunpack.c.h.b16 %v1547
        %v5846 = vunpack.c.l.b16 %v1548
        %v5847 = vunpack.c.h.b16 %v1548
        %v5848 = vunpack.c.l.b16 %v1549
        %v5849 = vunpack.c.h.b16 %v1549
        %v5850 = vunpack.c.l.b16 %v1550
        %v5851 = vunpack.c.h.b16 %v1550
        %v5852 = vunpack.c.l.b16 %v1551
        %v5853 = vunpack.c.h.b16 %v1551
        %v5854 = vunpack.c.l.b16 %v1552
        %v5855 = vunpack.c.h.b16 %v1552
        %v5856 = vunpack.c.l.b16 %v1553
        %v5857 = vunpack.c.h.b16 %v1553
        %v5858 = vunpack.c.l.b16 %v1554
        %v5859 = vunpack.c.h.b16 %v1554
        %v5860 = vunpack.c.l.b16 %v1555
        %v5861 = vunpack.c.h.b16 %v1555
        %v5862 = vunpack.c.l.b16 %v1556
        %v5863 = vunpack.c.h.b16 %v1556
        %v5864 = vunpack.c.l.b16 %v1557
        %v5865 = vunpack.c.h.b16 %v1557
        %v5866 = vunpack.c.l.b16 %v1558
        %v5867 = vunpack.c.h.b16 %v1558
        %v5868 = vunpack.c.l.b16 %v1559
        %v5869 = vunpack.c.h.b16 %v1559
        %v5870 = vunpack.c.l.b16 %v1560
        %v5871 = vunpack.c.h.b16 %v1560
        %v5872 = vunpack.c.l.b16 %v1561
        %v5873 = vunpack.c.h.b16 %v1561
        %v5874 = vunpack.c.l.b16 %v1562
        %v5875 = vunpack.c.h.b16 %v1562
        %v5876 = vunpack.c.l.b16 %v1563
        %v5877 = vunpack.c.h.b16 %v1563
        %v5878 = vunpack.c.l.b16 %v1564
        %v5879 = vunpack.c.h.b16 %v1564
        %v5880 = vunpack.c.l.b16 %v1565
        %v5881 = vunpack.c.h.b16 %v1565
        %v5882 = vunpack.c.l.b16 %v1566
        %v5883 = vunpack.c.h.b16 %v1566
        %v5884 = vunpack.c.l.b16 %v1567
        %v5885 = vunpack.c.h.b16 %v1567
        %v5886 = vunpack.c.l.b16 %v1568
        %v5887 = vunpack.c.h.b16 %v1568
        %v5888 = vunpack.c.l.b16 %v1569
        %v5889 = vunpack.c.h.b16 %v1569
        %v5890 = vunpack.c.l.b16 %v1570
        %v5891 = vunpack.c.h.b16 %v1570
        %v5892 = vunpack.c.l.b16 %v1571
        %v5893 = vunpack.c.h.b16 %v1571
        %v5894 = vunpack.c.l.b16 %v1572
        %v5895 = vunpack.c.h.b16 %v1572
        %v5896 = vunpack.c.l.b16 %v1573
        %v5897 = vunpack.c.h.b16 %v1573
        %v5898 = vunpack.c.l.b16 %v1574
        %v5899 = vunpack.c.h.b16 %v1574
        %v5900 = vunpack.c.l.b16 %v1575
        %v5901 = vunpack.c.h.b16 %v1575
        %v5902 = vunpack.c.l.b16 %v1576
        %v5903 = vunpack.c.h.b16 %v1576
        %v5904 = vunpack.c.l.b16 %v1577
        %v5905 = vunpack.c.h.b16 %v1577
        %v5906 = vunpack.c.l.b16 %v1578
        %v5907 = vunpack.c.h.b16 %v1578
        %v5908 = vunpack.c.l.b16 %v1579
        %v5909 = vunpack.c.h.b16 %v1579
        %v5910 = vunpack.c.l.b16 %v1580
        %v5911 = vunpack.c.h.b16 %v1580
        %v5912 = vunpack.c.l.b16 %v1581
        %v5913 = vunpack.c.h.b16 %v1581
        %v5914 = vunpack.c.l.b16 %v1582
        %v5915 = vunpack.c.h.b16 %v1582
        %v5916 = vunpack.c.l.b16 %v1583
        %v5917 = vunpack.c.h.b16 %v1583
        %v5918 = vunpack.c.l.b16 %v1584
        %v5919 = vunpack.c.h.b16 %v1584
        %v5920 = vunpack.c.l.b16 %v1585
        %v5921 = vunpack.c.h.b16 %v1585
        %v5922 = vunpack.c.l.b16 %v1586
        %v5923 = vunpack.c.h.b16 %v1586
        %v5924 = vunpack.c.l.b16 %v1587
        %v5925 = vunpack.c.h.b16 %v1587
        %v5926 = vunpack.c.l.b16 %v1588
        %v5927 = vunpack.c.h.b16 %v1588
        %v5928 = vunpack.c.l.b16 %v1589
        %v5929 = vunpack.c.h.b16 %v1589
        %v5930 = vunpack.c.l.b16 %v1590
        %v5931 = vunpack.c.h.b16 %v1590
        %v5932 = vunpack.c.l.b16 %v1591
        %v5933 = vunpack.c.h.b16 %v1591
        %v5934 = vunpack.c.l.b16 %v1592
        %v5935 = vunpack.c.h.b16 %v1592
        %v5936 = vunpack.c.l.b16 %v1593
        %v5937 = vunpack.c.h.b16 %v1593
        %v5938 = vunpack.c.l.b16 %v1594
        %v5939 = vunpack.c.h.b16 %v1594
        %v5940 = vunpack.c.l.b16 %v1595
        %v5941 = vunpack.c.h.b16 %v1595
        %v5942 = vunpack.c.l.b16 %v1596
        %v5943 = vunpack.c.h.b16 %v1596
        %v5944 = vunpack.c.l.b16 %v1597
        %v5945 = vunpack.c.h.b16 %v1597
        %v5946 = vunpack.c.l.b16 %v1598
        %v5947 = vunpack.c.h.b16 %v1598
        %v5948 = vunpack.c.l.b16 %v1599
        %v5949 = vunpack.c.h.b16 %v1599
        %v5950 = vunpack.c.l.b16 %v1600
        %v5951 = vunpack.c.h.b16 %v1600
        %v5952 = vunpack.c.l.b16 %v1601
        %v5953 = vunpack.c.h.b16 %v1601
        %v5954 = vunpack.c.l.b16 %v1602
        %v5955 = vunpack.c.h.b16 %v1602
        %v5956 = vunpack.c.l.b16 %v1603
        %v5957 = vunpack.c.h.b16 %v1603
        %v5958 = vunpack.c.l.b16 %v1604
        %v5959 = vunpack.c.h.b16 %v1604
        %v5960 = vunpack.c.l.b16 %v1605
        %v5961 = vunpack.c.h.b16 %v1605
        %v5962 = vunpack.c.l.b16 %v1606
        %v5963 = vunpack.c.h.b16 %v1606
        %v5964 = vunpack.c.l.b16 %v1607
        %v5965 = vunpack.c.h.b16 %v1607
        %v5966 = vunpack.c.l.b16 %v1608
        %v5967 = vunpack.c.h.b16 %v1608
        %v5968 = vunpack.c.l.b16 %v1609
        %v5969 = vunpack.c.h.b16 %v1609
        %v5970 = vunpack.c.l.b16 %v1610
        %v5971 = vunpack.c.h.b16 %v1610
        %v5972 = vunpack.c.l.b16 %v1611
        %v5973 = vunpack.c.h.b16 %v1611
        %v5974 = vunpack.c.l.b16 %v1612
        %v5975 = vunpack.c.h.b16 %v1612
        %v5976 = vunpack.c.l.b16 %v1613
        %v5977 = vunpack.c.h.b16 %v1613
        %v5978 = vunpack.c.l.b16 %v1614
        %v5979 = vunpack.c.h.b16 %v1614
        %v5980 = vunpack.c.l.b16 %v1615
        %v5981 = vunpack.c.h.b16 %v1615
        %v5982 = vunpack.c.l.b16 %v1616
        %v5983 = vunpack.c.h.b16 %v1616
        %v5984 = vunpack.c.l.b16 %v1617
        %v5985 = vunpack.c.h.b16 %v1617
        %v5986 = vunpack.c.l.b16 %v1618
        %v5987 = vunpack.c.h.b16 %v1618
        %v5988 = vunpack.c.l.b16 %v1619
        %v5989 = vunpack.c.h.b16 %v1619
        %v5990 = vunpack.c.l.b16 %v1620
        %v5991 = vunpack.c.h.b16 %v1620
        %v5992 = vunpack.c.l.b16 %v1621
        %v5993 = vunpack.c.h.b16 %v1621
        %v5994 = vunpack.c.l.b16 %v1622
        %v5995 = vunpack.c.h.b16 %v1622
        %v5996 = vunpack.c.l.b16 %v1623
        %v5997 = vunpack.c.h.b16 %v1623
        %v5998 = vunpack.c.l.b16 %v1624
        %v5999 = vunpack.c.h.b16 %v1624
        %v6000 = vunpack.c.l.b16 %v1625
        %v6001 = vunpack.c.h.b16 %v1625
        %v6002 = vunpack.c.l.b16 %v1626
        %v6003 = vunpack.c.h.b16 %v1626
        %v6004 = vunpack.c.l.b16 %v1627
        %v6005 = vunpack.c.h.b16 %v1627
        %v6006 = vunpack.c.l.b16 %v1628
        %v6007 = vunpack.c.h.b16 %v1628
        %v6008 = vunpack.c.l.b16 %v1629
        %v6009 = vunpack.c.h.b16 %v1629
        %v6010 = vunpack.c.l.b16 %v1630
        %v6011 = vunpack.c.h.b16 %v1630
        %v6012 = vunpack.c.l.b16 %v1631
        %v6013 = vunpack.c.h.b16 %v1631
        %v6014 = vunpack.c.l.b16 %v1632
        %v6015 = vunpack.c.h.b16 %v1632
        %v6016 = vunpack.c.l.b16 %v1633
        %v6017 = vunpack.c.h.b16 %v1633
        %v6018 = vunpack.c.l.b16 %v1634
        %v6019 = vunpack.c.h.b16 %v1634
        %v6020 = vunpack.c.l.b16 %v1635
        %v6021 = vunpack.c.h.b16 %v1635
        %v6022 = vunpack.c.l.b16 %v1636
        %v6023 = vunpack.c.h.b16 %v1636
        %v6024 = vunpack.c.l.b16 %v1637
        %v6025 = vunpack.c.h.b16 %v1637
        %v6026 = vunpack.c.l.b16 %v1638
        %v6027 = vunpack.c.h.b16 %v1638
        %v6028 = vunpack.c.l.b16 %v1639
        %v6029 = vunpack.c.h.b16 %v1639
        %v6030 = vunpack.c.l.b16 %v1640
        %v6031 = vunpack.c.h.b16 %v1640
        %v6032 = vunpack.c.l.b16 %v1641
        %v6033 = vunpack.c.h.b16 %v1641
        %v6034 = vunpack.c.l.b16 %v1642
        %v6035 = vunpack.c.h.b16 %v1642
        %v6036 = vunpack.c.l.b16 %v1643
        %v6037 = vunpack.c.h.b16 %v1643
        %v6038 = vunpack.c.l.b16 %v1644
        %v6039 = vunpack.c.h.b16 %v1644
        %v6040 = vunpack.c.l.b16 %v1645
        %v6041 = vunpack.c.h.b16 %v1645
        %v6042 = vunpack.c.l.b16 %v1646
        %v6043 = vunpack.c.h.b16 %v1646
        %v6044 = vunpack.c.l.b16 %v1647
        %v6045 = vunpack.c.h.b16 %v1647
        %v6046 = vunpack.c.l.b16 %v1648
        %v6047 = vunpack.c.h.b16 %v1648
        %v6048 = vunpack.c.l.b16 %v1649
        %v6049 = vunpack.c.h.b16 %v1649
        %v6050 = vunpack.c.l.b16 %v1650
        %v6051 = vunpack.c.h.b16 %v1650
        %v6052 = vunpack.c.l.b16 %v1651
        %v6053 = vunpack.c.h.b16 %v1651
        %v6054 = vunpack.c.l.b16 %v1652
        %v6055 = vunpack.c.h.b16 %v1652
        %v6056 = vunpack.c.l.b16 %v1653
        %v6057 = vunpack.c.h.b16 %v1653
        %v6058 = vunpack.c.l.b16 %v1654
        %v6059 = vunpack.c.h.b16 %v1654
        %v6060 = vunpack.c.l.b16 %v1655
        %v6061 = vunpack.c.h.b16 %v1655
        %v6062 = vunpack.c.l.b16 %v1656
        %v6063 = vunpack.c.h.b16 %v1656
        %v6064 = vunpack.c.l.b16 %v1657
        %v6065 = vunpack.c.h.b16 %v1657
        %v6066 = vunpack.c.l.b16 %v1658
        %v6067 = vunpack.c.h.b16 %v1658
        %v6068 = vunpack.c.l.b16 %v1659
        %v6069 = vunpack.c.h.b16 %v1659
        %v6070 = vunpack.c.l.b16 %v1660
        %v6071 = vunpack.c.h.b16 %v1660
        %v6072 = vunpack.c.l.b16 %v1661
        %v6073 = vunpack.c.h.b16 %v1661
        %v6074 = vunpack.c.l.b16 %v1662
        %v6075 = vunpack.c.h.b16 %v1662
        %v6076 = vunpack.c.l.b16 %v1663
        %v6077 = vunpack.c.h.b16 %v1663
        %v6078 = vunpack.c.l.b16 %v1664
        %v6079 = vunpack.c.h.b16 %v1664
        %v6080 = vunpack.c.l.b16 %v1665
        %v6081 = vunpack.c.h.b16 %v1665
        %v6082 = vunpack.c.l.b16 %v1666
        %v6083 = vunpack.c.h.b16 %v1666
        %v6084 = vunpack.c.l.b16 %v1667
        %v6085 = vunpack.c.h.b16 %v1667
        %v6086 = vunpack.c.l.b16 %v1668
        %v6087 = vunpack.c.h.b16 %v1668
        %v6088 = vunpack.c.l.b16 %v1669
        %v6089 = vunpack.c.h.b16 %v1669
        %v6090 = vunpack.c.l.b16 %v1670
        %v6091 = vunpack.c.h.b16 %v1670
        %v6092 = vunpack.c.l.b16 %v1671
        %v6093 = vunpack.c.h.b16 %v1671
        %v6094 = vunpack.c.l.b16 %v1672
        %v6095 = vunpack.c.h.b16 %v1672
        %v6096 = vunpack.c.l.b16 %v1673
        %v6097 = vunpack.c.h.b16 %v1673
        %v6098 = vunpack.c.l.b16 %v1674
        %v6099 = vunpack.c.h.b16 %v1674
        %v6100 = vunpack.c.l.b16 %v1675
        %v6101 = vunpack.c.h.b16 %v1675
        %v6102 = vunpack.c.l.b16 %v1676
        %v6103 = vunpack.c.h.b16 %v1676
        %v6104 = vunpack.c.l.b16 %v1677
        %v6105 = vunpack.c.h.b16 %v1677
        %v6106 = vunpack.c.l.b16 %v1678
        %v6107 = vunpack.c.h.b16 %v1678
        %v6108 = vunpack.c.l.b16 %v1679
        %v6109 = vunpack.c.h.b16 %v1679
        %v6110 = vunpack.c.l.b16 %v1680
        %v6111 = vunpack.c.h.b16 %v1680
        %v6112 = vunpack.c.l.b16 %v1681
        %v6113 = vunpack.c.h.b16 %v1681
        %v6114 = vunpack.c.l.b16 %v1682
        %v6115 = vunpack.c.h.b16 %v1682
        %v6116 = vunpack.c.l.b16 %v1683
        %v6117 = vunpack.c.h.b16 %v1683
        %v6118 = vunpack.c.l.b16 %v1684
        %v6119 = vunpack.c.h.b16 %v1684
        %v6120 = vunpack.c.l.b16 %v1685
        %v6121 = vunpack.c.h.b16 %v1685
        %v6122 = vunpack.c.l.b16 %v1686
        %v6123 = vunpack.c.h.b16 %v1686
        %v6124 = vunpack.c.l.b16 %v1687
        %v6125 = vunpack.c.h.b16 %v1687
        %v6126 = vunpack.c.l.b16 %v1688
        %v6127 = vunpack.c.h.b16 %v1688
        %v6128 = vunpack.c.l.b16 %v1689
        %v6129 = vunpack.c.h.b16 %v1689
        %v6130 = vunpack.c.l.b16 %v1690
        %v6131 = vunpack.c.h.b16 %v1690
        %v6132 = vunpack.c.l.b16 %v1691
        %v6133 = vunpack.c.h.b16 %v1691
        %v6134 = vunpack.c.l.b16 %v1692
        %v6135 = vunpack.c.h.b16 %v1692
        %v6136 = vunpack.c.l.b16 %v1693
        %v6137 = vunpack.c.h.b16 %v1693
        %v6138 = vunpack.c.l.b16 %v1694
        %v6139 = vunpack.c.h.b16 %v1694
        %v6140 = vunpack.c.l.b16 %v1695
        %v6141 = vunpack.c.h.b16 %v1695
        %v6142 = vunpack.c.l.b16 %v1696
        %v6143 = vunpack.c.h.b16 %v1696
        %v6144 = vunpack.c.l.b16 %v1697
        %v6145 = vunpack.c.h.b16 %v1697
        %v6146 = vunpack.c.l.b16 %v1698
        %v6147 = vunpack.c.h.b16 %v1698
        %v6148 = vunpack.c.l.b16 %v1699
        %v6149 = vunpack.c.h.b16 %v1699
        %v6150 = vunpack.c.l.b16 %v1700
        %v6151 = vunpack.c.h.b16 %v1700
        %v6152 = vunpack.c.l.b16 %v1701
        %v6153 = vunpack.c.h.b16 %v1701
        %v6154 = vunpack.c.l.b16 %v1702
        %v6155 = vunpack.c.h.b16 %v1702
        %v6156 = vunpack.c.l.b16 %v1703
        %v6157 = vunpack.c.h.b16 %v1703
        %v6158 = vunpack.c.l.b16 %v1704
        %v6159 = vunpack.c.h.b16 %v1704
        %v6160 = vunpack.c.l.b16 %v1705
        %v6161 = vunpack.c.h.b16 %v1705
        %v6162 = vunpack.c.l.b16 %v1706
        %v6163 = vunpack.c.h.b16 %v1706
        %v6164 = vunpack.c.l.b16 %v1707
        %v6165 = vunpack.c.h.b16 %v1707
        %v6166 = vunpack.c.l.b16 %v1708
        %v6167 = vunpack.c.h.b16 %v1708
        %v6168 = vunpack.c.l.b16 %v1709
        %v6169 = vunpack.c.h.b16 %v1709
        %v6170 = vunpack.c.l.b16 %v1710
        %v6171 = vunpack.c.h.b16 %v1710
        %v6172 = vunpack.c.l.b16 %v1711
        %v6173 = vunpack.c.h.b16 %v1711
        %v6174 = vunpack.c.l.b16 %v1712
        %v6175 = vunpack.c.h.b16 %v1712
        %v6176 = vunpack.c.l.b16 %v1713
        %v6177 = vunpack.c.h.b16 %v1713
        %v6178 = vunpack.c.l.b16 %v1714
        %v6179 = vunpack.c.h.b16 %v1714
        %v6180 = vunpack.c.l.b16 %v1715
        %v6181 = vunpack.c.h.b16 %v1715
        %v6182 = vunpack.c.l.b16 %v1716
        %v6183 = vunpack.c.h.b16 %v1716
        %v6184 = vunpack.c.l.b16 %v1717
        %v6185 = vunpack.c.h.b16 %v1717
        %v6186 = vunpack.c.l.b16 %v1718
        %v6187 = vunpack.c.h.b16 %v1718
        %v6188 = vunpack.c.l.b16 %v1719
        %v6189 = vunpack.c.h.b16 %v1719
        %v6190 = vunpack.c.l.b16 %v1720
        %v6191 = vunpack.c.h.b16 %v1720
        %v6192 = vunpack.c.l.b16 %v1721
        %v6193 = vunpack.c.h.b16 %v1721
        %v6194 = vunpack.c.l.b16 %v1722
        %v6195 = vunpack.c.h.b16 %v1722
        %v6196 = vunpack.c.l.b16 %v1723
        %v6197 = vunpack.c.h.b16 %v1723
        %v6198 = vunpack.c.l.b16 %v1724
        %v6199 = vunpack.c.h.b16 %v1724
        %v6200 = vunpack.c.l.b16 %v1725
        %v6201 = vunpack.c.h.b16 %v1725
        %v6202 = vunpack.c.l.b16 %v1726
        %v6203 = vunpack.c.h.b16 %v1726
        %v6204 = vunpack.c.l.b16 %v1727
        %v6205 = vunpack.c.h.b16 %v1727
        %v6206 = vunpack.c.l.b16 %v1728
        %v6207 = vunpack.c.h.b16 %v1728
        %v6208 = vunpack.c.l.b16 %v1729
        %v6209 = vunpack.c.h.b16 %v1729
        %v6210 = vunpack.c.l.b16 %v1730
        %v6211 = vunpack.c.h.b16 %v1730
        %v6212 = vunpack.c.l.b16 %v1731
        %v6213 = vunpack.c.h.b16 %v1731
        %v6214 = vunpack.c.l.b16 %v1732
        %v6215 = vunpack.c.h.b16 %v1732
        %v6216 = vunpack.c.l.b16 %v1733
        %v6217 = vunpack.c.h.b16 %v1733
        %v6218 = vunpack.c.l.b16 %v1734
        %v6219 = vunpack.c.h.b16 %v1734
        %v6220 = vunpack.c.l.b16 %v1735
        %v6221 = vunpack.c.h.b16 %v1735
        %v6222 = vunpack.c.l.b16 %v1736
        %v6223 = vunpack.c.h.b16 %v1736
        %v6224 = vunpack.c.l.b16 %v1737
        %v6225 = vunpack.c.h.b16 %v1737
        %v6226 = vunpack.c.l.b16 %v1738
        %v6227 = vunpack.c.h.b16 %v1738
        %v6228 = vunpack.c.l.b16 %v1739
        %v6229 = vunpack.c.h.b16 %v1739
        %v6230 = vunpack.c.l.b16 %v1740
        %v6231 = vunpack.c.h.b16 %v1740
        %v6232 = vunpack.c.l.b16 %v1741
        %v6233 = vunpack.c.h.b16 %v1741
        %v6234 = vunpack.c.l.b16 %v1742
        %v6235 = vunpack.c.h.b16 %v1742
        %v6236 = vunpack.c.l.b16 %v1743
        %v6237 = vunpack.c.h.b16 %v1743
        %v6238 = vunpack.c.l.b16 %v1744
        %v6239 = vunpack.c.h.b16 %v1744
        %v6240 = vunpack.c.l.b16 %v1745
        %v6241 = vunpack.c.h.b16 %v1745
        %v6242 = vunpack.c.l.b16 %v1746
        %v6243 = vunpack.c.h.b16 %v1746
        %v6244 = vunpack.c.l.b16 %v1747
        %v6245 = vunpack.c.h.b16 %v1747
        %v6246 = vunpack.c.l.b16 %v1748
        %v6247 = vunpack.c.h.b16 %v1748
        %v6248 = vunpack.c.l.b16 %v1749
        %v6249 = vunpack.c.h.b16 %v1749
        %v6250 = vunpack.c.l.b16 %v1750
        %v6251 = vunpack.c.h.b16 %v1750
        %v6252 = vunpack.c.l.b16 %v1751
        %v6253 = vunpack.c.h.b16 %v1751
        %v6254 = vunpack.c.l.b16 %v1752
        %v6255 = vunpack.c.h.b16 %v1752
        %v6256 = vunpack.c.l.b16 %v1753
        %v6257 = vunpack.c.h.b16 %v1753
        %v6258 = vunpack.c.l.b16 %v1754
        %v6259 = vunpack.c.h.b16 %v1754
        %v6260 = vunpack.c.l.b16 %v1755
        %v6261 = vunpack.c.h.b16 %v1755
        %v6262 = vunpack.c.l.b16 %v1756
        %v6263 = vunpack.c.h.b16 %v1756
        %v6264 = vunpack.c.l.b16 %v1757
        %v6265 = vunpack.c.h.b16 %v1757
        %v6266 = vunpack.c.l.b16 %v1758
        %v6267 = vunpack.c.h.b16 %v1758
        %v6268 = vunpack.c.l.b16 %v1759
        %v6269 = vunpack.c.h.b16 %v1759
        %v6270 = vunpack.c.l.b16 %v1760
        %v6271 = vunpack.c.h.b16 %v1760
        %v6272 = vunpack.c.l.b16 %v1761
        %v6273 = vunpack.c.h.b16 %v1761
        %v6274 = vunpack.c.l.b16 %v1762
        %v6275 = vunpack.c.h.b16 %v1762
        %v6276 = vunpack.c.l.b16 %v1763
        %v6277 = vunpack.c.h.b16 %v1763
        %v6278 = vunpack.c.l.b16 %v1764
        %v6279 = vunpack.c.h.b16 %v1764
        %v6280 = vunpack.c.l.b16 %v1765
        %v6281 = vunpack.c.h.b16 %v1765
        %v6282 = vunpack.c.l.b16 %v1766
        %v6283 = vunpack.c.h.b16 %v1766
        %v6284 = vunpack.c.l.b16 %v1767
        %v6285 = vunpack.c.h.b16 %v1767
        %v6286 = vunpack.c.l.b16 %v1768
        %v6287 = vunpack.c.h.b16 %v1768
        %v6288 = vunpack.c.l.b16 %v1769
        %v6289 = vunpack.c.h.b16 %v1769
        %v6290 = vunpack.c.l.b16 %v1770
        %v6291 = vunpack.c.h.b16 %v1770
        %v6292 = vunpack.c.l.b16 %v1771
        %v6293 = vunpack.c.h.b16 %v1771
        %v6294 = vunpack.c.l.b16 %v1772
        %v6295 = vunpack.c.h.b16 %v1772
        %v6296 = vunpack.c.l.b16 %v1773
        %v6297 = vunpack.c.h.b16 %v1773
        %v6298 = vunpack.c.l.b16 %v1774
        %v6299 = vunpack.c.h.b16 %v1774
        %v6300 = vunpack.c.l.b16 %v1775
        %v6301 = vunpack.c.h.b16 %v1775
        %v6302 = vunpack.c.l.b16 %v1776
        %v6303 = vunpack.c.h.b16 %v1776
        %v6304 = vunpack.c.l.b16 %v1777
        %v6305 = vunpack.c.h.b16 %v1777
        %v6306 = vunpack.c.l.b16 %v1778
        %v6307 = vunpack.c.h.b16 %v1778
        %v6308 = vunpack.c.l.b16 %v1779
        %v6309 = vunpack.c.h.b16 %v1779
        %v6310 = vunpack.c.l.b16 %v1780
        %v6311 = vunpack.c.h.b16 %v1780
        %v6312 = vunpack.c.l.b16 %v1781
        %v6313 = vunpack.c.h.b16 %v1781
        %v6314 = vunpack.c.l.b16 %v1782
        %v6315 = vunpack.c.h.b16 %v1782
        %v6316 = vunpack.c.l.b16 %v1783
        %v6317 = vunpack.c.h.b16 %v1783
        %v6318 = vunpack.c.l.b16 %v1784
        %v6319 = vunpack.c.h.b16 %v1784
        %v6320 = vunpack.c.l.b16 %v1785
        %v6321 = vunpack.c.h.b16 %v1785
        %v6322 = vunpack.c.l.b16 %v1786
        %v6323 = vunpack.c.h.b16 %v1786
        %v6324 = vunpack.c.l.b16 %v1787
        %v6325 = vunpack.c.h.b16 %v1787
        %v6326 = vunpack.c.l.b16 %v1788
        %v6327 = vunpack.c.h.b16 %v1788
        %v6328 = vunpack.c.l.b16 %v1789
        %v6329 = vunpack.c.h.b16 %v1789
        %v6330 = vunpack.c.l.b16 %v1790
        %v6331 = vunpack.c.h.b16 %v1790
        %v6332 = vunpack.c.l.b16 %v1791
        %v6333 = vunpack.c.h.b16 %v1791
        %v6334 = vunpack.c.l.b16 %v1792
        %v6335 = vunpack.c.h.b16 %v1792
        %v6336 = vunpack.c.l.b16 %v1793
        %v6337 = vunpack.c.h.b16 %v1793
        %v6338 = vunpack.c.l.b16 %v1794
        %v6339 = vunpack.c.h.b16 %v1794
        %v6340 = vunpack.c.l.b16 %v1795
        %v6341 = vunpack.c.h.b16 %v1795
        %v6342 = vunpack.c.l.b16 %v1796
        %v6343 = vunpack.c.h.b16 %v1796
        %v6344 = vunpack.c.l.b16 %v1797
        %v6345 = vunpack.c.h.b16 %v1797
        %v6346 = vunpack.c.l.b16 %v1798
        %v6347 = vunpack.c.h.b16 %v1798
        %v6348 = vunpack.c.l.b16 %v1799
        %v6349 = vunpack.c.h.b16 %v1799
        %v6350 = vunpack.c.l.b16 %v1800
        %v6351 = vunpack.c.h.b16 %v1800
        %v6352 = vunpack.c.l.b16 %v1801
        %v6353 = vunpack.c.h.b16 %v1801
        %v6354 = vunpack.c.l.b16 %v1802
        %v6355 = vunpack.c.h.b16 %v1802
        %v6356 = vunpack.c.l.b16 %v1803
        %v6357 = vunpack.c.h.b16 %v1803
        %v6358 = vunpack.c.l.b16 %v1804
        %v6359 = vunpack.c.h.b16 %v1804
        %v6360 = vunpack.c.l.b16 %v1805
        %v6361 = vunpack.c.h.b16 %v1805
        %v6362 = vunpack.c.l.b16 %v1806
        %v6363 = vunpack.c.h.b16 %v1806
        %v6364 = vunpack.c.l.b16 %v1807
        %v6365 = vunpack.c.h.b16 %v1807
        %v6366 = vunpack.c.l.b16 %v1808
        %v6367 = vunpack.c.h.b16 %v1808
        %v6368 = vunpack.c.l.b16 %v1809
        %v6369 = vunpack.c.h.b16 %v1809
        %v6370 = vunpack.c.l.b16 %v1810
        %v6371 = vunpack.c.h.b16 %v1810
        %v6372 = vunpack.c.l.b16 %v1811
        %v6373 = vunpack.c.h.b16 %v1811
        %v6374 = vunpack.c.l.b16 %v1812
        %v6375 = vunpack.c.h.b16 %v1812
        %v6376 = vunpack.c.l.b16 %v1813
        %v6377 = vunpack.c.h.b16 %v1813
        %v6378 = vunpack.c.l.b16 %v1814
        %v6379 = vunpack.c.h.b16 %v1814
        %v6380 = vunpack.c.l.b16 %v1815
        %v6381 = vunpack.c.h.b16 %v1815
        %v6382 = vunpack.c.l.b16 %v1816
        %v6383 = vunpack.c.h.b16 %v1816
        %v6384 = vunpack.c.l.b16 %v1817
        %v6385 = vunpack.c.h.b16 %v1817
        %v6386 = vunpack.c.l.b16 %v1818
        %v6387 = vunpack.c.h.b16 %v1818
        %v6388 = vunpack.c.l.b16 %v1819
        %v6389 = vunpack.c.h.b16 %v1819
        %v6390 = vunpack.c.l.b16 %v1820
        %v6391 = vunpack.c.h.b16 %v1820
        %v6392 = vunpack.c.l.b16 %v1821
        %v6393 = vunpack.c.h.b16 %v1821
        %v6394 = vunpack.c.l.b16 %v1822
        %v6395 = vunpack.c.h.b16 %v1822
        %v6396 = vunpack.c.l.b16 %v1823
        %v6397 = vunpack.c.h.b16 %v1823
        %v6398 = vunpack.c.l.b16 %v1824
        %v6399 = vunpack.c.h.b16 %v1824
        %v6400 = vunpack.c.l.b16 %v1825
        %v6401 = vunpack.c.h.b16 %v1825
        %v6402 = vunpack.c.l.b16 %v1826
        %v6403 = vunpack.c.h.b16 %v1826
        %v6404 = vunpack.c.l.b16 %v1827
        %v6405 = vunpack.c.h.b16 %v1827
        %v6406 = vunpack.c.l.b16 %v1828
        %v6407 = vunpack.c.h.b16 %v1828
        %v6408 = vunpack.c.l.b16 %v1829
        %v6409 = vunpack.c.h.b16 %v1829
        %v6410 = vunpack.c.l.b16 %v1830
        %v6411 = vunpack.c.h.b16 %v1830
        %v6412 = vunpack.c.l.b16 %v1831
        %v6413 = vunpack.c.h.b16 %v1831
        %v6414 = vunpack.c.l.b16 %v1832
        %v6415 = vunpack.c.h.b16 %v1832
        %v6416 = vunpack.c.l.b16 %v1833
        %v6417 = vunpack.c.h.b16 %v1833
        %v6418 = vunpack.c.l.b16 %v1834
        %v6419 = vunpack.c.h.b16 %v1834
        %v6420 = vunpack.c.l.b16 %v1835
        %v6421 = vunpack.c.h.b16 %v1835
        %v6422 = vunpack.c.l.b16 %v1836
        %v6423 = vunpack.c.h.b16 %v1836
        %v6424 = vunpack.c.l.b16 %v1837
        %v6425 = vunpack.c.h.b16 %v1837
        %v6426 = vunpack.c.l.b16 %v1838
        %v6427 = vunpack.c.h.b16 %v1838
        %v6428 = vunpack.c.l.b16 %v1839
        %v6429 = vunpack.c.h.b16 %v1839
        %v6430 = vunpack.c.l.b16 %v1840
        %v6431 = vunpack.c.h.b16 %v1840
        %v6432 = vunpack.c.l.b16 %v1841
        %v6433 = vunpack.c.h.b16 %v1841
        %v6434 = vunpack.c.l.b16 %v1842
        %v6435 = vunpack.c.h.b16 %v1842
        %v6436 = vunpack.c.l.b16 %v1843
        %v6437 = vunpack.c.h.b16 %v1843
        %v6438 = vunpack.c.l.b16 %v1844
        %v6439 = vunpack.c.h.b16 %v1844
        %v6440 = vunpack.c.l.b16 %v1845
        %v6441 = vunpack.c.h.b16 %v1845
        %v6442 = vunpack.c.l.b16 %v1846
        %v6443 = vunpack.c.h.b16 %v1846
        %v6444 = vunpack.c.l.b16 %v1847
        %v6445 = vunpack.c.h.b16 %v1847
        %v6446 = vunpack.c.l.b16 %v1848
        %v6447 = vunpack.c.h.b16 %v1848
        %v6448 = vunpack.c.l.b16 %v1849
        %v6449 = vunpack.c.h.b16 %v1849
        %v6450 = vunpack.c.l.b16 %v1850
        %v6451 = vunpack.c.h.b16 %v1850
        %v6452 = vunpack.c.l.b16 %v1851
        %v6453 = vunpack.c.h.b16 %v1851
        %v6454 = vunpack.c.l.b16 %v1852
        %v6455 = vunpack.c.h.b16 %v1852
        %v6456 = vunpack.c.l.b16 %v1853
        %v6457 = vunpack.c.h.b16 %v1853
        %v6458 = vunpack.c.l.b16 %v1854
        %v6459 = vunpack.c.h.b16 %v1854
        %v6460 = vunpack.c.l.b16 %v1855
        %v6461 = vunpack.c.h.b16 %v1855
        %v6462 = vunpack.c.l.b16 %v1856
        %v6463 = vunpack.c.h.b16 %v1856
        %v6464 = vunpack.c.l.b16 %v1857
        %v6465 = vunpack.c.h.b16 %v1857
        %v6466 = vunpack.c.l.b16 %v1858
        %v6467 = vunpack.c.h.b16 %v1858
        %v6468 = vunpack.c.l.b16 %v1859
        %v6469 = vunpack.c.h.b16 %v1859
        %v6470 = vunpack.c.l.b16 %v1860
        %v6471 = vunpack.c.h.b16 %v1860
        %v6472 = vunpack.c.l.b16 %v1861
        %v6473 = vunpack.c.h.b16 %v1861
        %v6474 = vunpack.c.l.b16 %v1862
        %v6475 = vunpack.c.h.b16 %v1862
        %v6476 = vunpack.c.l.b16 %v1863
        %v6477 = vunpack.c.h.b16 %v1863
        %v6478 = vunpack.c.l.b16 %v1864
        %v6479 = vunpack.c.h.b16 %v1864
        %v6480 = vunpack.c.l.b16 %v1865
        %v6481 = vunpack.c.h.b16 %v1865
        %v6482 = vunpack.c.l.b16 %v1866
        %v6483 = vunpack.c.h.b16 %v1866
        %v6484 = vunpack.c.l.b16 %v1867
        %v6485 = vunpack.c.h.b16 %v1867
        %v6486 = vunpack.c.l.b16 %v1868
        %v6487 = vunpack.c.h.b16 %v1868
        %v6488 = vunpack.c.l.b16 %v1869
        %v6489 = vunpack.c.h.b16 %v1869
        %v6490 = vunpack.c.l.b16 %v1870
        %v6491 = vunpack.c.h.b16 %v1870
        %v6492 = vunpack.c.l.b16 %v1871
        %v6493 = vunpack.c.h.b16 %v1871
        %v6494 = vunpack.c.l.b16 %v1872
        %v6495 = vunpack.c.h.b16 %v1872
        %v6496 = vunpack.c.l.b16 %v1873
        %v6497 = vunpack.c.h.b16 %v1873
        %v6498 = vunpack.c.l.b16 %v1874
        %v6499 = vunpack.c.h.b16 %v1874
        %v6500 = vunpack.c.l.b16 %v1875
        %v6501 = vunpack.c.h.b16 %v1875
        %v6502 = vunpack.c.l.b16 %v1876
        %v6503 = vunpack.c.h.b16 %v1876
        %v6504 = vunpack.c.l.b16 %v1877
        %v6505 = vunpack.c.h.b16 %v1877
        %v6506 = vunpack.c.l.b16 %v1878
        %v6507 = vunpack.c.h.b16 %v1878
        %v6508 = vunpack.c.l.b16 %v1879
        %v6509 = vunpack.c.h.b16 %v1879
        %v6510 = vunpack.c.l.b16 %v1880
        %v6511 = vunpack.c.h.b16 %v1880
        %v6512 = vunpack.c.l.b16 %v1881
        %v6513 = vunpack.c.h.b16 %v1881
        %v6514 = vunpack.c.l.b16 %v1882
        %v6515 = vunpack.c.h.b16 %v1882
        %v6516 = vunpack.c.l.b16 %v1883
        %v6517 = vunpack.c.h.b16 %v1883
        %v6518 = vunpack.c.l.b16 %v1884
        %v6519 = vunpack.c.h.b16 %v1884
        %v6520 = vunpack.c.l.b16 %v1885
        %v6521 = vunpack.c.h.b16 %v1885
        %v6522 = vunpack.c.l.b16 %v1886
        %v6523 = vunpack.c.h.b16 %v1886
        %v6524 = vunpack.c.l.b16 %v1887
        %v6525 = vunpack.c.h.b16 %v1887
        %v6526 = vunpack.c.l.b16 %v1888
        %v6527 = vunpack.c.h.b16 %v1888
        %v6528 = vunpack.c.l.b16 %v1889
        %v6529 = vunpack.c.h.b16 %v1889
        %v6530 = vunpack.c.l.b16 %v1890
        %v6531 = vunpack.c.h.b16 %v1890
        %v6532 = vunpack.c.l.b16 %v1891
        %v6533 = vunpack.c.h.b16 %v1891
        %v6534 = vunpack.c.l.b16 %v1892
        %v6535 = vunpack.c.h.b16 %v1892
        %v6536 = vunpack.c.l.b16 %v1893
        %v6537 = vunpack.c.h.b16 %v1893
        %v6538 = vunpack.c.l.b16 %v1894
        %v6539 = vunpack.c.h.b16 %v1894
        %v6540 = vunpack.c.l.b16 %v1895
        %v6541 = vunpack.c.h.b16 %v1895
        %v6542 = vunpack.c.l.b16 %v1896
        %v6543 = vunpack.c.h.b16 %v1896
        %v6544 = vunpack.c.l.b16 %v1897
        %v6545 = vunpack.c.h.b16 %v1897
        %v6546 = vunpack.c.l.b16 %v1898
        %v6547 = vunpack.c.h.b16 %v1898
        %v6548 = vunpack.c.l.b16 %v1899
        %v6549 = vunpack.c.h.b16 %v1899
        %v6550 = vunpack.c.l.b16 %v1900
        %v6551 = vunpack.c.h.b16 %v1900
        %v6552 = vunpack.c.l.b16 %v1901
        %v6553 = vunpack.c.h.b16 %v1901
        %v6554 = vunpack.c.l.b16 %v1902
        %v6555 = vunpack.c.h.b16 %v1902
        %v6556 = vunpack.c.l.b16 %v1903
        %v6557 = vunpack.c.h.b16 %v1903
        %v6558 = vunpack.c.l.b16 %v1904
        %v6559 = vunpack.c.h.b16 %v1904
        %v6560 = vunpack.c.l.b16 %v1905
        %v6561 = vunpack.c.h.b16 %v1905
        %v6562 = vunpack.c.l.b16 %v1906
        %v6563 = vunpack.c.h.b16 %v1906
        %v6564 = vunpack.c.l.b16 %v1907
        %v6565 = vunpack.c.h.b16 %v1907
        %v6566 = vunpack.c.l.b16 %v1908
        %v6567 = vunpack.c.h.b16 %v1908
        %v6568 = vunpack.c.l.b16 %v1909
        %v6569 = vunpack.c.h.b16 %v1909
        %v6570 = vunpack.c.l.b16 %v1910
        %v6571 = vunpack.c.h.b16 %v1910
        %v6572 = vunpack.c.l.b16 %v1911
        %v6573 = vunpack.c.h.b16 %v1911
        %v6574 = vunpack.c.l.b16 %v1912
        %v6575 = vunpack.c.h.b16 %v1912
        %v6576 = vunpack.c.l.b16 %v1913
        %v6577 = vunpack.c.h.b16 %v1913
        %v6578 = vunpack.c.l.b16 %v1914
        %v6579 = vunpack.c.h.b16 %v1914
        %v6580 = vunpack.c.l.b16 %v1915
        %v6581 = vunpack.c.h.b16 %v1915
        %v6582 = vunpack.c.l.b16 %v1916
        %v6583 = vunpack.c.h.b16 %v1916
        %v6584 = vunpack.c.l.b16 %v1917
        %v6585 = vunpack.c.h.b16 %v1917
        %v6586 = vunpack.c.l.b16 %v1918
        %v6587 = vunpack.c.h.b16 %v1918
        %v6588 = vunpack.c.l.b16 %v1919
        %v6589 = vunpack.c.h.b16 %v1919
        %v6590 = vunpack.c.l.b16 %v1920
        %v6591 = vunpack.c.h.b16 %v1920
        %v6592 = vunpack.c.l.b16 %v1921
        %v6593 = vunpack.c.h.b16 %v1921
        %v6594 = vunpack.c.l.b16 %v1922
        %v6595 = vunpack.c.h.b16 %v1922
        %v6596 = vunpack.c.l.b16 %v1923
        %v6597 = vunpack.c.h.b16 %v1923
        %v6598 = vunpack.c.l.b16 %v1924
        %v6599 = vunpack.c.h.b16 %v1924
        %v6600 = vunpack.c.l.b16 %v1925
        %v6601 = vunpack.c.h.b16 %v1925
        %v6602 = vunpack.c.l.b16 %v1926
        %v6603 = vunpack.c.h.b16 %v1926
        %v6604 = vunpack.c.l.b16 %v1927
        %v6605 = vunpack.c.h.b16 %v1927
        %v6606 = vunpack.c.l.b16 %v1928
        %v6607 = vunpack.c.h.b16 %v1928
        %v6608 = vunpack.c.l.b16 %v1929
        %v6609 = vunpack.c.h.b16 %v1929
        %v6610 = vunpack.c.l.b16 %v1930
        %v6611 = vunpack.c.h.b16 %v1930
        %v6612 = vunpack.c.l.b16 %v1931
        %v6613 = vunpack.c.h.b16 %v1931
        %v6614 = vunpack.c.l.b16 %v1932
        %v6615 = vunpack.c.h.b16 %v1932
        %v6616 = vunpack.c.l.b16 %v1933
        %v6617 = vunpack.c.h.b16 %v1933
        %v6618 = vunpack.c.l.b16 %v1934
        %v6619 = vunpack.c.h.b16 %v1934
        %v6620 = vunpack.c.l.b16 %v1935
        %v6621 = vunpack.c.h.b16 %v1935
        %v6622 = vunpack.c.l.b16 %v1936
        %v6623 = vunpack.c.h.b16 %v1936
        %v6624 = vunpack.c.l.b16 %v1937
        %v6625 = vunpack.c.h.b16 %v1937
        %v6626 = vunpack.c.l.b16 %v1938
        %v6627 = vunpack.c.h.b16 %v1938
        %v6628 = vunpack.c.l.b16 %v1939
        %v6629 = vunpack.c.h.b16 %v1939
        %v6630 = vunpack.c.l.b16 %v1940
        %v6631 = vunpack.c.h.b16 %v1940
        %v6632 = vunpack.c.l.b16 %v1941
        %v6633 = vunpack.c.h.b16 %v1941
        %v6634 = vunpack.c.l.b16 %v1942
        %v6635 = vunpack.c.h.b16 %v1942
        %v6636 = vunpack.c.l.b16 %v1943
        %v6637 = vunpack.c.h.b16 %v1943
        %v6638 = vunpack.c.l.b16 %v1944
        %v6639 = vunpack.c.h.b16 %v1944
        %v6640 = vunpack.c.l.b16 %v1945
        %v6641 = vunpack.c.h.b16 %v1945
        %v6642 = vunpack.c.l.b16 %v1946
        %v6643 = vunpack.c.h.b16 %v1946
        %v6644 = vunpack.c.l.b16 %v1947
        %v6645 = vunpack.c.h.b16 %v1947
        %v6646 = vunpack.c.l.b16 %v1948
        %v6647 = vunpack.c.h.b16 %v1948
        %v6648 = vunpack.c.l.b16 %v1949
        %v6649 = vunpack.c.h.b16 %v1949
        %v6650 = vunpack.c.l.b16 %v1950
        %v6651 = vunpack.c.h.b16 %v1950
        %v6652 = vunpack.c.l.b16 %v1951
        %v6653 = vunpack.c.h.b16 %v1951
        %v6654 = vunpack.c.l.b16 %v1952
        %v6655 = vunpack.c.h.b16 %v1952
        %v6656 = vunpack.c.l.b16 %v1953
        %v6657 = vunpack.c.h.b16 %v1953
        %v6658 = vunpack.c.l.b16 %v1954
        %v6659 = vunpack.c.h.b16 %v1954
        %v6660 = vunpack.c.l.b16 %v1955
        %v6661 = vunpack.c.h.b16 %v1955
        %v6662 = vunpack.c.l.b16 %v1956
        %v6663 = vunpack.c.h.b16 %v1956
        %v6664 = vunpack.c.l.b16 %v1957
        %v6665 = vunpack.c.h.b16 %v1957
        %v6666 = vunpack.c.l.b16 %v1958
        %v6667 = vunpack.c.h.b16 %v1958
        %v6668 = vunpack.c.l.b16 %v1959
        %v6669 = vunpack.c.h.b16 %v1959
        %v6670 = vpack.c.b16 %v3606, %v3598
        %v6671 = vpack.c.b16 %v3607, %v3599
        %v6672 = vpack.c.b16 %v3608, %v3600
        %v6673 = vpack.c.b16 %v3609, %v3601
        %v6674 = vpack.c.b16 %v3610, %v3602
        %v6675 = vpack.c.b16 %v3611, %v3603
        %v6676 = vpack.c.b16 %v3612, %v3604
        %v6677 = vpack.c.b16 %v3613, %v3605
        %v6678 = vpack.c.b16 %v3622, %v3614
        %v6679 = vpack.c.b16 %v3623, %v3615
        %v6680 = vpack.c.b16 %v3624, %v3616
        %v6681 = vpack.c.b16 %v3625, %v3617
        %v6682 = vpack.c.b16 %v3626, %v3618
        %v6683 = vpack.c.b16 %v3627, %v3619
        %v6684 = vpack.c.b16 %v3628, %v3620
        %v6685 = vpack.c.b16 %v3629, %v3621
        %v6686 = vpack.c.b16 %v3638, %v3630
        %v6687 = vpack.c.b16 %v3639, %v3631
        %v6688 = vpack.c.b16 %v3640, %v3632
        %v6689 = vpack.c.b16 %v3641, %v3633
        %v6690 = vpack.c.b16 %v3642, %v3634
        %v6691 = vpack.c.b16 %v3643, %v3635
        %v6692 = vpack.c.b16 %v3644, %v3636
        %v6693 = vpack.c.b16 %v3645, %v3637
        %v6694 = vpack.c.b16 %v3654, %v3646
        %v6695 = vpack.c.b16 %v3655, %v3647
        %v6696 = vpack.c.b16 %v3656, %v3648
        %v6697 = vpack.c.b16 %v3657, %v3649
        %v6698 = vpack.c.b16 %v3658, %v3650
        %v6699 = vpack.c.b16 %v3659, %v3651
        %v6700 = vpack.c.b16 %v3660, %v3652
        %v6701 = vpack.c.b16 %v3661, %v3653
        %v6702 = vpack.c.b16 %v3670, %v3662
        %v6703 = vpack.c.b16 %v3671, %v3663
        %v6704 = vpack.c.b16 %v3672, %v3664
        %v6705 = vpack.c.b16 %v3673, %v3665
        %v6706 = vpack.c.b16 %v3674, %v3666
        %v6707 = vpack.c.b16 %v3675, %v3667
        %v6708 = vpack.c.b16 %v3676, %v3668
        %v6709 = vpack.c.b16 %v3677, %v3669
        %v6710 = vpack.c.b16 %v3686, %v3678
        %v6711 = vpack.c.b16 %v3687, %v3679
        %v6712 = vpack.c.b16 %v3688, %v3680
        %v6713 = vpack.c.b16 %v3689, %v3681
        %v6714 = vpack.c.b16 %v3690, %v3682
        %v6715 = vpack.c.b16 %v3691, %v3683
        %v6716 = vpack.c.b16 %v3692, %v3684
        %v6717 = vpack.c.b16 %v3693, %v3685
        %v6718 = vpack.c.b16 %v3702, %v3694
        %v6719 = vpack.c.b16 %v3703, %v3695
        %v6720 = vpack.c.b16 %v3704, %v3696
        %v6721 = vpack.c.b16 %v3705, %v3697
        %v6722 = vpack.c.b16 %v3706, %v3698
        %v6723 = vpack.c.b16 %v3707, %v3699
        %v6724 = vpack.c.b16 %v3708, %v3700
        %v6725 = vpack.c.b16 %v3709, %v3701
        %v6726 = vpack.c.b16 %v3718, %v3710
        %v6727 = vpack.c.b16 %v3719, %v3711
        %v6728 = vpack.c.b16 %v3720, %v3712
        %v6729 = vpack.c.b16 %v3721, %v3713
        %v6730 = vpack.c.b16 %v3722, %v3714
        %v6731 = vpack.c.b16 %v3723, %v3715
        %v6732 = vpack.c.b16 %v3724, %v3716
        %v6733 = vpack.c.b16 %v3725, %v3717
        %v6734 = vpack.c.b16 %v3734, %v3726
        %v6735 = vpack.c.b16 %v3735, %v3727
        %v6736 = vpack.c.b16 %v3736, %v3728
        %v6737 = vpack.c.b16 %v3737, %v3729
        %v6738 = vpack.c.b16 %v3738, %v3730
        %v6739 = vpack.c.b16 %v3739, %v3731
        %v6740 = vpack.c.b16 %v3740, %v3732
        %v6741 = vpack.c.b16 %v3741, %v3733
        %v6742 = vpack.c.b16 %v3750, %v3742
        %v6743 = vpack.c.b16 %v3751, %v3743
        %v6744 = vpack.c.b16 %v3752, %v3744
        %v6745 = vpack.c.b16 %v3753, %v3745
        %v6746 = vpack.c.b16 %v3754, %v3746
        %v6747 = vpack.c.b16 %v3755, %v3747
        %v6748 = vpack.c.b16 %v3756, %v3748
        %v6749 = vpack.c.b16 %v3757, %v3749
        %v6750 = vpack.c.b16 %v3766, %v3758
        %v6751 = vpack.c.b16 %v3767, %v3759
        %v6752 = vpack.c.b16 %v3768, %v3760
        %v6753 = vpack.c.b16 %v3769, %v3761
        %v6754 = vpack.c.b16 %v3770, %v3762
        %v6755 = vpack.c.b16 %v3771, %v3763
        %v6756 = vpack.c.b16 %v3772, %v3764
        %v6757 = vpack.c.b16 %v3773, %v3765
        %v6758 = vpack.c.b16 %v3782, %v3774
        %v6759 = vpack.c.b16 %v3783, %v3775
        %v6760 = vpack.c.b16 %v3784, %v3776
        %v6761 = vpack.c.b16 %v3785, %v3777
        %v6762 = vpack.c.b16 %v3786, %v3778
        %v6763 = vpack.c.b16 %v3787, %v3779
        %v6764 = vpack.c.b16 %v3788, %v3780
        %v6765 = vpack.c.b16 %v3789, %v3781
        %v6766 = vpack.c.b16 %v3798, %v3790
        %v6767 = vpack.c.b16 %v3799, %v3791
        %v6768 = vpack.c.b16 %v3800, %v3792
        %v6769 = vpack.c.b16 %v3801, %v3793
        %v6770 = vpack.c.b16 %v3802, %v3794
        %v6771 = vpack.c.b16 %v3803, %v3795
        %v6772 = vpack.c.b16 %v3804, %v3796
        %v6773 = vpack.c.b16 %v3805, %v3797
        %v6774 = vpack.c.b16 %v3814, %v3806
        %v6775 = vpack.c.b16 %v3815, %v3807
        %v6776 = vpack.c.b16 %v3816, %v3808
        %v6777 = vpack.c.b16 %v3817, %v3809
        %v6778 = vpack.c.b16 %v3818, %v3810
        %v6779 = vpack.c.b16 %v3819, %v3811
        %v6780 = vpack.c.b16 %v3820, %v3812
        %v6781 = vpack.c.b16 %v3821, %v3813
        %v6782 = vpack.c.b16 %v3830, %v3822
        %v6783 = vpack.c.b16 %v3831, %v3823
        %v6784 = vpack.c.b16 %v3832, %v3824
        %v6785 = vpack.c.b16 %v3833, %v3825
        %v6786 = vpack.c.b16 %v3834, %v3826
        %v6787 = vpack.c.b16 %v3835, %v3827
        %v6788 = vpack.c.b16 %v3836, %v3828
        %v6789 = vpack.c.b16 %v3837, %v3829
        %v6790 = vpack.c.b16 %v3846, %v3838
        %v6791 = vpack.c.b16 %v3847, %v3839
        %v6792 = vpack.c.b16 %v3848, %v3840
        %v6793 = vpack.c.b16 %v3849, %v3841
        %v6794 = vpack.c.b16 %v3850, %v3842
        %v6795 = vpack.c.b16 %v3851, %v3843
        %v6796 = vpack.c.b16 %v3852, %v3844
        %v6797 = vpack.c.b16 %v3853, %v3845
        %v6798 = vpack.c.b16 %v3862, %v3854
        %v6799 = vpack.c.b16 %v3863, %v3855
        %v6800 = vpack.c.b16 %v3864, %v3856
        %v6801 = vpack.c.b16 %v3865, %v3857
        %v6802 = vpack.c.b16 %v3866, %v3858
        %v6803 = vpack.c.b16 %v3867, %v3859
        %v6804 = vpack.c.b16 %v3868, %v3860
        %v6805 = vpack.c.b16 %v3869, %v3861
        %v6806 = vpack.c.b16 %v3878, %v3870
        %v6807 = vpack.c.b16 %v3879, %v3871
        %v6808 = vpack.c.b16 %v3880, %v3872
        %v6809 = vpack.c.b16 %v3881, %v3873
        %v6810 = vpack.c.b16 %v3882, %v3874
        %v6811 = vpack.c.b16 %v3883, %v3875
        %v6812 = vpack.c.b16 %v3884, %v3876
        %v6813 = vpack.c.b16 %v3885, %v3877
        %v6814 = vpack.c.b16 %v3894, %v3886
        %v6815 = vpack.c.b16 %v3895, %v3887
        %v6816 = vpack.c.b16 %v3896, %v3888
        %v6817 = vpack.c.b16 %v3897, %v3889
        %v6818 = vpack.c.b16 %v3898, %v3890
        %v6819 = vpack.c.b16 %v3899, %v3891
        %v6820 = vpack.c.b16 %v3900, %v3892
        %v6821 = vpack.c.b16 %v3901, %v3893
        %v6822 = vpack.c.b16 %v3910, %v3902
        %v6823 = vpack.c.b16 %v3911, %v3903
        %v6824 = vpack.c.b16 %v3912, %v3904
        %v6825 = vpack.c.b16 %v3913, %v3905
        %v6826 = vpack.c.b16 %v3914, %v3906
        %v6827 = vpack.c.b16 %v3915, %v3907
        %v6828 = vpack.c.b16 %v3916, %v3908
        %v6829 = vpack.c.b16 %v3917, %v3909
        %v6830 = vpack.c.b16 %v3926, %v3918
        %v6831 = vpack.c.b16 %v3927, %v3919
        %v6832 = vpack.c.b16 %v3928, %v3920
        %v6833 = vpack.c.b16 %v3929, %v3921
        %v6834 = vpack.c.b16 %v3930, %v3922
        %v6835 = vpack.c.b16 %v3931, %v3923
        %v6836 = vpack.c.b16 %v3932, %v3924
        %v6837 = vpack.c.b16 %v3933, %v3925
        %v6838 = vpack.c.b16 %v3942, %v3934
        %v6839 = vpack.c.b16 %v3943, %v3935
        %v6840 = vpack.c.b16 %v3944, %v3936
        %v6841 = vpack.c.b16 %v3945, %v3937
        %v6842 = vpack.c.b16 %v3946, %v3938
        %v6843 = vpack.c.b16 %v3947, %v3939
        %v6844 = vpack.c.b16 %v3948, %v3940
        %v6845 = vpack.c.b16 %v3949, %v3941
        %v6846 = vpack.c.b16 %v3958, %v3950
        %v6847 = vpack.c.b16 %v3959, %v3951
        %v6848 = vpack.c.b16 %v3960, %v3952
        %v6849 = vpack.c.b16 %v3961, %v3953
        %v6850 = vpack.c.b16 %v3962, %v3954
        %v6851 = vpack.c.b16 %v3963, %v3955
        %v6852 = vpack.c.b16 %v3964, %v3956
        %v6853 = vpack.c.b16 %v3965, %v3957
        %v6854 = vpack.c.b16 %v3974, %v3966
        %v6855 = vpack.c.b16 %v3975, %v3967
        %v6856 = vpack.c.b16 %v3976, %v3968
        %v6857 = vpack.c.b16 %v3977, %v3969
        %v6858 = vpack.c.b16 %v3978, %v3970
        %v6859 = vpack.c.b16 %v3979, %v3971
        %v6860 = vpack.c.b16 %v3980, %v3972
        %v6861 = vpack.c.b16 %v3981, %v3973
        %v6862 = vpack.c.b16 %v3990, %v3982
        %v6863 = vpack.c.b16 %v3991, %v3983
        %v6864 = vpack.c.b16 %v3992, %v3984
        %v6865 = vpack.c.b16 %v3993, %v3985
        %v6866 = vpack.c.b16 %v3994, %v3986
        %v6867 = vpack.c.b16 %v3995, %v3987
        %v6868 = vpack.c.b16 %v3996, %v3988
        %v6869 = vpack.c.b16 %v3997, %v3989
        %v6870 = vpack.c.b16 %v4006, %v3998
        %v6871 = vpack.c.b16 %v4007, %v3999
        %v6872 = vpack.c.b16 %v4008, %v4000
        %v6873 = vpack.c.b16 %v4009, %v4001
        %v6874 = vpack.c.b16 %v4010, %v4002
        %v6875 = vpack.c.b16 %v4011, %v4003
        %v6876 = vpack.c.b16 %v4012, %v4004
        %v6877 = vpack.c.b16 %v4013, %v4005
        %v6878 = vpack.c.b16 %v4022, %v4014
        %v6879 = vpack.c.b16 %v4023, %v4015
        %v6880 = vpack.c.b16 %v4024, %v4016
        %v6881 = vpack.c.b16 %v4025, %v4017
        %v6882 = vpack.c.b16 %v4026, %v4018
        %v6883 = vpack.c.b16 %v4027, %v4019
        %v6884 = vpack.c.b16 %v4028, %v4020
        %v6885 = vpack.c.b16 %v4029, %v4021
        %v6886 = vpack.c.b16 %v4038, %v4030
        %v6887 = vpack.c.b16 %v4039, %v4031
        %v6888 = vpack.c.b16 %v4040, %v4032
        %v6889 = vpack.c.b16 %v4041, %v4033
        %v6890 = vpack.c.b16 %v4042, %v4034
        %v6891 = vpack.c.b16 %v4043, %v4035
        %v6892 = vpack.c.b16 %v4044, %v4036
        %v6893 = vpack.c.b16 %v4045, %v4037
        %v6894 = vpack.c.b16 %v4054, %v4046
        %v6895 = vpack.c.b16 %v4055, %v4047
        %v6896 = vpack.c.b16 %v4056, %v4048
        %v6897 = vpack.c.b16 %v4057, %v4049
        %v6898 = vpack.c.b16 %v4058, %v4050
        %v6899 = vpack.c.b16 %v4059, %v4051
        %v6900 = vpack.c.b16 %v4060, %v4052
        %v6901 = vpack.c.b16 %v4061, %v4053
        %v6902 = vpack.c.b16 %v4070, %v4062
        %v6903 = vpack.c.b16 %v4071, %v4063
        %v6904 = vpack.c.b16 %v4072, %v4064
        %v6905 = vpack.c.b16 %v4073, %v4065
        %v6906 = vpack.c.b16 %v4074, %v4066
        %v6907 = vpack.c.b16 %v4075, %v4067
        %v6908 = vpack.c.b16 %v4076, %v4068
        %v6909 = vpack.c.b16 %v4077, %v4069
        %v6910 = vpack.c.b16 %v4086, %v4078
        %v6911 = vpack.c.b16 %v4087, %v4079
        %v6912 = vpack.c.b16 %v4088, %v4080
        %v6913 = vpack.c.b16 %v4089, %v4081
        %v6914 = vpack.c.b16 %v4090, %v4082
        %v6915 = vpack.c.b16 %v4091, %v4083
        %v6916 = vpack.c.b16 %v4092, %v4084
        %v6917 = vpack.c.b16 %v4093, %v4085
        %v6918 = vpack.c.b16 %v4102, %v4094
        %v6919 = vpack.c.b16 %v4103, %v4095
        %v6920 = vpack.c.b16 %v4104, %v4096
        %v6921 = vpack.c.b16 %v4105, %v4097
        %v6922 = vpack.c.b16 %v4106, %v4098
        %v6923 = vpack.c.b16 %v4107, %v4099
        %v6924 = vpack.c.b16 %v4108, %v4100
        %v6925 = vpack.c.b16 %v4109, %v4101
        %v6926 = vpack.c.b16 %v4118, %v4110
        %v6927 = vpack.c.b16 %v4119, %v4111
        %v6928 = vpack.c.b16 %v4120, %v4112
        %v6929 = vpack.c.b16 %v4121, %v4113
        %v6930 = vpack.c.b16 %v4122, %v4114
        %v6931 = vpack.c.b16 %v4123, %v4115
        %v6932 = vpack.c.b16 %v4124, %v4116
        %v6933 = vpack.c.b16 %v4125, %v4117
        %v6934 = vpack.c.b16 %v4134, %v4126
        %v6935 = vpack.c.b16 %v4135, %v4127
        %v6936 = vpack.c.b16 %v4136, %v4128
        %v6937 = vpack.c.b16 %v4137, %v4129
        %v6938 = vpack.c.b16 %v4138, %v4130
        %v6939 = vpack.c.b16 %v4139, %v4131
        %v6940 = vpack.c.b16 %v4140, %v4132
        %v6941 = vpack.c.b16 %v4141, %v4133
        %v6942 = vpack.c.b16 %v4150, %v4142
        %v6943 = vpack.c.b16 %v4151, %v4143
        %v6944 = vpack.c.b16 %v4152, %v4144
        %v6945 = vpack.c.b16 %v4153, %v4145
        %v6946 = vpack.c.b16 %v4154, %v4146
        %v6947 = vpack.c.b16 %v4155, %v4147
        %v6948 = vpack.c.b16 %v4156, %v4148
        %v6949 = vpack.c.b16 %v4157, %v4149
        %v6950 = vpack.c.b16 %v4166, %v4158
        %v6951 = vpack.c.b16 %v4167, %v4159
        %v6952 = vpack.c.b16 %v4168, %v4160
        %v6953 = vpack.c.b16 %v4169, %v4161
        %v6954 = vpack.c.b16 %v4170, %v4162
        %v6955 = vpack.c.b16 %v4171, %v4163
        %v6956 = vpack.c.b16 %v4172, %v4164
        %v6957 = vpack.c.b16 %v4173, %v4165
        %v6958 = vpack.c.b16 %v4182, %v4174
        %v6959 = vpack.c.b16 %v4183, %v4175
        %v6960 = vpack.c.b16 %v4184, %v4176
        %v6961 = vpack.c.b16 %v4185, %v4177
        %v6962 = vpack.c.b16 %v4186, %v4178
        %v6963 = vpack.c.b16 %v4187, %v4179
        %v6964 = vpack.c.b16 %v4188, %v4180
        %v6965 = vpack.c.b16 %v4189, %v4181
        %v6966 = vpack.c.b16 %v4198, %v4190
        %v6967 = vpack.c.b16 %v4199, %v4191
        %v6968 = vpack.c.b16 %v4200, %v4192
        %v6969 = vpack.c.b16 %v4201, %v4193
        %v6970 = vpack.c.b16 %v4202, %v4194
        %v6971 = vpack.c.b16 %v4203, %v4195
        %v6972 = vpack.c.b16 %v4204, %v4196
        %v6973 = vpack.c.b16 %v4205, %v4197
        %v6974 = vpack.c.b16 %v4214, %v4206
        %v6975 = vpack.c.b16 %v4215, %v4207
        %v6976 = vpack.c.b16 %v4216, %v4208
        %v6977 = vpack.c.b16 %v4217, %v4209
        %v6978 = vpack.c.b16 %v4218, %v4210
        %v6979 = vpack.c.b16 %v4219, %v4211
        %v6980 = vpack.c.b16 %v4220, %v4212
        %v6981 = vpack.c.b16 %v4221, %v4213
        %v6982 = vpack.c.b16 %v4230, %v4222
        %v6983 = vpack.c.b16 %v4231, %v4223
        %v6984 = vpack.c.b16 %v4232, %v4224
        %v6985 = vpack.c.b16 %v4233, %v4225
        %v6986 = vpack.c.b16 %v4234, %v4226
        %v6987 = vpack.c.b16 %v4235, %v4227
        %v6988 = vpack.c.b16 %v4236, %v4228
        %v6989 = vpack.c.b16 %v4237, %v4229
        %v6990 = vpack.c.b16 %v4246, %v4238
        %v6991 = vpack.c.b16 %v4247, %v4239
        %v6992 = vpack.c.b16 %v4248, %v4240
        %v6993 = vpack.c.b16 %v4249, %v4241
        %v6994 = vpack.c.b16 %v4250, %v4242
        %v6995 = vpack.c.b16 %v4251, %v4243
        %v6996 = vpack.c.b16 %v4252, %v4244
        %v6997 = vpack.c.b16 %v4253, %v4245
        %v6998 = vpack.c.b16 %v4262, %v4254
        %v6999 = vpack.c.b16 %v4263, %v4255
        %v7000 = vpack.c.b16 %v4264, %v4256
        %v7001 = vpack.c.b16 %v4265, %v4257
        %v7002 = vpack.c.b16 %v4266, %v4258
        %v7003 = vpack.c.b16 %v4267, %v4259
        %v7004 = vpack.c.b16 %v4268, %v4260
        %v7005 = vpack.c.b16 %v4269, %v4261
        %v7006 = vpack.c.b16 %v4278, %v4270
        %v7007 = vpack.c.b16 %v4279, %v4271
        %v7008 = vpack.c.b16 %v4280, %v4272
        %v7009 = vpack.c.b16 %v4281, %v4273
        %v7010 = vpack.c.b16 %v4282, %v4274
        %v7011 = vpack.c.b16 %v4283, %v4275
        %v7012 = vpack.c.b16 %v4284, %v4276
        %v7013 = vpack.c.b16 %v4285, %v4277
        %v7014 = vpack.c.b16 %v4294, %v4286
        %v7015 = vpack.c.b16 %v4295, %v4287
        %v7016 = vpack.c.b16 %v4296, %v4288
        %v7017 = vpack.c.b16 %v4297, %v4289
        %v7018 = vpack.c.b16 %v4298, %v4290
        %v7019 = vpack.c.b16 %v4299, %v4291
        %v7020 = vpack.c.b16 %v4300, %v4292
        %v7021 = vpack.c.b16 %v4301, %v4293
        %v7022 = vpack.c.b16 %v4310, %v4302
        %v7023 = vpack.c.b16 %v4311, %v4303
        %v7024 = vpack.c.b16 %v4312, %v4304
        %v7025 = vpack.c.b16 %v4313, %v4305
        %v7026 = vpack.c.b16 %v4314, %v4306
        %v7027 = vpack.c.b16 %v4315, %v4307
        %v7028 = vpack.c.b16 %v4316, %v4308
        %v7029 = vpack.c.b16 %v4317, %v4309
        %v7030 = vpack.c.b16 %v4326, %v4318
        %v7031 = vpack.c.b16 %v4327, %v4319
        %v7032 = vpack.c.b16 %v4328, %v4320
        %v7033 = vpack.c.b16 %v4329, %v4321
        %v7034 = vpack.c.b16 %v4330, %v4322
        %v7035 = vpack.c.b16 %v4331, %v4323
        %v7036 = vpack.c.b16 %v4332, %v4324
        %v7037 = vpack.c.b16 %v4333, %v4325
        %v7038 = vpack.c.b16 %v4342, %v4334
        %v7039 = vpack.c.b16 %v4343, %v4335
        %v7040 = vpack.c.b16 %v4344, %v4336
        %v7041 = vpack.c.b16 %v4345, %v4337
        %v7042 = vpack.c.b16 %v4346, %v4338
        %v7043 = vpack.c.b16 %v4347, %v4339
        %v7044 = vpack.c.b16 %v4348, %v4340
        %v7045 = vpack.c.b16 %v4349, %v4341
        %v7046 = vpack.c.b16 %v4358, %v4350
        %v7047 = vpack.c.b16 %v4359, %v4351
        %v7048 = vpack.c.b16 %v4360, %v4352
        %v7049 = vpack.c.b16 %v4361, %v4353
        %v7050 = vpack.c.b16 %v4362, %v4354
        %v7051 = vpack.c.b16 %v4363, %v4355
        %v7052 = vpack.c.b16 %v4364, %v4356
        %v7053 = vpack.c.b16 %v4365, %v4357
        %v7054 = vpack.c.b16 %v4374, %v4366
        %v7055 = vpack.c.b16 %v4375, %v4367
        %v7056 = vpack.c.b16 %v4376, %v4368
        %v7057 = vpack.c.b16 %v4377, %v4369
        %v7058 = vpack.c.b16 %v4378, %v4370
        %v7059 = vpack.c.b16 %v4379, %v4371
        %v7060 = vpack.c.b16 %v4380, %v4372
        %v7061 = vpack.c.b16 %v4381, %v4373
        %v7062 = vpack.c.b16 %v4390, %v4382
        %v7063 = vpack.c.b16 %v4391, %v4383
        %v7064 = vpack.c.b16 %v4392, %v4384
        %v7065 = vpack.c.b16 %v4393, %v4385
        %v7066 = vpack.c.b16 %v4394, %v4386
        %v7067 = vpack.c.b16 %v4395, %v4387
        %v7068 = vpack.c.b16 %v4396, %v4388
        %v7069 = vpack.c.b16 %v4397, %v4389
        %v7070 = vpack.c.b16 %v4406, %v4398
        %v7071 = vpack.c.b16 %v4407, %v4399
        %v7072 = vpack.c.b16 %v4408, %v4400
        %v7073 = vpack.c.b16 %v4409, %v4401
        %v7074 = vpack.c.b16 %v4410, %v4402
        %v7075 = vpack.c.b16 %v4411, %v4403
        %v7076 = vpack.c.b16 %v4412, %v4404
        %v7077 = vpack.c.b16 %v4413, %v4405
        %v7078 = vpack.c.b16 %v4422, %v4414
        %v7079 = vpack.c.b16 %v4423, %v4415
        %v7080 = vpack.c.b16 %v4424, %v4416
        %v7081 = vpack.c.b16 %v4425, %v4417
        %v7082 = vpack.c.b16 %v4426, %v4418
        %v7083 = vpack.c.b16 %v4427, %v4419
        %v7084 = vpack.c.b16 %v4428, %v4420
        %v7085 = vpack.c.b16 %v4429, %v4421
        %v7086 = vpack.c.b16 %v4438, %v4430
        %v7087 = vpack.c.b16 %v4439, %v4431
        %v7088 = vpack.c.b16 %v4440, %v4432
        %v7089 = vpack.c.b16 %v4441, %v4433
        %v7090 = vpack.c.b16 %v4442, %v4434
        %v7091 = vpack.c.b16 %v4443, %v4435
        %v7092 = vpack.c.b16 %v4444, %v4436
        %v7093 = vpack.c.b16 %v4445, %v4437
        %v7094 = vpack.c.b16 %v4454, %v4446
        %v7095 = vpack.c.b16 %v4455, %v4447
        %v7096 = vpack.c.b16 %v4456, %v4448
        %v7097 = vpack.c.b16 %v4457, %v4449
        %v7098 = vpack.c.b16 %v4458, %v4450
        %v7099 = vpack.c.b16 %v4459, %v4451
        %v7100 = vpack.c.b16 %v4460, %v4452
        %v7101 = vpack.c.b16 %v4461, %v4453
        %v7102 = vpack.c.b16 %v4470, %v4462
        %v7103 = vpack.c.b16 %v4471, %v4463
        %v7104 = vpack.c.b16 %v4472, %v4464
        %v7105 = vpack.c.b16 %v4473, %v4465
        %v7106 = vpack.c.b16 %v4474, %v4466
        %v7107 = vpack.c.b16 %v4475, %v4467
        %v7108 = vpack.c.b16 %v4476, %v4468
        %v7109 = vpack.c.b16 %v4477, %v4469
        %v7110 = vpack.c.b16 %v4486, %v4478
        %v7111 = vpack.c.b16 %v4487, %v4479
        %v7112 = vpack.c.b16 %v4488, %v4480
        %v7113 = vpack.c.b16 %v4489, %v4481
        %v7114 = vpack.c.b16 %v4490, %v4482
        %v7115 = vpack.c.b16 %v4491, %v4483
        %v7116 = vpack.c.b16 %v4492, %v4484
        %v7117 = vpack.c.b16 %v4493, %v4485
        %v7118 = vpack.c.b16 %v4502, %v4494
        %v7119 = vpack.c.b16 %v4503, %v4495
        %v7120 = vpack.c.b16 %v4504, %v4496
        %v7121 = vpack.c.b16 %v4505, %v4497
        %v7122 = vpack.c.b16 %v4506, %v4498
        %v7123 = vpack.c.b16 %v4507, %v4499
        %v7124 = vpack.c.b16 %v4508, %v4500
        %v7125 = vpack.c.b16 %v4509, %v4501
        %v7126 = vpack.c.b16 %v4518, %v4510
        %v7127 = vpack.c.b16 %v4519, %v4511
        %v7128 = vpack.c.b16 %v4520, %v4512
        %v7129 = vpack.c.b16 %v4521, %v4513
        %v7130 = vpack.c.b16 %v4522, %v4514
        %v7131 = vpack.c.b16 %v4523, %v4515
        %v7132 = vpack.c.b16 %v4524, %v4516
        %v7133 = vpack.c.b16 %v4525, %v4517
        %v7134 = vpack.c.b16 %v4534, %v4526
        %v7135 = vpack.c.b16 %v4535, %v4527
        %v7136 = vpack.c.b16 %v4536, %v4528
        %v7137 = vpack.c.b16 %v4537, %v4529
        %v7138 = vpack.c.b16 %v4538, %v4530
        %v7139 = vpack.c.b16 %v4539, %v4531
        %v7140 = vpack.c.b16 %v4540, %v4532
        %v7141 = vpack.c.b16 %v4541, %v4533
        %v7142 = vpack.c.b16 %v4550, %v4542
        %v7143 = vpack.c.b16 %v4551, %v4543
        %v7144 = vpack.c.b16 %v4552, %v4544
        %v7145 = vpack.c.b16 %v4553, %v4545
        %v7146 = vpack.c.b16 %v4554, %v4546
        %v7147 = vpack.c.b16 %v4555, %v4547
        %v7148 = vpack.c.b16 %v4556, %v4548
        %v7149 = vpack.c.b16 %v4557, %v4549
        %v7150 = vpack.c.b16 %v4566, %v4558
        %v7151 = vpack.c.b16 %v4567, %v4559
        %v7152 = vpack.c.b16 %v4568, %v4560
        %v7153 = vpack.c.b16 %v4569, %v4561
        %v7154 = vpack.c.b16 %v4570, %v4562
        %v7155 = vpack.c.b16 %v4571, %v4563
        %v7156 = vpack.c.b16 %v4572, %v4564
        %v7157 = vpack.c.b16 %v4573, %v4565
        %v7158 = vpack.c.b16 %v4582, %v4574
        %v7159 = vpack.c.b16 %v4583, %v4575
        %v7160 = vpack.c.b16 %v4584, %v4576
        %v7161 = vpack.c.b16 %v4585, %v4577
        %v7162 = vpack.c.b16 %v4586, %v4578
        %v7163 = vpack.c.b16 %v4587, %v4579
        %v7164 = vpack.c.b16 %v4588, %v4580
        %v7165 = vpack.c.b16 %v4589, %v4581
        %v7166 = vpack.c.b16 %v4598, %v4590
        %v7167 = vpack.c.b16 %v4599, %v4591
        %v7168 = vpack.c.b16 %v4600, %v4592
        %v7169 = vpack.c.b16 %v4601, %v4593
        %v7170 = vpack.c.b16 %v4602, %v4594
        %v7171 = vpack.c.b16 %v4603, %v4595
        %v7172 = vpack.c.b16 %v4604, %v4596
        %v7173 = vpack.c.b16 %v4605, %v4597
        %v7174 = vpack.c.b16 %v4614, %v4606
        %v7175 = vpack.c.b16 %v4615, %v4607
        %v7176 = vpack.c.b16 %v4616, %v4608
        %v7177 = vpack.c.b16 %v4617, %v4609
        %v7178 = vpack.c.b16 %v4618, %v4610
        %v7179 = vpack.c.b16 %v4619, %v4611
        %v7180 = vpack.c.b16 %v4620, %v4612
        %v7181 = vpack.c.b16 %v4621, %v4613
        %v7182 = vpack.c.b16 %v4630, %v4622
        %v7183 = vpack.c.b16 %v4631, %v4623
        %v7184 = vpack.c.b16 %v4632, %v4624
        %v7185 = vpack.c.b16 %v4633, %v4625
        %v7186 = vpack.c.b16 %v4634, %v4626
        %v7187 = vpack.c.b16 %v4635, %v4627
        %v7188 = vpack.c.b16 %v4636, %v4628
        %v7189 = vpack.c.b16 %v4637, %v4629
        %v7190 = vpack.c.b16 %v4646, %v4638
        %v7191 = vpack.c.b16 %v4647, %v4639
        %v7192 = vpack.c.b16 %v4648, %v4640
        %v7193 = vpack.c.b16 %v4649, %v4641
        %v7194 = vpack.c.b16 %v4650, %v4642
        %v7195 = vpack.c.b16 %v4651, %v4643
        %v7196 = vpack.c.b16 %v4652, %v4644
        %v7197 = vpack.c.b16 %v4653, %v4645
        %v7198 = vpack.c.b16 %v4662, %v4654
        %v7199 = vpack.c.b16 %v4663, %v4655
        %v7200 = vpack.c.b16 %v4664, %v4656
        %v7201 = vpack.c.b16 %v4665, %v4657
        %v7202 = vpack.c.b16 %v4666, %v4658
        %v7203 = vpack.c.b16 %v4667, %v4659
        %v7204 = vpack.c.b16 %v4668, %v4660
        %v7205 = vpack.c.b16 %v4669, %v4661
        %v7206 = vpack.c.b16 %v4678, %v4670
        %v7207 = vpack.c.b16 %v4679, %v4671
        %v7208 = vpack.c.b16 %v4680, %v4672
        %v7209 = vpack.c.b16 %v4681, %v4673
        %v7210 = vpack.c.b16 %v4682, %v4674
        %v7211 = vpack.c.b16 %v4683, %v4675
        %v7212 = vpack.c.b16 %v4684, %v4676
        %v7213 = vpack.c.b16 %v4685, %v4677
        %v7214 = vpack.c.b16 %v4694, %v4686
        %v7215 = vpack.c.b16 %v4695, %v4687
        %v7216 = vpack.c.b16 %v4696, %v4688
        %v7217 = vpack.c.b16 %v4697, %v4689
        %v7218 = vpack.c.b16 %v4698, %v4690
        %v7219 = vpack.c.b16 %v4699, %v4691
        %v7220 = vpack.c.b16 %v4700, %v4692
        %v7221 = vpack.c.b16 %v4701, %v4693
        %v7222 = vpack.c.b16 %v4710, %v4702
        %v7223 = vpack.c.b16 %v4711, %v4703
        %v7224 = vpack.c.b16 %v4712, %v4704
        %v7225 = vpack.c.b16 %v4713, %v4705
        %v7226 = vpack.c.b16 %v4714, %v4706
        %v7227 = vpack.c.b16 %v4715, %v4707
        %v7228 = vpack.c.b16 %v4716, %v4708
        %v7229 = vpack.c.b16 %v4717, %v4709
        %v7230 = vpack.c.b16 %v4726, %v4718
        %v7231 = vpack.c.b16 %v4727, %v4719
        %v7232 = vpack.c.b16 %v4728, %v4720
        %v7233 = vpack.c.b16 %v4729, %v4721
        %v7234 = vpack.c.b16 %v4730, %v4722
        %v7235 = vpack.c.b16 %v4731, %v4723
        %v7236 = vpack.c.b16 %v4732, %v4724
        %v7237 = vpack.c.b16 %v4733, %v4725
        %v7238 = vpack.c.b16 %v4742, %v4734
        %v7239 = vpack.c.b16 %v4743, %v4735
        %v7240 = vpack.c.b16 %v4744, %v4736
        %v7241 = vpack.c.b16 %v4745, %v4737
        %v7242 = vpack.c.b16 %v4746, %v4738
        %v7243 = vpack.c.b16 %v4747, %v4739
        %v7244 = vpack.c.b16 %v4748, %v4740
        %v7245 = vpack.c.b16 %v4749, %v4741
        %v7246 = vpack.c.b16 %v4758, %v4750
        %v7247 = vpack.c.b16 %v4759, %v4751
        %v7248 = vpack.c.b16 %v4760, %v4752
        %v7249 = vpack.c.b16 %v4761, %v4753
        %v7250 = vpack.c.b16 %v4762, %v4754
        %v7251 = vpack.c.b16 %v4763, %v4755
        %v7252 = vpack.c.b16 %v4764, %v4756
        %v7253 = vpack.c.b16 %v4765, %v4757
        %v7254 = vpack.c.b16 %v4774, %v4766
        %v7255 = vpack.c.b16 %v4775, %v4767
        %v7256 = vpack.c.b16 %v4776, %v4768
        %v7257 = vpack.c.b16 %v4777, %v4769
        %v7258 = vpack.c.b16 %v4778, %v4770
        %v7259 = vpack.c.b16 %v4779, %v4771
        %v7260 = vpack.c.b16 %v4780, %v4772
        %v7261 = vpack.c.b16 %v4781, %v4773
        %v7262 = vpack.c.b16 %v4790, %v4782
        %v7263 = vpack.c.b16 %v4791, %v4783
        %v7264 = vpack.c.b16 %v4792, %v4784
        %v7265 = vpack.c.b16 %v4793, %v4785
        %v7266 = vpack.c.b16 %v4794, %v4786
        %v7267 = vpack.c.b16 %v4795, %v4787
        %v7268 = vpack.c.b16 %v4796, %v4788
        %v7269 = vpack.c.b16 %v4797, %v4789
        %v7270 = vpack.c.b16 %v4806, %v4798
        %v7271 = vpack.c.b16 %v4807, %v4799
        %v7272 = vpack.c.b16 %v4808, %v4800
        %v7273 = vpack.c.b16 %v4809, %v4801
        %v7274 = vpack.c.b16 %v4810, %v4802
        %v7275 = vpack.c.b16 %v4811, %v4803
        %v7276 = vpack.c.b16 %v4812, %v4804
        %v7277 = vpack.c.b16 %v4813, %v4805
        %v7278 = vpack.c.b16 %v4822, %v4814
        %v7279 = vpack.c.b16 %v4823, %v4815
        %v7280 = vpack.c.b16 %v4824, %v4816
        %v7281 = vpack.c.b16 %v4825, %v4817
        %v7282 = vpack.c.b16 %v4826, %v4818
        %v7283 = vpack.c.b16 %v4827, %v4819
        %v7284 = vpack.c.b16 %v4828, %v4820
        %v7285 = vpack.c.b16 %v4829, %v4821
        %v7286 = vpack.c.b16 %v4838, %v4830
        %v7287 = vpack.c.b16 %v4839, %v4831
        %v7288 = vpack.c.b16 %v4840, %v4832
        %v7289 = vpack.c.b16 %v4841, %v4833
        %v7290 = vpack.c.b16 %v4842, %v4834
        %v7291 = vpack.c.b16 %v4843, %v4835
        %v7292 = vpack.c.b16 %v4844, %v4836
        %v7293 = vpack.c.b16 %v4845, %v4837
        %v7294 = vpack.c.b16 %v4854, %v4846
        %v7295 = vpack.c.b16 %v4855, %v4847
        %v7296 = vpack.c.b16 %v4856, %v4848
        %v7297 = vpack.c.b16 %v4857, %v4849
        %v7298 = vpack.c.b16 %v4858, %v4850
        %v7299 = vpack.c.b16 %v4859, %v4851
        %v7300 = vpack.c.b16 %v4860, %v4852
        %v7301 = vpack.c.b16 %v4861, %v4853
        %v7302 = vpack.c.b16 %v4870, %v4862
        %v7303 = vpack.c.b16 %v4871, %v4863
        %v7304 = vpack.c.b16 %v4872, %v4864
        %v7305 = vpack.c.b16 %v4873, %v4865
        %v7306 = vpack.c.b16 %v4874, %v4866
        %v7307 = vpack.c.b16 %v4875, %v4867
        %v7308 = vpack.c.b16 %v4876, %v4868
        %v7309 = vpack.c.b16 %v4877, %v4869
        %v7310 = vpack.c.b16 %v4886, %v4878
        %v7311 = vpack.c.b16 %v4887, %v4879
        %v7312 = vpack.c.b16 %v4888, %v4880
        %v7313 = vpack.c.b16 %v4889, %v4881
        %v7314 = vpack.c.b16 %v4890, %v4882
        %v7315 = vpack.c.b16 %v4891, %v4883
        %v7316 = vpack.c.b16 %v4892, %v4884
        %v7317 = vpack.c.b16 %v4893, %v4885
        %v7318 = vpack.c.b16 %v4902, %v4894
        %v7319 = vpack.c.b16 %v4903, %v4895
        %v7320 = vpack.c.b16 %v4904, %v4896
        %v7321 = vpack.c.b16 %v4905, %v4897
        %v7322 = vpack.c.b16 %v4906, %v4898
        %v7323 = vpack.c.b16 %v4907, %v4899
        %v7324 = vpack.c.b16 %v4908, %v4900
        %v7325 = vpack.c.b16 %v4909, %v4901
        %v7326 = vpack.c.b16 %v4918, %v4910
        %v7327 = vpack.c.b16 %v4919, %v4911
        %v7328 = vpack.c.b16 %v4920, %v4912
        %v7329 = vpack.c.b16 %v4921, %v4913
        %v7330 = vpack.c.b16 %v4922, %v4914
        %v7331 = vpack.c.b16 %v4923, %v4915
        %v7332 = vpack.c.b16 %v4924, %v4916
        %v7333 = vpack.c.b16 %v4925, %v4917
        %v7334 = vpack.c.b16 %v4934, %v4926
        %v7335 = vpack.c.b16 %v4935, %v4927
        %v7336 = vpack.c.b16 %v4936, %v4928
        %v7337 = vpack.c.b16 %v4937, %v4929
        %v7338 = vpack.c.b16 %v4938, %v4930
        %v7339 = vpack.c.b16 %v4939, %v4931
        %v7340 = vpack.c.b16 %v4940, %v4932
        %v7341 = vpack.c.b16 %v4941, %v4933
        %v7342 = vpack.c.b16 %v4950, %v4942
        %v7343 = vpack.c.b16 %v4951, %v4943
        %v7344 = vpack.c.b16 %v4952, %v4944
        %v7345 = vpack.c.b16 %v4953, %v4945
        %v7346 = vpack.c.b16 %v4954, %v4946
        %v7347 = vpack.c.b16 %v4955, %v4947
        %v7348 = vpack.c.b16 %v4956, %v4948
        %v7349 = vpack.c.b16 %v4957, %v4949
        %v7350 = vpack.c.b16 %v4966, %v4958
        %v7351 = vpack.c.b16 %v4967, %v4959
        %v7352 = vpack.c.b16 %v4968, %v4960
        %v7353 = vpack.c.b16 %v4969, %v4961
        %v7354 = vpack.c.b16 %v4970, %v4962
        %v7355 = vpack.c.b16 %v4971, %v4963
        %v7356 = vpack.c.b16 %v4972, %v4964
        %v7357 = vpack.c.b16 %v4973, %v4965
        %v7358 = vpack.c.b16 %v4982, %v4974
        %v7359 = vpack.c.b16 %v4983, %v4975
        %v7360 = vpack.c.b16 %v4984, %v4976
        %v7361 = vpack.c.b16 %v4985, %v4977
        %v7362 = vpack.c.b16 %v4986, %v4978
        %v7363 = vpack.c.b16 %v4987, %v4979
        %v7364 = vpack.c.b16 %v4988, %v4980
        %v7365 = vpack.c.b16 %v4989, %v4981
        %v7366 = vpack.c.b16 %v4998, %v4990
        %v7367 = vpack.c.b16 %v4999, %v4991
        %v7368 = vpack.c.b16 %v5000, %v4992
        %v7369 = vpack.c.b16 %v5001, %v4993
        %v7370 = vpack.c.b16 %v5002, %v4994
        %v7371 = vpack.c.b16 %v5003, %v4995
        %v7372 = vpack.c.b16 %v5004, %v4996
        %v7373 = vpack.c.b16 %v5005, %v4997
        %v7374 = vpack.c.b16 %v5014, %v5006
        %v7375 = vpack.c.b16 %v5015, %v5007
        %v7376 = vpack.c.b16 %v5016, %v5008
        %v7377 = vpack.c.b16 %v5017, %v5009
        %v7378 = vpack.c.b16 %v5018, %v5010
        %v7379 = vpack.c.b16 %v5019, %v5011
        %v7380 = vpack.c.b16 %v5020, %v5012
        %v7381 = vpack.c.b16 %v5021, %v5013
        %v7382 = vpack.c.b16 %v5030, %v5022
        %v7383 = vpack.c.b16 %v5031, %v5023
        %v7384 = vpack.c.b16 %v5032, %v5024
        %v7385 = vpack.c.b16 %v5033, %v5025
        %v7386 = vpack.c.b16 %v5034, %v5026
        %v7387 = vpack.c.b16 %v5035, %v5027
        %v7388 = vpack.c.b16 %v5036, %v5028
        %v7389 = vpack.c.b16 %v5037, %v5029
        %v7390 = vpack.c.b16 %v5046, %v5038
        %v7391 = vpack.c.b16 %v5047, %v5039
        %v7392 = vpack.c.b16 %v5048, %v5040
        %v7393 = vpack.c.b16 %v5049, %v5041
        %v7394 = vpack.c.b16 %v5050, %v5042
        %v7395 = vpack.c.b16 %v5051, %v5043
        %v7396 = vpack.c.b16 %v5052, %v5044
        %v7397 = vpack.c.b16 %v5053, %v5045
        %v7398 = vpack.c.b16 %v5062, %v5054
        %v7399 = vpack.c.b16 %v5063, %v5055
        %v7400 = vpack.c.b16 %v5064, %v5056
        %v7401 = vpack.c.b16 %v5065, %v5057
        %v7402 = vpack.c.b16 %v5066, %v5058
        %v7403 = vpack.c.b16 %v5067, %v5059
        %v7404 = vpack.c.b16 %v5068, %v5060
        %v7405 = vpack.c.b16 %v5069, %v5061
        %v7406 = vpack.c.b16 %v5078, %v5070
        %v7407 = vpack.c.b16 %v5079, %v5071
        %v7408 = vpack.c.b16 %v5080, %v5072
        %v7409 = vpack.c.b16 %v5081, %v5073
        %v7410 = vpack.c.b16 %v5082, %v5074
        %v7411 = vpack.c.b16 %v5083, %v5075
        %v7412 = vpack.c.b16 %v5084, %v5076
        %v7413 = vpack.c.b16 %v5085, %v5077
        %v7414 = vpack.c.b16 %v5094, %v5086
        %v7415 = vpack.c.b16 %v5095, %v5087
        %v7416 = vpack.c.b16 %v5096, %v5088
        %v7417 = vpack.c.b16 %v5097, %v5089
        %v7418 = vpack.c.b16 %v5098, %v5090
        %v7419 = vpack.c.b16 %v5099, %v5091
        %v7420 = vpack.c.b16 %v5100, %v5092
        %v7421 = vpack.c.b16 %v5101, %v5093
        %v7422 = vpack.c.b16 %v5110, %v5102
        %v7423 = vpack.c.b16 %v5111, %v5103
        %v7424 = vpack.c.b16 %v5112, %v5104
        %v7425 = vpack.c.b16 %v5113, %v5105
        %v7426 = vpack.c.b16 %v5114, %v5106
        %v7427 = vpack.c.b16 %v5115, %v5107
        %v7428 = vpack.c.b16 %v5116, %v5108
        %v7429 = vpack.c.b16 %v5117, %v5109
        %v7430 = vpack.c.b16 %v5126, %v5118
        %v7431 = vpack.c.b16 %v5127, %v5119
        %v7432 = vpack.c.b16 %v5128, %v5120
        %v7433 = vpack.c.b16 %v5129, %v5121
        %v7434 = vpack.c.b16 %v5130, %v5122
        %v7435 = vpack.c.b16 %v5131, %v5123
        %v7436 = vpack.c.b16 %v5132, %v5124
        %v7437 = vpack.c.b16 %v5133, %v5125
        %v7438 = vpack.c.b16 %v5142, %v5134
        %v7439 = vpack.c.b16 %v5143, %v5135
        %v7440 = vpack.c.b16 %v5144, %v5136
        %v7441 = vpack.c.b16 %v5145, %v5137
        %v7442 = vpack.c.b16 %v5146, %v5138
        %v7443 = vpack.c.b16 %v5147, %v5139
        %v7444 = vpack.c.b16 %v5148, %v5140
        %v7445 = vpack.c.b16 %v5149, %v5141
        %v7446 = vpack.c.b16 %v5158, %v5150
        %v7447 = vpack.c.b16 %v5159, %v5151
        %v7448 = vpack.c.b16 %v5160, %v5152
        %v7449 = vpack.c.b16 %v5161, %v5153
        %v7450 = vpack.c.b16 %v5162, %v5154
        %v7451 = vpack.c.b16 %v5163, %v5155
        %v7452 = vpack.c.b16 %v5164, %v5156
        %v7453 = vpack.c.b16 %v5165, %v5157
        %v7454 = vpack.c.b16 %v5174, %v5166
        %v7455 = vpack.c.b16 %v5175, %v5167
        %v7456 = vpack.c.b16 %v5176, %v5168
        %v7457 = vpack.c.b16 %v5177, %v5169
        %v7458 = vpack.c.b16 %v5178, %v5170
        %v7459 = vpack.c.b16 %v5179, %v5171
        %v7460 = vpack.c.b16 %v5180, %v5172
        %v7461 = vpack.c.b16 %v5181, %v5173
        %v7462 = vpack.c.b16 %v5190, %v5182
        %v7463 = vpack.c.b16 %v5191, %v5183
        %v7464 = vpack.c.b16 %v5192, %v5184
        %v7465 = vpack.c.b16 %v5193, %v5185
        %v7466 = vpack.c.b16 %v5194, %v5186
        %v7467 = vpack.c.b16 %v5195, %v5187
        %v7468 = vpack.c.b16 %v5196, %v5188
        %v7469 = vpack.c.b16 %v5197, %v5189
        %v7470 = vpack.c.b16 %v5206, %v5198
        %v7471 = vpack.c.b16 %v5207, %v5199
        %v7472 = vpack.c.b16 %v5208, %v5200
        %v7473 = vpack.c.b16 %v5209, %v5201
        %v7474 = vpack.c.b16 %v5210, %v5202
        %v7475 = vpack.c.b16 %v5211, %v5203
        %v7476 = vpack.c.b16 %v5212, %v5204
        %v7477 = vpack.c.b16 %v5213, %v5205
        %v7478 = vpack.c.b16 %v5222, %v5214
        %v7479 = vpack.c.b16 %v5223, %v5215
        %v7480 = vpack.c.b16 %v5224, %v5216
        %v7481 = vpack.c.b16 %v5225, %v5217
        %v7482 = vpack.c.b16 %v5226, %v5218
        %v7483 = vpack.c.b16 %v5227, %v5219
        %v7484 = vpack.c.b16 %v5228, %v5220
        %v7485 = vpack.c.b16 %v5229, %v5221
        %v7486 = vpack.c.b16 %v5238, %v5230
        %v7487 = vpack.c.b16 %v5239, %v5231
        %v7488 = vpack.c.b16 %v5240, %v5232
        %v7489 = vpack.c.b16 %v5241, %v5233
        %v7490 = vpack.c.b16 %v5242, %v5234
        %v7491 = vpack.c.b16 %v5243, %v5235
        %v7492 = vpack.c.b16 %v5244, %v5236
        %v7493 = vpack.c.b16 %v5245, %v5237
        %v7494 = vpack.c.b16 %v5254, %v5246
        %v7495 = vpack.c.b16 %v5255, %v5247
        %v7496 = vpack.c.b16 %v5256, %v5248
        %v7497 = vpack.c.b16 %v5257, %v5249
        %v7498 = vpack.c.b16 %v5258, %v5250
        %v7499 = vpack.c.b16 %v5259, %v5251
        %v7500 = vpack.c.b16 %v5260, %v5252
        %v7501 = vpack.c.b16 %v5261, %v5253
        %v7502 = vpack.c.b16 %v5270, %v5262
        %v7503 = vpack.c.b16 %v5271, %v5263
        %v7504 = vpack.c.b16 %v5272, %v5264
        %v7505 = vpack.c.b16 %v5273, %v5265
        %v7506 = vpack.c.b16 %v5274, %v5266
        %v7507 = vpack.c.b16 %v5275, %v5267
        %v7508 = vpack.c.b16 %v5276, %v5268
        %v7509 = vpack.c.b16 %v5277, %v5269
        %v7510 = vpack.c.b16 %v5286, %v5278
        %v7511 = vpack.c.b16 %v5287, %v5279
        %v7512 = vpack.c.b16 %v5288, %v5280
        %v7513 = vpack.c.b16 %v5289, %v5281
        %v7514 = vpack.c.b16 %v5290, %v5282
        %v7515 = vpack.c.b16 %v5291, %v5283
        %v7516 = vpack.c.b16 %v5292, %v5284
        %v7517 = vpack.c.b16 %v5293, %v5285
        %v7518 = vpack.c.b16 %v5302, %v5294
        %v7519 = vpack.c.b16 %v5303, %v5295
        %v7520 = vpack.c.b16 %v5304, %v5296
        %v7521 = vpack.c.b16 %v5305, %v5297
        %v7522 = vpack.c.b16 %v5306, %v5298
        %v7523 = vpack.c.b16 %v5307, %v5299
        %v7524 = vpack.c.b16 %v5308, %v5300
        %v7525 = vpack.c.b16 %v5309, %v5301
        %v7526 = vpack.c.b16 %v5318, %v5310
        %v7527 = vpack.c.b16 %v5319, %v5311
        %v7528 = vpack.c.b16 %v5320, %v5312
        %v7529 = vpack.c.b16 %v5321, %v5313
        %v7530 = vpack.c.b16 %v5322, %v5314
        %v7531 = vpack.c.b16 %v5323, %v5315
        %v7532 = vpack.c.b16 %v5324, %v5316
        %v7533 = vpack.c.b16 %v5325, %v5317
        %v7534 = vpack.c.b16 %v5334, %v5326
        %v7535 = vpack.c.b16 %v5335, %v5327
        %v7536 = vpack.c.b16 %v5336, %v5328
        %v7537 = vpack.c.b16 %v5337, %v5329
        %v7538 = vpack.c.b16 %v5338, %v5330
        %v7539 = vpack.c.b16 %v5339, %v5331
        %v7540 = vpack.c.b16 %v5340, %v5332
        %v7541 = vpack.c.b16 %v5341, %v5333
        %v7542 = vpack.c.b16 %v5350, %v5342
        %v7543 = vpack.c.b16 %v5351, %v5343
        %v7544 = vpack.c.b16 %v5352, %v5344
        %v7545 = vpack.c.b16 %v5353, %v5345
        %v7546 = vpack.c.b16 %v5354, %v5346
        %v7547 = vpack.c.b16 %v5355, %v5347
        %v7548 = vpack.c.b16 %v5356, %v5348
        %v7549 = vpack.c.b16 %v5357, %v5349
        %v7550 = vpack.c.b16 %v5366, %v5358
        %v7551 = vpack.c.b16 %v5367, %v5359
        %v7552 = vpack.c.b16 %v5368, %v5360
        %v7553 = vpack.c.b16 %v5369, %v5361
        %v7554 = vpack.c.b16 %v5370, %v5362
        %v7555 = vpack.c.b16 %v5371, %v5363
        %v7556 = vpack.c.b16 %v5372, %v5364
        %v7557 = vpack.c.b16 %v5373, %v5365
        %v7558 = vpack.c.b16 %v5382, %v5374
        %v7559 = vpack.c.b16 %v5383, %v5375
        %v7560 = vpack.c.b16 %v5384, %v5376
        %v7561 = vpack.c.b16 %v5385, %v5377
        %v7562 = vpack.c.b16 %v5386, %v5378
        %v7563 = vpack.c.b16 %v5387, %v5379
        %v7564 = vpack.c.b16 %v5388, %v5380
        %v7565 = vpack.c.b16 %v5389, %v5381
        %v7566 = vpack.c.b16 %v5398, %v5390
        %v7567 = vpack.c.b16 %v5399, %v5391
        %v7568 = vpack.c.b16 %v5400, %v5392
        %v7569 = vpack.c.b16 %v5401, %v5393
        %v7570 = vpack.c.b16 %v5402, %v5394
        %v7571 = vpack.c.b16 %v5403, %v5395
        %v7572 = vpack.c.b16 %v5404, %v5396
        %v7573 = vpack.c.b16 %v5405, %v5397
        %v7574 = vpack.c.b16 %v5414, %v5406
        %v7575 = vpack.c.b16 %v5415, %v5407
        %v7576 = vpack.c.b16 %v5416, %v5408
        %v7577 = vpack.c.b16 %v5417, %v5409
        %v7578 = vpack.c.b16 %v5418, %v5410
        %v7579 = vpack.c.b16 %v5419, %v5411
        %v7580 = vpack.c.b16 %v5420, %v5412
        %v7581 = vpack.c.b16 %v5421, %v5413
        %v7582 = vpack.c.b16 %v5430, %v5422
        %v7583 = vpack.c.b16 %v5431, %v5423
        %v7584 = vpack.c.b16 %v5432, %v5424
        %v7585 = vpack.c.b16 %v5433, %v5425
        %v7586 = vpack.c.b16 %v5434, %v5426
        %v7587 = vpack.c.b16 %v5435, %v5427
        %v7588 = vpack.c.b16 %v5436, %v5428
        %v7589 = vpack.c.b16 %v5437, %v5429
        %v7590 = vpack.c.b16 %v5446, %v5438
        %v7591 = vpack.c.b16 %v5447, %v5439
        %v7592 = vpack.c.b16 %v5448, %v5440
        %v7593 = vpack.c.b16 %v5449, %v5441
        %v7594 = vpack.c.b16 %v5450, %v5442
        %v7595 = vpack.c.b16 %v5451, %v5443
        %v7596 = vpack.c.b16 %v5452, %v5444
        %v7597 = vpack.c.b16 %v5453, %v5445
        %v7598 = vpack.c.b16 %v5462, %v5454
        %v7599 = vpack.c.b16 %v5463, %v5455
        %v7600 = vpack.c.b16 %v5464, %v5456
        %v7601 = vpack.c.b16 %v5465, %v5457
        %v7602 = vpack.c.b16 %v5466, %v5458
        %v7603 = vpack.c.b16 %v5467, %v5459
        %v7604 = vpack.c.b16 %v5468, %v5460
        %v7605 = vpack.c.b16 %v5469, %v5461
        %v7606 = vpack.c.b16 %v5478, %v5470
        %v7607 = vpack.c.b16 %v5479, %v5471
        %v7608 = vpack.c.b16 %v5480, %v5472
        %v7609 = vpack.c.b16 %v5481, %v5473
        %v7610 = vpack.c.b16 %v5482, %v5474
        %v7611 = vpack.c.b16 %v5483, %v5475
        %v7612 = vpack.c.b16 %v5484, %v5476
        %v7613 = vpack.c.b16 %v5485, %v5477
        %v7614 = vpack.c.b16 %v5494, %v5486
        %v7615 = vpack.c.b16 %v5495, %v5487
        %v7616 = vpack.c.b16 %v5496, %v5488
        %v7617 = vpack.c.b16 %v5497, %v5489
        %v7618 = vpack.c.b16 %v5498, %v5490
        %v7619 = vpack.c.b16 %v5499, %v5491
        %v7620 = vpack.c.b16 %v5500, %v5492
        %v7621 = vpack.c.b16 %v5501, %v5493
        %v7622 = vpack.c.b16 %v5510, %v5502
        %v7623 = vpack.c.b16 %v5511, %v5503
        %v7624 = vpack.c.b16 %v5512, %v5504
        %v7625 = vpack.c.b16 %v5513, %v5505
        %v7626 = vpack.c.b16 %v5514, %v5506
        %v7627 = vpack.c.b16 %v5515, %v5507
        %v7628 = vpack.c.b16 %v5516, %v5508
        %v7629 = vpack.c.b16 %v5517, %v5509
        %v7630 = vpack.c.b16 %v5526, %v5518
        %v7631 = vpack.c.b16 %v5527, %v5519
        %v7632 = vpack.c.b16 %v5528, %v5520
        %v7633 = vpack.c.b16 %v5529, %v5521
        %v7634 = vpack.c.b16 %v5530, %v5522
        %v7635 = vpack.c.b16 %v5531, %v5523
        %v7636 = vpack.c.b16 %v5532, %v5524
        %v7637 = vpack.c.b16 %v5533, %v5525
        %v7638 = vpack.c.b16 %v5542, %v5534
        %v7639 = vpack.c.b16 %v5543, %v5535
        %v7640 = vpack.c.b16 %v5544, %v5536
        %v7641 = vpack.c.b16 %v5545, %v5537
        %v7642 = vpack.c.b16 %v5546, %v5538
        %v7643 = vpack.c.b16 %v5547, %v5539
        %v7644 = vpack.c.b16 %v5548, %v5540
        %v7645 = vpack.c.b16 %v5549, %v5541
        %v7646 = vpack.c.b16 %v5558, %v5550
        %v7647 = vpack.c.b16 %v5559, %v5551
        %v7648 = vpack.c.b16 %v5560, %v5552
        %v7649 = vpack.c.b16 %v5561, %v5553
        %v7650 = vpack.c.b16 %v5562, %v5554
        %v7651 = vpack.c.b16 %v5563, %v5555
        %v7652 = vpack.c.b16 %v5564, %v5556
        %v7653 = vpack.c.b16 %v5565, %v5557
        %v7654 = vpack.c.b16 %v5574, %v5566
        %v7655 = vpack.c.b16 %v5575, %v5567
        %v7656 = vpack.c.b16 %v5576, %v5568
        %v7657 = vpack.c.b16 %v5577, %v5569
        %v7658 = vpack.c.b16 %v5578, %v5570
        %v7659 = vpack.c.b16 %v5579, %v5571
        %v7660 = vpack.c.b16 %v5580, %v5572
        %v7661 = vpack.c.b16 %v5581, %v5573
        %v7662 = vpack.c.b16 %v5590, %v5582
        %v7663 = vpack.c.b16 %v5591, %v5583
        %v7664 = vpack.c.b16 %v5592, %v5584
        %v7665 = vpack.c.b16 %v5593, %v5585
        %v7666 = vpack.c.b16 %v5594, %v5586
        %v7667 = vpack.c.b16 %v5595, %v5587
        %v7668 = vpack.c.b16 %v5596, %v5588
        %v7669 = vpack.c.b16 %v5597, %v5589
        %v7670 = vpack.c.b16 %v5606, %v5598
        %v7671 = vpack.c.b16 %v5607, %v5599
        %v7672 = vpack.c.b16 %v5608, %v5600
        %v7673 = vpack.c.b16 %v5609, %v5601
        %v7674 = vpack.c.b16 %v5610, %v5602
        %v7675 = vpack.c.b16 %v5611, %v5603
        %v7676 = vpack.c.b16 %v5612, %v5604
        %v7677 = vpack.c.b16 %v5613, %v5605
        %v7678 = vpack.c.b16 %v5622, %v5614
        %v7679 = vpack.c.b16 %v5623, %v5615
        %v7680 = vpack.c.b16 %v5624, %v5616
        %v7681 = vpack.c.b16 %v5625, %v5617
        %v7682 = vpack.c.b16 %v5626, %v5618
        %v7683 = vpack.c.b16 %v5627, %v5619
        %v7684 = vpack.c.b16 %v5628, %v5620
        %v7685 = vpack.c.b16 %v5629, %v5621
        %v7686 = vpack.c.b16 %v5638, %v5630
        %v7687 = vpack.c.b16 %v5639, %v5631
        %v7688 = vpack.c.b16 %v5640, %v5632
        %v7689 = vpack.c.b16 %v5641, %v5633
        %v7690 = vpack.c.b16 %v5642, %v5634
        %v7691 = vpack.c.b16 %v5643, %v5635
        %v7692 = vpack.c.b16 %v5644, %v5636
        %v7693 = vpack.c.b16 %v5645, %v5637
        %v7694 = vpack.c.b16 %v5654, %v5646
        %v7695 = vpack.c.b16 %v5655, %v5647
        %v7696 = vpack.c.b16 %v5656, %v5648
        %v7697 = vpack.c.b16 %v5657, %v5649
        %v7698 = vpack.c.b16 %v5658, %v5650
        %v7699 = vpack.c.b16 %v5659, %v5651
        %v7700 = vpack.c.b16 %v5660, %v5652
        %v7701 = vpack.c.b16 %v5661, %v5653
        %v7702 = vpack.c.b16 %v5670, %v5662
        %v7703 = vpack.c.b16 %v5671, %v5663
        %v7704 = vpack.c.b16 %v5672, %v5664
        %v7705 = vpack.c.b16 %v5673, %v5665
        %v7706 = vpack.c.b16 %v5674, %v5666
        %v7707 = vpack.c.b16 %v5675, %v5667
        %v7708 = vpack.c.b16 %v5676, %v5668
        %v7709 = vpack.c.b16 %v5677, %v5669
        %v7710 = vpack.c.b16 %v5686, %v5678
        %v7711 = vpack.c.b16 %v5687, %v5679
        %v7712 = vpack.c.b16 %v5688, %v5680
        %v7713 = vpack.c.b16 %v5689, %v5681
        %v7714 = vpack.c.b16 %v5690, %v5682
        %v7715 = vpack.c.b16 %v5691, %v5683
        %v7716 = vpack.c.b16 %v5692, %v5684
        %v7717 = vpack.c.b16 %v5693, %v5685
        %v7718 = vpack.c.b16 %v5702, %v5694
        %v7719 = vpack.c.b16 %v5703, %v5695
        %v7720 = vpack.c.b16 %v5704, %v5696
        %v7721 = vpack.c.b16 %v5705, %v5697
        %v7722 = vpack.c.b16 %v5706, %v5698
        %v7723 = vpack.c.b16 %v5707, %v5699
        %v7724 = vpack.c.b16 %v5708, %v5700
        %v7725 = vpack.c.b16 %v5709, %v5701
        %v7726 = vpack.c.b16 %v5718, %v5710
        %v7727 = vpack.c.b16 %v5719, %v5711
        %v7728 = vpack.c.b16 %v5720, %v5712
        %v7729 = vpack.c.b16 %v5721, %v5713
        %v7730 = vpack.c.b16 %v5722, %v5714
        %v7731 = vpack.c.b16 %v5723, %v5715
        %v7732 = vpack.c.b16 %v5724, %v5716
        %v7733 = vpack.c.b16 %v5725, %v5717
        %v7734 = vpack.c.b16 %v5734, %v5726
        %v7735 = vpack.c.b16 %v5735, %v5727
        %v7736 = vpack.c.b16 %v5736, %v5728
        %v7737 = vpack.c.b16 %v5737, %v5729
        %v7738 = vpack.c.b16 %v5738, %v5730
        %v7739 = vpack.c.b16 %v5739, %v5731
        %v7740 = vpack.c.b16 %v5740, %v5732
        %v7741 = vpack.c.b16 %v5741, %v5733
        %v7742 = vpack.c.b16 %v5750, %v5742
        %v7743 = vpack.c.b16 %v5751, %v5743
        %v7744 = vpack.c.b16 %v5752, %v5744
        %v7745 = vpack.c.b16 %v5753, %v5745
        %v7746 = vpack.c.b16 %v5754, %v5746
        %v7747 = vpack.c.b16 %v5755, %v5747
        %v7748 = vpack.c.b16 %v5756, %v5748
        %v7749 = vpack.c.b16 %v5757, %v5749
        %v7750 = vpack.c.b16 %v5766, %v5758
        %v7751 = vpack.c.b16 %v5767, %v5759
        %v7752 = vpack.c.b16 %v5768, %v5760
        %v7753 = vpack.c.b16 %v5769, %v5761
        %v7754 = vpack.c.b16 %v5770, %v5762
        %v7755 = vpack.c.b16 %v5771, %v5763
        %v7756 = vpack.c.b16 %v5772, %v5764
        %v7757 = vpack.c.b16 %v5773, %v5765
        %v7758 = vpack.c.b16 %v5782, %v5774
        %v7759 = vpack.c.b16 %v5783, %v5775
        %v7760 = vpack.c.b16 %v5784, %v5776
        %v7761 = vpack.c.b16 %v5785, %v5777
        %v7762 = vpack.c.b16 %v5786, %v5778
        %v7763 = vpack.c.b16 %v5787, %v5779
        %v7764 = vpack.c.b16 %v5788, %v5780
        %v7765 = vpack.c.b16 %v5789, %v5781
        %v7766 = vpack.c.b16 %v5798, %v5790
        %v7767 = vpack.c.b16 %v5799, %v5791
        %v7768 = vpack.c.b16 %v5800, %v5792
        %v7769 = vpack.c.b16 %v5801, %v5793
        %v7770 = vpack.c.b16 %v5802, %v5794
        %v7771 = vpack.c.b16 %v5803, %v5795
        %v7772 = vpack.c.b16 %v5804, %v5796
        %v7773 = vpack.c.b16 %v5805, %v5797
        %v7774 = vpack.c.b16 %v5814, %v5806
        %v7775 = vpack.c.b16 %v5815, %v5807
        %v7776 = vpack.c.b16 %v5816, %v5808
        %v7777 = vpack.c.b16 %v5817, %v5809
        %v7778 = vpack.c.b16 %v5818, %v5810
        %v7779 = vpack.c.b16 %v5819, %v5811
        %v7780 = vpack.c.b16 %v5820, %v5812
        %v7781 = vpack.c.b16 %v5821, %v5813
        %v7782 = vpack.c.b16 %v5830, %v5822
        %v7783 = vpack.c.b16 %v5831, %v5823
        %v7784 = vpack.c.b16 %v5832, %v5824
        %v7785 = vpack.c.b16 %v5833, %v5825
        %v7786 = vpack.c.b16 %v5834, %v5826
        %v7787 = vpack.c.b16 %v5835, %v5827
        %v7788 = vpack.c.b16 %v5836, %v5828
        %v7789 = vpack.c.b16 %v5837, %v5829
        %v7790 = vpack.c.b16 %v5846, %v5838
        %v7791 = vpack.c.b16 %v5847, %v5839
        %v7792 = vpack.c.b16 %v5848, %v5840
        %v7793 = vpack.c.b16 %v5849, %v5841
        %v7794 = vpack.c.b16 %v5850, %v5842
        %v7795 = vpack.c.b16 %v5851, %v5843
        %v7796 = vpack.c.b16 %v5852, %v5844
        %v7797 = vpack.c.b16 %v5853, %v5845
        %v7798 = vpack.c.b16 %v5862, %v5854
        %v7799 = vpack.c.b16 %v5863, %v5855
        %v7800 = vpack.c.b16 %v5864, %v5856
        %v7801 = vpack.c.b16 %v5865, %v5857
        %v7802 = vpack.c.b16 %v5866, %v5858
        %v7803 = vpack.c.b16 %v5867, %v5859
        %v7804 = vpack.c.b16 %v5868, %v5860
        %v7805 = vpack.c.b16 %v5869, %v5861
        %v7806 = vpack.c.b16 %v5878, %v5870
        %v7807 = vpack.c.b16 %v5879, %v5871
        %v7808 = vpack.c.b16 %v5880, %v5872
        %v7809 = vpack.c.b16 %v5881, %v5873
        %v7810 = vpack.c.b16 %v5882, %v5874
        %v7811 = vpack.c.b16 %v5883, %v5875
        %v7812 = vpack.c.b16 %v5884, %v5876
        %v7813 = vpack.c.b16 %v5885, %v5877
        %v7814 = vpack.c.b16 %v5894, %v5886
        %v7815 = vpack.c.b16 %v5895, %v5887
        %v7816 = vpack.c.b16 %v5896, %v5888
        %v7817 = vpack.c.b16 %v5897, %v5889
        %v7818 = vpack.c.b16 %v5898, %v5890
        %v7819 = vpack.c.b16 %v5899, %v5891
        %v7820 = vpack.c.b16 %v5900, %v5892
        %v7821 = vpack.c.b16 %v5901, %v5893
        %v7822 = vpack.c.b16 %v5910, %v5902
        %v7823 = vpack.c.b16 %v5911, %v5903
        %v7824 = vpack.c.b16 %v5912, %v5904
        %v7825 = vpack.c.b16 %v5913, %v5905
        %v7826 = vpack.c.b16 %v5914, %v5906
        %v7827 = vpack.c.b16 %v5915, %v5907
        %v7828 = vpack.c.b16 %v5916, %v5908
        %v7829 = vpack.c.b16 %v5917, %v5909
        %v7830 = vpack.c.b16 %v5926, %v5918
        %v7831 = vpack.c.b16 %v5927, %v5919
        %v7832 = vpack.c.b16 %v5928, %v5920
        %v7833 = vpack.c.b16 %v5929, %v5921
        %v7834 = vpack.c.b16 %v5930, %v5922
        %v7835 = vpack.c.b16 %v5931, %v5923
        %v7836 = vpack.c.b16 %v5932, %v5924
        %v7837 = vpack.c.b16 %v5933, %v5925
        %v7838 = vpack.c.b16 %v5942, %v5934
        %v7839 = vpack.c.b16 %v5943, %v5935
        %v7840 = vpack.c.b16 %v5944, %v5936
        %v7841 = vpack.c.b16 %v5945, %v5937
        %v7842 = vpack.c.b16 %v5946, %v5938
        %v7843 = vpack.c.b16 %v5947, %v5939
        %v7844 = vpack.c.b16 %v5948, %v5940
        %v7845 = vpack.c.b16 %v5949, %v5941
        %v7846 = vpack.c.b16 %v5958, %v5950
        %v7847 = vpack.c.b16 %v5959, %v5951
        %v7848 = vpack.c.b16 %v5960, %v5952
        %v7849 = vpack.c.b16 %v5961, %v5953
        %v7850 = vpack.c.b16 %v5962, %v5954
        %v7851 = vpack.c.b16 %v5963, %v5955
        %v7852 = vpack.c.b16 %v5964, %v5956
        %v7853 = vpack.c.b16 %v5965, %v5957
        %v7854 = vpack.c.b16 %v5974, %v5966
        %v7855 = vpack.c.b16 %v5975, %v5967
        %v7856 = vpack.c.b16 %v5976, %v5968
        %v7857 = vpack.c.b16 %v5977, %v5969
        %v7858 = vpack.c.b16 %v5978, %v5970
        %v7859 = vpack.c.b16 %v5979, %v5971
        %v7860 = vpack.c.b16 %v5980, %v5972
        %v7861 = vpack.c.b16 %v5981, %v5973
        %v7862 = vpack.c.b16 %v5990, %v5982
        %v7863 = vpack.c.b16 %v5991, %v5983
        %v7864 = vpack.c.b16 %v5992, %v5984
        %v7865 = vpack.c.b16 %v5993, %v5985
        %v7866 = vpack.c.b16 %v5994, %v5986
        %v7867 = vpack.c.b16 %v5995, %v5987
        %v7868 = vpack.c.b16 %v5996, %v5988
        %v7869 = vpack.c.b16 %v5997, %v5989
        %v7870 = vpack.c.b16 %v6006, %v5998
        %v7871 = vpack.c.b16 %v6007, %v5999
        %v7872 = vpack.c.b16 %v6008, %v6000
        %v7873 = vpack.c.b16 %v6009, %v6001
        %v7874 = vpack.c.b16 %v6010, %v6002
        %v7875 = vpack.c.b16 %v6011, %v6003
        %v7876 = vpack.c.b16 %v6012, %v6004
        %v7877 = vpack.c.b16 %v6013, %v6005
        %v7878 = vpack.c.b16 %v6022, %v6014
        %v7879 = vpack.c.b16 %v6023, %v6015
        %v7880 = vpack.c.b16 %v6024, %v6016
        %v7881 = vpack.c.b16 %v6025, %v6017
        %v7882 = vpack.c.b16 %v6026, %v6018
        %v7883 = vpack.c.b16 %v6027, %v6019
        %v7884 = vpack.c.b16 %v6028, %v6020
        %v7885 = vpack.c.b16 %v6029, %v6021
        %v7886 = vpack.c.b16 %v6038, %v6030
        %v7887 = vpack.c.b16 %v6039, %v6031
        %v7888 = vpack.c.b16 %v6040, %v6032
        %v7889 = vpack.c.b16 %v6041, %v6033
        %v7890 = vpack.c.b16 %v6042, %v6034
        %v7891 = vpack.c.b16 %v6043, %v6035
        %v7892 = vpack.c.b16 %v6044, %v6036
        %v7893 = vpack.c.b16 %v6045, %v6037
        %v7894 = vpack.c.b16 %v6054, %v6046
        %v7895 = vpack.c.b16 %v6055, %v6047
        %v7896 = vpack.c.b16 %v6056, %v6048
        %v7897 = vpack.c.b16 %v6057, %v6049
        %v7898 = vpack.c.b16 %v6058, %v6050
        %v7899 = vpack.c.b16 %v6059, %v6051
        %v7900 = vpack.c.b16 %v6060, %v6052
        %v7901 = vpack.c.b16 %v6061, %v6053
        %v7902 = vpack.c.b16 %v6070, %v6062
        %v7903 = vpack.c.b16 %v6071, %v6063
        %v7904 = vpack.c.b16 %v6072, %v6064
        %v7905 = vpack.c.b16 %v6073, %v6065
        %v7906 = vpack.c.b16 %v6074, %v6066
        %v7907 = vpack.c.b16 %v6075, %v6067
        %v7908 = vpack.c.b16 %v6076, %v6068
        %v7909 = vpack.c.b16 %v6077, %v6069
        %v7910 = vpack.c.b16 %v6086, %v6078
        %v7911 = vpack.c.b16 %v6087, %v6079
        %v7912 = vpack.c.b16 %v6088, %v6080
        %v7913 = vpack.c.b16 %v6089, %v6081
        %v7914 = vpack.c.b16 %v6090, %v6082
        %v7915 = vpack.c.b16 %v6091, %v6083
        %v7916 = vpack.c.b16 %v6092, %v6084
        %v7917 = vpack.c.b16 %v6093, %v6085
        %v7918 = vpack.c.b16 %v6102, %v6094
        %v7919 = vpack.c.b16 %v6103, %v6095
        %v7920 = vpack.c.b16 %v6104, %v6096
        %v7921 = vpack.c.b16 %v6105, %v6097
        %v7922 = vpack.c.b16 %v6106, %v6098
        %v7923 = vpack.c.b16 %v6107, %v6099
        %v7924 = vpack.c.b16 %v6108, %v6100
        %v7925 = vpack.c.b16 %v6109, %v6101
        %v7926 = vpack.c.b16 %v6118, %v6110
        %v7927 = vpack.c.b16 %v6119, %v6111
        %v7928 = vpack.c.b16 %v6120, %v6112
        %v7929 = vpack.c.b16 %v6121, %v6113
        %v7930 = vpack.c.b16 %v6122, %v6114
        %v7931 = vpack.c.b16 %v6123, %v6115
        %v7932 = vpack.c.b16 %v6124, %v6116
        %v7933 = vpack.c.b16 %v6125, %v6117
        %v7934 = vpack.c.b16 %v6134, %v6126
        %v7935 = vpack.c.b16 %v6135, %v6127
        %v7936 = vpack.c.b16 %v6136, %v6128
        %v7937 = vpack.c.b16 %v6137, %v6129
        %v7938 = vpack.c.b16 %v6138, %v6130
        %v7939 = vpack.c.b16 %v6139, %v6131
        %v7940 = vpack.c.b16 %v6140, %v6132
        %v7941 = vpack.c.b16 %v6141, %v6133
        %v7942 = vpack.c.b16 %v6150, %v6142
        %v7943 = vpack.c.b16 %v6151, %v6143
        %v7944 = vpack.c.b16 %v6152, %v6144
        %v7945 = vpack.c.b16 %v6153, %v6145
        %v7946 = vpack.c.b16 %v6154, %v6146
        %v7947 = vpack.c.b16 %v6155, %v6147
        %v7948 = vpack.c.b16 %v6156, %v6148
        %v7949 = vpack.c.b16 %v6157, %v6149
        %v7950 = vpack.c.b16 %v6166, %v6158
        %v7951 = vpack.c.b16 %v6167, %v6159
        %v7952 = vpack.c.b16 %v6168, %v6160
        %v7953 = vpack.c.b16 %v6169, %v6161
        %v7954 = vpack.c.b16 %v6170, %v6162
        %v7955 = vpack.c.b16 %v6171, %v6163
        %v7956 = vpack.c.b16 %v6172, %v6164
        %v7957 = vpack.c.b16 %v6173, %v6165
        %v7958 = vpack.c.b16 %v6182, %v6174
        %v7959 = vpack.c.b16 %v6183, %v6175
        %v7960 = vpack.c.b16 %v6184, %v6176
        %v7961 = vpack.c.b16 %v6185, %v6177
        %v7962 = vpack.c.b16 %v6186, %v6178
        %v7963 = vpack.c.b16 %v6187, %v6179
        %v7964 = vpack.c.b16 %v6188, %v6180
        %v7965 = vpack.c.b16 %v6189, %v6181
        %v7966 = vpack.c.b16 %v6198, %v6190
        %v7967 = vpack.c.b16 %v6199, %v6191
        %v7968 = vpack.c.b16 %v6200, %v6192
        %v7969 = vpack.c.b16 %v6201, %v6193
        %v7970 = vpack.c.b16 %v6202, %v6194
        %v7971 = vpack.c.b16 %v6203, %v6195
        %v7972 = vpack.c.b16 %v6204, %v6196
        %v7973 = vpack.c.b16 %v6205, %v6197
        %v7974 = vpack.c.b16 %v6214, %v6206
        %v7975 = vpack.c.b16 %v6215, %v6207
        %v7976 = vpack.c.b16 %v6216, %v6208
        %v7977 = vpack.c.b16 %v6217, %v6209
        %v7978 = vpack.c.b16 %v6218, %v6210
        %v7979 = vpack.c.b16 %v6219, %v6211
        %v7980 = vpack.c.b16 %v6220, %v6212
        %v7981 = vpack.c.b16 %v6221, %v6213
        %v7982 = vpack.c.b16 %v6230, %v6222
        %v7983 = vpack.c.b16 %v6231, %v6223
        %v7984 = vpack.c.b16 %v6232, %v6224
        %v7985 = vpack.c.b16 %v6233, %v6225
        %v7986 = vpack.c.b16 %v6234, %v6226
        %v7987 = vpack.c.b16 %v6235, %v6227
        %v7988 = vpack.c.b16 %v6236, %v6228
        %v7989 = vpack.c.b16 %v6237, %v6229
        %v7990 = vpack.c.b16 %v6246, %v6238
        %v7991 = vpack.c.b16 %v6247, %v6239
        %v7992 = vpack.c.b16 %v6248, %v6240
        %v7993 = vpack.c.b16 %v6249, %v6241
        %v7994 = vpack.c.b16 %v6250, %v6242
        %v7995 = vpack.c.b16 %v6251, %v6243
        %v7996 = vpack.c.b16 %v6252, %v6244
        %v7997 = vpack.c.b16 %v6253, %v6245
        %v7998 = vpack.c.b16 %v6262, %v6254
        %v7999 = vpack.c.b16 %v6263, %v6255
        %v8000 = vpack.c.b16 %v6264, %v6256
        %v8001 = vpack.c.b16 %v6265, %v6257
        %v8002 = vpack.c.b16 %v6266, %v6258
        %v8003 = vpack.c.b16 %v6267, %v6259
        %v8004 = vpack.c.b16 %v6268, %v6260
        %v8005 = vpack.c.b16 %v6269, %v6261
        %v8006 = vpack.c.b16 %v6278, %v6270
        %v8007 = vpack.c.b16 %v6279, %v6271
        %v8008 = vpack.c.b16 %v6280, %v6272
        %v8009 = vpack.c.b16 %v6281, %v6273
        %v8010 = vpack.c.b16 %v6282, %v6274
        %v8011 = vpack.c.b16 %v6283, %v6275
        %v8012 = vpack.c.b16 %v6284, %v6276
        %v8013 = vpack.c.b16 %v6285, %v6277
        %v8014 = vpack.c.b16 %v6294, %v6286
        %v8015 = vpack.c.b16 %v6295, %v6287
        %v8016 = vpack.c.b16 %v6296, %v6288
        %v8017 = vpack.c.b16 %v6297, %v6289
        %v8018 = vpack.c.b16 %v6298, %v6290
        %v8019 = vpack.c.b16 %v6299, %v6291
        %v8020 = vpack.c.b16 %v6300, %v6292
        %v8021 = vpack.c.b16 %v6301, %v6293
        %v8022 = vpack.c.b16 %v6310, %v6302
        %v8023 = vpack.c.b16 %v6311, %v6303
        %v8024 = vpack.c.b16 %v6312, %v6304
        %v8025 = vpack.c.b16 %v6313, %v6305
        %v8026 = vpack.c.b16 %v6314, %v6306
        %v8027 = vpack.c.b16 %v6315, %v6307
        %v8028 = vpack.c.b16 %v6316, %v6308
        %v8029 = vpack.c.b16 %v6317, %v6309
        %v8030 = vpack.c.b16 %v6326, %v6318
        %v8031 = vpack.c.b16 %v6327, %v6319
        %v8032 = vpack.c.b16 %v6328, %v6320
        %v8033 = vpack.c.b16 %v6329, %v6321
        %v8034 = vpack.c.b16 %v6330, %v6322
        %v8035 = vpack.c.b16 %v6331, %v6323
        %v8036 = vpack.c.b16 %v6332, %v6324
        %v8037 = vpack.c.b16 %v6333, %v6325
        %v8038 = vpack.c.b16 %v6342, %v6334
        %v8039 = vpack.c.b16 %v6343, %v6335
        %v8040 = vpack.c.b16 %v6344, %v6336
        %v8041 = vpack.c.b16 %v6345, %v6337
        %v8042 = vpack.c.b16 %v6346, %v6338
        %v8043 = vpack.c.b16 %v6347, %v6339
        %v8044 = vpack.c.b16 %v6348, %v6340
        %v8045 = vpack.c.b16 %v6349, %v6341
        %v8046 = vpack.c.b16 %v6358, %v6350
        %v8047 = vpack.c.b16 %v6359, %v6351
        %v8048 = vpack.c.b16 %v6360, %v6352
        %v8049 = vpack.c.b16 %v6361, %v6353
        %v8050 = vpack.c.b16 %v6362, %v6354
        %v8051 = vpack.c.b16 %v6363, %v6355
        %v8052 = vpack.c.b16 %v6364, %v6356
        %v8053 = vpack.c.b16 %v6365, %v6357
        %v8054 = vpack.c.b16 %v6374, %v6366
        %v8055 = vpack.c.b16 %v6375, %v6367
        %v8056 = vpack.c.b16 %v6376, %v6368
        %v8057 = vpack.c.b16 %v6377, %v6369
        %v8058 = vpack.c.b16 %v6378, %v6370
        %v8059 = vpack.c.b16 %v6379, %v6371
        %v8060 = vpack.c.b16 %v6380, %v6372
        %v8061 = vpack.c.b16 %v6381, %v6373
        %v8062 = vpack.c.b16 %v6390, %v6382
        %v8063 = vpack.c.b16 %v6391, %v6383
        %v8064 = vpack.c.b16 %v6392, %v6384
        %v8065 = vpack.c.b16 %v6393, %v6385
        %v8066 = vpack.c.b16 %v6394, %v6386
        %v8067 = vpack.c.b16 %v6395, %v6387
        %v8068 = vpack.c.b16 %v6396, %v6388
        %v8069 = vpack.c.b16 %v6397, %v6389
        %v8070 = vpack.c.b16 %v6406, %v6398
        %v8071 = vpack.c.b16 %v6407, %v6399
        %v8072 = vpack.c.b16 %v6408, %v6400
        %v8073 = vpack.c.b16 %v6409, %v6401
        %v8074 = vpack.c.b16 %v6410, %v6402
        %v8075 = vpack.c.b16 %v6411, %v6403
        %v8076 = vpack.c.b16 %v6412, %v6404
        %v8077 = vpack.c.b16 %v6413, %v6405
        %v8078 = vpack.c.b16 %v6422, %v6414
        %v8079 = vpack.c.b16 %v6423, %v6415
        %v8080 = vpack.c.b16 %v6424, %v6416
        %v8081 = vpack.c.b16 %v6425, %v6417
        %v8082 = vpack.c.b16 %v6426, %v6418
        %v8083 = vpack.c.b16 %v6427, %v6419
        %v8084 = vpack.c.b16 %v6428, %v6420
        %v8085 = vpack.c.b16 %v6429, %v6421
        %v8086 = vpack.c.b16 %v6438, %v6430
        %v8087 = vpack.c.b16 %v6439, %v6431
        %v8088 = vpack.c.b16 %v6440, %v6432
        %v8089 = vpack.c.b16 %v6441, %v6433
        %v8090 = vpack.c.b16 %v6442, %v6434
        %v8091 = vpack.c.b16 %v6443, %v6435
        %v8092 = vpack.c.b16 %v6444, %v6436
        %v8093 = vpack.c.b16 %v6445, %v6437
        %v8094 = vpack.c.b16 %v6454, %v6446
        %v8095 = vpack.c.b16 %v6455, %v6447
        %v8096 = vpack.c.b16 %v6456, %v6448
        %v8097 = vpack.c.b16 %v6457, %v6449
        %v8098 = vpack.c.b16 %v6458, %v6450
        %v8099 = vpack.c.b16 %v6459, %v6451
        %v8100 = vpack.c.b16 %v6460, %v6452
        %v8101 = vpack.c.b16 %v6461, %v6453
        %v8102 = vpack.c.b16 %v6470, %v6462
        %v8103 = vpack.c.b16 %v6471, %v6463
        %v8104 = vpack.c.b16 %v6472, %v6464
        %v8105 = vpack.c.b16 %v6473, %v6465
        %v8106 = vpack.c.b16 %v6474, %v6466
        %v8107 = vpack.c.b16 %v6475, %v6467
        %v8108 = vpack.c.b16 %v6476, %v6468
        %v8109 = vpack.c.b16 %v6477, %v6469
        %v8110 = vpack.c.b16 %v6486, %v6478
        %v8111 = vpack.c.b16 %v6487, %v6479
        %v8112 = vpack.c.b16 %v6488, %v6480
        %v8113 = vpack.c.b16 %v6489, %v6481
        %v8114 = vpack.c.b16 %v6490, %v6482
        %v8115 = vpack.c.b16 %v6491, %v6483
        %v8116 = vpack.c.b16 %v6492, %v6484
        %v8117 = vpack.c.b16 %v6493, %v6485
        %v8118 = vpack.c.b16 %v6502, %v6494
        %v8119 = vpack.c.b16 %v6503, %v6495
        %v8120 = vpack.c.b16 %v6504, %v6496
        %v8121 = vpack.c.b16 %v6505, %v6497
        %v8122 = vpack.c.b16 %v6506, %v6498
        %v8123 = vpack.c.b16 %v6507, %v6499
        %v8124 = vpack.c.b16 %v6508, %v6500
        %v8125 = vpack.c.b16 %v6509, %v6501
        %v8126 = vpack.c.b16 %v6518, %v6510
        %v8127 = vpack.c.b16 %v6519, %v6511
        %v8128 = vpack.c.b16 %v6520, %v6512
        %v8129 = vpack.c.b16 %v6521, %v6513
        %v8130 = vpack.c.b16 %v6522, %v6514
        %v8131 = vpack.c.b16 %v6523, %v6515
        %v8132 = vpack.c.b16 %v6524, %v6516
        %v8133 = vpack.c.b16 %v6525, %v6517
        %v8134 = vpack.c.b16 %v6534, %v6526
        %v8135 = vpack.c.b16 %v6535, %v6527
        %v8136 = vpack.c.b16 %v6536, %v6528
        %v8137 = vpack.c.b16 %v6537, %v6529
        %v8138 = vpack.c.b16 %v6538, %v6530
        %v8139 = vpack.c.b16 %v6539, %v6531
        %v8140 = vpack.c.b16 %v6540, %v6532
        %v8141 = vpack.c.b16 %v6541, %v6533
        %v8142 = vpack.c.b16 %v6550, %v6542
        %v8143 = vpack.c.b16 %v6551, %v6543
        %v8144 = vpack.c.b16 %v6552, %v6544
        %v8145 = vpack.c.b16 %v6553, %v6545
        %v8146 = vpack.c.b16 %v6554, %v6546
        %v8147 = vpack.c.b16 %v6555, %v6547
        %v8148 = vpack.c.b16 %v6556, %v6548
        %v8149 = vpack.c.b16 %v6557, %v6549
        %v8150 = vpack.c.b16 %v6566, %v6558
        %v8151 = vpack.c.b16 %v6567, %v6559
        %v8152 = vpack.c.b16 %v6568, %v6560
        %v8153 = vpack.c.b16 %v6569, %v6561
        %v8154 = vpack.c.b16 %v6570, %v6562
        %v8155 = vpack.c.b16 %v6571, %v6563
        %v8156 = vpack.c.b16 %v6572, %v6564
        %v8157 = vpack.c.b16 %v6573, %v6565
        %v8158 = vpack.c.b16 %v6582, %v6574
        %v8159 = vpack.c.b16 %v6583, %v6575
        %v8160 = vpack.c.b16 %v6584, %v6576
        %v8161 = vpack.c.b16 %v6585, %v6577
        %v8162 = vpack.c.b16 %v6586, %v6578
        %v8163 = vpack.c.b16 %v6587, %v6579
        %v8164 = vpack.c.b16 %v6588, %v6580
        %v8165 = vpack.c.b16 %v6589, %v6581
        %v8166 = vpack.c.b16 %v6598, %v6590
        %v8167 = vpack.c.b16 %v6599, %v6591
        %v8168 = vpack.c.b16 %v6600, %v6592
        %v8169 = vpack.c.b16 %v6601, %v6593
        %v8170 = vpack.c.b16 %v6602, %v6594
        %v8171 = vpack.c.b16 %v6603, %v6595
        %v8172 = vpack.c.b16 %v6604, %v6596
        %v8173 = vpack.c.b16 %v6605, %v6597
        %v8174 = vpack.c.b16 %v6614, %v6606
        %v8175 = vpack.c.b16 %v6615, %v6607
        %v8176 = vpack.c.b16 %v6616, %v6608
        %v8177 = vpack.c.b16 %v6617, %v6609
        %v8178 = vpack.c.b16 %v6618, %v6610
        %v8179 = vpack.c.b16 %v6619, %v6611
        %v8180 = vpack.c.b16 %v6620, %v6612
        %v8181 = vpack.c.b16 %v6621, %v6613
        %v8182 = vpack.c.b16 %v6630, %v6622
        %v8183 = vpack.c.b16 %v6631, %v6623
        %v8184 = vpack.c.b16 %v6632, %v6624
        %v8185 = vpack.c.b16 %v6633, %v6625
        %v8186 = vpack.c.b16 %v6634, %v6626
        %v8187 = vpack.c.b16 %v6635, %v6627
        %v8188 = vpack.c.b16 %v6636, %v6628
        %v8189 = vpack.c.b16 %v6637, %v6629
        %v8190 = vpack.c.b16 %v6646, %v6638
        %v8191 = vpack.c.b16 %v6647, %v6639
        %v8192 = vpack.c.b16 %v6648, %v6640
        %v8193 = vpack.c.b16 %v6649, %v6641
        %v8194 = vpack.c.b16 %v6650, %v6642
        %v8195 = vpack.c.b16 %v6651, %v6643
        %v8196 = vpack.c.b16 %v6652, %v6644
        %v8197 = vpack.c.b16 %v6653, %v6645
        %v8198 = vpack.c.b16 %v6662, %v6654
        %v8199 = vpack.c.b16 %v6663, %v6655
        %v8200 = vpack.c.b16 %v6664, %v6656
        %v8201 = vpack.c.b16 %v6665, %v6657
        %v8202 = vpack.c.b16 %v6666, %v6658
        %v8203 = vpack.c.b16 %v6667, %v6659
        %v8204 = vpack.c.b16 %v6668, %v6660
        %v8205 = vpack.c.b16 %v6669, %v6661
        %9742 = vmatpush.bf16.msra.mxu0 %v6726
        %9743 = vmatpush.bf16.msra.mxu0 %v6718
        %9744 = vmatpush.bf16.msra.mxu0 %v6710
        %9745 = vmatpush.bf16.msra.mxu0 %v6702
        %9746 = vmatpush.bf16.msra.mxu0 %v6694
        %9747 = vmatpush.bf16.msra.mxu0 %v6686
        %9748 = vmatpush.bf16.msra.mxu0 %v6678
        %9749 = vmatpush.bf16.msra.mxu0 %v6670
        %9750 = vmatmul.bf16.gmra.mxu0 %v2014
        %v9751 = vpop.f32.mrf.mxu0
        %v9752 = vadd.f32 %v1962, %v9751
        %v9753 = vpop.f32.mrf.mxu0
        %9754 = vdwg.mxu0
        %9755 = vmatpush.bf16.msra.mxu0 %v6790
        %9756 = vmatpush.bf16.msra.mxu0 %v6782
        %9757 = vmatpush.bf16.msra.mxu0 %v6774
        %9758 = vmatpush.bf16.msra.mxu0 %v6766
        %9759 = vmatpush.bf16.msra.mxu0 %v6758
        %9760 = vmatpush.bf16.msra.mxu0 %v6750
        %9761 = vmatpush.bf16.msra.mxu0 %v6742
        %9762 = vmatpush.bf16.msra.mxu0 %v6734
        %9763 = vmatmul.bf16.gmra.mxu0 %v2015
        %v9764 = vpop.f32.mrf.mxu0
        %v9765 = vadd.f32 %v9752, %v9764
        %v9766 = vpop.f32.mrf.mxu0
        %9767 = vdwg.mxu0
        %9768 = vmatpush.bf16.msra.mxu0 %v6854
        %9769 = vmatpush.bf16.msra.mxu0 %v6846
        %9770 = vmatpush.bf16.msra.mxu0 %v6838
        %9771 = vmatpush.bf16.msra.mxu0 %v6830
        %9772 = vmatpush.bf16.msra.mxu0 %v6822
        %9773 = vmatpush.bf16.msra.mxu0 %v6814
        %9774 = vmatpush.bf16.msra.mxu0 %v6806
        %9775 = vmatpush.bf16.msra.mxu0 %v6798
        %9776 = vmatmul.bf16.gmra.mxu0 %v2016
        %v9777 = vpop.f32.mrf.mxu0
        %v9778 = vadd.f32 %v9765, %v9777
        %v9779 = vpop.f32.mrf.mxu0
        %9780 = vdwg.mxu0
        %9781 = vmatpush.bf16.msra.mxu0 %v6918
        %9782 = vmatpush.bf16.msra.mxu0 %v6910
        %9783 = vmatpush.bf16.msra.mxu0 %v6902
        %9784 = vmatpush.bf16.msra.mxu0 %v6894
        %9785 = vmatpush.bf16.msra.mxu0 %v6886
        %9786 = vmatpush.bf16.msra.mxu0 %v6878
        %9787 = vmatpush.bf16.msra.mxu0 %v6870
        %9788 = vmatpush.bf16.msra.mxu0 %v6862
        %9789 = vmatmul.bf16.gmra.mxu0 %v2017
        %v9790 = vpop.f32.mrf.mxu0
        %v9791 = vadd.f32 %v9778, %v9790
        %v9792 = vpop.f32.mrf.mxu0
        %9793 = vdwg.mxu0
        %9794 = vmatpush.bf16.msra.mxu0 %v6982
        %9795 = vmatpush.bf16.msra.mxu0 %v6974
        %9796 = vmatpush.bf16.msra.mxu0 %v6966
        %9797 = vmatpush.bf16.msra.mxu0 %v6958
        %9798 = vmatpush.bf16.msra.mxu0 %v6950
        %9799 = vmatpush.bf16.msra.mxu0 %v6942
        %9800 = vmatpush.bf16.msra.mxu0 %v6934
        %9801 = vmatpush.bf16.msra.mxu0 %v6926
        %9802 = vmatmul.bf16.gmra.mxu0 %v2018
        %v9803 = vpop.f32.mrf.mxu0
        %v9804 = vadd.f32 %v9791, %v9803
        %v9805 = vpop.f32.mrf.mxu0
        %9806 = vdwg.mxu0
        %9807 = vmatpush.bf16.msra.mxu0 %v7046
        %9808 = vmatpush.bf16.msra.mxu0 %v7038
        %9809 = vmatpush.bf16.msra.mxu0 %v7030
        %9810 = vmatpush.bf16.msra.mxu0 %v7022
        %9811 = vmatpush.bf16.msra.mxu0 %v7014
        %9812 = vmatpush.bf16.msra.mxu0 %v7006
        %9813 = vmatpush.bf16.msra.mxu0 %v6998
        %9814 = vmatpush.bf16.msra.mxu0 %v6990
        %9815 = vmatmul.bf16.gmra.mxu0 %v2019
        %v9816 = vpop.f32.mrf.mxu0
        %v9817 = vadd.f32 %v9804, %v9816
        %v9818 = vpop.f32.mrf.mxu0
        %9819 = vdwg.mxu0
        %9820 = vmatpush.bf16.msra.mxu0 %v7110
        %9821 = vmatpush.bf16.msra.mxu0 %v7102
        %9822 = vmatpush.bf16.msra.mxu0 %v7094
        %9823 = vmatpush.bf16.msra.mxu0 %v7086
        %9824 = vmatpush.bf16.msra.mxu0 %v7078
        %9825 = vmatpush.bf16.msra.mxu0 %v7070
        %9826 = vmatpush.bf16.msra.mxu0 %v7062
        %9827 = vmatpush.bf16.msra.mxu0 %v7054
        %9828 = vmatmul.bf16.gmra.mxu0 %v2020
        %v9829 = vpop.f32.mrf.mxu0
        %v9830 = vadd.f32 %v9817, %v9829
        %v9831 = vpop.f32.mrf.mxu0
        %9832 = vdwg.mxu0
        %9833 = vmatpush.bf16.msra.mxu0 %v7174
        %9834 = vmatpush.bf16.msra.mxu0 %v7166
        %9835 = vmatpush.bf16.msra.mxu0 %v7158
        %9836 = vmatpush.bf16.msra.mxu0 %v7150
        %9837 = vmatpush.bf16.msra.mxu0 %v7142
        %9838 = vmatpush.bf16.msra.mxu0 %v7134
        %9839 = vmatpush.bf16.msra.mxu0 %v7126
        %9840 = vmatpush.bf16.msra.mxu0 %v7118
        %9841 = vmatmul.bf16.gmra.mxu0 %v2021
        %v9842 = vpop.f32.mrf.mxu0
        %v9843 = vadd.f32 %v9830, %v9842
        %v9844 = vpop.f32.mrf.mxu0
        %9845 = vdwg.mxu0
        %9846 = vmatpush.bf16.msra.mxu0 %v7238
        %9847 = vmatpush.bf16.msra.mxu0 %v7230
        %9848 = vmatpush.bf16.msra.mxu0 %v7222
        %9849 = vmatpush.bf16.msra.mxu0 %v7214
        %9850 = vmatpush.bf16.msra.mxu0 %v7206
        %9851 = vmatpush.bf16.msra.mxu0 %v7198
        %9852 = vmatpush.bf16.msra.mxu0 %v7190
        %9853 = vmatpush.bf16.msra.mxu0 %v7182
        %9854 = vmatmul.bf16.gmra.mxu0 %v2022
        %v9855 = vpop.f32.mrf.mxu0
        %v9856 = vadd.f32 %v9843, %v9855
        %v9857 = vpop.f32.mrf.mxu0
        %9858 = vdwg.mxu0
        %9859 = vmatpush.bf16.msra.mxu0 %v7302
        %9860 = vmatpush.bf16.msra.mxu0 %v7294
        %9861 = vmatpush.bf16.msra.mxu0 %v7286
        %9862 = vmatpush.bf16.msra.mxu0 %v7278
        %9863 = vmatpush.bf16.msra.mxu0 %v7270
        %9864 = vmatpush.bf16.msra.mxu0 %v7262
        %9865 = vmatpush.bf16.msra.mxu0 %v7254
        %9866 = vmatpush.bf16.msra.mxu0 %v7246
        %9867 = vmatmul.bf16.gmra.mxu0 %v2023
        %v9868 = vpop.f32.mrf.mxu0
        %v9869 = vadd.f32 %v9856, %v9868
        %v9870 = vpop.f32.mrf.mxu0
        %9871 = vdwg.mxu0
        %9872 = vmatpush.bf16.msra.mxu0 %v7366
        %9873 = vmatpush.bf16.msra.mxu0 %v7358
        %9874 = vmatpush.bf16.msra.mxu0 %v7350
        %9875 = vmatpush.bf16.msra.mxu0 %v7342
        %9876 = vmatpush.bf16.msra.mxu0 %v7334
        %9877 = vmatpush.bf16.msra.mxu0 %v7326
        %9878 = vmatpush.bf16.msra.mxu0 %v7318
        %9879 = vmatpush.bf16.msra.mxu0 %v7310
        %9880 = vmatmul.bf16.gmra.mxu0 %v2024
        %v9881 = vpop.f32.mrf.mxu0
        %v9882 = vadd.f32 %v9869, %v9881
        %v9883 = vpop.f32.mrf.mxu0
        %9884 = vdwg.mxu0
        %9885 = vmatpush.bf16.msra.mxu0 %v7430
        %9886 = vmatpush.bf16.msra.mxu0 %v7422
        %9887 = vmatpush.bf16.msra.mxu0 %v7414
        %9888 = vmatpush.bf16.msra.mxu0 %v7406
        %9889 = vmatpush.bf16.msra.mxu0 %v7398
        %9890 = vmatpush.bf16.msra.mxu0 %v7390
        %9891 = vmatpush.bf16.msra.mxu0 %v7382
        %9892 = vmatpush.bf16.msra.mxu0 %v7374
        %9893 = vmatmul.bf16.gmra.mxu0 %v2025
        %v9894 = vpop.f32.mrf.mxu0
        %v9895 = vadd.f32 %v9882, %v9894
        %v9896 = vpop.f32.mrf.mxu0
        %9897 = vdwg.mxu0
        %9898 = vmatpush.bf16.msra.mxu0 %v7494
        %9899 = vmatpush.bf16.msra.mxu0 %v7486
        %9900 = vmatpush.bf16.msra.mxu0 %v7478
        %9901 = vmatpush.bf16.msra.mxu0 %v7470
        %9902 = vmatpush.bf16.msra.mxu0 %v7462
        %9903 = vmatpush.bf16.msra.mxu0 %v7454
        %9904 = vmatpush.bf16.msra.mxu0 %v7446
        %9905 = vmatpush.bf16.msra.mxu0 %v7438
        %9906 = vmatmul.bf16.gmra.mxu0 %v2026
        %v9907 = vpop.f32.mrf.mxu0
        %v9908 = vadd.f32 %v9895, %v9907
        %v9909 = vpop.f32.mrf.mxu0
        %9910 = vdwg.mxu0
        %9911 = vmatpush.bf16.msra.mxu0 %v7558
        %9912 = vmatpush.bf16.msra.mxu0 %v7550
        %9913 = vmatpush.bf16.msra.mxu0 %v7542
        %9914 = vmatpush.bf16.msra.mxu0 %v7534
        %9915 = vmatpush.bf16.msra.mxu0 %v7526
        %9916 = vmatpush.bf16.msra.mxu0 %v7518
        %9917 = vmatpush.bf16.msra.mxu0 %v7510
        %9918 = vmatpush.bf16.msra.mxu0 %v7502
        %9919 = vmatmul.bf16.gmra.mxu0 %v2027
        %v9920 = vpop.f32.mrf.mxu0
        %v9921 = vadd.f32 %v9908, %v9920
        %v9922 = vpop.f32.mrf.mxu0
        %9923 = vdwg.mxu0
        %9924 = vmatpush.bf16.msra.mxu0 %v7622
        %9925 = vmatpush.bf16.msra.mxu0 %v7614
        %9926 = vmatpush.bf16.msra.mxu0 %v7606
        %9927 = vmatpush.bf16.msra.mxu0 %v7598
        %9928 = vmatpush.bf16.msra.mxu0 %v7590
        %9929 = vmatpush.bf16.msra.mxu0 %v7582
        %9930 = vmatpush.bf16.msra.mxu0 %v7574
        %9931 = vmatpush.bf16.msra.mxu0 %v7566
        %9932 = vmatmul.bf16.gmra.mxu0 %v2028
        %v9933 = vpop.f32.mrf.mxu0
        %v9934 = vadd.f32 %v9921, %v9933
        %v9935 = vpop.f32.mrf.mxu0
        %9936 = vdwg.mxu0
        %9937 = vmatpush.bf16.msra.mxu0 %v7686
        %9938 = vmatpush.bf16.msra.mxu0 %v7678
        %9939 = vmatpush.bf16.msra.mxu0 %v7670
        %9940 = vmatpush.bf16.msra.mxu0 %v7662
        %9941 = vmatpush.bf16.msra.mxu0 %v7654
        %9942 = vmatpush.bf16.msra.mxu0 %v7646
        %9943 = vmatpush.bf16.msra.mxu0 %v7638
        %9944 = vmatpush.bf16.msra.mxu0 %v7630
        %9945 = vmatmul.bf16.gmra.mxu0 %v2029
        %v9946 = vpop.f32.mrf.mxu0
        %v9947 = vadd.f32 %v9934, %v9946
        %v9948 = vpop.f32.mrf.mxu0
        %9949 = vdwg.mxu0
        %9950 = vmatpush.bf16.msra.mxu0 %v7750
        %9951 = vmatpush.bf16.msra.mxu0 %v7742
        %9952 = vmatpush.bf16.msra.mxu0 %v7734
        %9953 = vmatpush.bf16.msra.mxu0 %v7726
        %9954 = vmatpush.bf16.msra.mxu0 %v7718
        %9955 = vmatpush.bf16.msra.mxu0 %v7710
        %9956 = vmatpush.bf16.msra.mxu0 %v7702
        %9957 = vmatpush.bf16.msra.mxu0 %v7694
        %9958 = vmatmul.bf16.gmra.mxu0 %v2030
        %v9959 = vpop.f32.mrf.mxu0
        %v9960 = vadd.f32 %v9947, %v9959
        %v9961 = vpop.f32.mrf.mxu0
        %9962 = vdwg.mxu0
        %9963 = vmatpush.bf16.msra.mxu0 %v7814
        %9964 = vmatpush.bf16.msra.mxu0 %v7806
        %9965 = vmatpush.bf16.msra.mxu0 %v7798
        %9966 = vmatpush.bf16.msra.mxu0 %v7790
        %9967 = vmatpush.bf16.msra.mxu0 %v7782
        %9968 = vmatpush.bf16.msra.mxu0 %v7774
        %9969 = vmatpush.bf16.msra.mxu0 %v7766
        %9970 = vmatpush.bf16.msra.mxu0 %v7758
        %9971 = vmatmul.bf16.gmra.mxu0 %v2031
        %v9972 = vpop.f32.mrf.mxu0
        %v9973 = vadd.f32 %v9960, %v9972
        %v9974 = vpop.f32.mrf.mxu0
        %9975 = vdwg.mxu0
        %9976 = vmatpush.bf16.msra.mxu0 %v7878
        %9977 = vmatpush.bf16.msra.mxu0 %v7870
        %9978 = vmatpush.bf16.msra.mxu0 %v7862
        %9979 = vmatpush.bf16.msra.mxu0 %v7854
        %9980 = vmatpush.bf16.msra.mxu0 %v7846
        %9981 = vmatpush.bf16.msra.mxu0 %v7838
        %9982 = vmatpush.bf16.msra.mxu0 %v7830
        %9983 = vmatpush.bf16.msra.mxu0 %v7822
        %9984 = vmatmul.bf16.gmra.mxu0 %v2032
        %v9985 = vpop.f32.mrf.mxu0
        %v9986 = vadd.f32 %v9973, %v9985
        %v9987 = vpop.f32.mrf.mxu0
        %9988 = vdwg.mxu0
        %9989 = vmatpush.bf16.msra.mxu0 %v7942
        %9990 = vmatpush.bf16.msra.mxu0 %v7934
        %9991 = vmatpush.bf16.msra.mxu0 %v7926
        %9992 = vmatpush.bf16.msra.mxu0 %v7918
        %9993 = vmatpush.bf16.msra.mxu0 %v7910
        %9994 = vmatpush.bf16.msra.mxu0 %v7902
        %9995 = vmatpush.bf16.msra.mxu0 %v7894
        %9996 = vmatpush.bf16.msra.mxu0 %v7886
        %9997 = vmatmul.bf16.gmra.mxu0 %v2033
        %v9998 = vpop.f32.mrf.mxu0
        %v9999 = vadd.f32 %v9986, %v9998
        %v10000 = vpop.f32.mrf.mxu0
        %10001 = vdwg.mxu0
        %10002 = vmatpush.bf16.msra.mxu0 %v8006
        %10003 = vmatpush.bf16.msra.mxu0 %v7998
        %10004 = vmatpush.bf16.msra.mxu0 %v7990
        %10005 = vmatpush.bf16.msra.mxu0 %v7982
        %10006 = vmatpush.bf16.msra.mxu0 %v7974
        %10007 = vmatpush.bf16.msra.mxu0 %v7966
        %10008 = vmatpush.bf16.msra.mxu0 %v7958
        %10009 = vmatpush.bf16.msra.mxu0 %v7950
        %10010 = vmatmul.bf16.gmra.mxu0 %v2034
        %v10011 = vpop.f32.mrf.mxu0
        %v10012 = vadd.f32 %v9999, %v10011
        %v10013 = vpop.f32.mrf.mxu0
        %10014 = vdwg.mxu0
        %10015 = vmatpush.bf16.msra.mxu0 %v8070
        %10016 = vmatpush.bf16.msra.mxu0 %v8062
        %10017 = vmatpush.bf16.msra.mxu0 %v8054
        %10018 = vmatpush.bf16.msra.mxu0 %v8046
        %10019 = vmatpush.bf16.msra.mxu0 %v8038
        %10020 = vmatpush.bf16.msra.mxu0 %v8030
        %10021 = vmatpush.bf16.msra.mxu0 %v8022
        %10022 = vmatpush.bf16.msra.mxu0 %v8014
        %10023 = vmatmul.bf16.gmra.mxu0 %v2035
        %v10024 = vpop.f32.mrf.mxu0
        %v10025 = vadd.f32 %v10012, %v10024
        %v10026 = vpop.f32.mrf.mxu0
        %10027 = vdwg.mxu0
        %10028 = vmatpush.bf16.msra.mxu0 %v8134
        %10029 = vmatpush.bf16.msra.mxu0 %v8126
        %10030 = vmatpush.bf16.msra.mxu0 %v8118
        %10031 = vmatpush.bf16.msra.mxu0 %v8110
        %10032 = vmatpush.bf16.msra.mxu0 %v8102
        %10033 = vmatpush.bf16.msra.mxu0 %v8094
        %10034 = vmatpush.bf16.msra.mxu0 %v8086
        %10035 = vmatpush.bf16.msra.mxu0 %v8078
        %10036 = vmatmul.bf16.gmra.mxu0 %v2036
        %v10037 = vpop.f32.mrf.mxu0
        %v10038 = vadd.f32 %v10025, %v10037
        %v10039 = vpop.f32.mrf.mxu0
        %10040 = vdwg.mxu0
        %10041 = vmatpush.bf16.msra.mxu0 %v8198
        %10042 = vmatpush.bf16.msra.mxu0 %v8190
        %10043 = vmatpush.bf16.msra.mxu0 %v8182
        %10044 = vmatpush.bf16.msra.mxu0 %v8174
        %10045 = vmatpush.bf16.msra.mxu0 %v8166
        %10046 = vmatpush.bf16.msra.mxu0 %v8158
        %10047 = vmatpush.bf16.msra.mxu0 %v8150
        %10048 = vmatpush.bf16.msra.mxu0 %v8142
        %10049 = vmatmul.bf16.gmra.mxu0 %v2037
        %v10050 = vpop.f32.mrf.mxu0
        %v10051 = vadd.f32 %v10038, %v10050
        %v10052 = vpop.f32.mrf.mxu0
        %10053 = vdwg.mxu0
        %10054 = vmatpush.bf16.msra.mxu0 %v6727
        %10055 = vmatpush.bf16.msra.mxu0 %v6719
        %10056 = vmatpush.bf16.msra.mxu0 %v6711
        %10057 = vmatpush.bf16.msra.mxu0 %v6703
        %10058 = vmatpush.bf16.msra.mxu0 %v6695
        %10059 = vmatpush.bf16.msra.mxu0 %v6687
        %10060 = vmatpush.bf16.msra.mxu0 %v6679
        %10061 = vmatpush.bf16.msra.mxu0 %v6671
        %10062 = vmatmul.bf16.gmra.mxu0 %v2014
        %v10063 = vpop.f32.mrf.mxu0
        %v10064 = vadd.f32 %v1963, %v10063
        %v10065 = vpop.f32.mrf.mxu0
        %10066 = vdwg.mxu0
        %10067 = vmatpush.bf16.msra.mxu0 %v6791
        %10068 = vmatpush.bf16.msra.mxu0 %v6783
        %10069 = vmatpush.bf16.msra.mxu0 %v6775
        %10070 = vmatpush.bf16.msra.mxu0 %v6767
        %10071 = vmatpush.bf16.msra.mxu0 %v6759
        %10072 = vmatpush.bf16.msra.mxu0 %v6751
        %10073 = vmatpush.bf16.msra.mxu0 %v6743
        %10074 = vmatpush.bf16.msra.mxu0 %v6735
        %10075 = vmatmul.bf16.gmra.mxu0 %v2015
        %v10076 = vpop.f32.mrf.mxu0
        %v10077 = vadd.f32 %v10064, %v10076
        %v10078 = vpop.f32.mrf.mxu0
        %10079 = vdwg.mxu0
        %10080 = vmatpush.bf16.msra.mxu0 %v6855
        %10081 = vmatpush.bf16.msra.mxu0 %v6847
        %10082 = vmatpush.bf16.msra.mxu0 %v6839
        %10083 = vmatpush.bf16.msra.mxu0 %v6831
        %10084 = vmatpush.bf16.msra.mxu0 %v6823
        %10085 = vmatpush.bf16.msra.mxu0 %v6815
        %10086 = vmatpush.bf16.msra.mxu0 %v6807
        %10087 = vmatpush.bf16.msra.mxu0 %v6799
        %10088 = vmatmul.bf16.gmra.mxu0 %v2016
        %v10089 = vpop.f32.mrf.mxu0
        %v10090 = vadd.f32 %v10077, %v10089
        %v10091 = vpop.f32.mrf.mxu0
        %10092 = vdwg.mxu0
        %10093 = vmatpush.bf16.msra.mxu0 %v6919
        %10094 = vmatpush.bf16.msra.mxu0 %v6911
        %10095 = vmatpush.bf16.msra.mxu0 %v6903
        %10096 = vmatpush.bf16.msra.mxu0 %v6895
        %10097 = vmatpush.bf16.msra.mxu0 %v6887
        %10098 = vmatpush.bf16.msra.mxu0 %v6879
        %10099 = vmatpush.bf16.msra.mxu0 %v6871
        %10100 = vmatpush.bf16.msra.mxu0 %v6863
        %10101 = vmatmul.bf16.gmra.mxu0 %v2017
        %v10102 = vpop.f32.mrf.mxu0
        %v10103 = vadd.f32 %v10090, %v10102
        %v10104 = vpop.f32.mrf.mxu0
        %10105 = vdwg.mxu0
        %10106 = vmatpush.bf16.msra.mxu0 %v6983
        %10107 = vmatpush.bf16.msra.mxu0 %v6975
        %10108 = vmatpush.bf16.msra.mxu0 %v6967
        %10109 = vmatpush.bf16.msra.mxu0 %v6959
        %10110 = vmatpush.bf16.msra.mxu0 %v6951
        %10111 = vmatpush.bf16.msra.mxu0 %v6943
        %10112 = vmatpush.bf16.msra.mxu0 %v6935
        %10113 = vmatpush.bf16.msra.mxu0 %v6927
        %10114 = vmatmul.bf16.gmra.mxu0 %v2018
        %v10115 = vpop.f32.mrf.mxu0
        %v10116 = vadd.f32 %v10103, %v10115
        %v10117 = vpop.f32.mrf.mxu0
        %10118 = vdwg.mxu0
        %10119 = vmatpush.bf16.msra.mxu0 %v7047
        %10120 = vmatpush.bf16.msra.mxu0 %v7039
        %10121 = vmatpush.bf16.msra.mxu0 %v7031
        %10122 = vmatpush.bf16.msra.mxu0 %v7023
        %10123 = vmatpush.bf16.msra.mxu0 %v7015
        %10124 = vmatpush.bf16.msra.mxu0 %v7007
        %10125 = vmatpush.bf16.msra.mxu0 %v6999
        %10126 = vmatpush.bf16.msra.mxu0 %v6991
        %10127 = vmatmul.bf16.gmra.mxu0 %v2019
        %v10128 = vpop.f32.mrf.mxu0
        %v10129 = vadd.f32 %v10116, %v10128
        %v10130 = vpop.f32.mrf.mxu0
        %10131 = vdwg.mxu0
        %10132 = vmatpush.bf16.msra.mxu0 %v7111
        %10133 = vmatpush.bf16.msra.mxu0 %v7103
        %10134 = vmatpush.bf16.msra.mxu0 %v7095
        %10135 = vmatpush.bf16.msra.mxu0 %v7087
        %10136 = vmatpush.bf16.msra.mxu0 %v7079
        %10137 = vmatpush.bf16.msra.mxu0 %v7071
        %10138 = vmatpush.bf16.msra.mxu0 %v7063
        %10139 = vmatpush.bf16.msra.mxu0 %v7055
        %10140 = vmatmul.bf16.gmra.mxu0 %v2020
        %v10141 = vpop.f32.mrf.mxu0
        %v10142 = vadd.f32 %v10129, %v10141
        %v10143 = vpop.f32.mrf.mxu0
        %10144 = vdwg.mxu0
        %10145 = vmatpush.bf16.msra.mxu0 %v7175
        %10146 = vmatpush.bf16.msra.mxu0 %v7167
        %10147 = vmatpush.bf16.msra.mxu0 %v7159
        %10148 = vmatpush.bf16.msra.mxu0 %v7151
        %10149 = vmatpush.bf16.msra.mxu0 %v7143
        %10150 = vmatpush.bf16.msra.mxu0 %v7135
        %10151 = vmatpush.bf16.msra.mxu0 %v7127
        %10152 = vmatpush.bf16.msra.mxu0 %v7119
        %10153 = vmatmul.bf16.gmra.mxu0 %v2021
        %v10154 = vpop.f32.mrf.mxu0
        %v10155 = vadd.f32 %v10142, %v10154
        %v10156 = vpop.f32.mrf.mxu0
        %10157 = vdwg.mxu0
        %10158 = vmatpush.bf16.msra.mxu0 %v7239
        %10159 = vmatpush.bf16.msra.mxu0 %v7231
        %10160 = vmatpush.bf16.msra.mxu0 %v7223
        %10161 = vmatpush.bf16.msra.mxu0 %v7215
        %10162 = vmatpush.bf16.msra.mxu0 %v7207
        %10163 = vmatpush.bf16.msra.mxu0 %v7199
        %10164 = vmatpush.bf16.msra.mxu0 %v7191
        %10165 = vmatpush.bf16.msra.mxu0 %v7183
        %10166 = vmatmul.bf16.gmra.mxu0 %v2022
        %v10167 = vpop.f32.mrf.mxu0
        %v10168 = vadd.f32 %v10155, %v10167
        %v10169 = vpop.f32.mrf.mxu0
        %10170 = vdwg.mxu0
        %10171 = vmatpush.bf16.msra.mxu0 %v7303
        %10172 = vmatpush.bf16.msra.mxu0 %v7295
        %10173 = vmatpush.bf16.msra.mxu0 %v7287
        %10174 = vmatpush.bf16.msra.mxu0 %v7279
        %10175 = vmatpush.bf16.msra.mxu0 %v7271
        %10176 = vmatpush.bf16.msra.mxu0 %v7263
        %10177 = vmatpush.bf16.msra.mxu0 %v7255
        %10178 = vmatpush.bf16.msra.mxu0 %v7247
        %10179 = vmatmul.bf16.gmra.mxu0 %v2023
        %v10180 = vpop.f32.mrf.mxu0
        %v10181 = vadd.f32 %v10168, %v10180
        %v10182 = vpop.f32.mrf.mxu0
        %10183 = vdwg.mxu0
        %10184 = vmatpush.bf16.msra.mxu0 %v7367
        %10185 = vmatpush.bf16.msra.mxu0 %v7359
        %10186 = vmatpush.bf16.msra.mxu0 %v7351
        %10187 = vmatpush.bf16.msra.mxu0 %v7343
        %10188 = vmatpush.bf16.msra.mxu0 %v7335
        %10189 = vmatpush.bf16.msra.mxu0 %v7327
        %10190 = vmatpush.bf16.msra.mxu0 %v7319
        %10191 = vmatpush.bf16.msra.mxu0 %v7311
        %10192 = vmatmul.bf16.gmra.mxu0 %v2024
        %v10193 = vpop.f32.mrf.mxu0
        %v10194 = vadd.f32 %v10181, %v10193
        %v10195 = vpop.f32.mrf.mxu0
        %10196 = vdwg.mxu0
        %10197 = vmatpush.bf16.msra.mxu0 %v7431
        %10198 = vmatpush.bf16.msra.mxu0 %v7423
        %10199 = vmatpush.bf16.msra.mxu0 %v7415
        %10200 = vmatpush.bf16.msra.mxu0 %v7407
        %10201 = vmatpush.bf16.msra.mxu0 %v7399
        %10202 = vmatpush.bf16.msra.mxu0 %v7391
        %10203 = vmatpush.bf16.msra.mxu0 %v7383
        %10204 = vmatpush.bf16.msra.mxu0 %v7375
        %10205 = vmatmul.bf16.gmra.mxu0 %v2025
        %v10206 = vpop.f32.mrf.mxu0
        %v10207 = vadd.f32 %v10194, %v10206
        %v10208 = vpop.f32.mrf.mxu0
        %10209 = vdwg.mxu0
        %10210 = vmatpush.bf16.msra.mxu0 %v7495
        %10211 = vmatpush.bf16.msra.mxu0 %v7487
        %10212 = vmatpush.bf16.msra.mxu0 %v7479
        %10213 = vmatpush.bf16.msra.mxu0 %v7471
        %10214 = vmatpush.bf16.msra.mxu0 %v7463
        %10215 = vmatpush.bf16.msra.mxu0 %v7455
        %10216 = vmatpush.bf16.msra.mxu0 %v7447
        %10217 = vmatpush.bf16.msra.mxu0 %v7439
        %10218 = vmatmul.bf16.gmra.mxu0 %v2026
        %v10219 = vpop.f32.mrf.mxu0
        %v10220 = vadd.f32 %v10207, %v10219
        %v10221 = vpop.f32.mrf.mxu0
        %10222 = vdwg.mxu0
        %10223 = vmatpush.bf16.msra.mxu0 %v7559
        %10224 = vmatpush.bf16.msra.mxu0 %v7551
        %10225 = vmatpush.bf16.msra.mxu0 %v7543
        %10226 = vmatpush.bf16.msra.mxu0 %v7535
        %10227 = vmatpush.bf16.msra.mxu0 %v7527
        %10228 = vmatpush.bf16.msra.mxu0 %v7519
        %10229 = vmatpush.bf16.msra.mxu0 %v7511
        %10230 = vmatpush.bf16.msra.mxu0 %v7503
        %10231 = vmatmul.bf16.gmra.mxu0 %v2027
        %v10232 = vpop.f32.mrf.mxu0
        %v10233 = vadd.f32 %v10220, %v10232
        %v10234 = vpop.f32.mrf.mxu0
        %10235 = vdwg.mxu0
        %10236 = vmatpush.bf16.msra.mxu0 %v7623
        %10237 = vmatpush.bf16.msra.mxu0 %v7615
        %10238 = vmatpush.bf16.msra.mxu0 %v7607
        %10239 = vmatpush.bf16.msra.mxu0 %v7599
        %10240 = vmatpush.bf16.msra.mxu0 %v7591
        %10241 = vmatpush.bf16.msra.mxu0 %v7583
        %10242 = vmatpush.bf16.msra.mxu0 %v7575
        %10243 = vmatpush.bf16.msra.mxu0 %v7567
        %10244 = vmatmul.bf16.gmra.mxu0 %v2028
        %v10245 = vpop.f32.mrf.mxu0
        %v10246 = vadd.f32 %v10233, %v10245
        %v10247 = vpop.f32.mrf.mxu0
        %10248 = vdwg.mxu0
        %10249 = vmatpush.bf16.msra.mxu0 %v7687
        %10250 = vmatpush.bf16.msra.mxu0 %v7679
        %10251 = vmatpush.bf16.msra.mxu0 %v7671
        %10252 = vmatpush.bf16.msra.mxu0 %v7663
        %10253 = vmatpush.bf16.msra.mxu0 %v7655
        %10254 = vmatpush.bf16.msra.mxu0 %v7647
        %10255 = vmatpush.bf16.msra.mxu0 %v7639
        %10256 = vmatpush.bf16.msra.mxu0 %v7631
        %10257 = vmatmul.bf16.gmra.mxu0 %v2029
        %v10258 = vpop.f32.mrf.mxu0
        %v10259 = vadd.f32 %v10246, %v10258
        %v10260 = vpop.f32.mrf.mxu0
        %10261 = vdwg.mxu0
        %10262 = vmatpush.bf16.msra.mxu0 %v7751
        %10263 = vmatpush.bf16.msra.mxu0 %v7743
        %10264 = vmatpush.bf16.msra.mxu0 %v7735
        %10265 = vmatpush.bf16.msra.mxu0 %v7727
        %10266 = vmatpush.bf16.msra.mxu0 %v7719
        %10267 = vmatpush.bf16.msra.mxu0 %v7711
        %10268 = vmatpush.bf16.msra.mxu0 %v7703
        %10269 = vmatpush.bf16.msra.mxu0 %v7695
        %10270 = vmatmul.bf16.gmra.mxu0 %v2030
        %v10271 = vpop.f32.mrf.mxu0
        %v10272 = vadd.f32 %v10259, %v10271
        %v10273 = vpop.f32.mrf.mxu0
        %10274 = vdwg.mxu0
        %10275 = vmatpush.bf16.msra.mxu0 %v7815
        %10276 = vmatpush.bf16.msra.mxu0 %v7807
        %10277 = vmatpush.bf16.msra.mxu0 %v7799
        %10278 = vmatpush.bf16.msra.mxu0 %v7791
        %10279 = vmatpush.bf16.msra.mxu0 %v7783
        %10280 = vmatpush.bf16.msra.mxu0 %v7775
        %10281 = vmatpush.bf16.msra.mxu0 %v7767
        %10282 = vmatpush.bf16.msra.mxu0 %v7759
        %10283 = vmatmul.bf16.gmra.mxu0 %v2031
        %v10284 = vpop.f32.mrf.mxu0
        %v10285 = vadd.f32 %v10272, %v10284
        %v10286 = vpop.f32.mrf.mxu0
        %10287 = vdwg.mxu0
        %10288 = vmatpush.bf16.msra.mxu0 %v7879
        %10289 = vmatpush.bf16.msra.mxu0 %v7871
        %10290 = vmatpush.bf16.msra.mxu0 %v7863
        %10291 = vmatpush.bf16.msra.mxu0 %v7855
        %10292 = vmatpush.bf16.msra.mxu0 %v7847
        %10293 = vmatpush.bf16.msra.mxu0 %v7839
        %10294 = vmatpush.bf16.msra.mxu0 %v7831
        %10295 = vmatpush.bf16.msra.mxu0 %v7823
        %10296 = vmatmul.bf16.gmra.mxu0 %v2032
        %v10297 = vpop.f32.mrf.mxu0
        %v10298 = vadd.f32 %v10285, %v10297
        %v10299 = vpop.f32.mrf.mxu0
        %10300 = vdwg.mxu0
        %10301 = vmatpush.bf16.msra.mxu0 %v7943
        %10302 = vmatpush.bf16.msra.mxu0 %v7935
        %10303 = vmatpush.bf16.msra.mxu0 %v7927
        %10304 = vmatpush.bf16.msra.mxu0 %v7919
        %10305 = vmatpush.bf16.msra.mxu0 %v7911
        %10306 = vmatpush.bf16.msra.mxu0 %v7903
        %10307 = vmatpush.bf16.msra.mxu0 %v7895
        %10308 = vmatpush.bf16.msra.mxu0 %v7887
        %10309 = vmatmul.bf16.gmra.mxu0 %v2033
        %v10310 = vpop.f32.mrf.mxu0
        %v10311 = vadd.f32 %v10298, %v10310
        %v10312 = vpop.f32.mrf.mxu0
        %10313 = vdwg.mxu0
        %10314 = vmatpush.bf16.msra.mxu0 %v8007
        %10315 = vmatpush.bf16.msra.mxu0 %v7999
        %10316 = vmatpush.bf16.msra.mxu0 %v7991
        %10317 = vmatpush.bf16.msra.mxu0 %v7983
        %10318 = vmatpush.bf16.msra.mxu0 %v7975
        %10319 = vmatpush.bf16.msra.mxu0 %v7967
        %10320 = vmatpush.bf16.msra.mxu0 %v7959
        %10321 = vmatpush.bf16.msra.mxu0 %v7951
        %10322 = vmatmul.bf16.gmra.mxu0 %v2034
        %v10323 = vpop.f32.mrf.mxu0
        %v10324 = vadd.f32 %v10311, %v10323
        %v10325 = vpop.f32.mrf.mxu0
        %10326 = vdwg.mxu0
        %10327 = vmatpush.bf16.msra.mxu0 %v8071
        %10328 = vmatpush.bf16.msra.mxu0 %v8063
        %10329 = vmatpush.bf16.msra.mxu0 %v8055
        %10330 = vmatpush.bf16.msra.mxu0 %v8047
        %10331 = vmatpush.bf16.msra.mxu0 %v8039
        %10332 = vmatpush.bf16.msra.mxu0 %v8031
        %10333 = vmatpush.bf16.msra.mxu0 %v8023
        %10334 = vmatpush.bf16.msra.mxu0 %v8015
        %10335 = vmatmul.bf16.gmra.mxu0 %v2035
        %v10336 = vpop.f32.mrf.mxu0
        %v10337 = vadd.f32 %v10324, %v10336
        %v10338 = vpop.f32.mrf.mxu0
        %10339 = vdwg.mxu0
        %10340 = vmatpush.bf16.msra.mxu0 %v8135
        %10341 = vmatpush.bf16.msra.mxu0 %v8127
        %10342 = vmatpush.bf16.msra.mxu0 %v8119
        %10343 = vmatpush.bf16.msra.mxu0 %v8111
        %10344 = vmatpush.bf16.msra.mxu0 %v8103
        %10345 = vmatpush.bf16.msra.mxu0 %v8095
        %10346 = vmatpush.bf16.msra.mxu0 %v8087
        %10347 = vmatpush.bf16.msra.mxu0 %v8079
        %10348 = vmatmul.bf16.gmra.mxu0 %v2036
        %v10349 = vpop.f32.mrf.mxu0
        %v10350 = vadd.f32 %v10337, %v10349
        %v10351 = vpop.f32.mrf.mxu0
        %10352 = vdwg.mxu0
        %10353 = vmatpush.bf16.msra.mxu0 %v8199
        %10354 = vmatpush.bf16.msra.mxu0 %v8191
        %10355 = vmatpush.bf16.msra.mxu0 %v8183
        %10356 = vmatpush.bf16.msra.mxu0 %v8175
        %10357 = vmatpush.bf16.msra.mxu0 %v8167
        %10358 = vmatpush.bf16.msra.mxu0 %v8159
        %10359 = vmatpush.bf16.msra.mxu0 %v8151
        %10360 = vmatpush.bf16.msra.mxu0 %v8143
        %10361 = vmatmul.bf16.gmra.mxu0 %v2037
        %v10362 = vpop.f32.mrf.mxu0
        %v10363 = vadd.f32 %v10350, %v10362
        %v10364 = vpop.f32.mrf.mxu0
        %10365 = vdwg.mxu0
        %10366 = vmatpush.bf16.msra.mxu0 %v6728
        %10367 = vmatpush.bf16.msra.mxu0 %v6720
        %10368 = vmatpush.bf16.msra.mxu0 %v6712
        %10369 = vmatpush.bf16.msra.mxu0 %v6704
        %10370 = vmatpush.bf16.msra.mxu0 %v6696
        %10371 = vmatpush.bf16.msra.mxu0 %v6688
        %10372 = vmatpush.bf16.msra.mxu0 %v6680
        %10373 = vmatpush.bf16.msra.mxu0 %v6672
        %10374 = vmatmul.bf16.gmra.mxu0 %v2014
        %v10375 = vpop.f32.mrf.mxu0
        %v10376 = vadd.f32 %v1964, %v10375
        %v10377 = vpop.f32.mrf.mxu0
        %10378 = vdwg.mxu0
        %10379 = vmatpush.bf16.msra.mxu0 %v6792
        %10380 = vmatpush.bf16.msra.mxu0 %v6784
        %10381 = vmatpush.bf16.msra.mxu0 %v6776
        %10382 = vmatpush.bf16.msra.mxu0 %v6768
        %10383 = vmatpush.bf16.msra.mxu0 %v6760
        %10384 = vmatpush.bf16.msra.mxu0 %v6752
        %10385 = vmatpush.bf16.msra.mxu0 %v6744
        %10386 = vmatpush.bf16.msra.mxu0 %v6736
        %10387 = vmatmul.bf16.gmra.mxu0 %v2015
        %v10388 = vpop.f32.mrf.mxu0
        %v10389 = vadd.f32 %v10376, %v10388
        %v10390 = vpop.f32.mrf.mxu0
        %10391 = vdwg.mxu0
        %10392 = vmatpush.bf16.msra.mxu0 %v6856
        %10393 = vmatpush.bf16.msra.mxu0 %v6848
        %10394 = vmatpush.bf16.msra.mxu0 %v6840
        %10395 = vmatpush.bf16.msra.mxu0 %v6832
        %10396 = vmatpush.bf16.msra.mxu0 %v6824
        %10397 = vmatpush.bf16.msra.mxu0 %v6816
        %10398 = vmatpush.bf16.msra.mxu0 %v6808
        %10399 = vmatpush.bf16.msra.mxu0 %v6800
        %10400 = vmatmul.bf16.gmra.mxu0 %v2016
        %v10401 = vpop.f32.mrf.mxu0
        %v10402 = vadd.f32 %v10389, %v10401
        %v10403 = vpop.f32.mrf.mxu0
        %10404 = vdwg.mxu0
        %10405 = vmatpush.bf16.msra.mxu0 %v6920
        %10406 = vmatpush.bf16.msra.mxu0 %v6912
        %10407 = vmatpush.bf16.msra.mxu0 %v6904
        %10408 = vmatpush.bf16.msra.mxu0 %v6896
        %10409 = vmatpush.bf16.msra.mxu0 %v6888
        %10410 = vmatpush.bf16.msra.mxu0 %v6880
        %10411 = vmatpush.bf16.msra.mxu0 %v6872
        %10412 = vmatpush.bf16.msra.mxu0 %v6864
        %10413 = vmatmul.bf16.gmra.mxu0 %v2017
        %v10414 = vpop.f32.mrf.mxu0
        %v10415 = vadd.f32 %v10402, %v10414
        %v10416 = vpop.f32.mrf.mxu0
        %10417 = vdwg.mxu0
        %10418 = vmatpush.bf16.msra.mxu0 %v6984
        %10419 = vmatpush.bf16.msra.mxu0 %v6976
        %10420 = vmatpush.bf16.msra.mxu0 %v6968
        %10421 = vmatpush.bf16.msra.mxu0 %v6960
        %10422 = vmatpush.bf16.msra.mxu0 %v6952
        %10423 = vmatpush.bf16.msra.mxu0 %v6944
        %10424 = vmatpush.bf16.msra.mxu0 %v6936
        %10425 = vmatpush.bf16.msra.mxu0 %v6928
        %10426 = vmatmul.bf16.gmra.mxu0 %v2018
        %v10427 = vpop.f32.mrf.mxu0
        %v10428 = vadd.f32 %v10415, %v10427
        %v10429 = vpop.f32.mrf.mxu0
        %10430 = vdwg.mxu0
        %10431 = vmatpush.bf16.msra.mxu0 %v7048
        %10432 = vmatpush.bf16.msra.mxu0 %v7040
        %10433 = vmatpush.bf16.msra.mxu0 %v7032
        %10434 = vmatpush.bf16.msra.mxu0 %v7024
        %10435 = vmatpush.bf16.msra.mxu0 %v7016
        %10436 = vmatpush.bf16.msra.mxu0 %v7008
        %10437 = vmatpush.bf16.msra.mxu0 %v7000
        %10438 = vmatpush.bf16.msra.mxu0 %v6992
        %10439 = vmatmul.bf16.gmra.mxu0 %v2019
        %v10440 = vpop.f32.mrf.mxu0
        %v10441 = vadd.f32 %v10428, %v10440
        %v10442 = vpop.f32.mrf.mxu0
        %10443 = vdwg.mxu0
        %10444 = vmatpush.bf16.msra.mxu0 %v7112
        %10445 = vmatpush.bf16.msra.mxu0 %v7104
        %10446 = vmatpush.bf16.msra.mxu0 %v7096
        %10447 = vmatpush.bf16.msra.mxu0 %v7088
        %10448 = vmatpush.bf16.msra.mxu0 %v7080
        %10449 = vmatpush.bf16.msra.mxu0 %v7072
        %10450 = vmatpush.bf16.msra.mxu0 %v7064
        %10451 = vmatpush.bf16.msra.mxu0 %v7056
        %10452 = vmatmul.bf16.gmra.mxu0 %v2020
        %v10453 = vpop.f32.mrf.mxu0
        %v10454 = vadd.f32 %v10441, %v10453
        %v10455 = vpop.f32.mrf.mxu0
        %10456 = vdwg.mxu0
        %10457 = vmatpush.bf16.msra.mxu0 %v7176
        %10458 = vmatpush.bf16.msra.mxu0 %v7168
        %10459 = vmatpush.bf16.msra.mxu0 %v7160
        %10460 = vmatpush.bf16.msra.mxu0 %v7152
        %10461 = vmatpush.bf16.msra.mxu0 %v7144
        %10462 = vmatpush.bf16.msra.mxu0 %v7136
        %10463 = vmatpush.bf16.msra.mxu0 %v7128
        %10464 = vmatpush.bf16.msra.mxu0 %v7120
        %10465 = vmatmul.bf16.gmra.mxu0 %v2021
        %v10466 = vpop.f32.mrf.mxu0
        %v10467 = vadd.f32 %v10454, %v10466
        %v10468 = vpop.f32.mrf.mxu0
        %10469 = vdwg.mxu0
        %10470 = vmatpush.bf16.msra.mxu0 %v7240
        %10471 = vmatpush.bf16.msra.mxu0 %v7232
        %10472 = vmatpush.bf16.msra.mxu0 %v7224
        %10473 = vmatpush.bf16.msra.mxu0 %v7216
        %10474 = vmatpush.bf16.msra.mxu0 %v7208
        %10475 = vmatpush.bf16.msra.mxu0 %v7200
        %10476 = vmatpush.bf16.msra.mxu0 %v7192
        %10477 = vmatpush.bf16.msra.mxu0 %v7184
        %10478 = vmatmul.bf16.gmra.mxu0 %v2022
        %v10479 = vpop.f32.mrf.mxu0
        %v10480 = vadd.f32 %v10467, %v10479
        %v10481 = vpop.f32.mrf.mxu0
        %10482 = vdwg.mxu0
        %10483 = vmatpush.bf16.msra.mxu0 %v7304
        %10484 = vmatpush.bf16.msra.mxu0 %v7296
        %10485 = vmatpush.bf16.msra.mxu0 %v7288
        %10486 = vmatpush.bf16.msra.mxu0 %v7280
        %10487 = vmatpush.bf16.msra.mxu0 %v7272
        %10488 = vmatpush.bf16.msra.mxu0 %v7264
        %10489 = vmatpush.bf16.msra.mxu0 %v7256
        %10490 = vmatpush.bf16.msra.mxu0 %v7248
        %10491 = vmatmul.bf16.gmra.mxu0 %v2023
        %v10492 = vpop.f32.mrf.mxu0
        %v10493 = vadd.f32 %v10480, %v10492
        %v10494 = vpop.f32.mrf.mxu0
        %10495 = vdwg.mxu0
        %10496 = vmatpush.bf16.msra.mxu0 %v7368
        %10497 = vmatpush.bf16.msra.mxu0 %v7360
        %10498 = vmatpush.bf16.msra.mxu0 %v7352
        %10499 = vmatpush.bf16.msra.mxu0 %v7344
        %10500 = vmatpush.bf16.msra.mxu0 %v7336
        %10501 = vmatpush.bf16.msra.mxu0 %v7328
        %10502 = vmatpush.bf16.msra.mxu0 %v7320
        %10503 = vmatpush.bf16.msra.mxu0 %v7312
        %10504 = vmatmul.bf16.gmra.mxu0 %v2024
        %v10505 = vpop.f32.mrf.mxu0
        %v10506 = vadd.f32 %v10493, %v10505
        %v10507 = vpop.f32.mrf.mxu0
        %10508 = vdwg.mxu0
        %10509 = vmatpush.bf16.msra.mxu0 %v7432
        %10510 = vmatpush.bf16.msra.mxu0 %v7424
        %10511 = vmatpush.bf16.msra.mxu0 %v7416
        %10512 = vmatpush.bf16.msra.mxu0 %v7408
        %10513 = vmatpush.bf16.msra.mxu0 %v7400
        %10514 = vmatpush.bf16.msra.mxu0 %v7392
        %10515 = vmatpush.bf16.msra.mxu0 %v7384
        %10516 = vmatpush.bf16.msra.mxu0 %v7376
        %10517 = vmatmul.bf16.gmra.mxu0 %v2025
        %v10518 = vpop.f32.mrf.mxu0
        %v10519 = vadd.f32 %v10506, %v10518
        %v10520 = vpop.f32.mrf.mxu0
        %10521 = vdwg.mxu0
        %10522 = vmatpush.bf16.msra.mxu0 %v7496
        %10523 = vmatpush.bf16.msra.mxu0 %v7488
        %10524 = vmatpush.bf16.msra.mxu0 %v7480
        %10525 = vmatpush.bf16.msra.mxu0 %v7472
        %10526 = vmatpush.bf16.msra.mxu0 %v7464
        %10527 = vmatpush.bf16.msra.mxu0 %v7456
        %10528 = vmatpush.bf16.msra.mxu0 %v7448
        %10529 = vmatpush.bf16.msra.mxu0 %v7440
        %10530 = vmatmul.bf16.gmra.mxu0 %v2026
        %v10531 = vpop.f32.mrf.mxu0
        %v10532 = vadd.f32 %v10519, %v10531
        %v10533 = vpop.f32.mrf.mxu0
        %10534 = vdwg.mxu0
        %10535 = vmatpush.bf16.msra.mxu0 %v7560
        %10536 = vmatpush.bf16.msra.mxu0 %v7552
        %10537 = vmatpush.bf16.msra.mxu0 %v7544
        %10538 = vmatpush.bf16.msra.mxu0 %v7536
        %10539 = vmatpush.bf16.msra.mxu0 %v7528
        %10540 = vmatpush.bf16.msra.mxu0 %v7520
        %10541 = vmatpush.bf16.msra.mxu0 %v7512
        %10542 = vmatpush.bf16.msra.mxu0 %v7504
        %10543 = vmatmul.bf16.gmra.mxu0 %v2027
        %v10544 = vpop.f32.mrf.mxu0
        %v10545 = vadd.f32 %v10532, %v10544
        %v10546 = vpop.f32.mrf.mxu0
        %10547 = vdwg.mxu0
        %10548 = vmatpush.bf16.msra.mxu0 %v7624
        %10549 = vmatpush.bf16.msra.mxu0 %v7616
        %10550 = vmatpush.bf16.msra.mxu0 %v7608
        %10551 = vmatpush.bf16.msra.mxu0 %v7600
        %10552 = vmatpush.bf16.msra.mxu0 %v7592
        %10553 = vmatpush.bf16.msra.mxu0 %v7584
        %10554 = vmatpush.bf16.msra.mxu0 %v7576
        %10555 = vmatpush.bf16.msra.mxu0 %v7568
        %10556 = vmatmul.bf16.gmra.mxu0 %v2028
        %v10557 = vpop.f32.mrf.mxu0
        %v10558 = vadd.f32 %v10545, %v10557
        %v10559 = vpop.f32.mrf.mxu0
        %10560 = vdwg.mxu0
        %10561 = vmatpush.bf16.msra.mxu0 %v7688
        %10562 = vmatpush.bf16.msra.mxu0 %v7680
        %10563 = vmatpush.bf16.msra.mxu0 %v7672
        %10564 = vmatpush.bf16.msra.mxu0 %v7664
        %10565 = vmatpush.bf16.msra.mxu0 %v7656
        %10566 = vmatpush.bf16.msra.mxu0 %v7648
        %10567 = vmatpush.bf16.msra.mxu0 %v7640
        %10568 = vmatpush.bf16.msra.mxu0 %v7632
        %10569 = vmatmul.bf16.gmra.mxu0 %v2029
        %v10570 = vpop.f32.mrf.mxu0
        %v10571 = vadd.f32 %v10558, %v10570
        %v10572 = vpop.f32.mrf.mxu0
        %10573 = vdwg.mxu0
        %10574 = vmatpush.bf16.msra.mxu0 %v7752
        %10575 = vmatpush.bf16.msra.mxu0 %v7744
        %10576 = vmatpush.bf16.msra.mxu0 %v7736
        %10577 = vmatpush.bf16.msra.mxu0 %v7728
        %10578 = vmatpush.bf16.msra.mxu0 %v7720
        %10579 = vmatpush.bf16.msra.mxu0 %v7712
        %10580 = vmatpush.bf16.msra.mxu0 %v7704
        %10581 = vmatpush.bf16.msra.mxu0 %v7696
        %10582 = vmatmul.bf16.gmra.mxu0 %v2030
        %v10583 = vpop.f32.mrf.mxu0
        %v10584 = vadd.f32 %v10571, %v10583
        %v10585 = vpop.f32.mrf.mxu0
        %10586 = vdwg.mxu0
        %10587 = vmatpush.bf16.msra.mxu0 %v7816
        %10588 = vmatpush.bf16.msra.mxu0 %v7808
        %10589 = vmatpush.bf16.msra.mxu0 %v7800
        %10590 = vmatpush.bf16.msra.mxu0 %v7792
        %10591 = vmatpush.bf16.msra.mxu0 %v7784
        %10592 = vmatpush.bf16.msra.mxu0 %v7776
        %10593 = vmatpush.bf16.msra.mxu0 %v7768
        %10594 = vmatpush.bf16.msra.mxu0 %v7760
        %10595 = vmatmul.bf16.gmra.mxu0 %v2031
        %v10596 = vpop.f32.mrf.mxu0
        %v10597 = vadd.f32 %v10584, %v10596
        %v10598 = vpop.f32.mrf.mxu0
        %10599 = vdwg.mxu0
        %10600 = vmatpush.bf16.msra.mxu0 %v7880
        %10601 = vmatpush.bf16.msra.mxu0 %v7872
        %10602 = vmatpush.bf16.msra.mxu0 %v7864
        %10603 = vmatpush.bf16.msra.mxu0 %v7856
        %10604 = vmatpush.bf16.msra.mxu0 %v7848
        %10605 = vmatpush.bf16.msra.mxu0 %v7840
        %10606 = vmatpush.bf16.msra.mxu0 %v7832
        %10607 = vmatpush.bf16.msra.mxu0 %v7824
        %10608 = vmatmul.bf16.gmra.mxu0 %v2032
        %v10609 = vpop.f32.mrf.mxu0
        %v10610 = vadd.f32 %v10597, %v10609
        %v10611 = vpop.f32.mrf.mxu0
        %10612 = vdwg.mxu0
        %10613 = vmatpush.bf16.msra.mxu0 %v7944
        %10614 = vmatpush.bf16.msra.mxu0 %v7936
        %10615 = vmatpush.bf16.msra.mxu0 %v7928
        %10616 = vmatpush.bf16.msra.mxu0 %v7920
        %10617 = vmatpush.bf16.msra.mxu0 %v7912
        %10618 = vmatpush.bf16.msra.mxu0 %v7904
        %10619 = vmatpush.bf16.msra.mxu0 %v7896
        %10620 = vmatpush.bf16.msra.mxu0 %v7888
        %10621 = vmatmul.bf16.gmra.mxu0 %v2033
        %v10622 = vpop.f32.mrf.mxu0
        %v10623 = vadd.f32 %v10610, %v10622
        %v10624 = vpop.f32.mrf.mxu0
        %10625 = vdwg.mxu0
        %10626 = vmatpush.bf16.msra.mxu0 %v8008
        %10627 = vmatpush.bf16.msra.mxu0 %v8000
        %10628 = vmatpush.bf16.msra.mxu0 %v7992
        %10629 = vmatpush.bf16.msra.mxu0 %v7984
        %10630 = vmatpush.bf16.msra.mxu0 %v7976
        %10631 = vmatpush.bf16.msra.mxu0 %v7968
        %10632 = vmatpush.bf16.msra.mxu0 %v7960
        %10633 = vmatpush.bf16.msra.mxu0 %v7952
        %10634 = vmatmul.bf16.gmra.mxu0 %v2034
        %v10635 = vpop.f32.mrf.mxu0
        %v10636 = vadd.f32 %v10623, %v10635
        %v10637 = vpop.f32.mrf.mxu0
        %10638 = vdwg.mxu0
        %10639 = vmatpush.bf16.msra.mxu0 %v8072
        %10640 = vmatpush.bf16.msra.mxu0 %v8064
        %10641 = vmatpush.bf16.msra.mxu0 %v8056
        %10642 = vmatpush.bf16.msra.mxu0 %v8048
        %10643 = vmatpush.bf16.msra.mxu0 %v8040
        %10644 = vmatpush.bf16.msra.mxu0 %v8032
        %10645 = vmatpush.bf16.msra.mxu0 %v8024
        %10646 = vmatpush.bf16.msra.mxu0 %v8016
        %10647 = vmatmul.bf16.gmra.mxu0 %v2035
        %v10648 = vpop.f32.mrf.mxu0
        %v10649 = vadd.f32 %v10636, %v10648
        %v10650 = vpop.f32.mrf.mxu0
        %10651 = vdwg.mxu0
        %10652 = vmatpush.bf16.msra.mxu0 %v8136
        %10653 = vmatpush.bf16.msra.mxu0 %v8128
        %10654 = vmatpush.bf16.msra.mxu0 %v8120
        %10655 = vmatpush.bf16.msra.mxu0 %v8112
        %10656 = vmatpush.bf16.msra.mxu0 %v8104
        %10657 = vmatpush.bf16.msra.mxu0 %v8096
        %10658 = vmatpush.bf16.msra.mxu0 %v8088
        %10659 = vmatpush.bf16.msra.mxu0 %v8080
        %10660 = vmatmul.bf16.gmra.mxu0 %v2036
        %v10661 = vpop.f32.mrf.mxu0
        %v10662 = vadd.f32 %v10649, %v10661
        %v10663 = vpop.f32.mrf.mxu0
        %10664 = vdwg.mxu0
        %10665 = vmatpush.bf16.msra.mxu0 %v8200
        %10666 = vmatpush.bf16.msra.mxu0 %v8192
        %10667 = vmatpush.bf16.msra.mxu0 %v8184
        %10668 = vmatpush.bf16.msra.mxu0 %v8176
        %10669 = vmatpush.bf16.msra.mxu0 %v8168
        %10670 = vmatpush.bf16.msra.mxu0 %v8160
        %10671 = vmatpush.bf16.msra.mxu0 %v8152
        %10672 = vmatpush.bf16.msra.mxu0 %v8144
        %10673 = vmatmul.bf16.gmra.mxu0 %v2037
        %v10674 = vpop.f32.mrf.mxu0
        %v10675 = vadd.f32 %v10662, %v10674
        %v10676 = vpop.f32.mrf.mxu0
        %10677 = vdwg.mxu0
        %10678 = vmatpush.bf16.msra.mxu0 %v6729
        %10679 = vmatpush.bf16.msra.mxu0 %v6721
        %10680 = vmatpush.bf16.msra.mxu0 %v6713
        %10681 = vmatpush.bf16.msra.mxu0 %v6705
        %10682 = vmatpush.bf16.msra.mxu0 %v6697
        %10683 = vmatpush.bf16.msra.mxu0 %v6689
        %10684 = vmatpush.bf16.msra.mxu0 %v6681
        %10685 = vmatpush.bf16.msra.mxu0 %v6673
        %10686 = vmatmul.bf16.gmra.mxu0 %v2014
        %v10687 = vpop.f32.mrf.mxu0
        %v10688 = vadd.f32 %v1965, %v10687
        %v10689 = vpop.f32.mrf.mxu0
        %10690 = vdwg.mxu0
        %10691 = vmatpush.bf16.msra.mxu0 %v6793
        %10692 = vmatpush.bf16.msra.mxu0 %v6785
        %10693 = vmatpush.bf16.msra.mxu0 %v6777
        %10694 = vmatpush.bf16.msra.mxu0 %v6769
        %10695 = vmatpush.bf16.msra.mxu0 %v6761
        %10696 = vmatpush.bf16.msra.mxu0 %v6753
        %10697 = vmatpush.bf16.msra.mxu0 %v6745
        %10698 = vmatpush.bf16.msra.mxu0 %v6737
        %10699 = vmatmul.bf16.gmra.mxu0 %v2015
        %v10700 = vpop.f32.mrf.mxu0
        %v10701 = vadd.f32 %v10688, %v10700
        %v10702 = vpop.f32.mrf.mxu0
        %10703 = vdwg.mxu0
        %10704 = vmatpush.bf16.msra.mxu0 %v6857
        %10705 = vmatpush.bf16.msra.mxu0 %v6849
        %10706 = vmatpush.bf16.msra.mxu0 %v6841
        %10707 = vmatpush.bf16.msra.mxu0 %v6833
        %10708 = vmatpush.bf16.msra.mxu0 %v6825
        %10709 = vmatpush.bf16.msra.mxu0 %v6817
        %10710 = vmatpush.bf16.msra.mxu0 %v6809
        %10711 = vmatpush.bf16.msra.mxu0 %v6801
        %10712 = vmatmul.bf16.gmra.mxu0 %v2016
        %v10713 = vpop.f32.mrf.mxu0
        %v10714 = vadd.f32 %v10701, %v10713
        %v10715 = vpop.f32.mrf.mxu0
        %10716 = vdwg.mxu0
        %10717 = vmatpush.bf16.msra.mxu0 %v6921
        %10718 = vmatpush.bf16.msra.mxu0 %v6913
        %10719 = vmatpush.bf16.msra.mxu0 %v6905
        %10720 = vmatpush.bf16.msra.mxu0 %v6897
        %10721 = vmatpush.bf16.msra.mxu0 %v6889
        %10722 = vmatpush.bf16.msra.mxu0 %v6881
        %10723 = vmatpush.bf16.msra.mxu0 %v6873
        %10724 = vmatpush.bf16.msra.mxu0 %v6865
        %10725 = vmatmul.bf16.gmra.mxu0 %v2017
        %v10726 = vpop.f32.mrf.mxu0
        %v10727 = vadd.f32 %v10714, %v10726
        %v10728 = vpop.f32.mrf.mxu0
        %10729 = vdwg.mxu0
        %10730 = vmatpush.bf16.msra.mxu0 %v6985
        %10731 = vmatpush.bf16.msra.mxu0 %v6977
        %10732 = vmatpush.bf16.msra.mxu0 %v6969
        %10733 = vmatpush.bf16.msra.mxu0 %v6961
        %10734 = vmatpush.bf16.msra.mxu0 %v6953
        %10735 = vmatpush.bf16.msra.mxu0 %v6945
        %10736 = vmatpush.bf16.msra.mxu0 %v6937
        %10737 = vmatpush.bf16.msra.mxu0 %v6929
        %10738 = vmatmul.bf16.gmra.mxu0 %v2018
        %v10739 = vpop.f32.mrf.mxu0
        %v10740 = vadd.f32 %v10727, %v10739
        %v10741 = vpop.f32.mrf.mxu0
        %10742 = vdwg.mxu0
        %10743 = vmatpush.bf16.msra.mxu0 %v7049
        %10744 = vmatpush.bf16.msra.mxu0 %v7041
        %10745 = vmatpush.bf16.msra.mxu0 %v7033
        %10746 = vmatpush.bf16.msra.mxu0 %v7025
        %10747 = vmatpush.bf16.msra.mxu0 %v7017
        %10748 = vmatpush.bf16.msra.mxu0 %v7009
        %10749 = vmatpush.bf16.msra.mxu0 %v7001
        %10750 = vmatpush.bf16.msra.mxu0 %v6993
        %10751 = vmatmul.bf16.gmra.mxu0 %v2019
        %v10752 = vpop.f32.mrf.mxu0
        %v10753 = vadd.f32 %v10740, %v10752
        %v10754 = vpop.f32.mrf.mxu0
        %10755 = vdwg.mxu0
        %10756 = vmatpush.bf16.msra.mxu0 %v7113
        %10757 = vmatpush.bf16.msra.mxu0 %v7105
        %10758 = vmatpush.bf16.msra.mxu0 %v7097
        %10759 = vmatpush.bf16.msra.mxu0 %v7089
        %10760 = vmatpush.bf16.msra.mxu0 %v7081
        %10761 = vmatpush.bf16.msra.mxu0 %v7073
        %10762 = vmatpush.bf16.msra.mxu0 %v7065
        %10763 = vmatpush.bf16.msra.mxu0 %v7057
        %10764 = vmatmul.bf16.gmra.mxu0 %v2020
        %v10765 = vpop.f32.mrf.mxu0
        %v10766 = vadd.f32 %v10753, %v10765
        %v10767 = vpop.f32.mrf.mxu0
        %10768 = vdwg.mxu0
        %10769 = vmatpush.bf16.msra.mxu0 %v7177
        %10770 = vmatpush.bf16.msra.mxu0 %v7169
        %10771 = vmatpush.bf16.msra.mxu0 %v7161
        %10772 = vmatpush.bf16.msra.mxu0 %v7153
        %10773 = vmatpush.bf16.msra.mxu0 %v7145
        %10774 = vmatpush.bf16.msra.mxu0 %v7137
        %10775 = vmatpush.bf16.msra.mxu0 %v7129
        %10776 = vmatpush.bf16.msra.mxu0 %v7121
        %10777 = vmatmul.bf16.gmra.mxu0 %v2021
        %v10778 = vpop.f32.mrf.mxu0
        %v10779 = vadd.f32 %v10766, %v10778
        %v10780 = vpop.f32.mrf.mxu0
        %10781 = vdwg.mxu0
        %10782 = vmatpush.bf16.msra.mxu0 %v7241
        %10783 = vmatpush.bf16.msra.mxu0 %v7233
        %10784 = vmatpush.bf16.msra.mxu0 %v7225
        %10785 = vmatpush.bf16.msra.mxu0 %v7217
        %10786 = vmatpush.bf16.msra.mxu0 %v7209
        %10787 = vmatpush.bf16.msra.mxu0 %v7201
        %10788 = vmatpush.bf16.msra.mxu0 %v7193
        %10789 = vmatpush.bf16.msra.mxu0 %v7185
        %10790 = vmatmul.bf16.gmra.mxu0 %v2022
        %v10791 = vpop.f32.mrf.mxu0
        %v10792 = vadd.f32 %v10779, %v10791
        %v10793 = vpop.f32.mrf.mxu0
        %10794 = vdwg.mxu0
        %10795 = vmatpush.bf16.msra.mxu0 %v7305
        %10796 = vmatpush.bf16.msra.mxu0 %v7297
        %10797 = vmatpush.bf16.msra.mxu0 %v7289
        %10798 = vmatpush.bf16.msra.mxu0 %v7281
        %10799 = vmatpush.bf16.msra.mxu0 %v7273
        %10800 = vmatpush.bf16.msra.mxu0 %v7265
        %10801 = vmatpush.bf16.msra.mxu0 %v7257
        %10802 = vmatpush.bf16.msra.mxu0 %v7249
        %10803 = vmatmul.bf16.gmra.mxu0 %v2023
        %v10804 = vpop.f32.mrf.mxu0
        %v10805 = vadd.f32 %v10792, %v10804
        %v10806 = vpop.f32.mrf.mxu0
        %10807 = vdwg.mxu0
        %10808 = vmatpush.bf16.msra.mxu0 %v7369
        %10809 = vmatpush.bf16.msra.mxu0 %v7361
        %10810 = vmatpush.bf16.msra.mxu0 %v7353
        %10811 = vmatpush.bf16.msra.mxu0 %v7345
        %10812 = vmatpush.bf16.msra.mxu0 %v7337
        %10813 = vmatpush.bf16.msra.mxu0 %v7329
        %10814 = vmatpush.bf16.msra.mxu0 %v7321
        %10815 = vmatpush.bf16.msra.mxu0 %v7313
        %10816 = vmatmul.bf16.gmra.mxu0 %v2024
        %v10817 = vpop.f32.mrf.mxu0
        %v10818 = vadd.f32 %v10805, %v10817
        %v10819 = vpop.f32.mrf.mxu0
        %10820 = vdwg.mxu0
        %10821 = vmatpush.bf16.msra.mxu0 %v7433
        %10822 = vmatpush.bf16.msra.mxu0 %v7425
        %10823 = vmatpush.bf16.msra.mxu0 %v7417
        %10824 = vmatpush.bf16.msra.mxu0 %v7409
        %10825 = vmatpush.bf16.msra.mxu0 %v7401
        %10826 = vmatpush.bf16.msra.mxu0 %v7393
        %10827 = vmatpush.bf16.msra.mxu0 %v7385
        %10828 = vmatpush.bf16.msra.mxu0 %v7377
        %10829 = vmatmul.bf16.gmra.mxu0 %v2025
        %v10830 = vpop.f32.mrf.mxu0
        %v10831 = vadd.f32 %v10818, %v10830
        %v10832 = vpop.f32.mrf.mxu0
        %10833 = vdwg.mxu0
        %10834 = vmatpush.bf16.msra.mxu0 %v7497
        %10835 = vmatpush.bf16.msra.mxu0 %v7489
        %10836 = vmatpush.bf16.msra.mxu0 %v7481
        %10837 = vmatpush.bf16.msra.mxu0 %v7473
        %10838 = vmatpush.bf16.msra.mxu0 %v7465
        %10839 = vmatpush.bf16.msra.mxu0 %v7457
        %10840 = vmatpush.bf16.msra.mxu0 %v7449
        %10841 = vmatpush.bf16.msra.mxu0 %v7441
        %10842 = vmatmul.bf16.gmra.mxu0 %v2026
        %v10843 = vpop.f32.mrf.mxu0
        %v10844 = vadd.f32 %v10831, %v10843
        %v10845 = vpop.f32.mrf.mxu0
        %10846 = vdwg.mxu0
        %10847 = vmatpush.bf16.msra.mxu0 %v7561
        %10848 = vmatpush.bf16.msra.mxu0 %v7553
        %10849 = vmatpush.bf16.msra.mxu0 %v7545
        %10850 = vmatpush.bf16.msra.mxu0 %v7537
        %10851 = vmatpush.bf16.msra.mxu0 %v7529
        %10852 = vmatpush.bf16.msra.mxu0 %v7521
        %10853 = vmatpush.bf16.msra.mxu0 %v7513
        %10854 = vmatpush.bf16.msra.mxu0 %v7505
        %10855 = vmatmul.bf16.gmra.mxu0 %v2027
        %v10856 = vpop.f32.mrf.mxu0
        %v10857 = vadd.f32 %v10844, %v10856
        %v10858 = vpop.f32.mrf.mxu0
        %10859 = vdwg.mxu0
        %10860 = vmatpush.bf16.msra.mxu0 %v7625
        %10861 = vmatpush.bf16.msra.mxu0 %v7617
        %10862 = vmatpush.bf16.msra.mxu0 %v7609
        %10863 = vmatpush.bf16.msra.mxu0 %v7601
        %10864 = vmatpush.bf16.msra.mxu0 %v7593
        %10865 = vmatpush.bf16.msra.mxu0 %v7585
        %10866 = vmatpush.bf16.msra.mxu0 %v7577
        %10867 = vmatpush.bf16.msra.mxu0 %v7569
        %10868 = vmatmul.bf16.gmra.mxu0 %v2028
        %v10869 = vpop.f32.mrf.mxu0
        %v10870 = vadd.f32 %v10857, %v10869
        %v10871 = vpop.f32.mrf.mxu0
        %10872 = vdwg.mxu0
        %10873 = vmatpush.bf16.msra.mxu0 %v7689
        %10874 = vmatpush.bf16.msra.mxu0 %v7681
        %10875 = vmatpush.bf16.msra.mxu0 %v7673
        %10876 = vmatpush.bf16.msra.mxu0 %v7665
        %10877 = vmatpush.bf16.msra.mxu0 %v7657
        %10878 = vmatpush.bf16.msra.mxu0 %v7649
        %10879 = vmatpush.bf16.msra.mxu0 %v7641
        %10880 = vmatpush.bf16.msra.mxu0 %v7633
        %10881 = vmatmul.bf16.gmra.mxu0 %v2029
        %v10882 = vpop.f32.mrf.mxu0
        %v10883 = vadd.f32 %v10870, %v10882
        %v10884 = vpop.f32.mrf.mxu0
        %10885 = vdwg.mxu0
        %10886 = vmatpush.bf16.msra.mxu0 %v7753
        %10887 = vmatpush.bf16.msra.mxu0 %v7745
        %10888 = vmatpush.bf16.msra.mxu0 %v7737
        %10889 = vmatpush.bf16.msra.mxu0 %v7729
        %10890 = vmatpush.bf16.msra.mxu0 %v7721
        %10891 = vmatpush.bf16.msra.mxu0 %v7713
        %10892 = vmatpush.bf16.msra.mxu0 %v7705
        %10893 = vmatpush.bf16.msra.mxu0 %v7697
        %10894 = vmatmul.bf16.gmra.mxu0 %v2030
        %v10895 = vpop.f32.mrf.mxu0
        %v10896 = vadd.f32 %v10883, %v10895
        %v10897 = vpop.f32.mrf.mxu0
        %10898 = vdwg.mxu0
        %10899 = vmatpush.bf16.msra.mxu0 %v7817
        %10900 = vmatpush.bf16.msra.mxu0 %v7809
        %10901 = vmatpush.bf16.msra.mxu0 %v7801
        %10902 = vmatpush.bf16.msra.mxu0 %v7793
        %10903 = vmatpush.bf16.msra.mxu0 %v7785
        %10904 = vmatpush.bf16.msra.mxu0 %v7777
        %10905 = vmatpush.bf16.msra.mxu0 %v7769
        %10906 = vmatpush.bf16.msra.mxu0 %v7761
        %10907 = vmatmul.bf16.gmra.mxu0 %v2031
        %v10908 = vpop.f32.mrf.mxu0
        %v10909 = vadd.f32 %v10896, %v10908
        %v10910 = vpop.f32.mrf.mxu0
        %10911 = vdwg.mxu0
        %10912 = vmatpush.bf16.msra.mxu0 %v7881
        %10913 = vmatpush.bf16.msra.mxu0 %v7873
        %10914 = vmatpush.bf16.msra.mxu0 %v7865
        %10915 = vmatpush.bf16.msra.mxu0 %v7857
        %10916 = vmatpush.bf16.msra.mxu0 %v7849
        %10917 = vmatpush.bf16.msra.mxu0 %v7841
        %10918 = vmatpush.bf16.msra.mxu0 %v7833
        %10919 = vmatpush.bf16.msra.mxu0 %v7825
        %10920 = vmatmul.bf16.gmra.mxu0 %v2032
        %v10921 = vpop.f32.mrf.mxu0
        %v10922 = vadd.f32 %v10909, %v10921
        %v10923 = vpop.f32.mrf.mxu0
        %10924 = vdwg.mxu0
        %10925 = vmatpush.bf16.msra.mxu0 %v7945
        %10926 = vmatpush.bf16.msra.mxu0 %v7937
        %10927 = vmatpush.bf16.msra.mxu0 %v7929
        %10928 = vmatpush.bf16.msra.mxu0 %v7921
        %10929 = vmatpush.bf16.msra.mxu0 %v7913
        %10930 = vmatpush.bf16.msra.mxu0 %v7905
        %10931 = vmatpush.bf16.msra.mxu0 %v7897
        %10932 = vmatpush.bf16.msra.mxu0 %v7889
        %10933 = vmatmul.bf16.gmra.mxu0 %v2033
        %v10934 = vpop.f32.mrf.mxu0
        %v10935 = vadd.f32 %v10922, %v10934
        %v10936 = vpop.f32.mrf.mxu0
        %10937 = vdwg.mxu0
        %10938 = vmatpush.bf16.msra.mxu0 %v8009
        %10939 = vmatpush.bf16.msra.mxu0 %v8001
        %10940 = vmatpush.bf16.msra.mxu0 %v7993
        %10941 = vmatpush.bf16.msra.mxu0 %v7985
        %10942 = vmatpush.bf16.msra.mxu0 %v7977
        %10943 = vmatpush.bf16.msra.mxu0 %v7969
        %10944 = vmatpush.bf16.msra.mxu0 %v7961
        %10945 = vmatpush.bf16.msra.mxu0 %v7953
        %10946 = vmatmul.bf16.gmra.mxu0 %v2034
        %v10947 = vpop.f32.mrf.mxu0
        %v10948 = vadd.f32 %v10935, %v10947
        %v10949 = vpop.f32.mrf.mxu0
        %10950 = vdwg.mxu0
        %10951 = vmatpush.bf16.msra.mxu0 %v8073
        %10952 = vmatpush.bf16.msra.mxu0 %v8065
        %10953 = vmatpush.bf16.msra.mxu0 %v8057
        %10954 = vmatpush.bf16.msra.mxu0 %v8049
        %10955 = vmatpush.bf16.msra.mxu0 %v8041
        %10956 = vmatpush.bf16.msra.mxu0 %v8033
        %10957 = vmatpush.bf16.msra.mxu0 %v8025
        %10958 = vmatpush.bf16.msra.mxu0 %v8017
        %10959 = vmatmul.bf16.gmra.mxu0 %v2035
        %v10960 = vpop.f32.mrf.mxu0
        %v10961 = vadd.f32 %v10948, %v10960
        %v10962 = vpop.f32.mrf.mxu0
        %10963 = vdwg.mxu0
        %10964 = vmatpush.bf16.msra.mxu0 %v8137
        %10965 = vmatpush.bf16.msra.mxu0 %v8129
        %10966 = vmatpush.bf16.msra.mxu0 %v8121
        %10967 = vmatpush.bf16.msra.mxu0 %v8113
        %10968 = vmatpush.bf16.msra.mxu0 %v8105
        %10969 = vmatpush.bf16.msra.mxu0 %v8097
        %10970 = vmatpush.bf16.msra.mxu0 %v8089
        %10971 = vmatpush.bf16.msra.mxu0 %v8081
        %10972 = vmatmul.bf16.gmra.mxu0 %v2036
        %v10973 = vpop.f32.mrf.mxu0
        %v10974 = vadd.f32 %v10961, %v10973
        %v10975 = vpop.f32.mrf.mxu0
        %10976 = vdwg.mxu0
        %10977 = vmatpush.bf16.msra.mxu0 %v8201
        %10978 = vmatpush.bf16.msra.mxu0 %v8193
        %10979 = vmatpush.bf16.msra.mxu0 %v8185
        %10980 = vmatpush.bf16.msra.mxu0 %v8177
        %10981 = vmatpush.bf16.msra.mxu0 %v8169
        %10982 = vmatpush.bf16.msra.mxu0 %v8161
        %10983 = vmatpush.bf16.msra.mxu0 %v8153
        %10984 = vmatpush.bf16.msra.mxu0 %v8145
        %10985 = vmatmul.bf16.gmra.mxu0 %v2037
        %v10986 = vpop.f32.mrf.mxu0
        %v10987 = vadd.f32 %v10974, %v10986
        %v10988 = vpop.f32.mrf.mxu0
        %10989 = vdwg.mxu0
        %10990 = vmatpush.bf16.msra.mxu0 %v6730
        %10991 = vmatpush.bf16.msra.mxu0 %v6722
        %10992 = vmatpush.bf16.msra.mxu0 %v6714
        %10993 = vmatpush.bf16.msra.mxu0 %v6706
        %10994 = vmatpush.bf16.msra.mxu0 %v6698
        %10995 = vmatpush.bf16.msra.mxu0 %v6690
        %10996 = vmatpush.bf16.msra.mxu0 %v6682
        %10997 = vmatpush.bf16.msra.mxu0 %v6674
        %10998 = vmatmul.bf16.gmra.mxu0 %v2014
        %v10999 = vpop.f32.mrf.mxu0
        %v11000 = vadd.f32 %v1966, %v10999
        %v11001 = vpop.f32.mrf.mxu0
        %11002 = vdwg.mxu0
        %11003 = vmatpush.bf16.msra.mxu0 %v6794
        %11004 = vmatpush.bf16.msra.mxu0 %v6786
        %11005 = vmatpush.bf16.msra.mxu0 %v6778
        %11006 = vmatpush.bf16.msra.mxu0 %v6770
        %11007 = vmatpush.bf16.msra.mxu0 %v6762
        %11008 = vmatpush.bf16.msra.mxu0 %v6754
        %11009 = vmatpush.bf16.msra.mxu0 %v6746
        %11010 = vmatpush.bf16.msra.mxu0 %v6738
        %11011 = vmatmul.bf16.gmra.mxu0 %v2015
        %v11012 = vpop.f32.mrf.mxu0
        %v11013 = vadd.f32 %v11000, %v11012
        %v11014 = vpop.f32.mrf.mxu0
        %11015 = vdwg.mxu0
        %11016 = vmatpush.bf16.msra.mxu0 %v6858
        %11017 = vmatpush.bf16.msra.mxu0 %v6850
        %11018 = vmatpush.bf16.msra.mxu0 %v6842
        %11019 = vmatpush.bf16.msra.mxu0 %v6834
        %11020 = vmatpush.bf16.msra.mxu0 %v6826
        %11021 = vmatpush.bf16.msra.mxu0 %v6818
        %11022 = vmatpush.bf16.msra.mxu0 %v6810
        %11023 = vmatpush.bf16.msra.mxu0 %v6802
        %11024 = vmatmul.bf16.gmra.mxu0 %v2016
        %v11025 = vpop.f32.mrf.mxu0
        %v11026 = vadd.f32 %v11013, %v11025
        %v11027 = vpop.f32.mrf.mxu0
        %11028 = vdwg.mxu0
        %11029 = vmatpush.bf16.msra.mxu0 %v6922
        %11030 = vmatpush.bf16.msra.mxu0 %v6914
        %11031 = vmatpush.bf16.msra.mxu0 %v6906
        %11032 = vmatpush.bf16.msra.mxu0 %v6898
        %11033 = vmatpush.bf16.msra.mxu0 %v6890
        %11034 = vmatpush.bf16.msra.mxu0 %v6882
        %11035 = vmatpush.bf16.msra.mxu0 %v6874
        %11036 = vmatpush.bf16.msra.mxu0 %v6866
        %11037 = vmatmul.bf16.gmra.mxu0 %v2017
        %v11038 = vpop.f32.mrf.mxu0
        %v11039 = vadd.f32 %v11026, %v11038
        %v11040 = vpop.f32.mrf.mxu0
        %11041 = vdwg.mxu0
        %11042 = vmatpush.bf16.msra.mxu0 %v6986
        %11043 = vmatpush.bf16.msra.mxu0 %v6978
        %11044 = vmatpush.bf16.msra.mxu0 %v6970
        %11045 = vmatpush.bf16.msra.mxu0 %v6962
        %11046 = vmatpush.bf16.msra.mxu0 %v6954
        %11047 = vmatpush.bf16.msra.mxu0 %v6946
        %11048 = vmatpush.bf16.msra.mxu0 %v6938
        %11049 = vmatpush.bf16.msra.mxu0 %v6930
        %11050 = vmatmul.bf16.gmra.mxu0 %v2018
        %v11051 = vpop.f32.mrf.mxu0
        %v11052 = vadd.f32 %v11039, %v11051
        %v11053 = vpop.f32.mrf.mxu0
        %11054 = vdwg.mxu0
        %11055 = vmatpush.bf16.msra.mxu0 %v7050
        %11056 = vmatpush.bf16.msra.mxu0 %v7042
        %11057 = vmatpush.bf16.msra.mxu0 %v7034
        %11058 = vmatpush.bf16.msra.mxu0 %v7026
        %11059 = vmatpush.bf16.msra.mxu0 %v7018
        %11060 = vmatpush.bf16.msra.mxu0 %v7010
        %11061 = vmatpush.bf16.msra.mxu0 %v7002
        %11062 = vmatpush.bf16.msra.mxu0 %v6994
        %11063 = vmatmul.bf16.gmra.mxu0 %v2019
        %v11064 = vpop.f32.mrf.mxu0
        %v11065 = vadd.f32 %v11052, %v11064
        %v11066 = vpop.f32.mrf.mxu0
        %11067 = vdwg.mxu0
        %11068 = vmatpush.bf16.msra.mxu0 %v7114
        %11069 = vmatpush.bf16.msra.mxu0 %v7106
        %11070 = vmatpush.bf16.msra.mxu0 %v7098
        %11071 = vmatpush.bf16.msra.mxu0 %v7090
        %11072 = vmatpush.bf16.msra.mxu0 %v7082
        %11073 = vmatpush.bf16.msra.mxu0 %v7074
        %11074 = vmatpush.bf16.msra.mxu0 %v7066
        %11075 = vmatpush.bf16.msra.mxu0 %v7058
        %11076 = vmatmul.bf16.gmra.mxu0 %v2020
        %v11077 = vpop.f32.mrf.mxu0
        %v11078 = vadd.f32 %v11065, %v11077
        %v11079 = vpop.f32.mrf.mxu0
        %11080 = vdwg.mxu0
        %11081 = vmatpush.bf16.msra.mxu0 %v7178
        %11082 = vmatpush.bf16.msra.mxu0 %v7170
        %11083 = vmatpush.bf16.msra.mxu0 %v7162
        %11084 = vmatpush.bf16.msra.mxu0 %v7154
        %11085 = vmatpush.bf16.msra.mxu0 %v7146
        %11086 = vmatpush.bf16.msra.mxu0 %v7138
        %11087 = vmatpush.bf16.msra.mxu0 %v7130
        %11088 = vmatpush.bf16.msra.mxu0 %v7122
        %11089 = vmatmul.bf16.gmra.mxu0 %v2021
        %v11090 = vpop.f32.mrf.mxu0
        %v11091 = vadd.f32 %v11078, %v11090
        %v11092 = vpop.f32.mrf.mxu0
        %11093 = vdwg.mxu0
        %11094 = vmatpush.bf16.msra.mxu0 %v7242
        %11095 = vmatpush.bf16.msra.mxu0 %v7234
        %11096 = vmatpush.bf16.msra.mxu0 %v7226
        %11097 = vmatpush.bf16.msra.mxu0 %v7218
        %11098 = vmatpush.bf16.msra.mxu0 %v7210
        %11099 = vmatpush.bf16.msra.mxu0 %v7202
        %11100 = vmatpush.bf16.msra.mxu0 %v7194
        %11101 = vmatpush.bf16.msra.mxu0 %v7186
        %11102 = vmatmul.bf16.gmra.mxu0 %v2022
        %v11103 = vpop.f32.mrf.mxu0
        %v11104 = vadd.f32 %v11091, %v11103
        %v11105 = vpop.f32.mrf.mxu0
        %11106 = vdwg.mxu0
        %11107 = vmatpush.bf16.msra.mxu0 %v7306
        %11108 = vmatpush.bf16.msra.mxu0 %v7298
        %11109 = vmatpush.bf16.msra.mxu0 %v7290
        %11110 = vmatpush.bf16.msra.mxu0 %v7282
        %11111 = vmatpush.bf16.msra.mxu0 %v7274
        %11112 = vmatpush.bf16.msra.mxu0 %v7266
        %11113 = vmatpush.bf16.msra.mxu0 %v7258
        %11114 = vmatpush.bf16.msra.mxu0 %v7250
        %11115 = vmatmul.bf16.gmra.mxu0 %v2023
        %v11116 = vpop.f32.mrf.mxu0
        %v11117 = vadd.f32 %v11104, %v11116
        %v11118 = vpop.f32.mrf.mxu0
        %11119 = vdwg.mxu0
        %11120 = vmatpush.bf16.msra.mxu0 %v7370
        %11121 = vmatpush.bf16.msra.mxu0 %v7362
        %11122 = vmatpush.bf16.msra.mxu0 %v7354
        %11123 = vmatpush.bf16.msra.mxu0 %v7346
        %11124 = vmatpush.bf16.msra.mxu0 %v7338
        %11125 = vmatpush.bf16.msra.mxu0 %v7330
        %11126 = vmatpush.bf16.msra.mxu0 %v7322
        %11127 = vmatpush.bf16.msra.mxu0 %v7314
        %11128 = vmatmul.bf16.gmra.mxu0 %v2024
        %v11129 = vpop.f32.mrf.mxu0
        %v11130 = vadd.f32 %v11117, %v11129
        %v11131 = vpop.f32.mrf.mxu0
        %11132 = vdwg.mxu0
        %11133 = vmatpush.bf16.msra.mxu0 %v7434
        %11134 = vmatpush.bf16.msra.mxu0 %v7426
        %11135 = vmatpush.bf16.msra.mxu0 %v7418
        %11136 = vmatpush.bf16.msra.mxu0 %v7410
        %11137 = vmatpush.bf16.msra.mxu0 %v7402
        %11138 = vmatpush.bf16.msra.mxu0 %v7394
        %11139 = vmatpush.bf16.msra.mxu0 %v7386
        %11140 = vmatpush.bf16.msra.mxu0 %v7378
        %11141 = vmatmul.bf16.gmra.mxu0 %v2025
        %v11142 = vpop.f32.mrf.mxu0
        %v11143 = vadd.f32 %v11130, %v11142
        %v11144 = vpop.f32.mrf.mxu0
        %11145 = vdwg.mxu0
        %11146 = vmatpush.bf16.msra.mxu0 %v7498
        %11147 = vmatpush.bf16.msra.mxu0 %v7490
        %11148 = vmatpush.bf16.msra.mxu0 %v7482
        %11149 = vmatpush.bf16.msra.mxu0 %v7474
        %11150 = vmatpush.bf16.msra.mxu0 %v7466
        %11151 = vmatpush.bf16.msra.mxu0 %v7458
        %11152 = vmatpush.bf16.msra.mxu0 %v7450
        %11153 = vmatpush.bf16.msra.mxu0 %v7442
        %11154 = vmatmul.bf16.gmra.mxu0 %v2026
        %v11155 = vpop.f32.mrf.mxu0
        %v11156 = vadd.f32 %v11143, %v11155
        %v11157 = vpop.f32.mrf.mxu0
        %11158 = vdwg.mxu0
        %11159 = vmatpush.bf16.msra.mxu0 %v7562
        %11160 = vmatpush.bf16.msra.mxu0 %v7554
        %11161 = vmatpush.bf16.msra.mxu0 %v7546
        %11162 = vmatpush.bf16.msra.mxu0 %v7538
        %11163 = vmatpush.bf16.msra.mxu0 %v7530
        %11164 = vmatpush.bf16.msra.mxu0 %v7522
        %11165 = vmatpush.bf16.msra.mxu0 %v7514
        %11166 = vmatpush.bf16.msra.mxu0 %v7506
        %11167 = vmatmul.bf16.gmra.mxu0 %v2027
        %v11168 = vpop.f32.mrf.mxu0
        %v11169 = vadd.f32 %v11156, %v11168
        %v11170 = vpop.f32.mrf.mxu0
        %11171 = vdwg.mxu0
        %11172 = vmatpush.bf16.msra.mxu0 %v7626
        %11173 = vmatpush.bf16.msra.mxu0 %v7618
        %11174 = vmatpush.bf16.msra.mxu0 %v7610
        %11175 = vmatpush.bf16.msra.mxu0 %v7602
        %11176 = vmatpush.bf16.msra.mxu0 %v7594
        %11177 = vmatpush.bf16.msra.mxu0 %v7586
        %11178 = vmatpush.bf16.msra.mxu0 %v7578
        %11179 = vmatpush.bf16.msra.mxu0 %v7570
        %11180 = vmatmul.bf16.gmra.mxu0 %v2028
        %v11181 = vpop.f32.mrf.mxu0
        %v11182 = vadd.f32 %v11169, %v11181
        %v11183 = vpop.f32.mrf.mxu0
        %11184 = vdwg.mxu0
        %11185 = vmatpush.bf16.msra.mxu0 %v7690
        %11186 = vmatpush.bf16.msra.mxu0 %v7682
        %11187 = vmatpush.bf16.msra.mxu0 %v7674
        %11188 = vmatpush.bf16.msra.mxu0 %v7666
        %11189 = vmatpush.bf16.msra.mxu0 %v7658
        %11190 = vmatpush.bf16.msra.mxu0 %v7650
        %11191 = vmatpush.bf16.msra.mxu0 %v7642
        %11192 = vmatpush.bf16.msra.mxu0 %v7634
        %11193 = vmatmul.bf16.gmra.mxu0 %v2029
        %v11194 = vpop.f32.mrf.mxu0
        %v11195 = vadd.f32 %v11182, %v11194
        %v11196 = vpop.f32.mrf.mxu0
        %11197 = vdwg.mxu0
        %11198 = vmatpush.bf16.msra.mxu0 %v7754
        %11199 = vmatpush.bf16.msra.mxu0 %v7746
        %11200 = vmatpush.bf16.msra.mxu0 %v7738
        %11201 = vmatpush.bf16.msra.mxu0 %v7730
        %11202 = vmatpush.bf16.msra.mxu0 %v7722
        %11203 = vmatpush.bf16.msra.mxu0 %v7714
        %11204 = vmatpush.bf16.msra.mxu0 %v7706
        %11205 = vmatpush.bf16.msra.mxu0 %v7698
        %11206 = vmatmul.bf16.gmra.mxu0 %v2030
        %v11207 = vpop.f32.mrf.mxu0
        %v11208 = vadd.f32 %v11195, %v11207
        %v11209 = vpop.f32.mrf.mxu0
        %11210 = vdwg.mxu0
        %11211 = vmatpush.bf16.msra.mxu0 %v7818
        %11212 = vmatpush.bf16.msra.mxu0 %v7810
        %11213 = vmatpush.bf16.msra.mxu0 %v7802
        %11214 = vmatpush.bf16.msra.mxu0 %v7794
        %11215 = vmatpush.bf16.msra.mxu0 %v7786
        %11216 = vmatpush.bf16.msra.mxu0 %v7778
        %11217 = vmatpush.bf16.msra.mxu0 %v7770
        %11218 = vmatpush.bf16.msra.mxu0 %v7762
        %11219 = vmatmul.bf16.gmra.mxu0 %v2031
        %v11220 = vpop.f32.mrf.mxu0
        %v11221 = vadd.f32 %v11208, %v11220
        %v11222 = vpop.f32.mrf.mxu0
        %11223 = vdwg.mxu0
        %11224 = vmatpush.bf16.msra.mxu0 %v7882
        %11225 = vmatpush.bf16.msra.mxu0 %v7874
        %11226 = vmatpush.bf16.msra.mxu0 %v7866
        %11227 = vmatpush.bf16.msra.mxu0 %v7858
        %11228 = vmatpush.bf16.msra.mxu0 %v7850
        %11229 = vmatpush.bf16.msra.mxu0 %v7842
        %11230 = vmatpush.bf16.msra.mxu0 %v7834
        %11231 = vmatpush.bf16.msra.mxu0 %v7826
        %11232 = vmatmul.bf16.gmra.mxu0 %v2032
        %v11233 = vpop.f32.mrf.mxu0
        %v11234 = vadd.f32 %v11221, %v11233
        %v11235 = vpop.f32.mrf.mxu0
        %11236 = vdwg.mxu0
        %11237 = vmatpush.bf16.msra.mxu0 %v7946
        %11238 = vmatpush.bf16.msra.mxu0 %v7938
        %11239 = vmatpush.bf16.msra.mxu0 %v7930
        %11240 = vmatpush.bf16.msra.mxu0 %v7922
        %11241 = vmatpush.bf16.msra.mxu0 %v7914
        %11242 = vmatpush.bf16.msra.mxu0 %v7906
        %11243 = vmatpush.bf16.msra.mxu0 %v7898
        %11244 = vmatpush.bf16.msra.mxu0 %v7890
        %11245 = vmatmul.bf16.gmra.mxu0 %v2033
        %v11246 = vpop.f32.mrf.mxu0
        %v11247 = vadd.f32 %v11234, %v11246
        %v11248 = vpop.f32.mrf.mxu0
        %11249 = vdwg.mxu0
        %11250 = vmatpush.bf16.msra.mxu0 %v8010
        %11251 = vmatpush.bf16.msra.mxu0 %v8002
        %11252 = vmatpush.bf16.msra.mxu0 %v7994
        %11253 = vmatpush.bf16.msra.mxu0 %v7986
        %11254 = vmatpush.bf16.msra.mxu0 %v7978
        %11255 = vmatpush.bf16.msra.mxu0 %v7970
        %11256 = vmatpush.bf16.msra.mxu0 %v7962
        %11257 = vmatpush.bf16.msra.mxu0 %v7954
        %11258 = vmatmul.bf16.gmra.mxu0 %v2034
        %v11259 = vpop.f32.mrf.mxu0
        %v11260 = vadd.f32 %v11247, %v11259
        %v11261 = vpop.f32.mrf.mxu0
        %11262 = vdwg.mxu0
        %11263 = vmatpush.bf16.msra.mxu0 %v8074
        %11264 = vmatpush.bf16.msra.mxu0 %v8066
        %11265 = vmatpush.bf16.msra.mxu0 %v8058
        %11266 = vmatpush.bf16.msra.mxu0 %v8050
        %11267 = vmatpush.bf16.msra.mxu0 %v8042
        %11268 = vmatpush.bf16.msra.mxu0 %v8034
        %11269 = vmatpush.bf16.msra.mxu0 %v8026
        %11270 = vmatpush.bf16.msra.mxu0 %v8018
        %11271 = vmatmul.bf16.gmra.mxu0 %v2035
        %v11272 = vpop.f32.mrf.mxu0
        %v11273 = vadd.f32 %v11260, %v11272
        %v11274 = vpop.f32.mrf.mxu0
        %11275 = vdwg.mxu0
        %11276 = vmatpush.bf16.msra.mxu0 %v8138
        %11277 = vmatpush.bf16.msra.mxu0 %v8130
        %11278 = vmatpush.bf16.msra.mxu0 %v8122
        %11279 = vmatpush.bf16.msra.mxu0 %v8114
        %11280 = vmatpush.bf16.msra.mxu0 %v8106
        %11281 = vmatpush.bf16.msra.mxu0 %v8098
        %11282 = vmatpush.bf16.msra.mxu0 %v8090
        %11283 = vmatpush.bf16.msra.mxu0 %v8082
        %11284 = vmatmul.bf16.gmra.mxu0 %v2036
        %v11285 = vpop.f32.mrf.mxu0
        %v11286 = vadd.f32 %v11273, %v11285
        %v11287 = vpop.f32.mrf.mxu0
        %11288 = vdwg.mxu0
        %11289 = vmatpush.bf16.msra.mxu0 %v8202
        %11290 = vmatpush.bf16.msra.mxu0 %v8194
        %11291 = vmatpush.bf16.msra.mxu0 %v8186
        %11292 = vmatpush.bf16.msra.mxu0 %v8178
        %11293 = vmatpush.bf16.msra.mxu0 %v8170
        %11294 = vmatpush.bf16.msra.mxu0 %v8162
        %11295 = vmatpush.bf16.msra.mxu0 %v8154
        %11296 = vmatpush.bf16.msra.mxu0 %v8146
        %11297 = vmatmul.bf16.gmra.mxu0 %v2037
        %v11298 = vpop.f32.mrf.mxu0
        %v11299 = vadd.f32 %v11286, %v11298
        %v11300 = vpop.f32.mrf.mxu0
        %11301 = vdwg.mxu0
        %11302 = vmatpush.bf16.msra.mxu0 %v6731
        %11303 = vmatpush.bf16.msra.mxu0 %v6723
        %11304 = vmatpush.bf16.msra.mxu0 %v6715
        %11305 = vmatpush.bf16.msra.mxu0 %v6707
        %11306 = vmatpush.bf16.msra.mxu0 %v6699
        %11307 = vmatpush.bf16.msra.mxu0 %v6691
        %11308 = vmatpush.bf16.msra.mxu0 %v6683
        %11309 = vmatpush.bf16.msra.mxu0 %v6675
        %11310 = vmatmul.bf16.gmra.mxu0 %v2014
        %v11311 = vpop.f32.mrf.mxu0
        %v11312 = vadd.f32 %v1967, %v11311
        %v11313 = vpop.f32.mrf.mxu0
        %11314 = vdwg.mxu0
        %11315 = vmatpush.bf16.msra.mxu0 %v6795
        %11316 = vmatpush.bf16.msra.mxu0 %v6787
        %11317 = vmatpush.bf16.msra.mxu0 %v6779
        %11318 = vmatpush.bf16.msra.mxu0 %v6771
        %11319 = vmatpush.bf16.msra.mxu0 %v6763
        %11320 = vmatpush.bf16.msra.mxu0 %v6755
        %11321 = vmatpush.bf16.msra.mxu0 %v6747
        %11322 = vmatpush.bf16.msra.mxu0 %v6739
        %11323 = vmatmul.bf16.gmra.mxu0 %v2015
        %v11324 = vpop.f32.mrf.mxu0
        %v11325 = vadd.f32 %v11312, %v11324
        %v11326 = vpop.f32.mrf.mxu0
        %11327 = vdwg.mxu0
        %11328 = vmatpush.bf16.msra.mxu0 %v6859
        %11329 = vmatpush.bf16.msra.mxu0 %v6851
        %11330 = vmatpush.bf16.msra.mxu0 %v6843
        %11331 = vmatpush.bf16.msra.mxu0 %v6835
        %11332 = vmatpush.bf16.msra.mxu0 %v6827
        %11333 = vmatpush.bf16.msra.mxu0 %v6819
        %11334 = vmatpush.bf16.msra.mxu0 %v6811
        %11335 = vmatpush.bf16.msra.mxu0 %v6803
        %11336 = vmatmul.bf16.gmra.mxu0 %v2016
        %v11337 = vpop.f32.mrf.mxu0
        %v11338 = vadd.f32 %v11325, %v11337
        %v11339 = vpop.f32.mrf.mxu0
        %11340 = vdwg.mxu0
        %11341 = vmatpush.bf16.msra.mxu0 %v6923
        %11342 = vmatpush.bf16.msra.mxu0 %v6915
        %11343 = vmatpush.bf16.msra.mxu0 %v6907
        %11344 = vmatpush.bf16.msra.mxu0 %v6899
        %11345 = vmatpush.bf16.msra.mxu0 %v6891
        %11346 = vmatpush.bf16.msra.mxu0 %v6883
        %11347 = vmatpush.bf16.msra.mxu0 %v6875
        %11348 = vmatpush.bf16.msra.mxu0 %v6867
        %11349 = vmatmul.bf16.gmra.mxu0 %v2017
        %v11350 = vpop.f32.mrf.mxu0
        %v11351 = vadd.f32 %v11338, %v11350
        %v11352 = vpop.f32.mrf.mxu0
        %11353 = vdwg.mxu0
        %11354 = vmatpush.bf16.msra.mxu0 %v6987
        %11355 = vmatpush.bf16.msra.mxu0 %v6979
        %11356 = vmatpush.bf16.msra.mxu0 %v6971
        %11357 = vmatpush.bf16.msra.mxu0 %v6963
        %11358 = vmatpush.bf16.msra.mxu0 %v6955
        %11359 = vmatpush.bf16.msra.mxu0 %v6947
        %11360 = vmatpush.bf16.msra.mxu0 %v6939
        %11361 = vmatpush.bf16.msra.mxu0 %v6931
        %11362 = vmatmul.bf16.gmra.mxu0 %v2018
        %v11363 = vpop.f32.mrf.mxu0
        %v11364 = vadd.f32 %v11351, %v11363
        %v11365 = vpop.f32.mrf.mxu0
        %11366 = vdwg.mxu0
        %11367 = vmatpush.bf16.msra.mxu0 %v7051
        %11368 = vmatpush.bf16.msra.mxu0 %v7043
        %11369 = vmatpush.bf16.msra.mxu0 %v7035
        %11370 = vmatpush.bf16.msra.mxu0 %v7027
        %11371 = vmatpush.bf16.msra.mxu0 %v7019
        %11372 = vmatpush.bf16.msra.mxu0 %v7011
        %11373 = vmatpush.bf16.msra.mxu0 %v7003
        %11374 = vmatpush.bf16.msra.mxu0 %v6995
        %11375 = vmatmul.bf16.gmra.mxu0 %v2019
        %v11376 = vpop.f32.mrf.mxu0
        %v11377 = vadd.f32 %v11364, %v11376
        %v11378 = vpop.f32.mrf.mxu0
        %11379 = vdwg.mxu0
        %11380 = vmatpush.bf16.msra.mxu0 %v7115
        %11381 = vmatpush.bf16.msra.mxu0 %v7107
        %11382 = vmatpush.bf16.msra.mxu0 %v7099
        %11383 = vmatpush.bf16.msra.mxu0 %v7091
        %11384 = vmatpush.bf16.msra.mxu0 %v7083
        %11385 = vmatpush.bf16.msra.mxu0 %v7075
        %11386 = vmatpush.bf16.msra.mxu0 %v7067
        %11387 = vmatpush.bf16.msra.mxu0 %v7059
        %11388 = vmatmul.bf16.gmra.mxu0 %v2020
        %v11389 = vpop.f32.mrf.mxu0
        %v11390 = vadd.f32 %v11377, %v11389
        %v11391 = vpop.f32.mrf.mxu0
        %11392 = vdwg.mxu0
        %11393 = vmatpush.bf16.msra.mxu0 %v7179
        %11394 = vmatpush.bf16.msra.mxu0 %v7171
        %11395 = vmatpush.bf16.msra.mxu0 %v7163
        %11396 = vmatpush.bf16.msra.mxu0 %v7155
        %11397 = vmatpush.bf16.msra.mxu0 %v7147
        %11398 = vmatpush.bf16.msra.mxu0 %v7139
        %11399 = vmatpush.bf16.msra.mxu0 %v7131
        %11400 = vmatpush.bf16.msra.mxu0 %v7123
        %11401 = vmatmul.bf16.gmra.mxu0 %v2021
        %v11402 = vpop.f32.mrf.mxu0
        %v11403 = vadd.f32 %v11390, %v11402
        %v11404 = vpop.f32.mrf.mxu0
        %11405 = vdwg.mxu0
        %11406 = vmatpush.bf16.msra.mxu0 %v7243
        %11407 = vmatpush.bf16.msra.mxu0 %v7235
        %11408 = vmatpush.bf16.msra.mxu0 %v7227
        %11409 = vmatpush.bf16.msra.mxu0 %v7219
        %11410 = vmatpush.bf16.msra.mxu0 %v7211
        %11411 = vmatpush.bf16.msra.mxu0 %v7203
        %11412 = vmatpush.bf16.msra.mxu0 %v7195
        %11413 = vmatpush.bf16.msra.mxu0 %v7187
        %11414 = vmatmul.bf16.gmra.mxu0 %v2022
        %v11415 = vpop.f32.mrf.mxu0
        %v11416 = vadd.f32 %v11403, %v11415
        %v11417 = vpop.f32.mrf.mxu0
        %11418 = vdwg.mxu0
        %11419 = vmatpush.bf16.msra.mxu0 %v7307
        %11420 = vmatpush.bf16.msra.mxu0 %v7299
        %11421 = vmatpush.bf16.msra.mxu0 %v7291
        %11422 = vmatpush.bf16.msra.mxu0 %v7283
        %11423 = vmatpush.bf16.msra.mxu0 %v7275
        %11424 = vmatpush.bf16.msra.mxu0 %v7267
        %11425 = vmatpush.bf16.msra.mxu0 %v7259
        %11426 = vmatpush.bf16.msra.mxu0 %v7251
        %11427 = vmatmul.bf16.gmra.mxu0 %v2023
        %v11428 = vpop.f32.mrf.mxu0
        %v11429 = vadd.f32 %v11416, %v11428
        %v11430 = vpop.f32.mrf.mxu0
        %11431 = vdwg.mxu0
        %11432 = vmatpush.bf16.msra.mxu0 %v7371
        %11433 = vmatpush.bf16.msra.mxu0 %v7363
        %11434 = vmatpush.bf16.msra.mxu0 %v7355
        %11435 = vmatpush.bf16.msra.mxu0 %v7347
        %11436 = vmatpush.bf16.msra.mxu0 %v7339
        %11437 = vmatpush.bf16.msra.mxu0 %v7331
        %11438 = vmatpush.bf16.msra.mxu0 %v7323
        %11439 = vmatpush.bf16.msra.mxu0 %v7315
        %11440 = vmatmul.bf16.gmra.mxu0 %v2024
        %v11441 = vpop.f32.mrf.mxu0
        %v11442 = vadd.f32 %v11429, %v11441
        %v11443 = vpop.f32.mrf.mxu0
        %11444 = vdwg.mxu0
        %11445 = vmatpush.bf16.msra.mxu0 %v7435
        %11446 = vmatpush.bf16.msra.mxu0 %v7427
        %11447 = vmatpush.bf16.msra.mxu0 %v7419
        %11448 = vmatpush.bf16.msra.mxu0 %v7411
        %11449 = vmatpush.bf16.msra.mxu0 %v7403
        %11450 = vmatpush.bf16.msra.mxu0 %v7395
        %11451 = vmatpush.bf16.msra.mxu0 %v7387
        %11452 = vmatpush.bf16.msra.mxu0 %v7379
        %11453 = vmatmul.bf16.gmra.mxu0 %v2025
        %v11454 = vpop.f32.mrf.mxu0
        %v11455 = vadd.f32 %v11442, %v11454
        %v11456 = vpop.f32.mrf.mxu0
        %11457 = vdwg.mxu0
        %11458 = vmatpush.bf16.msra.mxu0 %v7499
        %11459 = vmatpush.bf16.msra.mxu0 %v7491
        %11460 = vmatpush.bf16.msra.mxu0 %v7483
        %11461 = vmatpush.bf16.msra.mxu0 %v7475
        %11462 = vmatpush.bf16.msra.mxu0 %v7467
        %11463 = vmatpush.bf16.msra.mxu0 %v7459
        %11464 = vmatpush.bf16.msra.mxu0 %v7451
        %11465 = vmatpush.bf16.msra.mxu0 %v7443
        %11466 = vmatmul.bf16.gmra.mxu0 %v2026
        %v11467 = vpop.f32.mrf.mxu0
        %v11468 = vadd.f32 %v11455, %v11467
        %v11469 = vpop.f32.mrf.mxu0
        %11470 = vdwg.mxu0
        %11471 = vmatpush.bf16.msra.mxu0 %v7563
        %11472 = vmatpush.bf16.msra.mxu0 %v7555
        %11473 = vmatpush.bf16.msra.mxu0 %v7547
        %11474 = vmatpush.bf16.msra.mxu0 %v7539
        %11475 = vmatpush.bf16.msra.mxu0 %v7531
        %11476 = vmatpush.bf16.msra.mxu0 %v7523
        %11477 = vmatpush.bf16.msra.mxu0 %v7515
        %11478 = vmatpush.bf16.msra.mxu0 %v7507
        %11479 = vmatmul.bf16.gmra.mxu0 %v2027
        %v11480 = vpop.f32.mrf.mxu0
        %v11481 = vadd.f32 %v11468, %v11480
        %v11482 = vpop.f32.mrf.mxu0
        %11483 = vdwg.mxu0
        %11484 = vmatpush.bf16.msra.mxu0 %v7627
        %11485 = vmatpush.bf16.msra.mxu0 %v7619
        %11486 = vmatpush.bf16.msra.mxu0 %v7611
        %11487 = vmatpush.bf16.msra.mxu0 %v7603
        %11488 = vmatpush.bf16.msra.mxu0 %v7595
        %11489 = vmatpush.bf16.msra.mxu0 %v7587
        %11490 = vmatpush.bf16.msra.mxu0 %v7579
        %11491 = vmatpush.bf16.msra.mxu0 %v7571
        %11492 = vmatmul.bf16.gmra.mxu0 %v2028
        %v11493 = vpop.f32.mrf.mxu0
        %v11494 = vadd.f32 %v11481, %v11493
        %v11495 = vpop.f32.mrf.mxu0
        %11496 = vdwg.mxu0
        %11497 = vmatpush.bf16.msra.mxu0 %v7691
        %11498 = vmatpush.bf16.msra.mxu0 %v7683
        %11499 = vmatpush.bf16.msra.mxu0 %v7675
        %11500 = vmatpush.bf16.msra.mxu0 %v7667
        %11501 = vmatpush.bf16.msra.mxu0 %v7659
        %11502 = vmatpush.bf16.msra.mxu0 %v7651
        %11503 = vmatpush.bf16.msra.mxu0 %v7643
        %11504 = vmatpush.bf16.msra.mxu0 %v7635
        %11505 = vmatmul.bf16.gmra.mxu0 %v2029
        %v11506 = vpop.f32.mrf.mxu0
        %v11507 = vadd.f32 %v11494, %v11506
        %v11508 = vpop.f32.mrf.mxu0
        %11509 = vdwg.mxu0
        %11510 = vmatpush.bf16.msra.mxu0 %v7755
        %11511 = vmatpush.bf16.msra.mxu0 %v7747
        %11512 = vmatpush.bf16.msra.mxu0 %v7739
        %11513 = vmatpush.bf16.msra.mxu0 %v7731
        %11514 = vmatpush.bf16.msra.mxu0 %v7723
        %11515 = vmatpush.bf16.msra.mxu0 %v7715
        %11516 = vmatpush.bf16.msra.mxu0 %v7707
        %11517 = vmatpush.bf16.msra.mxu0 %v7699
        %11518 = vmatmul.bf16.gmra.mxu0 %v2030
        %v11519 = vpop.f32.mrf.mxu0
        %v11520 = vadd.f32 %v11507, %v11519
        %v11521 = vpop.f32.mrf.mxu0
        %11522 = vdwg.mxu0
        %11523 = vmatpush.bf16.msra.mxu0 %v7819
        %11524 = vmatpush.bf16.msra.mxu0 %v7811
        %11525 = vmatpush.bf16.msra.mxu0 %v7803
        %11526 = vmatpush.bf16.msra.mxu0 %v7795
        %11527 = vmatpush.bf16.msra.mxu0 %v7787
        %11528 = vmatpush.bf16.msra.mxu0 %v7779
        %11529 = vmatpush.bf16.msra.mxu0 %v7771
        %11530 = vmatpush.bf16.msra.mxu0 %v7763
        %11531 = vmatmul.bf16.gmra.mxu0 %v2031
        %v11532 = vpop.f32.mrf.mxu0
        %v11533 = vadd.f32 %v11520, %v11532
        %v11534 = vpop.f32.mrf.mxu0
        %11535 = vdwg.mxu0
        %11536 = vmatpush.bf16.msra.mxu0 %v7883
        %11537 = vmatpush.bf16.msra.mxu0 %v7875
        %11538 = vmatpush.bf16.msra.mxu0 %v7867
        %11539 = vmatpush.bf16.msra.mxu0 %v7859
        %11540 = vmatpush.bf16.msra.mxu0 %v7851
        %11541 = vmatpush.bf16.msra.mxu0 %v7843
        %11542 = vmatpush.bf16.msra.mxu0 %v7835
        %11543 = vmatpush.bf16.msra.mxu0 %v7827
        %11544 = vmatmul.bf16.gmra.mxu0 %v2032
        %v11545 = vpop.f32.mrf.mxu0
        %v11546 = vadd.f32 %v11533, %v11545
        %v11547 = vpop.f32.mrf.mxu0
        %11548 = vdwg.mxu0
        %11549 = vmatpush.bf16.msra.mxu0 %v7947
        %11550 = vmatpush.bf16.msra.mxu0 %v7939
        %11551 = vmatpush.bf16.msra.mxu0 %v7931
        %11552 = vmatpush.bf16.msra.mxu0 %v7923
        %11553 = vmatpush.bf16.msra.mxu0 %v7915
        %11554 = vmatpush.bf16.msra.mxu0 %v7907
        %11555 = vmatpush.bf16.msra.mxu0 %v7899
        %11556 = vmatpush.bf16.msra.mxu0 %v7891
        %11557 = vmatmul.bf16.gmra.mxu0 %v2033
        %v11558 = vpop.f32.mrf.mxu0
        %v11559 = vadd.f32 %v11546, %v11558
        %v11560 = vpop.f32.mrf.mxu0
        %11561 = vdwg.mxu0
        %11562 = vmatpush.bf16.msra.mxu0 %v8011
        %11563 = vmatpush.bf16.msra.mxu0 %v8003
        %11564 = vmatpush.bf16.msra.mxu0 %v7995
        %11565 = vmatpush.bf16.msra.mxu0 %v7987
        %11566 = vmatpush.bf16.msra.mxu0 %v7979
        %11567 = vmatpush.bf16.msra.mxu0 %v7971
        %11568 = vmatpush.bf16.msra.mxu0 %v7963
        %11569 = vmatpush.bf16.msra.mxu0 %v7955
        %11570 = vmatmul.bf16.gmra.mxu0 %v2034
        %v11571 = vpop.f32.mrf.mxu0
        %v11572 = vadd.f32 %v11559, %v11571
        %v11573 = vpop.f32.mrf.mxu0
        %11574 = vdwg.mxu0
        %11575 = vmatpush.bf16.msra.mxu0 %v8075
        %11576 = vmatpush.bf16.msra.mxu0 %v8067
        %11577 = vmatpush.bf16.msra.mxu0 %v8059
        %11578 = vmatpush.bf16.msra.mxu0 %v8051
        %11579 = vmatpush.bf16.msra.mxu0 %v8043
        %11580 = vmatpush.bf16.msra.mxu0 %v8035
        %11581 = vmatpush.bf16.msra.mxu0 %v8027
        %11582 = vmatpush.bf16.msra.mxu0 %v8019
        %11583 = vmatmul.bf16.gmra.mxu0 %v2035
        %v11584 = vpop.f32.mrf.mxu0
        %v11585 = vadd.f32 %v11572, %v11584
        %v11586 = vpop.f32.mrf.mxu0
        %11587 = vdwg.mxu0
        %11588 = vmatpush.bf16.msra.mxu0 %v8139
        %11589 = vmatpush.bf16.msra.mxu0 %v8131
        %11590 = vmatpush.bf16.msra.mxu0 %v8123
        %11591 = vmatpush.bf16.msra.mxu0 %v8115
        %11592 = vmatpush.bf16.msra.mxu0 %v8107
        %11593 = vmatpush.bf16.msra.mxu0 %v8099
        %11594 = vmatpush.bf16.msra.mxu0 %v8091
        %11595 = vmatpush.bf16.msra.mxu0 %v8083
        %11596 = vmatmul.bf16.gmra.mxu0 %v2036
        %v11597 = vpop.f32.mrf.mxu0
        %v11598 = vadd.f32 %v11585, %v11597
        %v11599 = vpop.f32.mrf.mxu0
        %11600 = vdwg.mxu0
        %11601 = vmatpush.bf16.msra.mxu0 %v8203
        %11602 = vmatpush.bf16.msra.mxu0 %v8195
        %11603 = vmatpush.bf16.msra.mxu0 %v8187
        %11604 = vmatpush.bf16.msra.mxu0 %v8179
        %11605 = vmatpush.bf16.msra.mxu0 %v8171
        %11606 = vmatpush.bf16.msra.mxu0 %v8163
        %11607 = vmatpush.bf16.msra.mxu0 %v8155
        %11608 = vmatpush.bf16.msra.mxu0 %v8147
        %11609 = vmatmul.bf16.gmra.mxu0 %v2037
        %v11610 = vpop.f32.mrf.mxu0
        %v11611 = vadd.f32 %v11598, %v11610
        %v11612 = vpop.f32.mrf.mxu0
        %11613 = vdwg.mxu0
        %11614 = vmatpush.bf16.msra.mxu0 %v6732
        %11615 = vmatpush.bf16.msra.mxu0 %v6724
        %11616 = vmatpush.bf16.msra.mxu0 %v6716
        %11617 = vmatpush.bf16.msra.mxu0 %v6708
        %11618 = vmatpush.bf16.msra.mxu0 %v6700
        %11619 = vmatpush.bf16.msra.mxu0 %v6692
        %11620 = vmatpush.bf16.msra.mxu0 %v6684
        %11621 = vmatpush.bf16.msra.mxu0 %v6676
        %11622 = vmatmul.bf16.gmra.mxu0 %v2014
        %v11623 = vpop.f32.mrf.mxu0
        %v11624 = vadd.f32 %v1968, %v11623
        %v11625 = vpop.f32.mrf.mxu0
        %11626 = vdwg.mxu0
        %11627 = vmatpush.bf16.msra.mxu0 %v6796
        %11628 = vmatpush.bf16.msra.mxu0 %v6788
        %11629 = vmatpush.bf16.msra.mxu0 %v6780
        %11630 = vmatpush.bf16.msra.mxu0 %v6772
        %11631 = vmatpush.bf16.msra.mxu0 %v6764
        %11632 = vmatpush.bf16.msra.mxu0 %v6756
        %11633 = vmatpush.bf16.msra.mxu0 %v6748
        %11634 = vmatpush.bf16.msra.mxu0 %v6740
        %11635 = vmatmul.bf16.gmra.mxu0 %v2015
        %v11636 = vpop.f32.mrf.mxu0
        %v11637 = vadd.f32 %v11624, %v11636
        %v11638 = vpop.f32.mrf.mxu0
        %11639 = vdwg.mxu0
        %11640 = vmatpush.bf16.msra.mxu0 %v6860
        %11641 = vmatpush.bf16.msra.mxu0 %v6852
        %11642 = vmatpush.bf16.msra.mxu0 %v6844
        %11643 = vmatpush.bf16.msra.mxu0 %v6836
        %11644 = vmatpush.bf16.msra.mxu0 %v6828
        %11645 = vmatpush.bf16.msra.mxu0 %v6820
        %11646 = vmatpush.bf16.msra.mxu0 %v6812
        %11647 = vmatpush.bf16.msra.mxu0 %v6804
        %11648 = vmatmul.bf16.gmra.mxu0 %v2016
        %v11649 = vpop.f32.mrf.mxu0
        %v11650 = vadd.f32 %v11637, %v11649
        %v11651 = vpop.f32.mrf.mxu0
        %11652 = vdwg.mxu0
        %11653 = vmatpush.bf16.msra.mxu0 %v6924
        %11654 = vmatpush.bf16.msra.mxu0 %v6916
        %11655 = vmatpush.bf16.msra.mxu0 %v6908
        %11656 = vmatpush.bf16.msra.mxu0 %v6900
        %11657 = vmatpush.bf16.msra.mxu0 %v6892
        %11658 = vmatpush.bf16.msra.mxu0 %v6884
        %11659 = vmatpush.bf16.msra.mxu0 %v6876
        %11660 = vmatpush.bf16.msra.mxu0 %v6868
        %11661 = vmatmul.bf16.gmra.mxu0 %v2017
        %v11662 = vpop.f32.mrf.mxu0
        %v11663 = vadd.f32 %v11650, %v11662
        %v11664 = vpop.f32.mrf.mxu0
        %11665 = vdwg.mxu0
        %11666 = vmatpush.bf16.msra.mxu0 %v6988
        %11667 = vmatpush.bf16.msra.mxu0 %v6980
        %11668 = vmatpush.bf16.msra.mxu0 %v6972
        %11669 = vmatpush.bf16.msra.mxu0 %v6964
        %11670 = vmatpush.bf16.msra.mxu0 %v6956
        %11671 = vmatpush.bf16.msra.mxu0 %v6948
        %11672 = vmatpush.bf16.msra.mxu0 %v6940
        %11673 = vmatpush.bf16.msra.mxu0 %v6932
        %11674 = vmatmul.bf16.gmra.mxu0 %v2018
        %v11675 = vpop.f32.mrf.mxu0
        %v11676 = vadd.f32 %v11663, %v11675
        %v11677 = vpop.f32.mrf.mxu0
        %11678 = vdwg.mxu0
        %11679 = vmatpush.bf16.msra.mxu0 %v7052
        %11680 = vmatpush.bf16.msra.mxu0 %v7044
        %11681 = vmatpush.bf16.msra.mxu0 %v7036
        %11682 = vmatpush.bf16.msra.mxu0 %v7028
        %11683 = vmatpush.bf16.msra.mxu0 %v7020
        %11684 = vmatpush.bf16.msra.mxu0 %v7012
        %11685 = vmatpush.bf16.msra.mxu0 %v7004
        %11686 = vmatpush.bf16.msra.mxu0 %v6996
        %11687 = vmatmul.bf16.gmra.mxu0 %v2019
        %v11688 = vpop.f32.mrf.mxu0
        %v11689 = vadd.f32 %v11676, %v11688
        %v11690 = vpop.f32.mrf.mxu0
        %11691 = vdwg.mxu0
        %11692 = vmatpush.bf16.msra.mxu0 %v7116
        %11693 = vmatpush.bf16.msra.mxu0 %v7108
        %11694 = vmatpush.bf16.msra.mxu0 %v7100
        %11695 = vmatpush.bf16.msra.mxu0 %v7092
        %11696 = vmatpush.bf16.msra.mxu0 %v7084
        %11697 = vmatpush.bf16.msra.mxu0 %v7076
        %11698 = vmatpush.bf16.msra.mxu0 %v7068
        %11699 = vmatpush.bf16.msra.mxu0 %v7060
        %11700 = vmatmul.bf16.gmra.mxu0 %v2020
        %v11701 = vpop.f32.mrf.mxu0
        %v11702 = vadd.f32 %v11689, %v11701
        %v11703 = vpop.f32.mrf.mxu0
        %11704 = vdwg.mxu0
        %11705 = vmatpush.bf16.msra.mxu0 %v7180
        %11706 = vmatpush.bf16.msra.mxu0 %v7172
        %11707 = vmatpush.bf16.msra.mxu0 %v7164
        %11708 = vmatpush.bf16.msra.mxu0 %v7156
        %11709 = vmatpush.bf16.msra.mxu0 %v7148
        %11710 = vmatpush.bf16.msra.mxu0 %v7140
        %11711 = vmatpush.bf16.msra.mxu0 %v7132
        %11712 = vmatpush.bf16.msra.mxu0 %v7124
        %11713 = vmatmul.bf16.gmra.mxu0 %v2021
        %v11714 = vpop.f32.mrf.mxu0
        %v11715 = vadd.f32 %v11702, %v11714
        %v11716 = vpop.f32.mrf.mxu0
        %11717 = vdwg.mxu0
        %11718 = vmatpush.bf16.msra.mxu0 %v7244
        %11719 = vmatpush.bf16.msra.mxu0 %v7236
        %11720 = vmatpush.bf16.msra.mxu0 %v7228
        %11721 = vmatpush.bf16.msra.mxu0 %v7220
        %11722 = vmatpush.bf16.msra.mxu0 %v7212
        %11723 = vmatpush.bf16.msra.mxu0 %v7204
        %11724 = vmatpush.bf16.msra.mxu0 %v7196
        %11725 = vmatpush.bf16.msra.mxu0 %v7188
        %11726 = vmatmul.bf16.gmra.mxu0 %v2022
        %v11727 = vpop.f32.mrf.mxu0
        %v11728 = vadd.f32 %v11715, %v11727
        %v11729 = vpop.f32.mrf.mxu0
        %11730 = vdwg.mxu0
        %11731 = vmatpush.bf16.msra.mxu0 %v7308
        %11732 = vmatpush.bf16.msra.mxu0 %v7300
        %11733 = vmatpush.bf16.msra.mxu0 %v7292
        %11734 = vmatpush.bf16.msra.mxu0 %v7284
        %11735 = vmatpush.bf16.msra.mxu0 %v7276
        %11736 = vmatpush.bf16.msra.mxu0 %v7268
        %11737 = vmatpush.bf16.msra.mxu0 %v7260
        %11738 = vmatpush.bf16.msra.mxu0 %v7252
        %11739 = vmatmul.bf16.gmra.mxu0 %v2023
        %v11740 = vpop.f32.mrf.mxu0
        %v11741 = vadd.f32 %v11728, %v11740
        %v11742 = vpop.f32.mrf.mxu0
        %11743 = vdwg.mxu0
        %11744 = vmatpush.bf16.msra.mxu0 %v7372
        %11745 = vmatpush.bf16.msra.mxu0 %v7364
        %11746 = vmatpush.bf16.msra.mxu0 %v7356
        %11747 = vmatpush.bf16.msra.mxu0 %v7348
        %11748 = vmatpush.bf16.msra.mxu0 %v7340
        %11749 = vmatpush.bf16.msra.mxu0 %v7332
        %11750 = vmatpush.bf16.msra.mxu0 %v7324
        %11751 = vmatpush.bf16.msra.mxu0 %v7316
        %11752 = vmatmul.bf16.gmra.mxu0 %v2024
        %v11753 = vpop.f32.mrf.mxu0
        %v11754 = vadd.f32 %v11741, %v11753
        %v11755 = vpop.f32.mrf.mxu0
        %11756 = vdwg.mxu0
        %11757 = vmatpush.bf16.msra.mxu0 %v7436
        %11758 = vmatpush.bf16.msra.mxu0 %v7428
        %11759 = vmatpush.bf16.msra.mxu0 %v7420
        %11760 = vmatpush.bf16.msra.mxu0 %v7412
        %11761 = vmatpush.bf16.msra.mxu0 %v7404
        %11762 = vmatpush.bf16.msra.mxu0 %v7396
        %11763 = vmatpush.bf16.msra.mxu0 %v7388
        %11764 = vmatpush.bf16.msra.mxu0 %v7380
        %11765 = vmatmul.bf16.gmra.mxu0 %v2025
        %v11766 = vpop.f32.mrf.mxu0
        %v11767 = vadd.f32 %v11754, %v11766
        %v11768 = vpop.f32.mrf.mxu0
        %11769 = vdwg.mxu0
        %11770 = vmatpush.bf16.msra.mxu0 %v7500
        %11771 = vmatpush.bf16.msra.mxu0 %v7492
        %11772 = vmatpush.bf16.msra.mxu0 %v7484
        %11773 = vmatpush.bf16.msra.mxu0 %v7476
        %11774 = vmatpush.bf16.msra.mxu0 %v7468
        %11775 = vmatpush.bf16.msra.mxu0 %v7460
        %11776 = vmatpush.bf16.msra.mxu0 %v7452
        %11777 = vmatpush.bf16.msra.mxu0 %v7444
        %11778 = vmatmul.bf16.gmra.mxu0 %v2026
        %v11779 = vpop.f32.mrf.mxu0
        %v11780 = vadd.f32 %v11767, %v11779
        %v11781 = vpop.f32.mrf.mxu0
        %11782 = vdwg.mxu0
        %11783 = vmatpush.bf16.msra.mxu0 %v7564
        %11784 = vmatpush.bf16.msra.mxu0 %v7556
        %11785 = vmatpush.bf16.msra.mxu0 %v7548
        %11786 = vmatpush.bf16.msra.mxu0 %v7540
        %11787 = vmatpush.bf16.msra.mxu0 %v7532
        %11788 = vmatpush.bf16.msra.mxu0 %v7524
        %11789 = vmatpush.bf16.msra.mxu0 %v7516
        %11790 = vmatpush.bf16.msra.mxu0 %v7508
        %11791 = vmatmul.bf16.gmra.mxu0 %v2027
        %v11792 = vpop.f32.mrf.mxu0
        %v11793 = vadd.f32 %v11780, %v11792
        %v11794 = vpop.f32.mrf.mxu0
        %11795 = vdwg.mxu0
        %11796 = vmatpush.bf16.msra.mxu0 %v7628
        %11797 = vmatpush.bf16.msra.mxu0 %v7620
        %11798 = vmatpush.bf16.msra.mxu0 %v7612
        %11799 = vmatpush.bf16.msra.mxu0 %v7604
        %11800 = vmatpush.bf16.msra.mxu0 %v7596
        %11801 = vmatpush.bf16.msra.mxu0 %v7588
        %11802 = vmatpush.bf16.msra.mxu0 %v7580
        %11803 = vmatpush.bf16.msra.mxu0 %v7572
        %11804 = vmatmul.bf16.gmra.mxu0 %v2028
        %v11805 = vpop.f32.mrf.mxu0
        %v11806 = vadd.f32 %v11793, %v11805
        %v11807 = vpop.f32.mrf.mxu0
        %11808 = vdwg.mxu0
        %11809 = vmatpush.bf16.msra.mxu0 %v7692
        %11810 = vmatpush.bf16.msra.mxu0 %v7684
        %11811 = vmatpush.bf16.msra.mxu0 %v7676
        %11812 = vmatpush.bf16.msra.mxu0 %v7668
        %11813 = vmatpush.bf16.msra.mxu0 %v7660
        %11814 = vmatpush.bf16.msra.mxu0 %v7652
        %11815 = vmatpush.bf16.msra.mxu0 %v7644
        %11816 = vmatpush.bf16.msra.mxu0 %v7636
        %11817 = vmatmul.bf16.gmra.mxu0 %v2029
        %v11818 = vpop.f32.mrf.mxu0
        %v11819 = vadd.f32 %v11806, %v11818
        %v11820 = vpop.f32.mrf.mxu0
        %11821 = vdwg.mxu0
        %11822 = vmatpush.bf16.msra.mxu0 %v7756
        %11823 = vmatpush.bf16.msra.mxu0 %v7748
        %11824 = vmatpush.bf16.msra.mxu0 %v7740
        %11825 = vmatpush.bf16.msra.mxu0 %v7732
        %11826 = vmatpush.bf16.msra.mxu0 %v7724
        %11827 = vmatpush.bf16.msra.mxu0 %v7716
        %11828 = vmatpush.bf16.msra.mxu0 %v7708
        %11829 = vmatpush.bf16.msra.mxu0 %v7700
        %11830 = vmatmul.bf16.gmra.mxu0 %v2030
        %v11831 = vpop.f32.mrf.mxu0
        %v11832 = vadd.f32 %v11819, %v11831
        %v11833 = vpop.f32.mrf.mxu0
        %11834 = vdwg.mxu0
        %11835 = vmatpush.bf16.msra.mxu0 %v7820
        %11836 = vmatpush.bf16.msra.mxu0 %v7812
        %11837 = vmatpush.bf16.msra.mxu0 %v7804
        %11838 = vmatpush.bf16.msra.mxu0 %v7796
        %11839 = vmatpush.bf16.msra.mxu0 %v7788
        %11840 = vmatpush.bf16.msra.mxu0 %v7780
        %11841 = vmatpush.bf16.msra.mxu0 %v7772
        %11842 = vmatpush.bf16.msra.mxu0 %v7764
        %11843 = vmatmul.bf16.gmra.mxu0 %v2031
        %v11844 = vpop.f32.mrf.mxu0
        %v11845 = vadd.f32 %v11832, %v11844
        %v11846 = vpop.f32.mrf.mxu0
        %11847 = vdwg.mxu0
        %11848 = vmatpush.bf16.msra.mxu0 %v7884
        %11849 = vmatpush.bf16.msra.mxu0 %v7876
        %11850 = vmatpush.bf16.msra.mxu0 %v7868
        %11851 = vmatpush.bf16.msra.mxu0 %v7860
        %11852 = vmatpush.bf16.msra.mxu0 %v7852
        %11853 = vmatpush.bf16.msra.mxu0 %v7844
        %11854 = vmatpush.bf16.msra.mxu0 %v7836
        %11855 = vmatpush.bf16.msra.mxu0 %v7828
        %11856 = vmatmul.bf16.gmra.mxu0 %v2032
        %v11857 = vpop.f32.mrf.mxu0
        %v11858 = vadd.f32 %v11845, %v11857
        %v11859 = vpop.f32.mrf.mxu0
        %11860 = vdwg.mxu0
        %11861 = vmatpush.bf16.msra.mxu0 %v7948
        %11862 = vmatpush.bf16.msra.mxu0 %v7940
        %11863 = vmatpush.bf16.msra.mxu0 %v7932
        %11864 = vmatpush.bf16.msra.mxu0 %v7924
        %11865 = vmatpush.bf16.msra.mxu0 %v7916
        %11866 = vmatpush.bf16.msra.mxu0 %v7908
        %11867 = vmatpush.bf16.msra.mxu0 %v7900
        %11868 = vmatpush.bf16.msra.mxu0 %v7892
        %11869 = vmatmul.bf16.gmra.mxu0 %v2033
        %v11870 = vpop.f32.mrf.mxu0
        %v11871 = vadd.f32 %v11858, %v11870
        %v11872 = vpop.f32.mrf.mxu0
        %11873 = vdwg.mxu0
        %11874 = vmatpush.bf16.msra.mxu0 %v8012
        %11875 = vmatpush.bf16.msra.mxu0 %v8004
        %11876 = vmatpush.bf16.msra.mxu0 %v7996
        %11877 = vmatpush.bf16.msra.mxu0 %v7988
        %11878 = vmatpush.bf16.msra.mxu0 %v7980
        %11879 = vmatpush.bf16.msra.mxu0 %v7972
        %11880 = vmatpush.bf16.msra.mxu0 %v7964
        %11881 = vmatpush.bf16.msra.mxu0 %v7956
        %11882 = vmatmul.bf16.gmra.mxu0 %v2034
        %v11883 = vpop.f32.mrf.mxu0
        %v11884 = vadd.f32 %v11871, %v11883
        %v11885 = vpop.f32.mrf.mxu0
        %11886 = vdwg.mxu0
        %11887 = vmatpush.bf16.msra.mxu0 %v8076
        %11888 = vmatpush.bf16.msra.mxu0 %v8068
        %11889 = vmatpush.bf16.msra.mxu0 %v8060
        %11890 = vmatpush.bf16.msra.mxu0 %v8052
        %11891 = vmatpush.bf16.msra.mxu0 %v8044
        %11892 = vmatpush.bf16.msra.mxu0 %v8036
        %11893 = vmatpush.bf16.msra.mxu0 %v8028
        %11894 = vmatpush.bf16.msra.mxu0 %v8020
        %11895 = vmatmul.bf16.gmra.mxu0 %v2035
        %v11896 = vpop.f32.mrf.mxu0
        %v11897 = vadd.f32 %v11884, %v11896
        %v11898 = vpop.f32.mrf.mxu0
        %11899 = vdwg.mxu0
        %11900 = vmatpush.bf16.msra.mxu0 %v8140
        %11901 = vmatpush.bf16.msra.mxu0 %v8132
        %11902 = vmatpush.bf16.msra.mxu0 %v8124
        %11903 = vmatpush.bf16.msra.mxu0 %v8116
        %11904 = vmatpush.bf16.msra.mxu0 %v8108
        %11905 = vmatpush.bf16.msra.mxu0 %v8100
        %11906 = vmatpush.bf16.msra.mxu0 %v8092
        %11907 = vmatpush.bf16.msra.mxu0 %v8084
        %11908 = vmatmul.bf16.gmra.mxu0 %v2036
        %v11909 = vpop.f32.mrf.mxu0
        %v11910 = vadd.f32 %v11897, %v11909
        %v11911 = vpop.f32.mrf.mxu0
        %11912 = vdwg.mxu0
        %11913 = vmatpush.bf16.msra.mxu0 %v8204
        %11914 = vmatpush.bf16.msra.mxu0 %v8196
        %11915 = vmatpush.bf16.msra.mxu0 %v8188
        %11916 = vmatpush.bf16.msra.mxu0 %v8180
        %11917 = vmatpush.bf16.msra.mxu0 %v8172
        %11918 = vmatpush.bf16.msra.mxu0 %v8164
        %11919 = vmatpush.bf16.msra.mxu0 %v8156
        %11920 = vmatpush.bf16.msra.mxu0 %v8148
        %11921 = vmatmul.bf16.gmra.mxu0 %v2037
        %v11922 = vpop.f32.mrf.mxu0
        %v11923 = vadd.f32 %v11910, %v11922
        %v11924 = vpop.f32.mrf.mxu0
        %11925 = vdwg.mxu0
        %11926 = vmatpush.bf16.msra.mxu0 %v6733
        %11927 = vmatpush.bf16.msra.mxu0 %v6725
        %11928 = vmatpush.bf16.msra.mxu0 %v6717
        %11929 = vmatpush.bf16.msra.mxu0 %v6709
        %11930 = vmatpush.bf16.msra.mxu0 %v6701
        %11931 = vmatpush.bf16.msra.mxu0 %v6693
        %11932 = vmatpush.bf16.msra.mxu0 %v6685
        %11933 = vmatpush.bf16.msra.mxu0 %v6677
        %11934 = vmatmul.bf16.gmra.mxu0 %v2014
        %v11935 = vpop.f32.mrf.mxu0
        %v11936 = vadd.f32 %v1969, %v11935
        %v11937 = vpop.f32.mrf.mxu0
        %11938 = vdwg.mxu0
        %11939 = vmatpush.bf16.msra.mxu0 %v6797
        %11940 = vmatpush.bf16.msra.mxu0 %v6789
        %11941 = vmatpush.bf16.msra.mxu0 %v6781
        %11942 = vmatpush.bf16.msra.mxu0 %v6773
        %11943 = vmatpush.bf16.msra.mxu0 %v6765
        %11944 = vmatpush.bf16.msra.mxu0 %v6757
        %11945 = vmatpush.bf16.msra.mxu0 %v6749
        %11946 = vmatpush.bf16.msra.mxu0 %v6741
        %11947 = vmatmul.bf16.gmra.mxu0 %v2015
        %v11948 = vpop.f32.mrf.mxu0
        %v11949 = vadd.f32 %v11936, %v11948
        %v11950 = vpop.f32.mrf.mxu0
        %11951 = vdwg.mxu0
        %11952 = vmatpush.bf16.msra.mxu0 %v6861
        %11953 = vmatpush.bf16.msra.mxu0 %v6853
        %11954 = vmatpush.bf16.msra.mxu0 %v6845
        %11955 = vmatpush.bf16.msra.mxu0 %v6837
        %11956 = vmatpush.bf16.msra.mxu0 %v6829
        %11957 = vmatpush.bf16.msra.mxu0 %v6821
        %11958 = vmatpush.bf16.msra.mxu0 %v6813
        %11959 = vmatpush.bf16.msra.mxu0 %v6805
        %11960 = vmatmul.bf16.gmra.mxu0 %v2016
        %v11961 = vpop.f32.mrf.mxu0
        %v11962 = vadd.f32 %v11949, %v11961
        %v11963 = vpop.f32.mrf.mxu0
        %11964 = vdwg.mxu0
        %11965 = vmatpush.bf16.msra.mxu0 %v6925
        %11966 = vmatpush.bf16.msra.mxu0 %v6917
        %11967 = vmatpush.bf16.msra.mxu0 %v6909
        %11968 = vmatpush.bf16.msra.mxu0 %v6901
        %11969 = vmatpush.bf16.msra.mxu0 %v6893
        %11970 = vmatpush.bf16.msra.mxu0 %v6885
        %11971 = vmatpush.bf16.msra.mxu0 %v6877
        %11972 = vmatpush.bf16.msra.mxu0 %v6869
        %11973 = vmatmul.bf16.gmra.mxu0 %v2017
        %v11974 = vpop.f32.mrf.mxu0
        %v11975 = vadd.f32 %v11962, %v11974
        %v11976 = vpop.f32.mrf.mxu0
        %11977 = vdwg.mxu0
        %11978 = vmatpush.bf16.msra.mxu0 %v6989
        %11979 = vmatpush.bf16.msra.mxu0 %v6981
        %11980 = vmatpush.bf16.msra.mxu0 %v6973
        %11981 = vmatpush.bf16.msra.mxu0 %v6965
        %11982 = vmatpush.bf16.msra.mxu0 %v6957
        %11983 = vmatpush.bf16.msra.mxu0 %v6949
        %11984 = vmatpush.bf16.msra.mxu0 %v6941
        %11985 = vmatpush.bf16.msra.mxu0 %v6933
        %11986 = vmatmul.bf16.gmra.mxu0 %v2018
        %v11987 = vpop.f32.mrf.mxu0
        %v11988 = vadd.f32 %v11975, %v11987
        %v11989 = vpop.f32.mrf.mxu0
        %11990 = vdwg.mxu0
        %11991 = vmatpush.bf16.msra.mxu0 %v7053
        %11992 = vmatpush.bf16.msra.mxu0 %v7045
        %11993 = vmatpush.bf16.msra.mxu0 %v7037
        %11994 = vmatpush.bf16.msra.mxu0 %v7029
        %11995 = vmatpush.bf16.msra.mxu0 %v7021
        %11996 = vmatpush.bf16.msra.mxu0 %v7013
        %11997 = vmatpush.bf16.msra.mxu0 %v7005
        %11998 = vmatpush.bf16.msra.mxu0 %v6997
        %11999 = vmatmul.bf16.gmra.mxu0 %v2019
        %v12000 = vpop.f32.mrf.mxu0
        %v12001 = vadd.f32 %v11988, %v12000
        %v12002 = vpop.f32.mrf.mxu0
        %12003 = vdwg.mxu0
        %12004 = vmatpush.bf16.msra.mxu0 %v7117
        %12005 = vmatpush.bf16.msra.mxu0 %v7109
        %12006 = vmatpush.bf16.msra.mxu0 %v7101
        %12007 = vmatpush.bf16.msra.mxu0 %v7093
        %12008 = vmatpush.bf16.msra.mxu0 %v7085
        %12009 = vmatpush.bf16.msra.mxu0 %v7077
        %12010 = vmatpush.bf16.msra.mxu0 %v7069
        %12011 = vmatpush.bf16.msra.mxu0 %v7061
        %12012 = vmatmul.bf16.gmra.mxu0 %v2020
        %v12013 = vpop.f32.mrf.mxu0
        %v12014 = vadd.f32 %v12001, %v12013
        %v12015 = vpop.f32.mrf.mxu0
        %12016 = vdwg.mxu0
        %12017 = vmatpush.bf16.msra.mxu0 %v7181
        %12018 = vmatpush.bf16.msra.mxu0 %v7173
        %12019 = vmatpush.bf16.msra.mxu0 %v7165
        %12020 = vmatpush.bf16.msra.mxu0 %v7157
        %12021 = vmatpush.bf16.msra.mxu0 %v7149
        %12022 = vmatpush.bf16.msra.mxu0 %v7141
        %12023 = vmatpush.bf16.msra.mxu0 %v7133
        %12024 = vmatpush.bf16.msra.mxu0 %v7125
        %12025 = vmatmul.bf16.gmra.mxu0 %v2021
        %v12026 = vpop.f32.mrf.mxu0
        %v12027 = vadd.f32 %v12014, %v12026
        %v12028 = vpop.f32.mrf.mxu0
        %12029 = vdwg.mxu0
        %12030 = vmatpush.bf16.msra.mxu0 %v7245
        %12031 = vmatpush.bf16.msra.mxu0 %v7237
        %12032 = vmatpush.bf16.msra.mxu0 %v7229
        %12033 = vmatpush.bf16.msra.mxu0 %v7221
        %12034 = vmatpush.bf16.msra.mxu0 %v7213
        %12035 = vmatpush.bf16.msra.mxu0 %v7205
        %12036 = vmatpush.bf16.msra.mxu0 %v7197
        %12037 = vmatpush.bf16.msra.mxu0 %v7189
        %12038 = vmatmul.bf16.gmra.mxu0 %v2022
        %v12039 = vpop.f32.mrf.mxu0
        %v12040 = vadd.f32 %v12027, %v12039
        %v12041 = vpop.f32.mrf.mxu0
        %12042 = vdwg.mxu0
        %12043 = vmatpush.bf16.msra.mxu0 %v7309
        %12044 = vmatpush.bf16.msra.mxu0 %v7301
        %12045 = vmatpush.bf16.msra.mxu0 %v7293
        %12046 = vmatpush.bf16.msra.mxu0 %v7285
        %12047 = vmatpush.bf16.msra.mxu0 %v7277
        %12048 = vmatpush.bf16.msra.mxu0 %v7269
        %12049 = vmatpush.bf16.msra.mxu0 %v7261
        %12050 = vmatpush.bf16.msra.mxu0 %v7253
        %12051 = vmatmul.bf16.gmra.mxu0 %v2023
        %v12052 = vpop.f32.mrf.mxu0
        %v12053 = vadd.f32 %v12040, %v12052
        %v12054 = vpop.f32.mrf.mxu0
        %12055 = vdwg.mxu0
        %12056 = vmatpush.bf16.msra.mxu0 %v7373
        %12057 = vmatpush.bf16.msra.mxu0 %v7365
        %12058 = vmatpush.bf16.msra.mxu0 %v7357
        %12059 = vmatpush.bf16.msra.mxu0 %v7349
        %12060 = vmatpush.bf16.msra.mxu0 %v7341
        %12061 = vmatpush.bf16.msra.mxu0 %v7333
        %12062 = vmatpush.bf16.msra.mxu0 %v7325
        %12063 = vmatpush.bf16.msra.mxu0 %v7317
        %12064 = vmatmul.bf16.gmra.mxu0 %v2024
        %v12065 = vpop.f32.mrf.mxu0
        %v12066 = vadd.f32 %v12053, %v12065
        %v12067 = vpop.f32.mrf.mxu0
        %12068 = vdwg.mxu0
        %12069 = vmatpush.bf16.msra.mxu0 %v7437
        %12070 = vmatpush.bf16.msra.mxu0 %v7429
        %12071 = vmatpush.bf16.msra.mxu0 %v7421
        %12072 = vmatpush.bf16.msra.mxu0 %v7413
        %12073 = vmatpush.bf16.msra.mxu0 %v7405
        %12074 = vmatpush.bf16.msra.mxu0 %v7397
        %12075 = vmatpush.bf16.msra.mxu0 %v7389
        %12076 = vmatpush.bf16.msra.mxu0 %v7381
        %12077 = vmatmul.bf16.gmra.mxu0 %v2025
        %v12078 = vpop.f32.mrf.mxu0
        %v12079 = vadd.f32 %v12066, %v12078
        %v12080 = vpop.f32.mrf.mxu0
        %12081 = vdwg.mxu0
        %12082 = vmatpush.bf16.msra.mxu0 %v7501
        %12083 = vmatpush.bf16.msra.mxu0 %v7493
        %12084 = vmatpush.bf16.msra.mxu0 %v7485
        %12085 = vmatpush.bf16.msra.mxu0 %v7477
        %12086 = vmatpush.bf16.msra.mxu0 %v7469
        %12087 = vmatpush.bf16.msra.mxu0 %v7461
        %12088 = vmatpush.bf16.msra.mxu0 %v7453
        %12089 = vmatpush.bf16.msra.mxu0 %v7445
        %12090 = vmatmul.bf16.gmra.mxu0 %v2026
        %v12091 = vpop.f32.mrf.mxu0
        %v12092 = vadd.f32 %v12079, %v12091
        %v12093 = vpop.f32.mrf.mxu0
        %12094 = vdwg.mxu0
        %12095 = vmatpush.bf16.msra.mxu0 %v7565
        %12096 = vmatpush.bf16.msra.mxu0 %v7557
        %12097 = vmatpush.bf16.msra.mxu0 %v7549
        %12098 = vmatpush.bf16.msra.mxu0 %v7541
        %12099 = vmatpush.bf16.msra.mxu0 %v7533
        %12100 = vmatpush.bf16.msra.mxu0 %v7525
        %12101 = vmatpush.bf16.msra.mxu0 %v7517
        %12102 = vmatpush.bf16.msra.mxu0 %v7509
        %12103 = vmatmul.bf16.gmra.mxu0 %v2027
        %v12104 = vpop.f32.mrf.mxu0
        %v12105 = vadd.f32 %v12092, %v12104
        %v12106 = vpop.f32.mrf.mxu0
        %12107 = vdwg.mxu0
        %12108 = vmatpush.bf16.msra.mxu0 %v7629
        %12109 = vmatpush.bf16.msra.mxu0 %v7621
        %12110 = vmatpush.bf16.msra.mxu0 %v7613
        %12111 = vmatpush.bf16.msra.mxu0 %v7605
        %12112 = vmatpush.bf16.msra.mxu0 %v7597
        %12113 = vmatpush.bf16.msra.mxu0 %v7589
        %12114 = vmatpush.bf16.msra.mxu0 %v7581
        %12115 = vmatpush.bf16.msra.mxu0 %v7573
        %12116 = vmatmul.bf16.gmra.mxu0 %v2028
        %v12117 = vpop.f32.mrf.mxu0
        %v12118 = vadd.f32 %v12105, %v12117
        %v12119 = vpop.f32.mrf.mxu0
        %12120 = vdwg.mxu0
        %12121 = vmatpush.bf16.msra.mxu0 %v7693
        %12122 = vmatpush.bf16.msra.mxu0 %v7685
        %12123 = vmatpush.bf16.msra.mxu0 %v7677
        %12124 = vmatpush.bf16.msra.mxu0 %v7669
        %12125 = vmatpush.bf16.msra.mxu0 %v7661
        %12126 = vmatpush.bf16.msra.mxu0 %v7653
        %12127 = vmatpush.bf16.msra.mxu0 %v7645
        %12128 = vmatpush.bf16.msra.mxu0 %v7637
        %12129 = vmatmul.bf16.gmra.mxu0 %v2029
        %v12130 = vpop.f32.mrf.mxu0
        %v12131 = vadd.f32 %v12118, %v12130
        %v12132 = vpop.f32.mrf.mxu0
        %12133 = vdwg.mxu0
        %12134 = vmatpush.bf16.msra.mxu0 %v7757
        %12135 = vmatpush.bf16.msra.mxu0 %v7749
        %12136 = vmatpush.bf16.msra.mxu0 %v7741
        %12137 = vmatpush.bf16.msra.mxu0 %v7733
        %12138 = vmatpush.bf16.msra.mxu0 %v7725
        %12139 = vmatpush.bf16.msra.mxu0 %v7717
        %12140 = vmatpush.bf16.msra.mxu0 %v7709
        %12141 = vmatpush.bf16.msra.mxu0 %v7701
        %12142 = vmatmul.bf16.gmra.mxu0 %v2030
        %v12143 = vpop.f32.mrf.mxu0
        %v12144 = vadd.f32 %v12131, %v12143
        %v12145 = vpop.f32.mrf.mxu0
        %12146 = vdwg.mxu0
        %12147 = vmatpush.bf16.msra.mxu0 %v7821
        %12148 = vmatpush.bf16.msra.mxu0 %v7813
        %12149 = vmatpush.bf16.msra.mxu0 %v7805
        %12150 = vmatpush.bf16.msra.mxu0 %v7797
        %12151 = vmatpush.bf16.msra.mxu0 %v7789
        %12152 = vmatpush.bf16.msra.mxu0 %v7781
        %12153 = vmatpush.bf16.msra.mxu0 %v7773
        %12154 = vmatpush.bf16.msra.mxu0 %v7765
        %12155 = vmatmul.bf16.gmra.mxu0 %v2031
        %v12156 = vpop.f32.mrf.mxu0
        %v12157 = vadd.f32 %v12144, %v12156
        %v12158 = vpop.f32.mrf.mxu0
        %12159 = vdwg.mxu0
        %12160 = vmatpush.bf16.msra.mxu0 %v7885
        %12161 = vmatpush.bf16.msra.mxu0 %v7877
        %12162 = vmatpush.bf16.msra.mxu0 %v7869
        %12163 = vmatpush.bf16.msra.mxu0 %v7861
        %12164 = vmatpush.bf16.msra.mxu0 %v7853
        %12165 = vmatpush.bf16.msra.mxu0 %v7845
        %12166 = vmatpush.bf16.msra.mxu0 %v7837
        %12167 = vmatpush.bf16.msra.mxu0 %v7829
        %12168 = vmatmul.bf16.gmra.mxu0 %v2032
        %v12169 = vpop.f32.mrf.mxu0
        %v12170 = vadd.f32 %v12157, %v12169
        %v12171 = vpop.f32.mrf.mxu0
        %12172 = vdwg.mxu0
        %12173 = vmatpush.bf16.msra.mxu0 %v7949
        %12174 = vmatpush.bf16.msra.mxu0 %v7941
        %12175 = vmatpush.bf16.msra.mxu0 %v7933
        %12176 = vmatpush.bf16.msra.mxu0 %v7925
        %12177 = vmatpush.bf16.msra.mxu0 %v7917
        %12178 = vmatpush.bf16.msra.mxu0 %v7909
        %12179 = vmatpush.bf16.msra.mxu0 %v7901
        %12180 = vmatpush.bf16.msra.mxu0 %v7893
        %12181 = vmatmul.bf16.gmra.mxu0 %v2033
        %v12182 = vpop.f32.mrf.mxu0
        %v12183 = vadd.f32 %v12170, %v12182
        %v12184 = vpop.f32.mrf.mxu0
        %12185 = vdwg.mxu0
        %12186 = vmatpush.bf16.msra.mxu0 %v8013
        %12187 = vmatpush.bf16.msra.mxu0 %v8005
        %12188 = vmatpush.bf16.msra.mxu0 %v7997
        %12189 = vmatpush.bf16.msra.mxu0 %v7989
        %12190 = vmatpush.bf16.msra.mxu0 %v7981
        %12191 = vmatpush.bf16.msra.mxu0 %v7973
        %12192 = vmatpush.bf16.msra.mxu0 %v7965
        %12193 = vmatpush.bf16.msra.mxu0 %v7957
        %12194 = vmatmul.bf16.gmra.mxu0 %v2034
        %v12195 = vpop.f32.mrf.mxu0
        %v12196 = vadd.f32 %v12183, %v12195
        %v12197 = vpop.f32.mrf.mxu0
        %12198 = vdwg.mxu0
        %12199 = vmatpush.bf16.msra.mxu0 %v8077
        %12200 = vmatpush.bf16.msra.mxu0 %v8069
        %12201 = vmatpush.bf16.msra.mxu0 %v8061
        %12202 = vmatpush.bf16.msra.mxu0 %v8053
        %12203 = vmatpush.bf16.msra.mxu0 %v8045
        %12204 = vmatpush.bf16.msra.mxu0 %v8037
        %12205 = vmatpush.bf16.msra.mxu0 %v8029
        %12206 = vmatpush.bf16.msra.mxu0 %v8021
        %12207 = vmatmul.bf16.gmra.mxu0 %v2035
        %v12208 = vpop.f32.mrf.mxu0
        %v12209 = vadd.f32 %v12196, %v12208
        %v12210 = vpop.f32.mrf.mxu0
        %12211 = vdwg.mxu0
        %12212 = vmatpush.bf16.msra.mxu0 %v8141
        %12213 = vmatpush.bf16.msra.mxu0 %v8133
        %12214 = vmatpush.bf16.msra.mxu0 %v8125
        %12215 = vmatpush.bf16.msra.mxu0 %v8117
        %12216 = vmatpush.bf16.msra.mxu0 %v8109
        %12217 = vmatpush.bf16.msra.mxu0 %v8101
        %12218 = vmatpush.bf16.msra.mxu0 %v8093
        %12219 = vmatpush.bf16.msra.mxu0 %v8085
        %12220 = vmatmul.bf16.gmra.mxu0 %v2036
        %v12221 = vpop.f32.mrf.mxu0
        %v12222 = vadd.f32 %v12209, %v12221
        %v12223 = vpop.f32.mrf.mxu0
        %12224 = vdwg.mxu0
        %12225 = vmatpush.bf16.msra.mxu0 %v8205
        %12226 = vmatpush.bf16.msra.mxu0 %v8197
        %12227 = vmatpush.bf16.msra.mxu0 %v8189
        %12228 = vmatpush.bf16.msra.mxu0 %v8181
        %12229 = vmatpush.bf16.msra.mxu0 %v8173
        %12230 = vmatpush.bf16.msra.mxu0 %v8165
        %12231 = vmatpush.bf16.msra.mxu0 %v8157
        %12232 = vmatpush.bf16.msra.mxu0 %v8149
        %12233 = vmatmul.bf16.gmra.mxu0 %v2037
        %v12234 = vpop.f32.mrf.mxu0
        %v12235 = vadd.f32 %v12222, %v12234
        %v12236 = vpop.f32.mrf.mxu0
        %12237 = vdwg.mxu0
        %v12238 = vrot.slane %v10051, 4
        %v12239 = vadd.f32 %v10051, %v12238
        %v12240 = vrot.slane %v12239, 2
        %v12241 = vadd.f32 %v12239, %v12240
        %v12242 = vrot.slane %v12241, 1
        %v12243 = vadd.f32 %v12241, %v12242
        %v12244 = vrot.slane %v10363, 4
        %v12245 = vadd.f32 %v10363, %v12244
        %v12246 = vrot.slane %v12245, 2
        %v12247 = vadd.f32 %v12245, %v12246
        %v12248 = vrot.slane %v12247, 1
        %v12249 = vadd.f32 %v12247, %v12248
        %v12250 = vrot.slane %v10675, 4
        %v12251 = vadd.f32 %v10675, %v12250
        %v12252 = vrot.slane %v12251, 2
        %v12253 = vadd.f32 %v12251, %v12252
        %v12254 = vrot.slane %v12253, 1
        %v12255 = vadd.f32 %v12253, %v12254
        %v12256 = vrot.slane %v10987, 4
        %v12257 = vadd.f32 %v10987, %v12256
        %v12258 = vrot.slane %v12257, 2
        %v12259 = vadd.f32 %v12257, %v12258
        %v12260 = vrot.slane %v12259, 1
        %v12261 = vadd.f32 %v12259, %v12260
        %v12262 = vrot.slane %v11299, 4
        %v12263 = vadd.f32 %v11299, %v12262
        %v12264 = vrot.slane %v12263, 2
        %v12265 = vadd.f32 %v12263, %v12264
        %v12266 = vrot.slane %v12265, 1
        %v12267 = vadd.f32 %v12265, %v12266
        %v12268 = vrot.slane %v11611, 4
        %v12269 = vadd.f32 %v11611, %v12268
        %v12270 = vrot.slane %v12269, 2
        %v12271 = vadd.f32 %v12269, %v12270
        %v12272 = vrot.slane %v12271, 1
        %v12273 = vadd.f32 %v12271, %v12272
        %v12274 = vrot.slane %v11923, 4
        %v12275 = vadd.f32 %v11923, %v12274
        %v12276 = vrot.slane %v12275, 2
        %v12277 = vadd.f32 %v12275, %v12276
        %v12278 = vrot.slane %v12277, 1
        %v12279 = vadd.f32 %v12277, %v12278
        %v12280 = vrot.slane %v12235, 4
        %v12281 = vadd.f32 %v12235, %v12280
        %v12282 = vrot.slane %v12281, 2
        %v12283 = vadd.f32 %v12281, %v12282
        %v12284 = vrot.slane %v12283, 1
        %v12285 = vadd.f32 %v12283, %v12284
        %v12286 = vrcp.pop 8.0
        %v12287 = vmul.f32 8.0, %v12286
        %v12288 = vsub.f32 1.0, %v12287
        %v12289 = vmul.f32 %v12286, %v12288
        %v12290 = vadd.f32 %v12286, %v12289
        %vm12291 = vweird.f32 %v12286
        %v12292 = vsel %vm12291, %v12286, %v12290
        %v12293 = vmul.f32 %v12243, %v12292
        %v12294 = vmul.f32 %v12249, %v12292
        %v12295 = vmul.f32 %v12255, %v12292
        %v12296 = vmul.f32 %v12261, %v12292
        %v12297 = vmul.f32 %v12267, %v12292
        %v12298 = vmul.f32 %v12273, %v12292
        %v12299 = vmul.f32 %v12279, %v12292
        %v12300 = vmul.f32 %v12285, %v12292
        %v12301 = vsub.f32 %v10051, %v12293
        %v12302 = vsub.f32 %v10363, %v12294
        %v12303 = vsub.f32 %v10675, %v12295
        %v12304 = vsub.f32 %v10987, %v12296
        %v12305 = vsub.f32 %v11299, %v12297
        %v12306 = vsub.f32 %v11611, %v12298
        %v12307 = vsub.f32 %v11923, %v12299
        %v12308 = vsub.f32 %v12235, %v12300
        %v12309 = vmul.f32 %v12301, %v12301
        %v12310 = vmul.f32 %v12302, %v12302
        %v12311 = vmul.f32 %v12303, %v12303
        %v12312 = vmul.f32 %v12304, %v12304
        %v12313 = vmul.f32 %v12305, %v12305
        %v12314 = vmul.f32 %v12306, %v12306
        %v12315 = vmul.f32 %v12307, %v12307
        %v12316 = vmul.f32 %v12308, %v12308
        %v12317 = vrot.slane %v12309, 4
        %v12318 = vadd.f32 %v12309, %v12317
        %v12319 = vrot.slane %v12318, 2
        %v12320 = vadd.f32 %v12318, %v12319
        %v12321 = vrot.slane %v12320, 1
        %v12322 = vadd.f32 %v12320, %v12321
        %v12323 = vrot.slane %v12310, 4
        %v12324 = vadd.f32 %v12310, %v12323
        %v12325 = vrot.slane %v12324, 2
        %v12326 = vadd.f32 %v12324, %v12325
        %v12327 = vrot.slane %v12326, 1
        %v12328 = vadd.f32 %v12326, %v12327
        %v12329 = vrot.slane %v12311, 4
        %v12330 = vadd.f32 %v12311, %v12329
        %v12331 = vrot.slane %v12330, 2
        %v12332 = vadd.f32 %v12330, %v12331
        %v12333 = vrot.slane %v12332, 1
        %v12334 = vadd.f32 %v12332, %v12333
        %v12335 = vrot.slane %v12312, 4
        %v12336 = vadd.f32 %v12312, %v12335
        %v12337 = vrot.slane %v12336, 2
        %v12338 = vadd.f32 %v12336, %v12337
        %v12339 = vrot.slane %v12338, 1
        %v12340 = vadd.f32 %v12338, %v12339
        %v12341 = vrot.slane %v12313, 4
        %v12342 = vadd.f32 %v12313, %v12341
        %v12343 = vrot.slane %v12342, 2
        %v12344 = vadd.f32 %v12342, %v12343
        %v12345 = vrot.slane %v12344, 1
        %v12346 = vadd.f32 %v12344, %v12345
        %v12347 = vrot.slane %v12314, 4
        %v12348 = vadd.f32 %v12314, %v12347
        %v12349 = vrot.slane %v12348, 2
        %v12350 = vadd.f32 %v12348, %v12349
        %v12351 = vrot.slane %v12350, 1
        %v12352 = vadd.f32 %v12350, %v12351
        %v12353 = vrot.slane %v12315, 4
        %v12354 = vadd.f32 %v12315, %v12353
        %v12355 = vrot.slane %v12354, 2
        %v12356 = vadd.f32 %v12354, %v12355
        %v12357 = vrot.slane %v12356, 1
        %v12358 = vadd.f32 %v12356, %v12357
        %v12359 = vrot.slane %v12316, 4
        %v12360 = vadd.f32 %v12316, %v12359
        %v12361 = vrot.slane %v12360, 2
        %v12362 = vadd.f32 %v12360, %v12361
        %v12363 = vrot.slane %v12362, 1
        %v12364 = vadd.f32 %v12362, %v12363
        %v12365 = vmul.f32 %v12322, %v12292
        %v12366 = vmul.f32 %v12328, %v12292
        %v12367 = vmul.f32 %v12334, %v12292
        %v12368 = vmul.f32 %v12340, %v12292
        %v12369 = vmul.f32 %v12346, %v12292
        %v12370 = vmul.f32 %v12352, %v12292
        %v12371 = vmul.f32 %v12358, %v12292
        %v12372 = vmul.f32 %v12364, %v12292
        %v12373 = vadd.f32 %v12365, 1e-05
        %v12374 = vadd.f32 %v12366, 1e-05
        %v12375 = vadd.f32 %v12367, 1e-05
        %v12376 = vadd.f32 %v12368, 1e-05
        %v12377 = vadd.f32 %v12369, 1e-05
        %v12378 = vadd.f32 %v12370, 1e-05
        %v12379 = vadd.f32 %v12371, 1e-05
        %v12380 = vadd.f32 %v12372, 1e-05
        %v12381 = vrsqrt.pop %v12373
        %v12382 = vmul.f32 %v12381, %v12373
        %v12383 = vmul.f32 %v12382, %v12381
        %v12384 = vmul.f32 0.5, %v12383
        %v12385 = vsub.f32 1.5, %v12384
        %v12386 = vmul.f32 %v12381, %v12385
        %vm12387 = vweird.f32 %v12373
        %vm12388 = vweird.f32 %v12381
        %vm12389 = vmor %vm12387, %vm12388
        %v12390 = vsel %vm12389, %v12381, %v12386
        %v12391 = vrsqrt.pop %v12374
        %v12392 = vmul.f32 %v12391, %v12374
        %v12393 = vmul.f32 %v12392, %v12391
        %v12394 = vmul.f32 0.5, %v12393
        %v12395 = vsub.f32 1.5, %v12394
        %v12396 = vmul.f32 %v12391, %v12395
        %vm12397 = vweird.f32 %v12374
        %vm12398 = vweird.f32 %v12391
        %vm12399 = vmor %vm12397, %vm12398
        %v12400 = vsel %vm12399, %v12391, %v12396
        %v12401 = vrsqrt.pop %v12375
        %v12402 = vmul.f32 %v12401, %v12375
        %v12403 = vmul.f32 %v12402, %v12401
        %v12404 = vmul.f32 0.5, %v12403
        %v12405 = vsub.f32 1.5, %v12404
        %v12406 = vmul.f32 %v12401, %v12405
        %vm12407 = vweird.f32 %v12375
        %vm12408 = vweird.f32 %v12401
        %vm12409 = vmor %vm12407, %vm12408
        %v12410 = vsel %vm12409, %v12401, %v12406
        %v12411 = vrsqrt.pop %v12376
        %v12412 = vmul.f32 %v12411, %v12376
        %v12413 = vmul.f32 %v12412, %v12411
        %v12414 = vmul.f32 0.5, %v12413
        %v12415 = vsub.f32 1.5, %v12414
        %v12416 = vmul.f32 %v12411, %v12415
        %vm12417 = vweird.f32 %v12376
        %vm12418 = vweird.f32 %v12411
        %vm12419 = vmor %vm12417, %vm12418
        %v12420 = vsel %vm12419, %v12411, %v12416
        %v12421 = vrsqrt.pop %v12377
        %v12422 = vmul.f32 %v12421, %v12377
        %v12423 = vmul.f32 %v12422, %v12421
        %v12424 = vmul.f32 0.5, %v12423
        %v12425 = vsub.f32 1.5, %v12424
        %v12426 = vmul.f32 %v12421, %v12425
        %vm12427 = vweird.f32 %v12377
        %vm12428 = vweird.f32 %v12421
        %vm12429 = vmor %vm12427, %vm12428
        %v12430 = vsel %vm12429, %v12421, %v12426
        %v12431 = vrsqrt.pop %v12378
        %v12432 = vmul.f32 %v12431, %v12378
        %v12433 = vmul.f32 %v12432, %v12431
        %v12434 = vmul.f32 0.5, %v12433
        %v12435 = vsub.f32 1.5, %v12434
        %v12436 = vmul.f32 %v12431, %v12435
        %vm12437 = vweird.f32 %v12378
        %vm12438 = vweird.f32 %v12431
        %vm12439 = vmor %vm12437, %vm12438
        %v12440 = vsel %vm12439, %v12431, %v12436
        %v12441 = vrsqrt.pop %v12379
        %v12442 = vmul.f32 %v12441, %v12379
        %v12443 = vmul.f32 %v12442, %v12441
        %v12444 = vmul.f32 0.5, %v12443
        %v12445 = vsub.f32 1.5, %v12444
        %v12446 = vmul.f32 %v12441, %v12445
        %vm12447 = vweird.f32 %v12379
        %vm12448 = vweird.f32 %v12441
        %vm12449 = vmor %vm12447, %vm12448
        %v12450 = vsel %vm12449, %v12441, %v12446
        %v12451 = vrsqrt.pop %v12380
        %v12452 = vmul.f32 %v12451, %v12380
        %v12453 = vmul.f32 %v12452, %v12451
        %v12454 = vmul.f32 0.5, %v12453
        %v12455 = vsub.f32 1.5, %v12454
        %v12456 = vmul.f32 %v12451, %v12455
        %vm12457 = vweird.f32 %v12380
        %vm12458 = vweird.f32 %v12451
        %vm12459 = vmor %vm12457, %vm12458
        %v12460 = vsel %vm12459, %v12451, %v12456
        %v12461 = vmul.f32 %v12301, %v12390
        %v12462 = vmul.f32 %v12302, %v12400
        %v12463 = vmul.f32 %v12303, %v12410
        %v12464 = vmul.f32 %v12304, %v12420
        %v12465 = vmul.f32 %v12305, %v12430
        %v12466 = vmul.f32 %v12306, %v12440
        %v12467 = vmul.f32 %v12307, %v12450
        %v12468 = vmul.f32 %v12308, %v12460
        %v12469 = vld [vmem:[%s339] sm:$0xff]
        %v12471 = vperm.slane %v12469, 0
        %v12472 = vperm.slane %v12469, 1
        %v12473 = vperm.slane %v12469, 2
        %v12474 = vperm.slane %v12469, 3
        %v12475 = vperm.slane %v12469, 4
        %v12476 = vperm.slane %v12469, 5
        %v12477 = vperm.slane %v12469, 6
        %v12478 = vperm.slane %v12469, 7
        %v12487 = vmul.f32 %v12471, %v12461
        %v12488 = vmul.f32 %v12472, %v12462
        %v12489 = vmul.f32 %v12473, %v12463
        %v12490 = vmul.f32 %v12474, %v12464
        %v12491 = vmul.f32 %v12475, %v12465
        %v12492 = vmul.f32 %v12476, %v12466
        %v12493 = vmul.f32 %v12477, %v12467
        %v12494 = vmul.f32 %v12478, %v12468
        %v12495 = vld [vmem:[%s349] sm:$0xff]
        %v12497 = vperm.slane %v12495, 0
        %v12498 = vperm.slane %v12495, 1
        %v12499 = vperm.slane %v12495, 2
        %v12500 = vperm.slane %v12495, 3
        %v12501 = vperm.slane %v12495, 4
        %v12502 = vperm.slane %v12495, 5
        %v12503 = vperm.slane %v12495, 6
        %v12504 = vperm.slane %v12495, 7
        %v12513 = vadd.f32 %v12487, %v12497
        %v12514 = vadd.f32 %v12488, %v12498
        %v12515 = vadd.f32 %v12489, %v12499
        %v12516 = vadd.f32 %v12490, %v12500
        %v12517 = vadd.f32 %v12491, %v12501
        %v12518 = vadd.f32 %v12492, %v12502
        %v12519 = vadd.f32 %v12493, %v12503
        %v12520 = vadd.f32 %v12494, %v12504
        %v12521 = vmax.f32 %v12513, 0.0
        %v12522 = vmax.f32 %v12514, 0.0
        %v12523 = vmax.f32 %v12515, 0.0
        %v12524 = vmax.f32 %v12516, 0.0
        %v12525 = vmax.f32 %v12517, 0.0
        %v12526 = vmax.f32 %v12518, 0.0
        %v12527 = vmax.f32 %v12519, 0.0
        %v12528 = vmax.f32 %v12520, 0.0
        %v12529 = vld [vmem:[%s406] sm:$0xff]
        %v12530 = vld [vmem:[%s406 + $0x8] sm:$0xff]
        %v12531 = vld [vmem:[%s406 + $0x10] sm:$0xff]
        %v12532 = vld [vmem:[%s406 + $0x18] sm:$0xff]
        %v12533 = vld [vmem:[%s406 + $0x20] sm:$0xff]
        %v12534 = vld [vmem:[%s406 + $0x28] sm:$0xff]
        %v12535 = vld [vmem:[%s406 + $0x30] sm:$0xff]
        %v12536 = vld [vmem:[%s406 + $0x38] sm:$0xff]
        %v12537 = vld [vmem:[%s406 + $0x40] sm:$0xff]
        %v12538 = vld [vmem:[%s406 + $0x48] sm:$0xff]
        %v12539 = vld [vmem:[%s406 + $0x50] sm:$0xff]
        %v12540 = vld [vmem:[%s406 + $0x58] sm:$0xff]
        %v12541 = vld [vmem:[%s406 + $0x60] sm:$0xff]
        %v12542 = vld [vmem:[%s406 + $0x68] sm:$0xff]
        %v12543 = vld [vmem:[%s406 + $0x70] sm:$0xff]
        %v12544 = vld [vmem:[%s406 + $0x78] sm:$0xff]
        %v12545 = vld [vmem:[%s406 + $0x80] sm:$0xff]
        %v12546 = vld [vmem:[%s406 + $0x88] sm:$0xff]
        %v12547 = vld [vmem:[%s406 + $0x90] sm:$0xff]
        %v12548 = vld [vmem:[%s406 + $0x98] sm:$0xff]
        %v12549 = vld [vmem:[%s406 + $0xa0] sm:$0xff]
        %v12550 = vld [vmem:[%s406 + $0xa8] sm:$0xff]
        %v12551 = vld [vmem:[%s406 + $0xb0] sm:$0xff]
        %v12552 = vld [vmem:[%s406 + $0xb8] sm:$0xff]
        %v12553 = vld [vmem:[%s406 + $0xc0] sm:$0xff]
        %v12554 = vld [vmem:[%s406 + $0xc8] sm:$0xff]
        %v12555 = vld [vmem:[%s406 + $0xd0] sm:$0xff]
        %v12556 = vld [vmem:[%s406 + $0xd8] sm:$0xff]
        %v12557 = vld [vmem:[%s406 + $0xe0] sm:$0xff]
        %v12558 = vld [vmem:[%s406 + $0xe8] sm:$0xff]
        %v12559 = vld [vmem:[%s406 + $0xf0] sm:$0xff]
        %v12560 = vld [vmem:[%s406 + $0xf8] sm:$0xff]
        %v12561 = vld [vmem:[%s406 + $0x100] sm:$0xff]
        %v12562 = vld [vmem:[%s406 + $0x108] sm:$0xff]
        %v12563 = vld [vmem:[%s406 + $0x110] sm:$0xff]
        %v12564 = vld [vmem:[%s406 + $0x118] sm:$0xff]
        %v12565 = vld [vmem:[%s406 + $0x120] sm:$0xff]
        %v12566 = vld [vmem:[%s406 + $0x128] sm:$0xff]
        %v12567 = vld [vmem:[%s406 + $0x130] sm:$0xff]
        %v12568 = vld [vmem:[%s406 + $0x138] sm:$0xff]
        %v12569 = vld [vmem:[%s406 + $0x140] sm:$0xff]
        %v12570 = vld [vmem:[%s406 + $0x148] sm:$0xff]
        %v12571 = vld [vmem:[%s406 + $0x150] sm:$0xff]
        %v12572 = vld [vmem:[%s406 + $0x158] sm:$0xff]
        %v12573 = vld [vmem:[%s406 + $0x160] sm:$0xff]
        %v12574 = vld [vmem:[%s406 + $0x168] sm:$0xff]
        %v12575 = vld [vmem:[%s406 + $0x170] sm:$0xff]
        %v12576 = vld [vmem:[%s406 + $0x178] sm:$0xff]
        %v12577 = vld [vmem:[%s406 + $0x180] sm:$0xff]
        %v12578 = vld [vmem:[%s406 + $0x188] sm:$0xff]
        %v12579 = vld [vmem:[%s406 + $0x190] sm:$0xff]
        %v12580 = vld [vmem:[%s406 + $0x198] sm:$0xff]
        %v12581 = vld [vmem:[%s406 + $0x1a0] sm:$0xff]
        %v12582 = vld [vmem:[%s406 + $0x1a8] sm:$0xff]
        %v12583 = vld [vmem:[%s406 + $0x1b0] sm:$0xff]
        %v12584 = vld [vmem:[%s406 + $0x1b8] sm:$0xff]
        %v12585 = vld [vmem:[%s406 + $0x1c0] sm:$0xff]
        %v12586 = vld [vmem:[%s406 + $0x1c8] sm:$0xff]
        %v12587 = vld [vmem:[%s406 + $0x1d0] sm:$0xff]
        %v12588 = vld [vmem:[%s406 + $0x1d8] sm:$0xff]
        %v12589 = vld [vmem:[%s406 + $0x1e0] sm:$0xff]
        %v12590 = vld [vmem:[%s406 + $0x1e8] sm:$0xff]
        %v12591 = vld [vmem:[%s406 + $0x1f0] sm:$0xff]
        %v12592 = vld [vmem:[%s406 + $0x1f8] sm:$0xff]
        %v12593 = vld [vmem:[%s406 + $0x200] sm:$0xff]
        %v12594 = vld [vmem:[%s406 + $0x208] sm:$0xff]
        %v12595 = vld [vmem:[%s406 + $0x210] sm:$0xff]
        %v12596 = vld [vmem:[%s406 + $0x218] sm:$0xff]
        %v12597 = vld [vmem:[%s406 + $0x220] sm:$0xff]
        %v12598 = vld [vmem:[%s406 + $0x228] sm:$0xff]
        %v12599 = vld [vmem:[%s406 + $0x230] sm:$0xff]
        %v12600 = vld [vmem:[%s406 + $0x238] sm:$0xff]
        %v12601 = vld [vmem:[%s406 + $0x240] sm:$0xff]
        %v12602 = vld [vmem:[%s406 + $0x248] sm:$0xff]
        %v12603 = vld [vmem:[%s406 + $0x250] sm:$0xff]
        %v12604 = vld [vmem:[%s406 + $0x258] sm:$0xff]
        %v12605 = vld [vmem:[%s406 + $0x260] sm:$0xff]
        %v12606 = vld [vmem:[%s406 + $0x268] sm:$0xff]
        %v12607 = vld [vmem:[%s406 + $0x270] sm:$0xff]
        %v12608 = vld [vmem:[%s406 + $0x278] sm:$0xff]
        %v12609 = vld [vmem:[%s406 + $0x280] sm:$0xff]
        %v12610 = vld [vmem:[%s406 + $0x288] sm:$0xff]
        %v12611 = vld [vmem:[%s406 + $0x290] sm:$0xff]
        %v12612 = vld [vmem:[%s406 + $0x298] sm:$0xff]
        %v12613 = vld [vmem:[%s406 + $0x2a0] sm:$0xff]
        %v12614 = vld [vmem:[%s406 + $0x2a8] sm:$0xff]
        %v12615 = vld [vmem:[%s406 + $0x2b0] sm:$0xff]
        %v12616 = vld [vmem:[%s406 + $0x2b8] sm:$0xff]
        %v12617 = vld [vmem:[%s406 + $0x2c0] sm:$0xff]
        %v12618 = vld [vmem:[%s406 + $0x2c8] sm:$0xff]
        %v12619 = vld [vmem:[%s406 + $0x2d0] sm:$0xff]
        %v12620 = vld [vmem:[%s406 + $0x2d8] sm:$0xff]
        %v12621 = vld [vmem:[%s406 + $0x2e0] sm:$0xff]
        %v12622 = vld [vmem:[%s406 + $0x2e8] sm:$0xff]
        %v12623 = vld [vmem:[%s406 + $0x2f0] sm:$0xff]
        %v12624 = vld [vmem:[%s406 + $0x2f8] sm:$0xff]
        %v12625 = vld [vmem:[%s406 + $0x300] sm:$0xff]
        %v12626 = vld [vmem:[%s406 + $0x308] sm:$0xff]
        %v12627 = vld [vmem:[%s406 + $0x310] sm:$0xff]
        %v12628 = vld [vmem:[%s406 + $0x318] sm:$0xff]
        %v12629 = vld [vmem:[%s406 + $0x320] sm:$0xff]
        %v12630 = vld [vmem:[%s406 + $0x328] sm:$0xff]
        %v12631 = vld [vmem:[%s406 + $0x330] sm:$0xff]
        %v12632 = vld [vmem:[%s406 + $0x338] sm:$0xff]
        %v12633 = vld [vmem:[%s406 + $0x340] sm:$0xff]
        %v12634 = vld [vmem:[%s406 + $0x348] sm:$0xff]
        %v12635 = vld [vmem:[%s406 + $0x350] sm:$0xff]
        %v12636 = vld [vmem:[%s406 + $0x358] sm:$0xff]
        %v12637 = vld [vmem:[%s406 + $0x360] sm:$0xff]
        %v12638 = vld [vmem:[%s406 + $0x368] sm:$0xff]
        %v12639 = vld [vmem:[%s406 + $0x370] sm:$0xff]
        %v12640 = vld [vmem:[%s406 + $0x378] sm:$0xff]
        %v12641 = vld [vmem:[%s406 + $0x380] sm:$0xff]
        %v12642 = vld [vmem:[%s406 + $0x388] sm:$0xff]
        %v12643 = vld [vmem:[%s406 + $0x390] sm:$0xff]
        %v12644 = vld [vmem:[%s406 + $0x398] sm:$0xff]
        %v12645 = vld [vmem:[%s406 + $0x3a0] sm:$0xff]
        %v12646 = vld [vmem:[%s406 + $0x3a8] sm:$0xff]
        %v12647 = vld [vmem:[%s406 + $0x3b0] sm:$0xff]
        %v12648 = vld [vmem:[%s406 + $0x3b8] sm:$0xff]
        %v12649 = vld [vmem:[%s406 + $0x3c0] sm:$0xff]
        %v12650 = vld [vmem:[%s406 + $0x3c8] sm:$0xff]
        %v12651 = vld [vmem:[%s406 + $0x3d0] sm:$0xff]
        %v12652 = vld [vmem:[%s406 + $0x3d8] sm:$0xff]
        %v12653 = vld [vmem:[%s406 + $0x3e0] sm:$0xff]
        %v12654 = vld [vmem:[%s406 + $0x3e8] sm:$0xff]
        %v12655 = vld [vmem:[%s406 + $0x3f0] sm:$0xff]
        %v12656 = vld [vmem:[%s406 + $0x3f8] sm:$0xff]
        %12657 = vmatpush.msra.mxu0 %v12544
        %12658 = vmatpush.msra.mxu0 %v12543
        %12659 = vmatpush.msra.mxu0 %v12542
        %12660 = vmatpush.msra.mxu0 %v12541
        %12661 = vmatpush.msra.mxu0 %v12540
        %12662 = vmatpush.msra.mxu0 %v12539
        %12663 = vmatpush.msra.mxu0 %v12538
        %12664 = vmatpush.msra.mxu0 %v12537
        %12665 = vmatpush.msra.mxu0 %v12536
        %12666 = vmatpush.msra.mxu0 %v12535
        %12667 = vmatpush.msra.mxu0 %v12534
        %12668 = vmatpush.msra.mxu0 %v12533
        %12669 = vmatpush.msra.mxu0 %v12532
        %12670 = vmatpush.msra.mxu0 %v12531
        %12671 = vmatpush.msra.mxu0 %v12530
        %12672 = vmatpush.msra.mxu0 %v12529
        %12673 = vmatmul.f32.gmra.mxu0 %v12521
        %v12674 = vpop.f32.mrf.mxu0
        %v12675 = vadd.f32 0.0, %v12674
        %12676 = vdwg.mxu0
        %12677 = vmatpush.msra.mxu0 %v12560
        %12678 = vmatpush.msra.mxu0 %v12559
        %12679 = vmatpush.msra.mxu0 %v12558
        %12680 = vmatpush.msra.mxu0 %v12557
        %12681 = vmatpush.msra.mxu0 %v12556
        %12682 = vmatpush.msra.mxu0 %v12555
        %12683 = vmatpush.msra.mxu0 %v12554
        %12684 = vmatpush.msra.mxu0 %v12553
        %12685 = vmatpush.msra.mxu0 %v12552
        %12686 = vmatpush.msra.mxu0 %v12551
        %12687 = vmatpush.msra.mxu0 %v12550
        %12688 = vmatpush.msra.mxu0 %v12549
        %12689 = vmatpush.msra.mxu0 %v12548
        %12690 = vmatpush.msra.mxu0 %v12547
        %12691 = vmatpush.msra.mxu0 %v12546
        %12692 = vmatpush.msra.mxu0 %v12545
        %12693 = vmatmul.f32.gmra.mxu0 %v12522
        %v12694 = vpop.f32.mrf.mxu0
        %v12695 = vadd.f32 %v12675, %v12694
        %12696 = vdwg.mxu0
        %12697 = vmatpush.msra.mxu0 %v12576
        %12698 = vmatpush.msra.mxu0 %v12575
        %12699 = vmatpush.msra.mxu0 %v12574
        %12700 = vmatpush.msra.mxu0 %v12573
        %12701 = vmatpush.msra.mxu0 %v12572
        %12702 = vmatpush.msra.mxu0 %v12571
        %12703 = vmatpush.msra.mxu0 %v12570
        %12704 = vmatpush.msra.mxu0 %v12569
        %12705 = vmatpush.msra.mxu0 %v12568
        %12706 = vmatpush.msra.mxu0 %v12567
        %12707 = vmatpush.msra.mxu0 %v12566
        %12708 = vmatpush.msra.mxu0 %v12565
        %12709 = vmatpush.msra.mxu0 %v12564
        %12710 = vmatpush.msra.mxu0 %v12563
        %12711 = vmatpush.msra.mxu0 %v12562
        %12712 = vmatpush.msra.mxu0 %v12561
        %12713 = vmatmul.f32.gmra.mxu0 %v12523
        %v12714 = vpop.f32.mrf.mxu0
        %v12715 = vadd.f32 %v12695, %v12714
        %12716 = vdwg.mxu0
        %12717 = vmatpush.msra.mxu0 %v12592
        %12718 = vmatpush.msra.mxu0 %v12591
        %12719 = vmatpush.msra.mxu0 %v12590
        %12720 = vmatpush.msra.mxu0 %v12589
        %12721 = vmatpush.msra.mxu0 %v12588
        %12722 = vmatpush.msra.mxu0 %v12587
        %12723 = vmatpush.msra.mxu0 %v12586
        %12724 = vmatpush.msra.mxu0 %v12585
        %12725 = vmatpush.msra.mxu0 %v12584
        %12726 = vmatpush.msra.mxu0 %v12583
        %12727 = vmatpush.msra.mxu0 %v12582
        %12728 = vmatpush.msra.mxu0 %v12581
        %12729 = vmatpush.msra.mxu0 %v12580
        %12730 = vmatpush.msra.mxu0 %v12579
        %12731 = vmatpush.msra.mxu0 %v12578
        %12732 = vmatpush.msra.mxu0 %v12577
        %12733 = vmatmul.f32.gmra.mxu0 %v12524
        %v12734 = vpop.f32.mrf.mxu0
        %v12735 = vadd.f32 %v12715, %v12734
        %12736 = vdwg.mxu0
        %12737 = vmatpush.msra.mxu0 %v12608
        %12738 = vmatpush.msra.mxu0 %v12607
        %12739 = vmatpush.msra.mxu0 %v12606
        %12740 = vmatpush.msra.mxu0 %v12605
        %12741 = vmatpush.msra.mxu0 %v12604
        %12742 = vmatpush.msra.mxu0 %v12603
        %12743 = vmatpush.msra.mxu0 %v12602
        %12744 = vmatpush.msra.mxu0 %v12601
        %12745 = vmatpush.msra.mxu0 %v12600
        %12746 = vmatpush.msra.mxu0 %v12599
        %12747 = vmatpush.msra.mxu0 %v12598
        %12748 = vmatpush.msra.mxu0 %v12597
        %12749 = vmatpush.msra.mxu0 %v12596
        %12750 = vmatpush.msra.mxu0 %v12595
        %12751 = vmatpush.msra.mxu0 %v12594
        %12752 = vmatpush.msra.mxu0 %v12593
        %12753 = vmatmul.f32.gmra.mxu0 %v12525
        %v12754 = vpop.f32.mrf.mxu0
        %v12755 = vadd.f32 %v12735, %v12754
        %12756 = vdwg.mxu0
        %12757 = vmatpush.msra.mxu0 %v12624
        %12758 = vmatpush.msra.mxu0 %v12623
        %12759 = vmatpush.msra.mxu0 %v12622
        %12760 = vmatpush.msra.mxu0 %v12621
        %12761 = vmatpush.msra.mxu0 %v12620
        %12762 = vmatpush.msra.mxu0 %v12619
        %12763 = vmatpush.msra.mxu0 %v12618
        %12764 = vmatpush.msra.mxu0 %v12617
        %12765 = vmatpush.msra.mxu0 %v12616
        %12766 = vmatpush.msra.mxu0 %v12615
        %12767 = vmatpush.msra.mxu0 %v12614
        %12768 = vmatpush.msra.mxu0 %v12613
        %12769 = vmatpush.msra.mxu0 %v12612
        %12770 = vmatpush.msra.mxu0 %v12611
        %12771 = vmatpush.msra.mxu0 %v12610
        %12772 = vmatpush.msra.mxu0 %v12609
        %12773 = vmatmul.f32.gmra.mxu0 %v12526
        %v12774 = vpop.f32.mrf.mxu0
        %v12775 = vadd.f32 %v12755, %v12774
        %12776 = vdwg.mxu0
        %12777 = vmatpush.msra.mxu0 %v12640
        %12778 = vmatpush.msra.mxu0 %v12639
        %12779 = vmatpush.msra.mxu0 %v12638
        %12780 = vmatpush.msra.mxu0 %v12637
        %12781 = vmatpush.msra.mxu0 %v12636
        %12782 = vmatpush.msra.mxu0 %v12635
        %12783 = vmatpush.msra.mxu0 %v12634
        %12784 = vmatpush.msra.mxu0 %v12633
        %12785 = vmatpush.msra.mxu0 %v12632
        %12786 = vmatpush.msra.mxu0 %v12631
        %12787 = vmatpush.msra.mxu0 %v12630
        %12788 = vmatpush.msra.mxu0 %v12629
        %12789 = vmatpush.msra.mxu0 %v12628
        %12790 = vmatpush.msra.mxu0 %v12627
        %12791 = vmatpush.msra.mxu0 %v12626
        %12792 = vmatpush.msra.mxu0 %v12625
        %12793 = vmatmul.f32.gmra.mxu0 %v12527
        %v12794 = vpop.f32.mrf.mxu0
        %v12795 = vadd.f32 %v12775, %v12794
        %12796 = vdwg.mxu0
        %12797 = vmatpush.msra.mxu0 %v12656
        %12798 = vmatpush.msra.mxu0 %v12655
        %12799 = vmatpush.msra.mxu0 %v12654
        %12800 = vmatpush.msra.mxu0 %v12653
        %12801 = vmatpush.msra.mxu0 %v12652
        %12802 = vmatpush.msra.mxu0 %v12651
        %12803 = vmatpush.msra.mxu0 %v12650
        %12804 = vmatpush.msra.mxu0 %v12649
        %12805 = vmatpush.msra.mxu0 %v12648
        %12806 = vmatpush.msra.mxu0 %v12647
        %12807 = vmatpush.msra.mxu0 %v12646
        %12808 = vmatpush.msra.mxu0 %v12645
        %12809 = vmatpush.msra.mxu0 %v12644
        %12810 = vmatpush.msra.mxu0 %v12643
        %12811 = vmatpush.msra.mxu0 %v12642
        %12812 = vmatpush.msra.mxu0 %v12641
        %12813 = vmatmul.f32.gmra.mxu0 %v12528
        %v12814 = vpop.f32.mrf.mxu0
        %v12815 = vadd.f32 %v12795, %v12814
        %12816 = vdwg.mxu0
        %vm12817 = vcmask 80896
        %12818 = vst.msk [vmem:[%s411] sm:$0xff] %vm12817, %v12815
        %p12819 = scmp.lt.s32.totalorder %s26, 1
        %s12820 = scalar_select %p12819, %s26, 1
        %s12821 = smul.addr %s12820, 8
        %s12822 = scalar_lea.vmem %s6, %s12821
        // Predicated region
        $region61: #{label_classifier_forward.1} parent=43 // pred_check
          %p12823 = pneg %p195
        $region62: #{label_classifier_forward.1} parent=43 // pred_check_branch
          %12825 = sbr.rel (%p12823) target = $region64
        $region63: #{label_classifier_forward.1} parent=43 // pred_region
          _
        $region64: #{label_classifier_forward.1} parent=43 // pred_fallthru
          _
      $region44: #{label_classifier_forward.1} parent=5 // pred_fallthru
        _
      %p12826 = scmp.le.s32.totalorder 2, %s21
      // Predicated region
      $region65: #{label_classifier_forward.1} parent=5 // pred_check
        %p12827 = pneg %p12826
      $region66: #{label_classifier_forward.1} parent=5 // pred_check_branch
        %12829 = sbr.rel (%p12827) target = $region68
      $region67: #{label_classifier_forward.1} parent=5 // pred_region
        %s12830 = ssub.s32 %s21, 2
        // Predicated region
        $region69: #{label_classifier_forward.1} parent=67 // pred_check
          %p12831 = pneg %p201
        $region70: #{label_classifier_forward.1} parent=67 // pred_check_branch
          %12833 = sbr.rel (%p12831) target = $region72
        $region71: #{label_classifier_forward.1} parent=67 // pred_region
          %p12834 = scmp.lt.s32.totalorder %s27, 1
          %s12835 = scalar_select %p12834, %s27, 1
          %s12836 = smul.addr %s12835, 8
          %s12837 = scalar_lea.vmem %s6, %s12836
        $region72: #{label_classifier_forward.1} parent=67 // pred_fallthru
          _
      $region68: #{label_classifier_forward.1} parent=5 // pred_fallthru
        _
    $region6: #{label_classifier_forward.1} parent=1 // loop_footer
      %s25 = sadd.s32 1, %s21
    $region7: #{label_classifier_forward.1} parent=1 // loop_footer_branch
      %20 = sbr.rel target = $region3
    $region8: #{label_classifier_forward.1} parent=1 // loop_exit
      _
    %12838 = vsyncpa [#allocation3], 1
    %s12839 = scalar_lea.sflag [#allocation3], 1
    %12840 = vsyncpa %s12839, 1
    %12841 = vsyncpa [#allocation5], 1
    %s12842 = scalar_lea.sflag [#allocation5], 1
    %12843 = vsyncpa %s12842, 1
    %12844 = vsyncpa [#allocation8], 1
    %s12845 = scalar_lea.sflag [#allocation8], 1
    %12846 = vsyncpa %s12845, 1

</llo_original>
